<compile_context>
chip_gen: v7x
topology: tpu7x:2x2x1
jax: 0.10.0
libtpu: 0.0.40
codegen_flags: <defaults>
</compile_context>

<pallas_src>
import functools
import math

import jax
import jax.numpy as jnp
from jax import lax
from jax.experimental import pallas as pl
from jax.experimental.pallas import tpu as pltpu

LN_EPS = 1e-5


def _tri_attn_kernel(z_ref, bias_ref, lng_ref, lnb_ref,
                     wq_ref, wk_ref, wv_ref, wg_ref, bg_ref,
                     wo_ref, bo_ref, o_ref, *, n_head, c_head):
    # z_ref:    (1, TI, J, C)  f32/bf16   rows of the pair matrix for this step
    # bias_ref: (1, H, J, J)   bf16       triangle bias, shared across rows of a batch
    # lng/lnb:  (1, C)         f32        LayerNorm gamma / beta
    # wq/wk/wv/wg: (C, H*c)    bf16       projection weights (no bias on q/k/v)
    # bg: (1, H*c) f32   wo: (H*c, C) bf16   bo: (1, C) f32
    ti, j, cz = z_ref.shape[1], z_ref.shape[2], z_ref.shape[3]

    z = z_ref[0].astype(jnp.float32)                     # [TI, J, C]

    # LayerNorm over channels in f32 (biased variance, like torch).
    mean = jnp.mean(z, axis=-1, keepdims=True)
    cent = z - mean
    var = jnp.mean(cent * cent, axis=-1, keepdims=True)
    zn = cent * lax.rsqrt(var + LN_EPS)
    zn = zn * lng_ref[...].astype(jnp.float32) + lnb_ref[...].astype(jnp.float32)

    # bf16 operands into the MXU, f32 accumulation.
    zn2 = zn.reshape(ti * j, cz).astype(jnp.bfloat16)    # rows = (i, j) positions

    q = jnp.dot(zn2, wq_ref[...], preferred_element_type=jnp.float32)
    k = jnp.dot(zn2, wk_ref[...], preferred_element_type=jnp.float32)
    v = jnp.dot(zn2, wv_ref[...], preferred_element_type=jnp.float32)
    g = jax.nn.sigmoid(
        jnp.dot(zn2, wg_ref[...], preferred_element_type=jnp.float32)
        + bg_ref[...].astype(jnp.float32))               # [TI*J, H*c] f32

    # Hoisted scale: applied once to q (not per head).
    q = q * (1.0 / math.sqrt(c_head))

    qb = q.astype(jnp.bfloat16)
    kb = k.astype(jnp.bfloat16)
    vb = v.astype(jnp.bfloat16)

    # Per-head attention with per-head accumulation of the output projection
    # (avoids a lane-relayout concatenate across heads).
    out_acc = jnp.zeros((ti * j, cz), jnp.float32)
    for h in range(n_head):
        lo = h * c_head
        qh = qb[:, lo:lo + c_head].reshape(ti, j, c_head)   # [TI, J, c]
        kh = kb[:, lo:lo + c_head].reshape(ti, j, c_head)
        vh = vb[:, lo:lo + c_head].reshape(ti, j, c_head)

        # Scores over the attention (j) axis, per query row; bias shared over rows.
        s = jnp.einsum('tqc,tkc->tqk', qh, kh,
                       preferred_element_type=jnp.float32)  # [TI, J, J]
        s = s + bias_ref[0, h].astype(jnp.float32)[None, :, :]

        # Softmax without normalizing the full score matrix: PV on unnormalized
        # exp() weights, then rescale the [TI, J, c] result by 1/row_sum.
        # (Padded tail rows may produce inf/NaN here; their stores are masked.)
        m = jnp.max(s, axis=-1, keepdims=True)
        e = jnp.exp(s - m)                                  # f32 (v5e-safe)
        denom = jnp.sum(e, axis=-1, keepdims=True)          # [TI, J, 1]

        oh = jnp.einsum('tqk,tkc->tqc', e.astype(jnp.bfloat16), vh,
                        preferred_element_type=jnp.float32)  # [TI, J, c]
        oh = oh * pl.reciprocal(denom, approx=True)

        gated = (oh.reshape(ti * j, c_head)
                 * g[:, lo:lo + c_head]).astype(jnp.bfloat16)
        out_acc = out_acc + jnp.dot(gated, wo_ref[lo:lo + c_head, :],
                                    preferred_element_type=jnp.float32)

    out = out_acc + bo_ref[...].astype(jnp.float32)
    o_ref[...] = out.reshape(1, ti, j, cz).astype(o_ref.dtype)


def _layer_norm(x, gamma, beta):
    xf = x.astype(jnp.float32)
    mean = jnp.mean(xf, axis=-1, keepdims=True)
    var = jnp.mean((xf - mean) ** 2, axis=-1, keepdims=True)
    return (xf - mean) * lax.rsqrt(var + LN_EPS) * gamma + beta


def _vmem_capacity_bytes():
    try:
        return int(pltpu.get_tpu_info().vmem_capacity_bytes)
    except Exception:
        return 64 << 20   # conservative (v7x-sized) fallback


@functools.partial(jax.jit, static_argnames=("node_type", "c", "n_head", "tile_i"))
def triangle_attention(z, params, *, node_type="starting_node", c=32, n_head=4,
                       tile_i=None):
    """z: [..., N_res, N_res, c_z] -> [..., N_res, N_res, c_z]."""
    if node_type not in ("starting_node", "ending_node"):
        raise ValueError(f"bad node_type {node_type}")

    # Ending-node attention on z == starting-node attention on z^T, transposed back.
    # TODO(synk): replace these two full HBM transposes with a column-tiled
    # BlockSpec variant (swap I/J roles in block_shape/index_map).
    if node_type == "ending_node":
        z = jnp.swapaxes(z, -2, -3)

    zb = z.reshape((-1,) + z.shape[-3:])
    B, I, J, C = zb.shape
    if I != J:
        raise ValueError("pair representation must be square (N_res x N_res)")
    HC = n_head * c

    # Triangle bias in XLA (tiny linear + layout move), produced in bf16 to halve
    # the largest per-batch DMA and its resident VMEM block: [B, H, N, N].
    zn_x = _layer_norm(zb, params["ln_g"], params["ln_b"]).astype(jnp.bfloat16)
    bias = jnp.moveaxis(
        jnp.einsum('bijc,ch->bijh', zn_x, params["wb"].astype(jnp.bfloat16),
                   preferred_element_type=jnp.float32), -1, -3)
    bias = bias.astype(jnp.bfloat16)

    # --- VMEM-aware row-tile sizing -------------------------------------------
    vmem_cap = _vmem_capacity_bytes()
    vmem_limit = max(32 << 20, min(int(0.85 * vmem_cap), 100 << 20))

    z_item = zb.dtype.itemsize
    # Resident (tile-independent): bf16 weights (x2 pipeline buffers), bias block
    # (x2), LN/bias vectors.
    fixed_bytes = (2 * (4 * C * HC + HC * C + HC) * 2
                   + 2 * n_head * J * J * 2
                   + 4 * C * 4)
    # Per extra row of the tile (actual live set: only ONE head's scores live).
    per_row = (
        4 * J * C * z_item            # 2x input + 2x output pipeline buffers
        + J * C * (4 + 2)             # zn (f32) + zn2 (bf16)
        + J * HC * (4 * 4 + 3 * 2)    # q/k/v/g f32 + q/k/v bf16 copies
        + 3 * J * J * 4               # one head's s / e / temp (f32)
        + J * C * 4                   # output accumulator (f32)
    )
    if tile_i is None:
        budget = max(vmem_limit - fixed_bytes, per_row)
        tile_i = max(1, min(I, budget // per_row))
    tile_i = int(min(tile_i, I))
    # --------------------------------------------------------------------------

    grid = (B, pl.cdiv(I, tile_i))   # no padding round trip; rows are independent

    kernel = functools.partial(_tri_attn_kernel, n_head=n_head, c_head=c)
    bf16 = jnp.bfloat16

    out = pl.pallas_call(
        kernel,
        out_shape=jax.ShapeDtypeStruct((B, I, J, C), zb.dtype),
        grid_spec=pltpu.PrefetchScalarGridSpec(
            num_scalar_prefetch=0,
            grid=grid,
            in_specs=[
                pl.BlockSpec((1, tile_i, J, C), lambda b, i: (b, i, 0, 0)),  # z rows
                pl.BlockSpec((1, n_head, J, J), lambda b, i: (b, 0, 0, 0)),  # bias
                pl.BlockSpec((1, C), lambda b, i: (0, 0)),                   # ln gamma
                pl.BlockSpec((1, C), lambda b, i: (0, 0)),                   # ln beta
                pl.BlockSpec((C, HC), lambda b, i: (0, 0)),                  # Wq
                pl.BlockSpec((C, HC), lambda b, i: (0, 0)),                  # Wk
                pl.BlockSpec((C, HC), lambda b, i: (0, 0)),                  # Wv
                pl.BlockSpec((C, HC), lambda b, i: (0, 0)),                  # Wg
                pl.BlockSpec((1, HC), lambda b, i: (0, 0)),                  # bg
                pl.BlockSpec((HC, C), lambda b, i: (0, 0)),                  # Wo
                pl.BlockSpec((1, C), lambda b, i: (0, 0)),                   # bo
            ],
            out_specs=pl.BlockSpec((1, tile_i, J, C), lambda b, i: (b, i, 0, 0)),
        ),
        compiler_params=pltpu.CompilerParams(
            dimension_semantics=("parallel", "parallel"),
            vmem_limit_bytes=vmem_limit),
    )(zb, bias,
      params["ln_g"].reshape(1, C), params["ln_b"].reshape(1, C),
      params["wq"].astype(bf16), params["wk"].astype(bf16),
      params["wv"].astype(bf16), params["wg"].astype(bf16),
      params["bg"].reshape(1, HC),
      params["wo"].astype(bf16), params["bo"].reshape(1, C))

    out = out.reshape(z.shape)
    if node_type == "ending_node":
        out = jnp.swapaxes(out, -2, -3)
    return out


def init_params(key, c_z, c=32, n_head=4):
    """Deterministic synthetic parameters. PyTorch Linear stores (out, in);
    weights here are pre-transposed as (in, out) so the kernel computes x @ W."""
    hc = n_head * c
    ks = jax.random.split(key, 10)
    s = 0.05
    return {
        "ln_g": 1.0 + 0.1 * jax.random.normal(ks[0], (c_z,), jnp.float32),
        "ln_b": 0.1 * jax.random.normal(ks[1], (c_z,), jnp.float32),
        "wq": s * jax.random.normal(ks[2], (c_z, hc), jnp.float32),
        "wk": s * jax.random.normal(ks[3], (c_z, hc), jnp.float32),
        "wv": s * jax.random.normal(ks[4], (c_z, hc), jnp.float32),
        "wg": s * jax.random.normal(ks[5], (c_z, hc), jnp.float32),
        "bg": s * jax.random.normal(ks[6], (hc,), jnp.float32),
        "wo": s * jax.random.normal(ks[7], (hc, c_z), jnp.float32),
        "bo": s * jax.random.normal(ks[8], (c_z,), jnp.float32),
        "wb": s * jax.random.normal(ks[9], (c_z, n_head), jnp.float32),  # bias=False
    }


def _reference(z, p, node_type, c, n_head):
    """Literal JAX (f32) transcription of the PyTorch TriangleAttention forward."""
    zn = _layer_norm(z, p["ln_g"], p["ln_b"])
    bias = zn @ p["wb"]                                   # [B, I, J, H]
    bias = jnp.moveaxis(bias, -1, -3)                     # [B, H, I, J]
    if node_type == "ending_node":
        bias = jnp.swapaxes(bias, -1, -2)
    attn_dim = -2 if node_type == "starting_node" else -3

    x = jnp.moveaxis(zn, attn_dim, -2)                    # attention dim at -2
    q, k, v = x @ p["wq"], x @ p["wk"], x @ p["wv"]

    def split_heads(t):
        t = t.reshape(t.shape[:-1] + (n_head, c))
        return jnp.swapaxes(t, -2, -3)                    # [..., H, q, c]

    qh, kh, vh = split_heads(q), split_heads(k), split_heads(v)
    qh = qh / jnp.sqrt(c)
    a = jnp.einsum('...qc,...kc->...qk', qh, kh)
    bias_bc = bias.reshape(bias.shape[:-3] + (1,) * (a.ndim - bias.ndim)
                           + bias.shape[-3:])
    a = jax.nn.softmax(a + bias_bc, axis=-1)
    o = jnp.einsum('...qk,...kc->...qc', a, vh)           # [..., H, q, c]
    o = jnp.swapaxes(o, -2, -3)
    o = o.reshape(o.shape[:-2] + (n_head * c,))
    g = jax.nn.sigmoid(x @ p["wg"] + p["bg"])
    o = g * o
    o = jnp.moveaxis(o, -2, attn_dim)
    out = o @ p["wo"] + p["bo"]
    return out.astype(z.dtype)


if __name__ == "__main__":
    key = jax.random.PRNGKey(0)
    kz, kp = jax.random.split(key)

    # Small pair representation, lane-dense features: c_z = 128, H*c = 4*32 = 128.
    B, N, c_z, c, n_head = 2, 16, 128, 32, 4
    z = jax.random.normal(kz, (B, N, N, c_z), jnp.float32)
    params = init_params(kp, c_z, c=c, n_head=n_head)

    for node_type in ("starting_node", "ending_node"):
        out = triangle_attention(z, params, node_type=node_type, c=c, n_head=n_head)
        out = jax.block_until_ready(out)
        ref = _reference(z, params, node_type, c, n_head)
        assert out.shape == z.shape and out.dtype == z.dtype
        # Tolerance loosened deliberately: the kernel feeds the MXU bf16 operands
        # (f32 accumulation) per the perf review; the reference is pure f32.
        assert jnp.allclose(out, ref, atol=3e-2, rtol=3e-2), \
            (node_type, float(jnp.max(jnp.abs(out - ref))))

    print("KERNEL_OK")
</pallas_src>

<mosaic_0001>
module attributes {stable_mosaic.version = 11 : i64} {
  func.func @_tri_attn_kernel(%arg0: i32, %arg1: i32, %arg2: memref<1x16x16x128xf32, #tpu.memory_space<vmem>>, %arg3: memref<1x4x16x16xbf16, #tpu.memory_space<vmem>>, %arg4: memref<1x128xf32, #tpu.memory_space<vmem>>, %arg5: memref<1x128xf32, #tpu.memory_space<vmem>>, %arg6: memref<128x128xbf16, #tpu.memory_space<vmem>>, %arg7: memref<128x128xbf16, #tpu.memory_space<vmem>>, %arg8: memref<128x128xbf16, #tpu.memory_space<vmem>>, %arg9: memref<128x128xbf16, #tpu.memory_space<vmem>>, %arg10: memref<1x128xf32, #tpu.memory_space<vmem>>, %arg11: memref<128x128xbf16, #tpu.memory_space<vmem>>, %arg12: memref<1x128xf32, #tpu.memory_space<vmem>>, %arg13: memref<1x16x16x128xf32, #tpu.memory_space<vmem>>) attributes {dimension_semantics = [#tpu.dimension_semantics<parallel>, #tpu.dimension_semantics<parallel>], iteration_bounds = array<i64: 2, 1>, scalar_prefetch = 0 : i64, scratch_operands = 0 : i64, tpu.core_type = #tpu.core_type<tc>, window_params = [{transform_indices = @transform_0, window_bounds = array<i64: 1, 16, 16, 128>}, {transform_indices = @transform_1, window_bounds = array<i64: 1, 4, 16, 16>}, {pipeline_mode = #tpu.pipeline_mode<synchronous>, transform_indices = @transform_2, window_bounds = array<i64: 1, 128>}, {pipeline_mode = #tpu.pipeline_mode<synchronous>, transform_indices = @transform_3, window_bounds = array<i64: 1, 128>}, {pipeline_mode = #tpu.pipeline_mode<synchronous>, transform_indices = @transform_4, window_bounds = array<i64: 128, 128>}, {pipeline_mode = #tpu.pipeline_mode<synchronous>, transform_indices = @transform_5, window_bounds = array<i64: 128, 128>}, {pipeline_mode = #tpu.pipeline_mode<synchronous>, transform_indices = @transform_6, window_bounds = array<i64: 128, 128>}, {pipeline_mode = #tpu.pipeline_mode<synchronous>, transform_indices = @transform_7, window_bounds = array<i64: 128, 128>}, {pipeline_mode = #tpu.pipeline_mode<synchronous>, transform_indices = @transform_8, window_bounds = array<i64: 1, 128>}, {pipeline_mode = #tpu.pipeline_mode<synchronous>, transform_indices = @transform_9, window_bounds = array<i64: 128, 128>}, {pipeline_mode = #tpu.pipeline_mode<synchronous>, transform_indices = @transform_10, window_bounds = array<i64: 1, 128>}, {transform_indices = @transform_11, window_bounds = array<i64: 1, 16, 16, 128>}]} {
    %c0 = arith.constant 0 : index
    %c0_0 = arith.constant 0 : index
    %c0_1 = arith.constant 0 : index
    %c0_2 = arith.constant 0 : index
    %0 = vector.load %arg2[%c0, %c0_0, %c0_1, %c0_2] : memref<1x16x16x128xf32, #tpu.memory_space<vmem>>, vector<1x16x16x128xf32>
    %1 = vector.shape_cast %0 : vector<1x16x16x128xf32> to vector<16x16x128xf32>
    %cst = arith.constant dense<0.000000e+00> : vector<16x16xf32>
    %2 = vector.multi_reduction <add>, %1, %cst [2] : vector<16x16x128xf32> to vector<16x16xf32>
    %3 = vector.shape_cast %2 : vector<16x16xf32> to vector<16x16x1xf32>
    %cst_3 = arith.constant 1.280000e+02 : f32
    %4 = vector.broadcast %cst_3 : f32 to vector<16x16x1xf32>
    %5 = arith.divf %3, %4 : vector<16x16x1xf32>
    %6 = vector.broadcast %5 : vector<16x16x1xf32> to vector<16x16x128xf32>
    %7 = arith.subf %1, %6 : vector<16x16x128xf32>
    %8 = arith.mulf %7, %7 : vector<16x16x128xf32>
    %cst_4 = arith.constant dense<0.000000e+00> : vector<16x16xf32>
    %9 = vector.multi_reduction <add>, %8, %cst_4 [2] : vector<16x16x128xf32> to vector<16x16xf32>
    %10 = vector.shape_cast %9 : vector<16x16xf32> to vector<16x16x1xf32>
    %cst_5 = arith.constant 1.280000e+02 : f32
    %11 = vector.broadcast %cst_5 : f32 to vector<16x16x1xf32>
    %12 = arith.divf %10, %11 : vector<16x16x1xf32>
    %cst_6 = arith.constant 9.99999974E-6 : f32
    %13 = vector.broadcast %cst_6 : f32 to vector<16x16x1xf32>
    %14 = arith.addf %12, %13 : vector<16x16x1xf32>
    %15 = math.rsqrt %14 : vector<16x16x1xf32>
    %16 = vector.broadcast %15 : vector<16x16x1xf32> to vector<16x16x128xf32>
    %17 = arith.mulf %7, %16 : vector<16x16x128xf32>
    %c0_7 = arith.constant 0 : index
    %c0_8 = arith.constant 0 : index
    %18 = vector.load %arg4[%c0_7, %c0_8] : memref<1x128xf32, #tpu.memory_space<vmem>>, vector<1x128xf32>
    %19 = vector.shape_cast %18 : vector<1x128xf32> to vector<1x1x128xf32>
    %20 = vector.broadcast %19 : vector<1x1x128xf32> to vector<16x16x128xf32>
    %21 = arith.mulf %17, %20 : vector<16x16x128xf32>
    %c0_9 = arith.constant 0 : index
    %c0_10 = arith.constant 0 : index
    %22 = vector.load %arg5[%c0_9, %c0_10] : memref<1x128xf32, #tpu.memory_space<vmem>>, vector<1x128xf32>
    %23 = vector.shape_cast %22 : vector<1x128xf32> to vector<1x1x128xf32>
    %24 = vector.broadcast %23 : vector<1x1x128xf32> to vector<16x16x128xf32>
    %25 = arith.addf %21, %24 : vector<16x16x128xf32>
    %26 = vector.shape_cast %25 : vector<16x16x128xf32> to vector<256x128xf32>
    %27 = arith.truncf %26 : vector<256x128xf32> to vector<256x128xbf16>
    %c0_11 = arith.constant 0 : index
    %c0_12 = arith.constant 0 : index
    %28 = vector.load %arg6[%c0_11, %c0_12] : memref<128x128xbf16, #tpu.memory_space<vmem>>, vector<128x128xbf16>
    %cst_13 = arith.constant dense<0.000000e+00> : vector<256x128xf32>
    %29 = tpu.matmul %27, %28, %cst_13 {dimension_numbers = #tpu.dot_dimension_numbers<[1], [0], [0], [1], [0, 0, 1, 1], [], []>} : vector<256x128xbf16>, vector<128x128xbf16>, vector<256x128xf32> -> vector<256x128xf32>
    %c0_14 = arith.constant 0 : index
    %c0_15 = arith.constant 0 : index
    %30 = vector.load %arg7[%c0_14, %c0_15] : memref<128x128xbf16, #tpu.memory_space<vmem>>, vector<128x128xbf16>
    %cst_16 = arith.constant dense<0.000000e+00> : vector<256x128xf32>
    %31 = tpu.matmul %27, %30, %cst_16 {dimension_numbers = #tpu.dot_dimension_numbers<[1], [0], [0], [1], [0, 0, 1, 1], [], []>} : vector<256x128xbf16>, vector<128x128xbf16>, vector<256x128xf32> -> vector<256x128xf32>
    %c0_17 = arith.constant 0 : index
    %c0_18 = arith.constant 0 : index
    %32 = vector.load %arg8[%c0_17, %c0_18] : memref<128x128xbf16, #tpu.memory_space<vmem>>, vector<128x128xbf16>
    %cst_19 = arith.constant dense<0.000000e+00> : vector<256x128xf32>
    %33 = tpu.matmul %27, %32, %cst_19 {dimension_numbers = #tpu.dot_dimension_numbers<[1], [0], [0], [1], [0, 0, 1, 1], [], []>} : vector<256x128xbf16>, vector<128x128xbf16>, vector<256x128xf32> -> vector<256x128xf32>
    %c0_20 = arith.constant 0 : index
    %c0_21 = arith.constant 0 : index
    %34 = vector.load %arg9[%c0_20, %c0_21] : memref<128x128xbf16, #tpu.memory_space<vmem>>, vector<128x128xbf16>
    %cst_22 = arith.constant dense<0.000000e+00> : vector<256x128xf32>
    %35 = tpu.matmul %27, %34, %cst_22 {dimension_numbers = #tpu.dot_dimension_numbers<[1], [0], [0], [1], [0, 0, 1, 1], [], []>} : vector<256x128xbf16>, vector<128x128xbf16>, vector<256x128xf32> -> vector<256x128xf32>
    %c0_23 = arith.constant 0 : index
    %c0_24 = arith.constant 0 : index
    %36 = vector.load %arg10[%c0_23, %c0_24] : memref<1x128xf32, #tpu.memory_space<vmem>>, vector<1x128xf32>
    %37 = vector.broadcast %36 : vector<1x128xf32> to vector<256x128xf32>
    %38 = arith.addf %35, %37 : vector<256x128xf32>
    %39 = arith.negf %38 : vector<256x128xf32>
    %40 = math.exp %39 : vector<256x128xf32>
    %cst_25 = arith.constant 1.000000e+00 : f32
    %41 = vector.broadcast %cst_25 : f32 to vector<256x128xf32>
    %42 = arith.addf %41, %40 : vector<256x128xf32>
    %43 = arith.divf %41, %42 : vector<256x128xf32>
    %cst_26 = arith.constant 0.176776692 : f32
    %44 = vector.broadcast %cst_26 : f32 to vector<256x128xf32>
    %45 = arith.mulf %29, %44 : vector<256x128xf32>
    %46 = arith.truncf %45 : vector<256x128xf32> to vector<256x128xbf16>
    %47 = arith.truncf %31 : vector<256x128xf32> to vector<256x128xbf16>
    %48 = arith.truncf %33 : vector<256x128xf32> to vector<256x128xbf16>
    %cst_27 = arith.constant 0.000000e+00 : f32
    %49 = vector.broadcast %cst_27 : f32 to vector<256x128xf32>
    %50 = vector.extract_strided_slice %46 {offsets = [0, 0], sizes = [256, 32], strides = [1, 1]} : vector<256x128xbf16> to vector<256x32xbf16>
    %51 = vector.shape_cast %50 : vector<256x32xbf16> to vector<16x16x32xbf16>
    %52 = vector.extract_strided_slice %47 {offsets = [0, 0], sizes = [256, 32], strides = [1, 1]} : vector<256x128xbf16> to vector<256x32xbf16>
    %53 = vector.shape_cast %52 : vector<256x32xbf16> to vector<16x16x32xbf16>
    %54 = vector.extract_strided_slice %48 {offsets = [0, 0], sizes = [256, 32], strides = [1, 1]} : vector<256x128xbf16> to vector<256x32xbf16>
    %55 = vector.shape_cast %54 : vector<256x32xbf16> to vector<16x16x32xbf16>
    "tpu.trace_start"() <{level = 10 : i32, message = "tqc,tkc->tqk"}> : () -> ()
    %cst_28 = arith.constant dense<0.000000e+00> : vector<16x16x16xf32>
    %56 = tpu.matmul %51, %53, %cst_28 {dimension_numbers = #tpu.dot_dimension_numbers<[2], [2], [1], [1], [0, 0, 0, 1, 1, 1], [0], [0]>} : vector<16x16x32xbf16>, vector<16x16x32xbf16>, vector<16x16x16xf32> -> vector<16x16x16xf32>
    "tpu.trace_stop"() : () -> ()
    %c0_29 = arith.constant 0 : index
    %c0_30 = arith.constant 0 : index
    %c0_31 = arith.constant 0 : index
    %c0_32 = arith.constant 0 : index
    %57 = vector.load %arg3[%c0_29, %c0_30, %c0_31, %c0_32] : memref<1x4x16x16xbf16, #tpu.memory_space<vmem>>, vector<1x1x16x16xbf16>
    %58 = vector.shape_cast %57 : vector<1x1x16x16xbf16> to vector<16x16xbf16>
    %59 = arith.extf %58 : vector<16x16xbf16> to vector<16x16xf32>
    %60 = vector.shape_cast %59 : vector<16x16xf32> to vector<1x16x16xf32>
    %61 = vector.broadcast %60 : vector<1x16x16xf32> to vector<16x16x16xf32>
    %62 = arith.addf %56, %61 : vector<16x16x16xf32>
    %cst_33 = arith.constant dense<0xFF800000> : vector<16x16xf32>
    %63 = vector.multi_reduction <maximumf>, %62, %cst_33 [2] : vector<16x16x16xf32> to vector<16x16xf32>
    %64 = vector.shape_cast %63 : vector<16x16xf32> to vector<16x16x1xf32>
    %65 = vector.broadcast %64 : vector<16x16x1xf32> to vector<16x16x16xf32>
    %66 = arith.subf %62, %65 : vector<16x16x16xf32>
    %67 = math.exp %66 : vector<16x16x16xf32>
    %cst_34 = arith.constant dense<0.000000e+00> : vector<16x16xf32>
    %68 = vector.multi_reduction <add>, %67, %cst_34 [2] : vector<16x16x16xf32> to vector<16x16xf32>
    %69 = vector.shape_cast %68 : vector<16x16xf32> to vector<16x16x1xf32>
    %70 = arith.truncf %67 : vector<16x16x16xf32> to vector<16x16x16xbf16>
    "tpu.trace_start"() <{level = 10 : i32, message = "tqk,tkc->tqc"}> : () -> ()
    %cst_35 = arith.constant dense<0.000000e+00> : vector<16x16x32xf32>
    %71 = tpu.matmul %70, %55, %cst_35 {dimension_numbers = #tpu.dot_dimension_numbers<[2], [1], [1], [2], [0, 0, 0, 1, 1, 2], [0], [0]>} : vector<16x16x16xbf16>, vector<16x16x32xbf16>, vector<16x16x32xf32> -> vector<16x16x32xf32>
    "tpu.trace_stop"() : () -> ()
    %72 = tpu.reciprocal %69 {approx = true} : vector<16x16x1xf32> -> vector<16x16x1xf32>
    %73 = vector.broadcast %72 : vector<16x16x1xf32> to vector<16x16x32xf32>
    %74 = arith.mulf %71, %73 : vector<16x16x32xf32>
    %75 = vector.shape_cast %74 : vector<16x16x32xf32> to vector<256x32xf32>
    %76 = vector.extract_strided_slice %43 {offsets = [0, 0], sizes = [256, 32], strides = [1, 1]} : vector<256x128xf32> to vector<256x32xf32>
    %77 = arith.mulf %75, %76 : vector<256x32xf32>
    %78 = arith.truncf %77 : vector<256x32xf32> to vector<256x32xbf16>
    %c0_36 = arith.constant 0 : index
    %c0_37 = arith.constant 0 : index
    %79 = vector.load %arg11[%c0_36, %c0_37] : memref<128x128xbf16, #tpu.memory_space<vmem>>, vector<32x128xbf16>
    %cst_38 = arith.constant dense<0.000000e+00> : vector<256x128xf32>
    %80 = tpu.matmul %78, %79, %cst_38 {dimension_numbers = #tpu.dot_dimension_numbers<[1], [0], [0], [1], [0, 0, 1, 1], [], []>} : vector<256x32xbf16>, vector<32x128xbf16>, vector<256x128xf32> -> vector<256x128xf32>
    %81 = arith.addf %49, %80 : vector<256x128xf32>
    %82 = vector.extract_strided_slice %46 {offsets = [0, 32], sizes = [256, 32], strides = [1, 1]} : vector<256x128xbf16> to vector<256x32xbf16>
    %83 = vector.shape_cast %82 : vector<256x32xbf16> to vector<16x16x32xbf16>
    %84 = vector.extract_strided_slice %47 {offsets = [0, 32], sizes = [256, 32], strides = [1, 1]} : vector<256x128xbf16> to vector<256x32xbf16>
    %85 = vector.shape_cast %84 : vector<256x32xbf16> to vector<16x16x32xbf16>
    %86 = vector.extract_strided_slice %48 {offsets = [0, 32], sizes = [256, 32], strides = [1, 1]} : vector<256x128xbf16> to vector<256x32xbf16>
    %87 = vector.shape_cast %86 : vector<256x32xbf16> to vector<16x16x32xbf16>
    "tpu.trace_start"() <{level = 10 : i32, message = "tqc,tkc->tqk"}> : () -> ()
    %cst_39 = arith.constant dense<0.000000e+00> : vector<16x16x16xf32>
    %88 = tpu.matmul %83, %85, %cst_39 {dimension_numbers = #tpu.dot_dimension_numbers<[2], [2], [1], [1], [0, 0, 0, 1, 1, 1], [0], [0]>} : vector<16x16x32xbf16>, vector<16x16x32xbf16>, vector<16x16x16xf32> -> vector<16x16x16xf32>
    "tpu.trace_stop"() : () -> ()
    %c0_40 = arith.constant 0 : index
    %c1 = arith.constant 1 : index
    %c0_41 = arith.constant 0 : index
    %c0_42 = arith.constant 0 : index
    %89 = vector.load %arg3[%c0_40, %c1, %c0_41, %c0_42] : memref<1x4x16x16xbf16, #tpu.memory_space<vmem>>, vector<1x1x16x16xbf16>
    %90 = vector.shape_cast %89 : vector<1x1x16x16xbf16> to vector<16x16xbf16>
    %91 = arith.extf %90 : vector<16x16xbf16> to vector<16x16xf32>
    %92 = vector.shape_cast %91 : vector<16x16xf32> to vector<1x16x16xf32>
    %93 = vector.broadcast %92 : vector<1x16x16xf32> to vector<16x16x16xf32>
    %94 = arith.addf %88, %93 : vector<16x16x16xf32>
    %cst_43 = arith.constant dense<0xFF800000> : vector<16x16xf32>
    %95 = vector.multi_reduction <maximumf>, %94, %cst_43 [2] : vector<16x16x16xf32> to vector<16x16xf32>
    %96 = vector.shape_cast %95 : vector<16x16xf32> to vector<16x16x1xf32>
    %97 = vector.broadcast %96 : vector<16x16x1xf32> to vector<16x16x16xf32>
    %98 = arith.subf %94, %97 : vector<16x16x16xf32>
    %99 = math.exp %98 : vector<16x16x16xf32>
    %cst_44 = arith.constant dense<0.000000e+00> : vector<16x16xf32>
    %100 = vector.multi_reduction <add>, %99, %cst_44 [2] : vector<16x16x16xf32> to vector<16x16xf32>
    %101 = vector.shape_cast %100 : vector<16x16xf32> to vector<16x16x1xf32>
    %102 = arith.truncf %99 : vector<16x16x16xf32> to vector<16x16x16xbf16>
    "tpu.trace_start"() <{level = 10 : i32, message = "tqk,tkc->tqc"}> : () -> ()
    %cst_45 = arith.constant dense<0.000000e+00> : vector<16x16x32xf32>
    %103 = tpu.matmul %102, %87, %cst_45 {dimension_numbers = #tpu.dot_dimension_numbers<[2], [1], [1], [2], [0, 0, 0, 1, 1, 2], [0], [0]>} : vector<16x16x16xbf16>, vector<16x16x32xbf16>, vector<16x16x32xf32> -> vector<16x16x32xf32>
    "tpu.trace_stop"() : () -> ()
    %104 = tpu.reciprocal %101 {approx = true} : vector<16x16x1xf32> -> vector<16x16x1xf32>
    %105 = vector.broadcast %104 : vector<16x16x1xf32> to vector<16x16x32xf32>
    %106 = arith.mulf %103, %105 : vector<16x16x32xf32>
    %107 = vector.shape_cast %106 : vector<16x16x32xf32> to vector<256x32xf32>
    %108 = vector.extract_strided_slice %43 {offsets = [0, 32], sizes = [256, 32], strides = [1, 1]} : vector<256x128xf32> to vector<256x32xf32>
    %109 = arith.mulf %107, %108 : vector<256x32xf32>
    %110 = arith.truncf %109 : vector<256x32xf32> to vector<256x32xbf16>
    %c32 = arith.constant 32 : index
    %c0_46 = arith.constant 0 : index
    %111 = vector.load %arg11[%c32, %c0_46] : memref<128x128xbf16, #tpu.memory_space<vmem>>, vector<32x128xbf16>
    %cst_47 = arith.constant dense<0.000000e+00> : vector<256x128xf32>
    %112 = tpu.matmul %110, %111, %cst_47 {dimension_numbers = #tpu.dot_dimension_numbers<[1], [0], [0], [1], [0, 0, 1, 1], [], []>} : vector<256x32xbf16>, vector<32x128xbf16>, vector<256x128xf32> -> vector<256x128xf32>
    %113 = arith.addf %81, %112 : vector<256x128xf32>
    %114 = vector.extract_strided_slice %46 {offsets = [0, 64], sizes = [256, 32], strides = [1, 1]} : vector<256x128xbf16> to vector<256x32xbf16>
    %115 = vector.shape_cast %114 : vector<256x32xbf16> to vector<16x16x32xbf16>
    %116 = vector.extract_strided_slice %47 {offsets = [0, 64], sizes = [256, 32], strides = [1, 1]} : vector<256x128xbf16> to vector<256x32xbf16>
    %117 = vector.shape_cast %116 : vector<256x32xbf16> to vector<16x16x32xbf16>
    %118 = vector.extract_strided_slice %48 {offsets = [0, 64], sizes = [256, 32], strides = [1, 1]} : vector<256x128xbf16> to vector<256x32xbf16>
    %119 = vector.shape_cast %118 : vector<256x32xbf16> to vector<16x16x32xbf16>
    "tpu.trace_start"() <{level = 10 : i32, message = "tqc,tkc->tqk"}> : () -> ()
    %cst_48 = arith.constant dense<0.000000e+00> : vector<16x16x16xf32>
    %120 = tpu.matmul %115, %117, %cst_48 {dimension_numbers = #tpu.dot_dimension_numbers<[2], [2], [1], [1], [0, 0, 0, 1, 1, 1], [0], [0]>} : vector<16x16x32xbf16>, vector<16x16x32xbf16>, vector<16x16x16xf32> -> vector<16x16x16xf32>
    "tpu.trace_stop"() : () -> ()
    %c0_49 = arith.constant 0 : index
    %c2 = arith.constant 2 : index
    %c0_50 = arith.constant 0 : index
    %c0_51 = arith.constant 0 : index
    %121 = vector.load %arg3[%c0_49, %c2, %c0_50, %c0_51] : memref<1x4x16x16xbf16, #tpu.memory_space<vmem>>, vector<1x1x16x16xbf16>
    %122 = vector.shape_cast %121 : vector<1x1x16x16xbf16> to vector<16x16xbf16>
    %123 = arith.extf %122 : vector<16x16xbf16> to vector<16x16xf32>
    %124 = vector.shape_cast %123 : vector<16x16xf32> to vector<1x16x16xf32>
    %125 = vector.broadcast %124 : vector<1x16x16xf32> to vector<16x16x16xf32>
    %126 = arith.addf %120, %125 : vector<16x16x16xf32>
    %cst_52 = arith.constant dense<0xFF800000> : vector<16x16xf32>
    %127 = vector.multi_reduction <maximumf>, %126, %cst_52 [2] : vector<16x16x16xf32> to vector<16x16xf32>
    %128 = vector.shape_cast %127 : vector<16x16xf32> to vector<16x16x1xf32>
    %129 = vector.broadcast %128 : vector<16x16x1xf32> to vector<16x16x16xf32>
    %130 = arith.subf %126, %129 : vector<16x16x16xf32>
    %131 = math.exp %130 : vector<16x16x16xf32>
    %cst_53 = arith.constant dense<0.000000e+00> : vector<16x16xf32>
    %132 = vector.multi_reduction <add>, %131, %cst_53 [2] : vector<16x16x16xf32> to vector<16x16xf32>
    %133 = vector.shape_cast %132 : vector<16x16xf32> to vector<16x16x1xf32>
    %134 = arith.truncf %131 : vector<16x16x16xf32> to vector<16x16x16xbf16>
    "tpu.trace_start"() <{level = 10 : i32, message = "tqk,tkc->tqc"}> : () -> ()
    %cst_54 = arith.constant dense<0.000000e+00> : vector<16x16x32xf32>
    %135 = tpu.matmul %134, %119, %cst_54 {dimension_numbers = #tpu.dot_dimension_numbers<[2], [1], [1], [2], [0, 0, 0, 1, 1, 2], [0], [0]>} : vector<16x16x16xbf16>, vector<16x16x32xbf16>, vector<16x16x32xf32> -> vector<16x16x32xf32>
    "tpu.trace_stop"() : () -> ()
    %136 = tpu.reciprocal %133 {approx = true} : vector<16x16x1xf32> -> vector<16x16x1xf32>
    %137 = vector.broadcast %136 : vector<16x16x1xf32> to vector<16x16x32xf32>
    %138 = arith.mulf %135, %137 : vector<16x16x32xf32>
    %139 = vector.shape_cast %138 : vector<16x16x32xf32> to vector<256x32xf32>
    %140 = vector.extract_strided_slice %43 {offsets = [0, 64], sizes = [256, 32], strides = [1, 1]} : vector<256x128xf32> to vector<256x32xf32>
    %141 = arith.mulf %139, %140 : vector<256x32xf32>
    %142 = arith.truncf %141 : vector<256x32xf32> to vector<256x32xbf16>
    %c64 = arith.constant 64 : index
    %c0_55 = arith.constant 0 : index
    %143 = vector.load %arg11[%c64, %c0_55] : memref<128x128xbf16, #tpu.memory_space<vmem>>, vector<32x128xbf16>
    %cst_56 = arith.constant dense<0.000000e+00> : vector<256x128xf32>
    %144 = tpu.matmul %142, %143, %cst_56 {dimension_numbers = #tpu.dot_dimension_numbers<[1], [0], [0], [1], [0, 0, 1, 1], [], []>} : vector<256x32xbf16>, vector<32x128xbf16>, vector<256x128xf32> -> vector<256x128xf32>
    %145 = arith.addf %113, %144 : vector<256x128xf32>
    %146 = vector.extract_strided_slice %46 {offsets = [0, 96], sizes = [256, 32], strides = [1, 1]} : vector<256x128xbf16> to vector<256x32xbf16>
    %147 = vector.shape_cast %146 : vector<256x32xbf16> to vector<16x16x32xbf16>
    %148 = vector.extract_strided_slice %47 {offsets = [0, 96], sizes = [256, 32], strides = [1, 1]} : vector<256x128xbf16> to vector<256x32xbf16>
    %149 = vector.shape_cast %148 : vector<256x32xbf16> to vector<16x16x32xbf16>
    %150 = vector.extract_strided_slice %48 {offsets = [0, 96], sizes = [256, 32], strides = [1, 1]} : vector<256x128xbf16> to vector<256x32xbf16>
    %151 = vector.shape_cast %150 : vector<256x32xbf16> to vector<16x16x32xbf16>
    "tpu.trace_start"() <{level = 10 : i32, message = "tqc,tkc->tqk"}> : () -> ()
    %cst_57 = arith.constant dense<0.000000e+00> : vector<16x16x16xf32>
    %152 = tpu.matmul %147, %149, %cst_57 {dimension_numbers = #tpu.dot_dimension_numbers<[2], [2], [1], [1], [0, 0, 0, 1, 1, 1], [0], [0]>} : vector<16x16x32xbf16>, vector<16x16x32xbf16>, vector<16x16x16xf32> -> vector<16x16x16xf32>
    "tpu.trace_stop"() : () -> ()
    %c0_58 = arith.constant 0 : index
    %c3 = arith.constant 3 : index
    %c0_59 = arith.constant 0 : index
    %c0_60 = arith.constant 0 : index
    %153 = vector.load %arg3[%c0_58, %c3, %c0_59, %c0_60] : memref<1x4x16x16xbf16, #tpu.memory_space<vmem>>, vector<1x1x16x16xbf16>
    %154 = vector.shape_cast %153 : vector<1x1x16x16xbf16> to vector<16x16xbf16>
    %155 = arith.extf %154 : vector<16x16xbf16> to vector<16x16xf32>
    %156 = vector.shape_cast %155 : vector<16x16xf32> to vector<1x16x16xf32>
    %157 = vector.broadcast %156 : vector<1x16x16xf32> to vector<16x16x16xf32>
    %158 = arith.addf %152, %157 : vector<16x16x16xf32>
    %cst_61 = arith.constant dense<0xFF800000> : vector<16x16xf32>
    %159 = vector.multi_reduction <maximumf>, %158, %cst_61 [2] : vector<16x16x16xf32> to vector<16x16xf32>
    %160 = vector.shape_cast %159 : vector<16x16xf32> to vector<16x16x1xf32>
    %161 = vector.broadcast %160 : vector<16x16x1xf32> to vector<16x16x16xf32>
    %162 = arith.subf %158, %161 : vector<16x16x16xf32>
    %163 = math.exp %162 : vector<16x16x16xf32>
    %cst_62 = arith.constant dense<0.000000e+00> : vector<16x16xf32>
    %164 = vector.multi_reduction <add>, %163, %cst_62 [2] : vector<16x16x16xf32> to vector<16x16xf32>
    %165 = vector.shape_cast %164 : vector<16x16xf32> to vector<16x16x1xf32>
    %166 = arith.truncf %163 : vector<16x16x16xf32> to vector<16x16x16xbf16>
    "tpu.trace_start"() <{level = 10 : i32, message = "tqk,tkc->tqc"}> : () -> ()
    %cst_63 = arith.constant dense<0.000000e+00> : vector<16x16x32xf32>
    %167 = tpu.matmul %166, %151, %cst_63 {dimension_numbers = #tpu.dot_dimension_numbers<[2], [1], [1], [2], [0, 0, 0, 1, 1, 2], [0], [0]>} : vector<16x16x16xbf16>, vector<16x16x32xbf16>, vector<16x16x32xf32> -> vector<16x16x32xf32>
    "tpu.trace_stop"() : () -> ()
    %168 = tpu.reciprocal %165 {approx = true} : vector<16x16x1xf32> -> vector<16x16x1xf32>
    %169 = vector.broadcast %168 : vector<16x16x1xf32> to vector<16x16x32xf32>
    %170 = arith.mulf %167, %169 : vector<16x16x32xf32>
    %171 = vector.shape_cast %170 : vector<16x16x32xf32> to vector<256x32xf32>
    %172 = vector.extract_strided_slice %43 {offsets = [0, 96], sizes = [256, 32], strides = [1, 1]} : vector<256x128xf32> to vector<256x32xf32>
    %173 = arith.mulf %171, %172 : vector<256x32xf32>
    %174 = arith.truncf %173 : vector<256x32xf32> to vector<256x32xbf16>
    %c96 = arith.constant 96 : index
    %c0_64 = arith.constant 0 : index
    %175 = vector.load %arg11[%c96, %c0_64] : memref<128x128xbf16, #tpu.memory_space<vmem>>, vector<32x128xbf16>
    %cst_65 = arith.constant dense<0.000000e+00> : vector<256x128xf32>
    %176 = tpu.matmul %174, %175, %cst_65 {dimension_numbers = #tpu.dot_dimension_numbers<[1], [0], [0], [1], [0, 0, 1, 1], [], []>} : vector<256x32xbf16>, vector<32x128xbf16>, vector<256x128xf32> -> vector<256x128xf32>
    %177 = arith.addf %145, %176 : vector<256x128xf32>
    %c0_66 = arith.constant 0 : index
    %c0_67 = arith.constant 0 : index
    %178 = vector.load %arg12[%c0_66, %c0_67] : memref<1x128xf32, #tpu.memory_space<vmem>>, vector<1x128xf32>
    %179 = vector.broadcast %178 : vector<1x128xf32> to vector<256x128xf32>
    %180 = arith.addf %177, %179 : vector<256x128xf32>
    %181 = vector.shape_cast %180 : vector<256x128xf32> to vector<1x16x16x128xf32>
    %c0_68 = arith.constant 0 : index
    %c0_69 = arith.constant 0 : index
    %c0_70 = arith.constant 0 : index
    %c0_71 = arith.constant 0 : index
    %182 = vector.load %arg13[%c0_68, %c0_69, %c0_70, %c0_71] : memref<1x16x16x128xf32, #tpu.memory_space<vmem>>, vector<1x16x16x128xf32>
    tpu.vector_store %arg13[%c0_68, %c0_69, %c0_70, %c0_71], %181 {strides = array<i32>} : memref<1x16x16x128xf32, #tpu.memory_space<vmem>>, vector<1x16x16x128xf32>,
    return
  }
  func.func @transform_0(%arg0: i32, %arg1: i32) -> (i32, i32, i32, i32) {
    %c0_i32 = arith.constant 0 : i32
    %c0_i32_0 = arith.constant 0 : i32
    %c0_i32_1 = arith.constant 0 : i32
    return %arg0, %arg1, %c0_i32, %c0_i32_0 : i32, i32, i32, i32
  }
  func.func @transform_1(%arg0: i32, %arg1: i32) -> (i32, i32, i32, i32) {
    %c0_i32 = arith.constant 0 : i32
    %c0_i32_0 = arith.constant 0 : i32
    %c0_i32_1 = arith.constant 0 : i32
    %c0_i32_2 = arith.constant 0 : i32
    return %arg0, %c0_i32, %c0_i32_0, %c0_i32_1 : i32, i32, i32, i32
  }
  func.func @transform_2(%arg0: i32, %arg1: i32) -> (i32, i32) {
    %c0_i32 = arith.constant 0 : i32
    %c0_i32_0 = arith.constant 0 : i32
    %c0_i32_1 = arith.constant 0 : i32
    return %c0_i32, %c0_i32_0 : i32, i32
  }
  func.func @transform_3(%arg0: i32, %arg1: i32) -> (i32, i32) {
    %c0_i32 = arith.constant 0 : i32
    %c0_i32_0 = arith.constant 0 : i32
    %c0_i32_1 = arith.constant 0 : i32
    return %c0_i32, %c0_i32_0 : i32, i32
  }
  func.func @transform_4(%arg0: i32, %arg1: i32) -> (i32, i32) {
    %c0_i32 = arith.constant 0 : i32
    %c0_i32_0 = arith.constant 0 : i32
    %c0_i32_1 = arith.constant 0 : i32
    return %c0_i32, %c0_i32_0 : i32, i32
  }
  func.func @transform_5(%arg0: i32, %arg1: i32) -> (i32, i32) {
    %c0_i32 = arith.constant 0 : i32
    %c0_i32_0 = arith.constant 0 : i32
    %c0_i32_1 = arith.constant 0 : i32
    return %c0_i32, %c0_i32_0 : i32, i32
  }
  func.func @transform_6(%arg0: i32, %arg1: i32) -> (i32, i32) {
    %c0_i32 = arith.constant 0 : i32
    %c0_i32_0 = arith.constant 0 : i32
    %c0_i32_1 = arith.constant 0 : i32
    return %c0_i32, %c0_i32_0 : i32, i32
  }
  func.func @transform_7(%arg0: i32, %arg1: i32) -> (i32, i32) {
    %c0_i32 = arith.constant 0 : i32
    %c0_i32_0 = arith.constant 0 : i32
    %c0_i32_1 = arith.constant 0 : i32
    return %c0_i32, %c0_i32_0 : i32, i32
  }
  func.func @transform_8(%arg0: i32, %arg1: i32) -> (i32, i32) {
    %c0_i32 = arith.constant 0 : i32
    %c0_i32_0 = arith.constant 0 : i32
    %c0_i32_1 = arith.constant 0 : i32
    return %c0_i32, %c0_i32_0 : i32, i32
  }
  func.func @transform_9(%arg0: i32, %arg1: i32) -> (i32, i32) {
    %c0_i32 = arith.constant 0 : i32
    %c0_i32_0 = arith.constant 0 : i32
    %c0_i32_1 = arith.constant 0 : i32
    return %c0_i32, %c0_i32_0 : i32, i32
  }
  func.func @transform_10(%arg0: i32, %arg1: i32) -> (i32, i32) {
    %c0_i32 = arith.constant 0 : i32
    %c0_i32_0 = arith.constant 0 : i32
    %c0_i32_1 = arith.constant 0 : i32
    return %c0_i32, %c0_i32_0 : i32, i32
  }
  func.func @transform_11(%arg0: i32, %arg1: i32) -> (i32, i32, i32, i32) {
    %c0_i32 = arith.constant 0 : i32
    %c0_i32_0 = arith.constant 0 : i32
    %c0_i32_1 = arith.constant 0 : i32
    return %arg0, %arg1, %c0_i32, %c0_i32_0 : i32, i32, i32, i32
  }
}

</mosaic_0001>

<llo_original>
// kernel: triangle_attention.1
$region0: #{triangle_attention.1}
  #allocation0 [shape = 'u32[]', space=smem, size = 0x4, offset = 0x4, fixed_abs, tag = 'smem constant byte address 0x4 - core index']
  #allocation1 [shape = 'u32[144,128]{1,0:T(1,128)}', space=vmem, size = 0x12000, scoped, tag = 'internal scratch']
  %s0 = inlined_call_operand.vmem [shape: f32[2,16,16,128], index: 0, kind: input, shape index: {}]
  %s1 = inlined_call_operand.vmem [shape: bf16[2,4,16,16], index: 1, kind: input, shape index: {}]
  %s2 = inlined_call_operand.vmem [shape: f32[1,128], index: 2, kind: input, shape index: {}]
  %s3 = inlined_call_operand.vmem [shape: f32[1,128], index: 3, kind: input, shape index: {}]
  %s4 = inlined_call_operand.vmem [shape: bf16[128,128], index: 4, kind: input, shape index: {}]
  %s5 = inlined_call_operand.vmem [shape: bf16[128,128], index: 5, kind: input, shape index: {}]
  %s6 = inlined_call_operand.vmem [shape: bf16[128,128], index: 6, kind: input, shape index: {}]
  %s7 = inlined_call_operand.vmem [shape: bf16[128,128], index: 7, kind: input, shape index: {}]
  %s8 = inlined_call_operand.vmem [shape: f32[1,128], index: 8, kind: input, shape index: {}]
  %s9 = inlined_call_operand.vmem [shape: bf16[128,128], index: 9, kind: input, shape index: {}]
  %s10 = inlined_call_operand.vmem [shape: f32[1,128], index: 10, kind: input, shape index: {}]
  %s11 = inlined_call_operand.hbm [shape: f32[2,16,16,128], index: 11, kind: output, shape index: {}]
  %s12 = sld [smem:[#allocation0]]
  $region77: #{triangle_attention.1} parent=0
    _
  %s14 = ssub.s32 1, %s12
  %s15 = scalar_select 0, %s14, %s12
  $region1: #{triangle_attention.1} parent=0
    #allocation2 [shape = 'u8[262144]{0}', space=vmem, size = 0x40000, scoped, tag = 'output window, operand 0']
    #allocation3 [shape = 's32[2]{0}', space=sflag, size = 0x8, scoped, tag = 'scoped memory for triangle_attention.1']
    %16 = vsyncpa [#allocation3], 0
    %s17 = scalar_lea.sflag [#allocation3], 1
    %18 = vsyncpa %s17, 0
    loop: start=0, step=1, limit=4
    $region2: #{triangle_attention.1} parent=1 // loop_pre_header
      _
    $region3: #{triangle_attention.1} parent=1 // loop_header
      %s20 = sphi 0, %s24
      %p21 = scmp.ge.s32.totalorder %s20, 4
      %s27 = sphi 0, %s39
      %s28 = sphi 0, %s35
      %s29 = sphi 0, %s27
      %s30 = sphi 0, %s28
      %s31 = sphi 0, %s29
      %s32 = sphi 0, %s30
      %s44 = sphi 0, %s46
      %s47 = sphi 0, %s44
      %s48 = sphi 0, %s47
      %s64 = sphi 0, %s48
      %s70 = sphi 0, %s72
      %s73 = sphi 0, %s70
      %s74 = sphi 0, %s73
      %s90 = sphi 0, %s74
      %s94 = sphi 0, %s94
      %s96 = sphi 0, %s94
      %s97 = sphi 0, %s96
      %s111 = sphi 0, %s97
      %s115 = sphi 0, %s115
      %s117 = sphi 0, %s115
      %s118 = sphi 0, %s117
      %s132 = sphi 0, %s118
      %s136 = sphi 0, %s136
      %s138 = sphi 0, %s136
      %s139 = sphi 0, %s138
      %s153 = sphi 0, %s139
      %s157 = sphi 0, %s157
      %s159 = sphi 0, %s157
      %s160 = sphi 0, %s159
      %s174 = sphi 0, %s160
      %s178 = sphi 0, %s178
      %s180 = sphi 0, %s178
      %s181 = sphi 0, %s180
      %s195 = sphi 0, %s181
      %s199 = sphi 0, %s199
      %s201 = sphi 0, %s199
      %s202 = sphi 0, %s201
      %s216 = sphi 0, %s202
      %s220 = sphi 0, %s220
      %s222 = sphi 0, %s220
      %s223 = sphi 0, %s222
      %s237 = sphi 0, %s223
      %s241 = sphi 0, %s241
      %s243 = sphi 0, %s241
      %s244 = sphi 0, %s243
      %s258 = sphi 0, %s244
      %s262 = sphi 0, %s262
      %s264 = sphi 0, %s262
      %s265 = sphi 0, %s264
      %s279 = sphi 0, %s265
      %s287 = sphi 0, %s289
      %s290 = sphi 0, %s287
      %s291 = sphi 0, %s290
      %s307 = sphi 0, %s291
    $region4: #{triangle_attention.1} parent=1 // loop_header_branch
      %23 = sbr.rel (%p21) target = $region8
    $region5: #{triangle_attention.1} parent=1 // loop_body
      %s25 = ssub.s32 %s20, 1
      %s26 = ssub.s32 %s20, 2
      %s33 = sadd.s32 1, %s28
      %p34 = scmp.ge.s32.totalorder %s33, 1
      %s35 = scalar_select %p34, 0, %s33
      %s36 = sadd.s32 1, %s27
      %s37 = scalar_select %p34, %s36, %s27
      %p38 = scmp.ge.s32.totalorder %s37, 2
      %s39 = scalar_select %p38, 0, %s37
      %s40 = ssub.s32 %s27, %s39
      %s41 = ssub.s32 %s28, %s35
      %s42 = sor.u32 %s40, %s41
      %p43 = scmp.eq.s32.totalorder %s42, 0
      %s45 = sadd.s32 %s44, 1
      %s46 = scalar_select %p43, %s44, %s45
      %p49 = pneg %p43
      %p50 = scmp.eq.s32.totalorder %s20, 1
      %p51 = por %p49, %p50
      %p52 = scmp.ne.s32.totalorder %s44, %s47
      %p53 = scmp.eq.s32.totalorder %s20, 0
      %p54 = por %p52, %p53
      %p55 = scmp.ne.s32.totalorder %s44, %s47
      %p56 = scmp.eq.s32.totalorder %s25, 1
      %p57 = por %p55, %p56
      %p58 = scmp.ne.s32.totalorder %s47, %s48
      %p59 = scmp.eq.s32.totalorder %s25, 0
      %p60 = por %p58, %p59
      %p61 = scmp.ne.s32.totalorder %s47, %s48
      %p62 = scmp.eq.s32.totalorder %s26, 1
      %p63 = por %p61, %p62
      %p65 = scmp.ne.s32.totalorder %s48, %s64
      %p66 = scmp.eq.s32.totalorder %s26, 0
      %p67 = por %p65, %p66
      %s68 = ssub.s32 %s27, %s39
      %p69 = scmp.eq.s32.totalorder %s68, 0
      %s71 = sadd.s32 %s70, 1
      %s72 = scalar_select %p69, %s70, %s71
      %p75 = pneg %p69
      %p76 = scmp.eq.s32.totalorder %s20, 1
      %p77 = por %p75, %p76
      %p78 = scmp.ne.s32.totalorder %s70, %s73
      %p79 = scmp.eq.s32.totalorder %s20, 0
      %p80 = por %p78, %p79
      %p81 = scmp.ne.s32.totalorder %s70, %s73
      %p82 = scmp.eq.s32.totalorder %s25, 1
      %p83 = por %p81, %p82
      %p84 = scmp.ne.s32.totalorder %s73, %s74
      %p85 = scmp.eq.s32.totalorder %s25, 0
      %p86 = por %p84, %p85
      %p87 = scmp.ne.s32.totalorder %s73, %s74
      %p88 = scmp.eq.s32.totalorder %s26, 1
      %p89 = por %p87, %p88
      %p91 = scmp.ne.s32.totalorder %s74, %s90
      %p92 = scmp.eq.s32.totalorder %s26, 0
      %p93 = por %p91, %p92
      %s95 = sadd.s32 %s94, 1
      %p98 = scmp.eq.s32.totalorder %s20, 1
      %p99 = scmp.ne.s32.totalorder %s94, %s96
      %p100 = scmp.eq.s32.totalorder %s20, 0
      %p101 = por %p99, %p100
      %p102 = scmp.ne.s32.totalorder %s94, %s96
      %p103 = scmp.eq.s32.totalorder %s25, 1
      %p104 = por %p102, %p103
      %p105 = scmp.ne.s32.totalorder %s96, %s97
      %p106 = scmp.eq.s32.totalorder %s25, 0
      %p107 = por %p105, %p106
      %p108 = scmp.ne.s32.totalorder %s96, %s97
      %p109 = scmp.eq.s32.totalorder %s26, 1
      %p110 = por %p108, %p109
      %p112 = scmp.ne.s32.totalorder %s97, %s111
      %p113 = scmp.eq.s32.totalorder %s26, 0
      %p114 = por %p112, %p113
      %s116 = sadd.s32 %s115, 1
      %p119 = scmp.eq.s32.totalorder %s20, 1
      %p120 = scmp.ne.s32.totalorder %s115, %s117
      %p121 = scmp.eq.s32.totalorder %s20, 0
      %p122 = por %p120, %p121
      %p123 = scmp.ne.s32.totalorder %s115, %s117
      %p124 = scmp.eq.s32.totalorder %s25, 1
      %p125 = por %p123, %p124
      %p126 = scmp.ne.s32.totalorder %s117, %s118
      %p127 = scmp.eq.s32.totalorder %s25, 0
      %p128 = por %p126, %p127
      %p129 = scmp.ne.s32.totalorder %s117, %s118
      %p130 = scmp.eq.s32.totalorder %s26, 1
      %p131 = por %p129, %p130
      %p133 = scmp.ne.s32.totalorder %s118, %s132
      %p134 = scmp.eq.s32.totalorder %s26, 0
      %p135 = por %p133, %p134
      %s137 = sadd.s32 %s136, 1
      %p140 = scmp.eq.s32.totalorder %s20, 1
      %p141 = scmp.ne.s32.totalorder %s136, %s138
      %p142 = scmp.eq.s32.totalorder %s20, 0
      %p143 = por %p141, %p142
      %p144 = scmp.ne.s32.totalorder %s136, %s138
      %p145 = scmp.eq.s32.totalorder %s25, 1
      %p146 = por %p144, %p145
      %p147 = scmp.ne.s32.totalorder %s138, %s139
      %p148 = scmp.eq.s32.totalorder %s25, 0
      %p149 = por %p147, %p148
      %p150 = scmp.ne.s32.totalorder %s138, %s139
      %p151 = scmp.eq.s32.totalorder %s26, 1
      %p152 = por %p150, %p151
      %p154 = scmp.ne.s32.totalorder %s139, %s153
      %p155 = scmp.eq.s32.totalorder %s26, 0
      %p156 = por %p154, %p155
      %s158 = sadd.s32 %s157, 1
      %p161 = scmp.eq.s32.totalorder %s20, 1
      %p162 = scmp.ne.s32.totalorder %s157, %s159
      %p163 = scmp.eq.s32.totalorder %s20, 0
      %p164 = por %p162, %p163
      %p165 = scmp.ne.s32.totalorder %s157, %s159
      %p166 = scmp.eq.s32.totalorder %s25, 1
      %p167 = por %p165, %p166
      %p168 = scmp.ne.s32.totalorder %s159, %s160
      %p169 = scmp.eq.s32.totalorder %s25, 0
      %p170 = por %p168, %p169
      %p171 = scmp.ne.s32.totalorder %s159, %s160
      %p172 = scmp.eq.s32.totalorder %s26, 1
      %p173 = por %p171, %p172
      %p175 = scmp.ne.s32.totalorder %s160, %s174
      %p176 = scmp.eq.s32.totalorder %s26, 0
      %p177 = por %p175, %p176
      %s179 = sadd.s32 %s178, 1
      %p182 = scmp.eq.s32.totalorder %s20, 1
      %p183 = scmp.ne.s32.totalorder %s178, %s180
      %p184 = scmp.eq.s32.totalorder %s20, 0
      %p185 = por %p183, %p184
      %p186 = scmp.ne.s32.totalorder %s178, %s180
      %p187 = scmp.eq.s32.totalorder %s25, 1
      %p188 = por %p186, %p187
      %p189 = scmp.ne.s32.totalorder %s180, %s181
      %p190 = scmp.eq.s32.totalorder %s25, 0
      %p191 = por %p189, %p190
      %p192 = scmp.ne.s32.totalorder %s180, %s181
      %p193 = scmp.eq.s32.totalorder %s26, 1
      %p194 = por %p192, %p193
      %p196 = scmp.ne.s32.totalorder %s181, %s195
      %p197 = scmp.eq.s32.totalorder %s26, 0
      %p198 = por %p196, %p197
      %s200 = sadd.s32 %s199, 1
      %p203 = scmp.eq.s32.totalorder %s20, 1
      %p204 = scmp.ne.s32.totalorder %s199, %s201
      %p205 = scmp.eq.s32.totalorder %s20, 0
      %p206 = por %p204, %p205
      %p207 = scmp.ne.s32.totalorder %s199, %s201
      %p208 = scmp.eq.s32.totalorder %s25, 1
      %p209 = por %p207, %p208
      %p210 = scmp.ne.s32.totalorder %s201, %s202
      %p211 = scmp.eq.s32.totalorder %s25, 0
      %p212 = por %p210, %p211
      %p213 = scmp.ne.s32.totalorder %s201, %s202
      %p214 = scmp.eq.s32.totalorder %s26, 1
      %p215 = por %p213, %p214
      %p217 = scmp.ne.s32.totalorder %s202, %s216
      %p218 = scmp.eq.s32.totalorder %s26, 0
      %p219 = por %p217, %p218
      %s221 = sadd.s32 %s220, 1
      %p224 = scmp.eq.s32.totalorder %s20, 1
      %p225 = scmp.ne.s32.totalorder %s220, %s222
      %p226 = scmp.eq.s32.totalorder %s20, 0
      %p227 = por %p225, %p226
      %p228 = scmp.ne.s32.totalorder %s220, %s222
      %p229 = scmp.eq.s32.totalorder %s25, 1
      %p230 = por %p228, %p229
      %p231 = scmp.ne.s32.totalorder %s222, %s223
      %p232 = scmp.eq.s32.totalorder %s25, 0
      %p233 = por %p231, %p232
      %p234 = scmp.ne.s32.totalorder %s222, %s223
      %p235 = scmp.eq.s32.totalorder %s26, 1
      %p236 = por %p234, %p235
      %p238 = scmp.ne.s32.totalorder %s223, %s237
      %p239 = scmp.eq.s32.totalorder %s26, 0
      %p240 = por %p238, %p239
      %s242 = sadd.s32 %s241, 1
      %p245 = scmp.eq.s32.totalorder %s20, 1
      %p246 = scmp.ne.s32.totalorder %s241, %s243
      %p247 = scmp.eq.s32.totalorder %s20, 0
      %p248 = por %p246, %p247
      %p249 = scmp.ne.s32.totalorder %s241, %s243
      %p250 = scmp.eq.s32.totalorder %s25, 1
      %p251 = por %p249, %p250
      %p252 = scmp.ne.s32.totalorder %s243, %s244
      %p253 = scmp.eq.s32.totalorder %s25, 0
      %p254 = por %p252, %p253
      %p255 = scmp.ne.s32.totalorder %s243, %s244
      %p256 = scmp.eq.s32.totalorder %s26, 1
      %p257 = por %p255, %p256
      %p259 = scmp.ne.s32.totalorder %s244, %s258
      %p260 = scmp.eq.s32.totalorder %s26, 0
      %p261 = por %p259, %p260
      %s263 = sadd.s32 %s262, 1
      %p266 = scmp.eq.s32.totalorder %s20, 1
      %p267 = scmp.ne.s32.totalorder %s262, %s264
      %p268 = scmp.eq.s32.totalorder %s20, 0
      %p269 = por %p267, %p268
      %p270 = scmp.ne.s32.totalorder %s262, %s264
      %p271 = scmp.eq.s32.totalorder %s25, 1
      %p272 = por %p270, %p271
      %p273 = scmp.ne.s32.totalorder %s264, %s265
      %p274 = scmp.eq.s32.totalorder %s25, 0
      %p275 = por %p273, %p274
      %p276 = scmp.ne.s32.totalorder %s264, %s265
      %p277 = scmp.eq.s32.totalorder %s26, 1
      %p278 = por %p276, %p277
      %p280 = scmp.ne.s32.totalorder %s265, %s279
      %p281 = scmp.eq.s32.totalorder %s26, 0
      %p282 = por %p280, %p281
      %s283 = ssub.s32 %s27, %s39
      %s284 = ssub.s32 %s28, %s35
      %s285 = sor.u32 %s283, %s284
      %p286 = scmp.eq.s32.totalorder %s285, 0
      %s288 = sadd.s32 %s287, 1
      %s289 = scalar_select %p286, %s287, %s288
      %p292 = pneg %p286
      %p293 = scmp.eq.s32.totalorder %s20, 1
      %p294 = por %p292, %p293
      %p295 = scmp.ne.s32.totalorder %s287, %s290
      %p296 = scmp.eq.s32.totalorder %s20, 0
      %p297 = por %p295, %p296
      %p298 = scmp.ne.s32.totalorder %s287, %s290
      %p299 = scmp.eq.s32.totalorder %s25, 1
      %p300 = por %p298, %p299
      %p301 = scmp.ne.s32.totalorder %s290, %s291
      %p302 = scmp.eq.s32.totalorder %s25, 0
      %p303 = por %p301, %p302
      %p304 = scmp.ne.s32.totalorder %s290, %s291
      %p305 = scmp.eq.s32.totalorder %s26, 1
      %p306 = por %p304, %p305
      %p308 = scmp.ne.s32.totalorder %s291, %s307
      %p309 = scmp.eq.s32.totalorder %s26, 0
      %p310 = por %p308, %p309
      %p311 = scmp.le.s32.totalorder 1, %s20
      %p312 = scmp.lt.s32.totalorder %s20, 3
      %p313 = pnand %p311, %p312
      %p314 = pneg %p313
      // Predicated region
      $region9: #{triangle_attention.1} parent=5 // pred_check
        _
      $region10: #{triangle_attention.1} parent=5 // pred_check_branch
        %316 = sbr.rel (%p313) target = $region12
      $region11: #{triangle_attention.1} parent=5 // pred_region
        %s317 = ssub.s32 %s20, 1
        // Predicated region
        $region13: #{triangle_attention.1} parent=11 // pred_check
          %p318 = pneg %p107
        $region14: #{triangle_attention.1} parent=11 // pred_check_branch
          %320 = sbr.rel (%p318) target = $region16
        $region15: #{triangle_attention.1} parent=11 // pred_region
          _
        $region16: #{triangle_attention.1} parent=11 // pred_fallthru
          _
        // Predicated region
        $region17: #{triangle_attention.1} parent=11 // pred_check
          %p321 = pneg %p128
        $region18: #{triangle_attention.1} parent=11 // pred_check_branch
          %323 = sbr.rel (%p321) target = $region20
        $region19: #{triangle_attention.1} parent=11 // pred_region
          _
        $region20: #{triangle_attention.1} parent=11 // pred_fallthru
          _
        // Predicated region
        $region21: #{triangle_attention.1} parent=11 // pred_check
          %p324 = pneg %p149
        $region22: #{triangle_attention.1} parent=11 // pred_check_branch
          %326 = sbr.rel (%p324) target = $region24
        $region23: #{triangle_attention.1} parent=11 // pred_region
          _
        $region24: #{triangle_attention.1} parent=11 // pred_fallthru
          _
        // Predicated region
        $region25: #{triangle_attention.1} parent=11 // pred_check
          %p327 = pneg %p170
        $region26: #{triangle_attention.1} parent=11 // pred_check_branch
          %329 = sbr.rel (%p327) target = $region28
        $region27: #{triangle_attention.1} parent=11 // pred_region
          _
        $region28: #{triangle_attention.1} parent=11 // pred_fallthru
          _
        // Predicated region
        $region29: #{triangle_attention.1} parent=11 // pred_check
          %p330 = pneg %p191
        $region30: #{triangle_attention.1} parent=11 // pred_check_branch
          %332 = sbr.rel (%p330) target = $region32
        $region31: #{triangle_attention.1} parent=11 // pred_region
          _
        $region32: #{triangle_attention.1} parent=11 // pred_fallthru
          _
        // Predicated region
        $region33: #{triangle_attention.1} parent=11 // pred_check
          %p333 = pneg %p212
        $region34: #{triangle_attention.1} parent=11 // pred_check_branch
          %335 = sbr.rel (%p333) target = $region36
        $region35: #{triangle_attention.1} parent=11 // pred_region
          _
        $region36: #{triangle_attention.1} parent=11 // pred_fallthru
          _
        // Predicated region
        $region37: #{triangle_attention.1} parent=11 // pred_check
          %p336 = pneg %p233
        $region38: #{triangle_attention.1} parent=11 // pred_check_branch
          %338 = sbr.rel (%p336) target = $region40
        $region39: #{triangle_attention.1} parent=11 // pred_region
          _
        $region40: #{triangle_attention.1} parent=11 // pred_fallthru
          _
        // Predicated region
        $region41: #{triangle_attention.1} parent=11 // pred_check
          %p339 = pneg %p254
        $region42: #{triangle_attention.1} parent=11 // pred_check_branch
          %341 = sbr.rel (%p339) target = $region44
        $region43: #{triangle_attention.1} parent=11 // pred_region
          _
        $region44: #{triangle_attention.1} parent=11 // pred_fallthru
          _
        // Predicated region
        $region45: #{triangle_attention.1} parent=11 // pred_check
          %p342 = pneg %p275
        $region46: #{triangle_attention.1} parent=11 // pred_check_branch
          %344 = sbr.rel (%p342) target = $region48
        $region47: #{triangle_attention.1} parent=11 // pred_region
          _
        $region48: #{triangle_attention.1} parent=11 // pred_fallthru
          _
      $region12: #{triangle_attention.1} parent=5 // pred_fallthru
        _
      %p345 = scmp.lt.s32.totalorder %s20, 2
      // Predicated region
      $region49: #{triangle_attention.1} parent=5 // pred_check
        %p346 = pneg %p345
      $region50: #{triangle_attention.1} parent=5 // pred_check_branch
        %348 = sbr.rel (%p346) target = $region52
      $region51: #{triangle_attention.1} parent=5 // pred_region
        // Predicated region
        $region53: #{triangle_attention.1} parent=51 // pred_check
          %p349 = pneg %p54
        $region54: #{triangle_attention.1} parent=51 // pred_check_branch
          %351 = sbr.rel (%p349) target = $region56
        $region55: #{triangle_attention.1} parent=51 // pred_region
          %s352 = smul.u32 16, %s28
          %p353 = scmp.lt.s32.totalorder %s27, 1
          %s354 = scalar_select %p353, %s27, 1
          %p355 = scmp.lt.s32.totalorder %s352, 15
          %s356 = scalar_select %p355, %s352, 15
          %s357 = smul.addr %s356, 2
          %s358 = smul.addr %s354, 32
          %s359 = sadd.s32 %s357, %s358
          %s360 = smul.addr %s359, 8
          %s361 = scalar_lea.vmem %s0, %s360
          %s362 = smul.u32 16, %s28
        $region56: #{triangle_attention.1} parent=51 // pred_fallthru
          _
        // Predicated region
        $region57: #{triangle_attention.1} parent=51 // pred_check
          %p363 = pneg %p80
        $region58: #{triangle_attention.1} parent=51 // pred_check_branch
          %365 = sbr.rel (%p363) target = $region60
        $region59: #{triangle_attention.1} parent=51 // pred_region
          %p366 = scmp.lt.s32.totalorder %s27, 1
          %s367 = scalar_select %p366, %s27, 1
          %s368 = smul.addr %s367, 8
          %s369 = smul.addr %s368, 4
          %s370 = scalar_lea.vmem %s1, %s369
        $region60: #{triangle_attention.1} parent=51 // pred_fallthru
          _
      $region52: #{triangle_attention.1} parent=5 // pred_fallthru
        _
      %p371 = scmp.le.s32.totalorder 1, %s20
      %p372 = scmp.lt.s32.totalorder %s20, 3
      %p373 = pnand %p371, %p372
      %p374 = pneg %p373
      // Predicated region
      $region61: #{triangle_attention.1} parent=5 // pred_check
        _
      $region62: #{triangle_attention.1} parent=5 // pred_check_branch
        %376 = sbr.rel (%p373) target = $region64
      $region63: #{triangle_attention.1} parent=5 // pred_region
        %s377 = ssub.s32 %s20, 1
        %s378 = smul.u32 16, %s30
        %p379 = scmp.lt.s32.totalorder %s29, 1
        %s380 = scalar_select %p379, %s29, 1
        %p381 = scmp.lt.s32.totalorder %s378, 15
        %s382 = scalar_select %p381, %s378, 15
        %s383 = smul.addr %s382, 2
        %s384 = smul.addr %s380, 32
        %s385 = sadd.s32 %s383, %s384
        %s386 = smul.addr %s385, 8
        %s387 = scalar_lea.vmem %s0, %s386
        %p388 = pneg %p60
        %p389 = pneg %p57
        %p390 = scmp.lt.s32.totalorder %s29, 1
        %s391 = scalar_select %p390, %s29, 1
        %s392 = smul.addr %s391, 8
        %s393 = smul.addr %s392, 4
        %s394 = scalar_lea.vmem %s1, %s393
        %p395 = pneg %p86
        %p396 = pneg %p83
        %p397 = pneg %p107
        %p398 = pneg %p104
        %p399 = pneg %p128
        %p400 = pneg %p125
        %p401 = pneg %p149
        %p402 = pneg %p146
        %p403 = pneg %p170
        %p404 = pneg %p167
        %p405 = pneg %p191
        %p406 = pneg %p188
        %p407 = pneg %p212
        %p408 = pneg %p209
        %p409 = pneg %p233
        %p410 = pneg %p230
        %p411 = pneg %p254
        %p412 = pneg %p251
        %p413 = pneg %p275
        %p414 = pneg %p272
        %p415 = pneg %p303
        %p416 = pneg %p300
        %s417 = sand.u32 %s290, 1
        %s418 = scalar_lea.sflag [#allocation3], %s417
        %s419 = sand.u32 %s290, 1
        %s420 = smul.addr %s419, 256
        %s421 = scalar_lea.vmem [#allocation2], %s420
        %s422 = smul.u32 16, %s30
        %p423 = scmp.lt.s32.totalorder %s29, 1
        %s424 = scalar_select %p423, %s29, 1
        %p425 = scmp.lt.s32.totalorder %s422, 15
        %s426 = scalar_select %p425, %s422, 15
        %s427 = smul.addr %s426, 2
        %s428 = smul.addr %s424, 32
        %s429 = sadd.s32 %s427, %s428
        %s430 = smul.addr %s429, 8
        %s431 = scalar_lea.vmem %s0, %s430
        %s432 = smul.u32 16, %s30
        %p433 = scmp.lt.s32.totalorder %s29, 1
        %s434 = scalar_select %p433, %s29, 1
        %s435 = smul.addr %s434, 8
        %s436 = smul.addr %s435, 4
        %s437 = scalar_lea.vmem %s1, %s436
        %s438 = smul.u32 16, %s30
        %v440 = vld [vmem:[%s431] sm:$0xff]
        %v441 = vld [vmem:[%s431 + $0x8] sm:$0xff]
        %v442 = vld [vmem:[%s431 + $0x10] sm:$0xff]
        %v443 = vld [vmem:[%s431 + $0x18] sm:$0xff]
        %v444 = vld [vmem:[%s431 + $0x20] sm:$0xff]
        %v445 = vld [vmem:[%s431 + $0x28] sm:$0xff]
        %v446 = vld [vmem:[%s431 + $0x30] sm:$0xff]
        %v447 = vld [vmem:[%s431 + $0x38] sm:$0xff]
        %v448 = vld [vmem:[%s431 + $0x40] sm:$0xff]
        %v449 = vld [vmem:[%s431 + $0x48] sm:$0xff]
        %v450 = vld [vmem:[%s431 + $0x50] sm:$0xff]
        %v451 = vld [vmem:[%s431 + $0x58] sm:$0xff]
        %v452 = vld [vmem:[%s431 + $0x60] sm:$0xff]
        %v453 = vld [vmem:[%s431 + $0x68] sm:$0xff]
        %v454 = vld [vmem:[%s431 + $0x70] sm:$0xff]
        %v455 = vld [vmem:[%s431 + $0x78] sm:$0xff]
        %v456 = vld [vmem:[%s431 + $0x80] sm:$0xff]
        %v457 = vld [vmem:[%s431 + $0x88] sm:$0xff]
        %v458 = vld [vmem:[%s431 + $0x90] sm:$0xff]
        %v459 = vld [vmem:[%s431 + $0x98] sm:$0xff]
        %v460 = vld [vmem:[%s431 + $0xa0] sm:$0xff]
        %v461 = vld [vmem:[%s431 + $0xa8] sm:$0xff]
        %v462 = vld [vmem:[%s431 + $0xb0] sm:$0xff]
        %v463 = vld [vmem:[%s431 + $0xb8] sm:$0xff]
        %v464 = vld [vmem:[%s431 + $0xc0] sm:$0xff]
        %v465 = vld [vmem:[%s431 + $0xc8] sm:$0xff]
        %v466 = vld [vmem:[%s431 + $0xd0] sm:$0xff]
        %v467 = vld [vmem:[%s431 + $0xd8] sm:$0xff]
        %v468 = vld [vmem:[%s431 + $0xe0] sm:$0xff]
        %v469 = vld [vmem:[%s431 + $0xe8] sm:$0xff]
        %v470 = vld [vmem:[%s431 + $0xf0] sm:$0xff]
        %v471 = vld [vmem:[%s431 + $0xf8] sm:$0xff]
        %472 = vadd.xlane.f32.xlu0 %v440
        %v473 = vpop.xlane.xlu0 %472
        %474 = vadd.xlane.f32.xlu0 %v441
        %v475 = vpop.xlane.xlu0 %474
        %476 = vadd.xlane.f32.xlu0 %v442
        %v477 = vpop.xlane.xlu0 %476
        %478 = vadd.xlane.f32.xlu0 %v443
        %v479 = vpop.xlane.xlu0 %478
        %480 = vadd.xlane.f32.xlu0 %v444
        %v481 = vpop.xlane.xlu0 %480
        %482 = vadd.xlane.f32.xlu0 %v445
        %v483 = vpop.xlane.xlu0 %482
        %484 = vadd.xlane.f32.xlu0 %v446
        %v485 = vpop.xlane.xlu0 %484
        %486 = vadd.xlane.f32.xlu0 %v447
        %v487 = vpop.xlane.xlu0 %486
        %488 = vadd.xlane.f32.xlu0 %v448
        %v489 = vpop.xlane.xlu0 %488
        %490 = vadd.xlane.f32.xlu0 %v449
        %v491 = vpop.xlane.xlu0 %490
        %492 = vadd.xlane.f32.xlu0 %v450
        %v493 = vpop.xlane.xlu0 %492
        %494 = vadd.xlane.f32.xlu0 %v451
        %v495 = vpop.xlane.xlu0 %494
        %496 = vadd.xlane.f32.xlu0 %v452
        %v497 = vpop.xlane.xlu0 %496
        %498 = vadd.xlane.f32.xlu0 %v453
        %v499 = vpop.xlane.xlu0 %498
        %500 = vadd.xlane.f32.xlu0 %v454
        %v501 = vpop.xlane.xlu0 %500
        %502 = vadd.xlane.f32.xlu0 %v455
        %v503 = vpop.xlane.xlu0 %502
        %504 = vadd.xlane.f32.xlu0 %v456
        %v505 = vpop.xlane.xlu0 %504
        %506 = vadd.xlane.f32.xlu0 %v457
        %v507 = vpop.xlane.xlu0 %506
        %508 = vadd.xlane.f32.xlu0 %v458
        %v509 = vpop.xlane.xlu0 %508
        %510 = vadd.xlane.f32.xlu0 %v459
        %v511 = vpop.xlane.xlu0 %510
        %512 = vadd.xlane.f32.xlu0 %v460
        %v513 = vpop.xlane.xlu0 %512
        %514 = vadd.xlane.f32.xlu0 %v461
        %v515 = vpop.xlane.xlu0 %514
        %516 = vadd.xlane.f32.xlu0 %v462
        %v517 = vpop.xlane.xlu0 %516
        %518 = vadd.xlane.f32.xlu0 %v463
        %v519 = vpop.xlane.xlu0 %518
        %520 = vadd.xlane.f32.xlu0 %v464
        %v521 = vpop.xlane.xlu0 %520
        %522 = vadd.xlane.f32.xlu0 %v465
        %v523 = vpop.xlane.xlu0 %522
        %524 = vadd.xlane.f32.xlu0 %v466
        %v525 = vpop.xlane.xlu0 %524
        %526 = vadd.xlane.f32.xlu0 %v467
        %v527 = vpop.xlane.xlu0 %526
        %528 = vadd.xlane.f32.xlu0 %v468
        %v529 = vpop.xlane.xlu0 %528
        %530 = vadd.xlane.f32.xlu0 %v469
        %v531 = vpop.xlane.xlu0 %530
        %532 = vadd.xlane.f32.xlu0 %v470
        %v533 = vpop.xlane.xlu0 %532
        %534 = vadd.xlane.f32.xlu0 %v471
        %v535 = vpop.xlane.xlu0 %534
        %v536 = vrcp.pop 128.0
        %v537 = vmul.f32 %v473, %v536
        %v538 = vmul.f32 %v475, %v536
        %v539 = vmul.f32 %v477, %v536
        %v540 = vmul.f32 %v479, %v536
        %v541 = vmul.f32 %v481, %v536
        %v542 = vmul.f32 %v483, %v536
        %v543 = vmul.f32 %v485, %v536
        %v544 = vmul.f32 %v487, %v536
        %v545 = vmul.f32 %v489, %v536
        %v546 = vmul.f32 %v491, %v536
        %v547 = vmul.f32 %v493, %v536
        %v548 = vmul.f32 %v495, %v536
        %v549 = vmul.f32 %v497, %v536
        %v550 = vmul.f32 %v499, %v536
        %v551 = vmul.f32 %v501, %v536
        %v552 = vmul.f32 %v503, %v536
        %v553 = vmul.f32 %v505, %v536
        %v554 = vmul.f32 %v507, %v536
        %v555 = vmul.f32 %v509, %v536
        %v556 = vmul.f32 %v511, %v536
        %v557 = vmul.f32 %v513, %v536
        %v558 = vmul.f32 %v515, %v536
        %v559 = vmul.f32 %v517, %v536
        %v560 = vmul.f32 %v519, %v536
        %v561 = vmul.f32 %v521, %v536
        %v562 = vmul.f32 %v523, %v536
        %v563 = vmul.f32 %v525, %v536
        %v564 = vmul.f32 %v527, %v536
        %v565 = vmul.f32 %v529, %v536
        %v566 = vmul.f32 %v531, %v536
        %v567 = vmul.f32 %v533, %v536
        %v568 = vmul.f32 %v535, %v536
        %v569 = vsub.f32 %v440, %v537
        %v570 = vsub.f32 %v441, %v538
        %v571 = vsub.f32 %v442, %v539
        %v572 = vsub.f32 %v443, %v540
        %v573 = vsub.f32 %v444, %v541
        %v574 = vsub.f32 %v445, %v542
        %v575 = vsub.f32 %v446, %v543
        %v576 = vsub.f32 %v447, %v544
        %v577 = vsub.f32 %v448, %v545
        %v578 = vsub.f32 %v449, %v546
        %v579 = vsub.f32 %v450, %v547
        %v580 = vsub.f32 %v451, %v548
        %v581 = vsub.f32 %v452, %v549
        %v582 = vsub.f32 %v453, %v550
        %v583 = vsub.f32 %v454, %v551
        %v584 = vsub.f32 %v455, %v552
        %v585 = vsub.f32 %v456, %v553
        %v586 = vsub.f32 %v457, %v554
        %v587 = vsub.f32 %v458, %v555
        %v588 = vsub.f32 %v459, %v556
        %v589 = vsub.f32 %v460, %v557
        %v590 = vsub.f32 %v461, %v558
        %v591 = vsub.f32 %v462, %v559
        %v592 = vsub.f32 %v463, %v560
        %v593 = vsub.f32 %v464, %v561
        %v594 = vsub.f32 %v465, %v562
        %v595 = vsub.f32 %v466, %v563
        %v596 = vsub.f32 %v467, %v564
        %v597 = vsub.f32 %v468, %v565
        %v598 = vsub.f32 %v469, %v566
        %v599 = vsub.f32 %v470, %v567
        %v600 = vsub.f32 %v471, %v568
        %v601 = vmul.f32 %v569, %v569
        %v602 = vmul.f32 %v570, %v570
        %v603 = vmul.f32 %v571, %v571
        %v604 = vmul.f32 %v572, %v572
        %v605 = vmul.f32 %v573, %v573
        %v606 = vmul.f32 %v574, %v574
        %v607 = vmul.f32 %v575, %v575
        %v608 = vmul.f32 %v576, %v576
        %v609 = vmul.f32 %v577, %v577
        %v610 = vmul.f32 %v578, %v578
        %v611 = vmul.f32 %v579, %v579
        %v612 = vmul.f32 %v580, %v580
        %v613 = vmul.f32 %v581, %v581
        %v614 = vmul.f32 %v582, %v582
        %v615 = vmul.f32 %v583, %v583
        %v616 = vmul.f32 %v584, %v584
        %v617 = vmul.f32 %v585, %v585
        %v618 = vmul.f32 %v586, %v586
        %v619 = vmul.f32 %v587, %v587
        %v620 = vmul.f32 %v588, %v588
        %v621 = vmul.f32 %v589, %v589
        %v622 = vmul.f32 %v590, %v590
        %v623 = vmul.f32 %v591, %v591
        %v624 = vmul.f32 %v592, %v592
        %v625 = vmul.f32 %v593, %v593
        %v626 = vmul.f32 %v594, %v594
        %v627 = vmul.f32 %v595, %v595
        %v628 = vmul.f32 %v596, %v596
        %v629 = vmul.f32 %v597, %v597
        %v630 = vmul.f32 %v598, %v598
        %v631 = vmul.f32 %v599, %v599
        %v632 = vmul.f32 %v600, %v600
        %633 = vadd.xlane.f32.xlu0 %v601
        %v634 = vpop.xlane.xlu0 %633
        %635 = vadd.xlane.f32.xlu0 %v602
        %v636 = vpop.xlane.xlu0 %635
        %637 = vadd.xlane.f32.xlu0 %v603
        %v638 = vpop.xlane.xlu0 %637
        %639 = vadd.xlane.f32.xlu0 %v604
        %v640 = vpop.xlane.xlu0 %639
        %641 = vadd.xlane.f32.xlu0 %v605
        %v642 = vpop.xlane.xlu0 %641
        %643 = vadd.xlane.f32.xlu0 %v606
        %v644 = vpop.xlane.xlu0 %643
        %645 = vadd.xlane.f32.xlu0 %v607
        %v646 = vpop.xlane.xlu0 %645
        %647 = vadd.xlane.f32.xlu0 %v608
        %v648 = vpop.xlane.xlu0 %647
        %649 = vadd.xlane.f32.xlu0 %v609
        %v650 = vpop.xlane.xlu0 %649
        %651 = vadd.xlane.f32.xlu0 %v610
        %v652 = vpop.xlane.xlu0 %651
        %653 = vadd.xlane.f32.xlu0 %v611
        %v654 = vpop.xlane.xlu0 %653
        %655 = vadd.xlane.f32.xlu0 %v612
        %v656 = vpop.xlane.xlu0 %655
        %657 = vadd.xlane.f32.xlu0 %v613
        %v658 = vpop.xlane.xlu0 %657
        %659 = vadd.xlane.f32.xlu0 %v614
        %v660 = vpop.xlane.xlu0 %659
        %661 = vadd.xlane.f32.xlu0 %v615
        %v662 = vpop.xlane.xlu0 %661
        %663 = vadd.xlane.f32.xlu0 %v616
        %v664 = vpop.xlane.xlu0 %663
        %665 = vadd.xlane.f32.xlu0 %v617
        %v666 = vpop.xlane.xlu0 %665
        %667 = vadd.xlane.f32.xlu0 %v618
        %v668 = vpop.xlane.xlu0 %667
        %669 = vadd.xlane.f32.xlu0 %v619
        %v670 = vpop.xlane.xlu0 %669
        %671 = vadd.xlane.f32.xlu0 %v620
        %v672 = vpop.xlane.xlu0 %671
        %673 = vadd.xlane.f32.xlu0 %v621
        %v674 = vpop.xlane.xlu0 %673
        %675 = vadd.xlane.f32.xlu0 %v622
        %v676 = vpop.xlane.xlu0 %675
        %677 = vadd.xlane.f32.xlu0 %v623
        %v678 = vpop.xlane.xlu0 %677
        %679 = vadd.xlane.f32.xlu0 %v624
        %v680 = vpop.xlane.xlu0 %679
        %681 = vadd.xlane.f32.xlu0 %v625
        %v682 = vpop.xlane.xlu0 %681
        %683 = vadd.xlane.f32.xlu0 %v626
        %v684 = vpop.xlane.xlu0 %683
        %685 = vadd.xlane.f32.xlu0 %v627
        %v686 = vpop.xlane.xlu0 %685
        %687 = vadd.xlane.f32.xlu0 %v628
        %v688 = vpop.xlane.xlu0 %687
        %689 = vadd.xlane.f32.xlu0 %v629
        %v690 = vpop.xlane.xlu0 %689
        %691 = vadd.xlane.f32.xlu0 %v630
        %v692 = vpop.xlane.xlu0 %691
        %693 = vadd.xlane.f32.xlu0 %v631
        %v694 = vpop.xlane.xlu0 %693
        %695 = vadd.xlane.f32.xlu0 %v632
        %v696 = vpop.xlane.xlu0 %695
        %v697 = vmul.f32 %v634, %v536
        %v698 = vmul.f32 %v636, %v536
        %v699 = vmul.f32 %v638, %v536
        %v700 = vmul.f32 %v640, %v536
        %v701 = vmul.f32 %v642, %v536
        %v702 = vmul.f32 %v644, %v536
        %v703 = vmul.f32 %v646, %v536
        %v704 = vmul.f32 %v648, %v536
        %v705 = vmul.f32 %v650, %v536
        %v706 = vmul.f32 %v652, %v536
        %v707 = vmul.f32 %v654, %v536
        %v708 = vmul.f32 %v656, %v536
        %v709 = vmul.f32 %v658, %v536
        %v710 = vmul.f32 %v660, %v536
        %v711 = vmul.f32 %v662, %v536
        %v712 = vmul.f32 %v664, %v536
        %v713 = vmul.f32 %v666, %v536
        %v714 = vmul.f32 %v668, %v536
        %v715 = vmul.f32 %v670, %v536
        %v716 = vmul.f32 %v672, %v536
        %v717 = vmul.f32 %v674, %v536
        %v718 = vmul.f32 %v676, %v536
        %v719 = vmul.f32 %v678, %v536
        %v720 = vmul.f32 %v680, %v536
        %v721 = vmul.f32 %v682, %v536
        %v722 = vmul.f32 %v684, %v536
        %v723 = vmul.f32 %v686, %v536
        %v724 = vmul.f32 %v688, %v536
        %v725 = vmul.f32 %v690, %v536
        %v726 = vmul.f32 %v692, %v536
        %v727 = vmul.f32 %v694, %v536
        %v728 = vmul.f32 %v696, %v536
        %v729 = vadd.f32 %v697, 1e-05
        %v730 = vadd.f32 %v698, 1e-05
        %v731 = vadd.f32 %v699, 1e-05
        %v732 = vadd.f32 %v700, 1e-05
        %v733 = vadd.f32 %v701, 1e-05
        %v734 = vadd.f32 %v702, 1e-05
        %v735 = vadd.f32 %v703, 1e-05
        %v736 = vadd.f32 %v704, 1e-05
        %v737 = vadd.f32 %v705, 1e-05
        %v738 = vadd.f32 %v706, 1e-05
        %v739 = vadd.f32 %v707, 1e-05
        %v740 = vadd.f32 %v708, 1e-05
        %v741 = vadd.f32 %v709, 1e-05
        %v742 = vadd.f32 %v710, 1e-05
        %v743 = vadd.f32 %v711, 1e-05
        %v744 = vadd.f32 %v712, 1e-05
        %v745 = vadd.f32 %v713, 1e-05
        %v746 = vadd.f32 %v714, 1e-05
        %v747 = vadd.f32 %v715, 1e-05
        %v748 = vadd.f32 %v716, 1e-05
        %v749 = vadd.f32 %v717, 1e-05
        %v750 = vadd.f32 %v718, 1e-05
        %v751 = vadd.f32 %v719, 1e-05
        %v752 = vadd.f32 %v720, 1e-05
        %v753 = vadd.f32 %v721, 1e-05
        %v754 = vadd.f32 %v722, 1e-05
        %v755 = vadd.f32 %v723, 1e-05
        %v756 = vadd.f32 %v724, 1e-05
        %v757 = vadd.f32 %v725, 1e-05
        %v758 = vadd.f32 %v726, 1e-05
        %v759 = vadd.f32 %v727, 1e-05
        %v760 = vadd.f32 %v728, 1e-05
        %v761 = vrsqrt.pop %v729
        %v762 = vrsqrt.pop %v730
        %v763 = vrsqrt.pop %v731
        %v764 = vrsqrt.pop %v732
        %v765 = vrsqrt.pop %v733
        %v766 = vrsqrt.pop %v734
        %v767 = vrsqrt.pop %v735
        %v768 = vrsqrt.pop %v736
        %v769 = vrsqrt.pop %v737
        %v770 = vrsqrt.pop %v738
        %v771 = vrsqrt.pop %v739
        %v772 = vrsqrt.pop %v740
        %v773 = vrsqrt.pop %v741
        %v774 = vrsqrt.pop %v742
        %v775 = vrsqrt.pop %v743
        %v776 = vrsqrt.pop %v744
        %v777 = vrsqrt.pop %v745
        %v778 = vrsqrt.pop %v746
        %v779 = vrsqrt.pop %v747
        %v780 = vrsqrt.pop %v748
        %v781 = vrsqrt.pop %v749
        %v782 = vrsqrt.pop %v750
        %v783 = vrsqrt.pop %v751
        %v784 = vrsqrt.pop %v752
        %v785 = vrsqrt.pop %v753
        %v786 = vrsqrt.pop %v754
        %v787 = vrsqrt.pop %v755
        %v788 = vrsqrt.pop %v756
        %v789 = vrsqrt.pop %v757
        %v790 = vrsqrt.pop %v758
        %v791 = vrsqrt.pop %v759
        %v792 = vrsqrt.pop %v760
        %v793 = vmul.f32 %v569, %v761
        %v794 = vmul.f32 %v570, %v762
        %v795 = vmul.f32 %v571, %v763
        %v796 = vmul.f32 %v572, %v764
        %v797 = vmul.f32 %v573, %v765
        %v798 = vmul.f32 %v574, %v766
        %v799 = vmul.f32 %v575, %v767
        %v800 = vmul.f32 %v576, %v768
        %v801 = vmul.f32 %v577, %v769
        %v802 = vmul.f32 %v578, %v770
        %v803 = vmul.f32 %v579, %v771
        %v804 = vmul.f32 %v580, %v772
        %v805 = vmul.f32 %v581, %v773
        %v806 = vmul.f32 %v582, %v774
        %v807 = vmul.f32 %v583, %v775
        %v808 = vmul.f32 %v584, %v776
        %v809 = vmul.f32 %v585, %v777
        %v810 = vmul.f32 %v586, %v778
        %v811 = vmul.f32 %v587, %v779
        %v812 = vmul.f32 %v588, %v780
        %v813 = vmul.f32 %v589, %v781
        %v814 = vmul.f32 %v590, %v782
        %v815 = vmul.f32 %v591, %v783
        %v816 = vmul.f32 %v592, %v784
        %v817 = vmul.f32 %v593, %v785
        %v818 = vmul.f32 %v594, %v786
        %v819 = vmul.f32 %v595, %v787
        %v820 = vmul.f32 %v596, %v788
        %v821 = vmul.f32 %v597, %v789
        %v822 = vmul.f32 %v598, %v790
        %v823 = vmul.f32 %v599, %v791
        %v824 = vmul.f32 %v600, %v792
        %v825 = vld [vmem:[%s2] sm:$0x1]
        %v827 = vlaneseq
        %v828 = vshrl.u32 %v827, 7
        %v829 = vsub.s32 0, %v828
        %v830 = vrot.slane %v825, %v829
        %v832 = vmul.f32 %v793, %v830
        %v833 = vmul.f32 %v794, %v830
        %v834 = vmul.f32 %v795, %v830
        %v835 = vmul.f32 %v796, %v830
        %v836 = vmul.f32 %v797, %v830
        %v837 = vmul.f32 %v798, %v830
        %v838 = vmul.f32 %v799, %v830
        %v839 = vmul.f32 %v800, %v830
        %v840 = vmul.f32 %v801, %v830
        %v841 = vmul.f32 %v802, %v830
        %v842 = vmul.f32 %v803, %v830
        %v843 = vmul.f32 %v804, %v830
        %v844 = vmul.f32 %v805, %v830
        %v845 = vmul.f32 %v806, %v830
        %v846 = vmul.f32 %v807, %v830
        %v847 = vmul.f32 %v808, %v830
        %v848 = vmul.f32 %v809, %v830
        %v849 = vmul.f32 %v810, %v830
        %v850 = vmul.f32 %v811, %v830
        %v851 = vmul.f32 %v812, %v830
        %v852 = vmul.f32 %v813, %v830
        %v853 = vmul.f32 %v814, %v830
        %v854 = vmul.f32 %v815, %v830
        %v855 = vmul.f32 %v816, %v830
        %v856 = vmul.f32 %v817, %v830
        %v857 = vmul.f32 %v818, %v830
        %v858 = vmul.f32 %v819, %v830
        %v859 = vmul.f32 %v820, %v830
        %v860 = vmul.f32 %v821, %v830
        %v861 = vmul.f32 %v822, %v830
        %v862 = vmul.f32 %v823, %v830
        %v863 = vmul.f32 %v824, %v830
        %v864 = vld [vmem:[%s3] sm:$0x1]
        %v866 = vlaneseq
        %v867 = vshrl.u32 %v866, 7
        %v868 = vsub.s32 0, %v867
        %v869 = vrot.slane %v864, %v868
        %v871 = vadd.f32 %v832, %v869
        %v872 = vadd.f32 %v833, %v869
        %v873 = vadd.f32 %v834, %v869
        %v874 = vadd.f32 %v835, %v869
        %v875 = vadd.f32 %v836, %v869
        %v876 = vadd.f32 %v837, %v869
        %v877 = vadd.f32 %v838, %v869
        %v878 = vadd.f32 %v839, %v869
        %v879 = vadd.f32 %v840, %v869
        %v880 = vadd.f32 %v841, %v869
        %v881 = vadd.f32 %v842, %v869
        %v882 = vadd.f32 %v843, %v869
        %v883 = vadd.f32 %v844, %v869
        %v884 = vadd.f32 %v845, %v869
        %v885 = vadd.f32 %v846, %v869
        %v886 = vadd.f32 %v847, %v869
        %v887 = vadd.f32 %v848, %v869
        %v888 = vadd.f32 %v849, %v869
        %v889 = vadd.f32 %v850, %v869
        %v890 = vadd.f32 %v851, %v869
        %v891 = vadd.f32 %v852, %v869
        %v892 = vadd.f32 %v853, %v869
        %v893 = vadd.f32 %v854, %v869
        %v894 = vadd.f32 %v855, %v869
        %v895 = vadd.f32 %v856, %v869
        %v896 = vadd.f32 %v857, %v869
        %v897 = vadd.f32 %v858, %v869
        %v898 = vadd.f32 %v859, %v869
        %v899 = vadd.f32 %v860, %v869
        %v900 = vadd.f32 %v861, %v869
        %v901 = vadd.f32 %v862, %v869
        %v902 = vadd.f32 %v863, %v869
        %v903 = vpack.c.bf16 %v872, %v871
        %v904 = vpack.c.bf16 %v874, %v873
        %v905 = vpack.c.bf16 %v876, %v875
        %v906 = vpack.c.bf16 %v878, %v877
        %v907 = vpack.c.bf16 %v880, %v879
        %v908 = vpack.c.bf16 %v882, %v881
        %v909 = vpack.c.bf16 %v884, %v883
        %v910 = vpack.c.bf16 %v886, %v885
        %v911 = vpack.c.bf16 %v888, %v887
        %v912 = vpack.c.bf16 %v890, %v889
        %v913 = vpack.c.bf16 %v892, %v891
        %v914 = vpack.c.bf16 %v894, %v893
        %v915 = vpack.c.bf16 %v896, %v895
        %v916 = vpack.c.bf16 %v898, %v897
        %v917 = vpack.c.bf16 %v900, %v899
        %v918 = vpack.c.bf16 %v902, %v901
        %v919 = vld [vmem:[%s4] sm:$0xf]
        %v920 = vld [vmem:[%s4 + $0x4] sm:$0xf]
        %v921 = vld [vmem:[%s4 + $0x8] sm:$0xf]
        %v922 = vld [vmem:[%s4 + $0xc] sm:$0xf]
        %v923 = vld [vmem:[%s4 + $0x10] sm:$0xf]
        %v924 = vld [vmem:[%s4 + $0x14] sm:$0xf]
        %v925 = vld [vmem:[%s4 + $0x18] sm:$0xf]
        %v926 = vld [vmem:[%s4 + $0x1c] sm:$0xf]
        %v927 = vld [vmem:[%s4 + $0x20] sm:$0xf]
        %v928 = vld [vmem:[%s4 + $0x24] sm:$0xf]
        %v929 = vld [vmem:[%s4 + $0x28] sm:$0xf]
        %v930 = vld [vmem:[%s4 + $0x2c] sm:$0xf]
        %v931 = vld [vmem:[%s4 + $0x30] sm:$0xf]
        %v932 = vld [vmem:[%s4 + $0x34] sm:$0xf]
        %v933 = vld [vmem:[%s4 + $0x38] sm:$0xf]
        %v934 = vld [vmem:[%s4 + $0x3c] sm:$0xf]
        %v951 = vunpack.c.l.b16 %v919
        %v952 = vunpack.c.l.b16 %v920
        %v953 = vunpack.c.l.b16 %v921
        %v954 = vunpack.c.l.b16 %v922
        %v955 = vunpack.c.l.b16 %v923
        %v956 = vunpack.c.l.b16 %v924
        %v957 = vunpack.c.l.b16 %v925
        %v958 = vunpack.c.l.b16 %v926
        %v959 = vunpack.c.l.b16 %v927
        %v960 = vunpack.c.l.b16 %v928
        %v961 = vunpack.c.l.b16 %v929
        %v962 = vunpack.c.l.b16 %v930
        %v963 = vunpack.c.l.b16 %v931
        %v964 = vunpack.c.l.b16 %v932
        %v965 = vunpack.c.l.b16 %v933
        %v966 = vunpack.c.l.b16 %v934
        %v967 = vpack.c.b16 %v952, %v951
        %v968 = vpack.c.b16 %v954, %v953
        %v969 = vpack.c.b16 %v956, %v955
        %v970 = vpack.c.b16 %v958, %v957
        %v971 = vpack.c.b16 %v960, %v959
        %v972 = vpack.c.b16 %v962, %v961
        %v973 = vpack.c.b16 %v964, %v963
        %v974 = vpack.c.b16 %v966, %v965
        %983 = vmatprep.subr.bf16.mxu0 0
        %984 = vmatpush1.bf16.msra.mxu0 %v967
        %985 = vmatprep.subr.bf16.mxu0 0
        %986 = vmatpush1.bf16.msra.mxu0 %v968
        %987 = vmatprep.subr.bf16.mxu0 0
        %988 = vmatpush1.bf16.msra.mxu0 %v969
        %989 = vmatprep.subr.bf16.mxu0 0
        %990 = vmatpush1.bf16.msra.mxu0 %v970
        %991 = vmatprep.subr.bf16.mxu0 0
        %992 = vmatpush1.bf16.msra.mxu0 %v971
        %993 = vmatprep.subr.bf16.mxu0 0
        %994 = vmatpush1.bf16.msra.mxu0 %v972
        %995 = vmatprep.subr.bf16.mxu0 0
        %996 = vmatpush1.bf16.msra.mxu0 %v973
        %997 = vmatprep.subr.bf16.mxu0 0
        %998 = vmatpush1.bf16.msra.mxu0 %v974
        %999 = vmatprep.subr.bf16.mxu0 0
        %1000 = vmatpush1.bf16.msra.mxu0 0
        %1001 = vmatprep.subr.bf16.mxu0 0
        %1002 = vmatpush1.bf16.msra.mxu0 0
        %1003 = vmatprep.subr.bf16.mxu0 0
        %1004 = vmatpush1.bf16.msra.mxu0 0
        %1005 = vmatprep.subr.bf16.mxu0 0
        %1006 = vmatpush1.bf16.msra.mxu0 0
        %1007 = vmatprep.subr.bf16.mxu0 0
        %1008 = vmatpush1.bf16.msra.mxu0 0
        %1009 = vmatprep.subr.bf16.mxu0 0
        %1010 = vmatpush1.bf16.msra.mxu0 0
        %1011 = vmatprep.subr.bf16.mxu0 0
        %1012 = vmatpush1.bf16.msra.mxu0 0
        %1013 = vmatprep.subr.bf16.mxu0 0
        %1014 = vmatpush1.bf16.msra.mxu0 0
        %1015 = vmatprep.mubr.bf16.mxu0 0
        %1016 = vmatmul.mubr.bf16.gmra.mrb[0].mxu0 %v903
        %v1017 = vpop.f32.mrb[0].mxu0
        %v1018 = vadd.f32 0.0, %v1017
        %v1019 = vpop.f32.mrb[0].mxu0
        %v1020 = vpop.f32.mrb[0].mxu0
        %v1021 = vadd.f32 0.0, %v1020
        %v1022 = vpop.f32.mrb[0].mxu0
        %1023 = vmatprep.mubr.bf16.mxu0 0
        %1024 = vmatmul.mubr.bf16.gmra.mrb[0].mxu0 %v904
        %v1025 = vpop.f32.mrb[0].mxu0
        %v1026 = vadd.f32 0.0, %v1025
        %v1027 = vpop.f32.mrb[0].mxu0
        %v1028 = vpop.f32.mrb[0].mxu0
        %v1029 = vadd.f32 0.0, %v1028
        %v1030 = vpop.f32.mrb[0].mxu0
        %1031 = vmatprep.mubr.bf16.mxu0 0
        %1032 = vmatmul.mubr.bf16.gmra.mrb[0].mxu0 %v905
        %v1033 = vpop.f32.mrb[0].mxu0
        %v1034 = vadd.f32 0.0, %v1033
        %v1035 = vpop.f32.mrb[0].mxu0
        %v1036 = vpop.f32.mrb[0].mxu0
        %v1037 = vadd.f32 0.0, %v1036
        %v1038 = vpop.f32.mrb[0].mxu0
        %1039 = vmatprep.mubr.bf16.mxu0 0
        %1040 = vmatmul.mubr.bf16.gmra.mrb[0].mxu0 %v906
        %v1041 = vpop.f32.mrb[0].mxu0
        %v1042 = vadd.f32 0.0, %v1041
        %v1043 = vpop.f32.mrb[0].mxu0
        %v1044 = vpop.f32.mrb[0].mxu0
        %v1045 = vadd.f32 0.0, %v1044
        %v1046 = vpop.f32.mrb[0].mxu0
        %1047 = vmatprep.mubr.bf16.mxu0 0
        %1048 = vmatmul.mubr.bf16.gmra.mrb[0].mxu0 %v907
        %v1049 = vpop.f32.mrb[0].mxu0
        %v1050 = vadd.f32 0.0, %v1049
        %v1051 = vpop.f32.mrb[0].mxu0
        %v1052 = vpop.f32.mrb[0].mxu0
        %v1053 = vadd.f32 0.0, %v1052
        %v1054 = vpop.f32.mrb[0].mxu0
        %1055 = vmatprep.mubr.bf16.mxu0 0
        %1056 = vmatmul.mubr.bf16.gmra.mrb[0].mxu0 %v908
        %v1057 = vpop.f32.mrb[0].mxu0
        %v1058 = vadd.f32 0.0, %v1057
        %v1059 = vpop.f32.mrb[0].mxu0
        %v1060 = vpop.f32.mrb[0].mxu0
        %v1061 = vadd.f32 0.0, %v1060
        %v1062 = vpop.f32.mrb[0].mxu0
        %1063 = vmatprep.mubr.bf16.mxu0 0
        %1064 = vmatmul.mubr.bf16.gmra.mrb[0].mxu0 %v909
        %v1065 = vpop.f32.mrb[0].mxu0
        %v1066 = vadd.f32 0.0, %v1065
        %v1067 = vpop.f32.mrb[0].mxu0
        %v1068 = vpop.f32.mrb[0].mxu0
        %v1069 = vadd.f32 0.0, %v1068
        %v1070 = vpop.f32.mrb[0].mxu0
        %1071 = vmatprep.mubr.bf16.mxu0 0
        %1072 = vmatmul.mubr.bf16.gmra.mrb[0].mxu0 %v910
        %v1073 = vpop.f32.mrb[0].mxu0
        %v1074 = vadd.f32 0.0, %v1073
        %v1075 = vpop.f32.mrb[0].mxu0
        %v1076 = vpop.f32.mrb[0].mxu0
        %v1077 = vadd.f32 0.0, %v1076
        %v1078 = vpop.f32.mrb[0].mxu0
        %1079 = vmatprep.mubr.bf16.mxu0 0
        %1080 = vmatmul.mubr.bf16.gmra.mrb[0].mxu0 %v911
        %v1081 = vpop.f32.mrb[0].mxu0
        %v1082 = vadd.f32 0.0, %v1081
        %v1083 = vpop.f32.mrb[0].mxu0
        %v1084 = vpop.f32.mrb[0].mxu0
        %v1085 = vadd.f32 0.0, %v1084
        %v1086 = vpop.f32.mrb[0].mxu0
        %1087 = vmatprep.mubr.bf16.mxu0 0
        %1088 = vmatmul.mubr.bf16.gmra.mrb[0].mxu0 %v912
        %v1089 = vpop.f32.mrb[0].mxu0
        %v1090 = vadd.f32 0.0, %v1089
        %v1091 = vpop.f32.mrb[0].mxu0
        %v1092 = vpop.f32.mrb[0].mxu0
        %v1093 = vadd.f32 0.0, %v1092
        %v1094 = vpop.f32.mrb[0].mxu0
        %1095 = vmatprep.mubr.bf16.mxu0 0
        %1096 = vmatmul.mubr.bf16.gmra.mrb[0].mxu0 %v913
        %v1097 = vpop.f32.mrb[0].mxu0
        %v1098 = vadd.f32 0.0, %v1097
        %v1099 = vpop.f32.mrb[0].mxu0
        %v1100 = vpop.f32.mrb[0].mxu0
        %v1101 = vadd.f32 0.0, %v1100
        %v1102 = vpop.f32.mrb[0].mxu0
        %1103 = vmatprep.mubr.bf16.mxu0 0
        %1104 = vmatmul.mubr.bf16.gmra.mrb[0].mxu0 %v914
        %v1105 = vpop.f32.mrb[0].mxu0
        %v1106 = vadd.f32 0.0, %v1105
        %v1107 = vpop.f32.mrb[0].mxu0
        %v1108 = vpop.f32.mrb[0].mxu0
        %v1109 = vadd.f32 0.0, %v1108
        %v1110 = vpop.f32.mrb[0].mxu0
        %1111 = vmatprep.mubr.bf16.mxu0 0
        %1112 = vmatmul.mubr.bf16.gmra.mrb[0].mxu0 %v915
        %v1113 = vpop.f32.mrb[0].mxu0
        %v1114 = vadd.f32 0.0, %v1113
        %v1115 = vpop.f32.mrb[0].mxu0
        %v1116 = vpop.f32.mrb[0].mxu0
        %v1117 = vadd.f32 0.0, %v1116
        %v1118 = vpop.f32.mrb[0].mxu0
        %1119 = vmatprep.mubr.bf16.mxu0 0
        %1120 = vmatmul.mubr.bf16.gmra.mrb[0].mxu0 %v916
        %v1121 = vpop.f32.mrb[0].mxu0
        %v1122 = vadd.f32 0.0, %v1121
        %v1123 = vpop.f32.mrb[0].mxu0
        %v1124 = vpop.f32.mrb[0].mxu0
        %v1125 = vadd.f32 0.0, %v1124
        %v1126 = vpop.f32.mrb[0].mxu0
        %1127 = vmatprep.mubr.bf16.mxu0 0
        %1128 = vmatmul.mubr.bf16.gmra.mrb[0].mxu0 %v917
        %v1129 = vpop.f32.mrb[0].mxu0
        %v1130 = vadd.f32 0.0, %v1129
        %v1131 = vpop.f32.mrb[0].mxu0
        %v1132 = vpop.f32.mrb[0].mxu0
        %v1133 = vadd.f32 0.0, %v1132
        %v1134 = vpop.f32.mrb[0].mxu0
        %1135 = vmatprep.mubr.bf16.mxu0 0
        %1136 = vmatmul.mubr.bf16.gmra.mrb[0].mxu0 %v918
        %v1137 = vpop.f32.mrb[0].mxu0
        %v1138 = vadd.f32 0.0, %v1137
        %v1139 = vpop.f32.mrb[0].mxu0
        %v1140 = vpop.f32.mrb[0].mxu0
        %v1141 = vadd.f32 0.0, %v1140
        %v1142 = vpop.f32.mrb[0].mxu0
        %1143 = vdwg.mxu0
        %v1144 = vld [vmem:[%s5] sm:$0xf]
        %v1145 = vld [vmem:[%s5 + $0x4] sm:$0xf]
        %v1146 = vld [vmem:[%s5 + $0x8] sm:$0xf]
        %v1147 = vld [vmem:[%s5 + $0xc] sm:$0xf]
        %v1148 = vld [vmem:[%s5 + $0x10] sm:$0xf]
        %v1149 = vld [vmem:[%s5 + $0x14] sm:$0xf]
        %v1150 = vld [vmem:[%s5 + $0x18] sm:$0xf]
        %v1151 = vld [vmem:[%s5 + $0x1c] sm:$0xf]
        %v1152 = vld [vmem:[%s5 + $0x20] sm:$0xf]
        %v1153 = vld [vmem:[%s5 + $0x24] sm:$0xf]
        %v1154 = vld [vmem:[%s5 + $0x28] sm:$0xf]
        %v1155 = vld [vmem:[%s5 + $0x2c] sm:$0xf]
        %v1156 = vld [vmem:[%s5 + $0x30] sm:$0xf]
        %v1157 = vld [vmem:[%s5 + $0x34] sm:$0xf]
        %v1158 = vld [vmem:[%s5 + $0x38] sm:$0xf]
        %v1159 = vld [vmem:[%s5 + $0x3c] sm:$0xf]
        %v1176 = vunpack.c.l.b16 %v1144
        %v1177 = vunpack.c.l.b16 %v1145
        %v1178 = vunpack.c.l.b16 %v1146
        %v1179 = vunpack.c.l.b16 %v1147
        %v1180 = vunpack.c.l.b16 %v1148
        %v1181 = vunpack.c.l.b16 %v1149
        %v1182 = vunpack.c.l.b16 %v1150
        %v1183 = vunpack.c.l.b16 %v1151
        %v1184 = vunpack.c.l.b16 %v1152
        %v1185 = vunpack.c.l.b16 %v1153
        %v1186 = vunpack.c.l.b16 %v1154
        %v1187 = vunpack.c.l.b16 %v1155
        %v1188 = vunpack.c.l.b16 %v1156
        %v1189 = vunpack.c.l.b16 %v1157
        %v1190 = vunpack.c.l.b16 %v1158
        %v1191 = vunpack.c.l.b16 %v1159
        %v1192 = vpack.c.b16 %v1177, %v1176
        %v1193 = vpack.c.b16 %v1179, %v1178
        %v1194 = vpack.c.b16 %v1181, %v1180
        %v1195 = vpack.c.b16 %v1183, %v1182
        %v1196 = vpack.c.b16 %v1185, %v1184
        %v1197 = vpack.c.b16 %v1187, %v1186
        %v1198 = vpack.c.b16 %v1189, %v1188
        %v1199 = vpack.c.b16 %v1191, %v1190
        %1208 = vmatprep.subr.bf16.mxu0 0
        %1209 = vmatpush1.bf16.msra.mxu0 %v1192
        %1210 = vmatprep.subr.bf16.mxu0 0
        %1211 = vmatpush1.bf16.msra.mxu0 %v1193
        %1212 = vmatprep.subr.bf16.mxu0 0
        %1213 = vmatpush1.bf16.msra.mxu0 %v1194
        %1214 = vmatprep.subr.bf16.mxu0 0
        %1215 = vmatpush1.bf16.msra.mxu0 %v1195
        %1216 = vmatprep.subr.bf16.mxu0 0
        %1217 = vmatpush1.bf16.msra.mxu0 %v1196
        %1218 = vmatprep.subr.bf16.mxu0 0
        %1219 = vmatpush1.bf16.msra.mxu0 %v1197
        %1220 = vmatprep.subr.bf16.mxu0 0
        %1221 = vmatpush1.bf16.msra.mxu0 %v1198
        %1222 = vmatprep.subr.bf16.mxu0 0
        %1223 = vmatpush1.bf16.msra.mxu0 %v1199
        %1224 = vmatprep.subr.bf16.mxu0 0
        %1225 = vmatpush1.bf16.msra.mxu0 0
        %1226 = vmatprep.subr.bf16.mxu0 0
        %1227 = vmatpush1.bf16.msra.mxu0 0
        %1228 = vmatprep.subr.bf16.mxu0 0
        %1229 = vmatpush1.bf16.msra.mxu0 0
        %1230 = vmatprep.subr.bf16.mxu0 0
        %1231 = vmatpush1.bf16.msra.mxu0 0
        %1232 = vmatprep.subr.bf16.mxu0 0
        %1233 = vmatpush1.bf16.msra.mxu0 0
        %1234 = vmatprep.subr.bf16.mxu0 0
        %1235 = vmatpush1.bf16.msra.mxu0 0
        %1236 = vmatprep.subr.bf16.mxu0 0
        %1237 = vmatpush1.bf16.msra.mxu0 0
        %1238 = vmatprep.subr.bf16.mxu0 0
        %1239 = vmatpush1.bf16.msra.mxu0 0
        %1240 = vmatprep.mubr.bf16.mxu0 0
        %1241 = vmatmul.mubr.bf16.gmra.mrb[0].mxu0 %v903
        %v1242 = vpop.f32.mrb[0].mxu0
        %v1243 = vadd.f32 0.0, %v1242
        %v1244 = vpop.f32.mrb[0].mxu0
        %v1245 = vpop.f32.mrb[0].mxu0
        %v1246 = vadd.f32 0.0, %v1245
        %v1247 = vpop.f32.mrb[0].mxu0
        %1248 = vmatprep.mubr.bf16.mxu0 0
        %1249 = vmatmul.mubr.bf16.gmra.mrb[0].mxu0 %v904
        %v1250 = vpop.f32.mrb[0].mxu0
        %v1251 = vadd.f32 0.0, %v1250
        %v1252 = vpop.f32.mrb[0].mxu0
        %v1253 = vpop.f32.mrb[0].mxu0
        %v1254 = vadd.f32 0.0, %v1253
        %v1255 = vpop.f32.mrb[0].mxu0
        %1256 = vmatprep.mubr.bf16.mxu0 0
        %1257 = vmatmul.mubr.bf16.gmra.mrb[0].mxu0 %v905
        %v1258 = vpop.f32.mrb[0].mxu0
        %v1259 = vadd.f32 0.0, %v1258
        %v1260 = vpop.f32.mrb[0].mxu0
        %v1261 = vpop.f32.mrb[0].mxu0
        %v1262 = vadd.f32 0.0, %v1261
        %v1263 = vpop.f32.mrb[0].mxu0
        %1264 = vmatprep.mubr.bf16.mxu0 0
        %1265 = vmatmul.mubr.bf16.gmra.mrb[0].mxu0 %v906
        %v1266 = vpop.f32.mrb[0].mxu0
        %v1267 = vadd.f32 0.0, %v1266
        %v1268 = vpop.f32.mrb[0].mxu0
        %v1269 = vpop.f32.mrb[0].mxu0
        %v1270 = vadd.f32 0.0, %v1269
        %v1271 = vpop.f32.mrb[0].mxu0
        %1272 = vmatprep.mubr.bf16.mxu0 0
        %1273 = vmatmul.mubr.bf16.gmra.mrb[0].mxu0 %v907
        %v1274 = vpop.f32.mrb[0].mxu0
        %v1275 = vadd.f32 0.0, %v1274
        %v1276 = vpop.f32.mrb[0].mxu0
        %v1277 = vpop.f32.mrb[0].mxu0
        %v1278 = vadd.f32 0.0, %v1277
        %v1279 = vpop.f32.mrb[0].mxu0
        %1280 = vmatprep.mubr.bf16.mxu0 0
        %1281 = vmatmul.mubr.bf16.gmra.mrb[0].mxu0 %v908
        %v1282 = vpop.f32.mrb[0].mxu0
        %v1283 = vadd.f32 0.0, %v1282
        %v1284 = vpop.f32.mrb[0].mxu0
        %v1285 = vpop.f32.mrb[0].mxu0
        %v1286 = vadd.f32 0.0, %v1285
        %v1287 = vpop.f32.mrb[0].mxu0
        %1288 = vmatprep.mubr.bf16.mxu0 0
        %1289 = vmatmul.mubr.bf16.gmra.mrb[0].mxu0 %v909
        %v1290 = vpop.f32.mrb[0].mxu0
        %v1291 = vadd.f32 0.0, %v1290
        %v1292 = vpop.f32.mrb[0].mxu0
        %v1293 = vpop.f32.mrb[0].mxu0
        %v1294 = vadd.f32 0.0, %v1293
        %v1295 = vpop.f32.mrb[0].mxu0
        %1296 = vmatprep.mubr.bf16.mxu0 0
        %1297 = vmatmul.mubr.bf16.gmra.mrb[0].mxu0 %v910
        %v1298 = vpop.f32.mrb[0].mxu0
        %v1299 = vadd.f32 0.0, %v1298
        %v1300 = vpop.f32.mrb[0].mxu0
        %v1301 = vpop.f32.mrb[0].mxu0
        %v1302 = vadd.f32 0.0, %v1301
        %v1303 = vpop.f32.mrb[0].mxu0
        %1304 = vmatprep.mubr.bf16.mxu0 0
        %1305 = vmatmul.mubr.bf16.gmra.mrb[0].mxu0 %v911
        %v1306 = vpop.f32.mrb[0].mxu0
        %v1307 = vadd.f32 0.0, %v1306
        %v1308 = vpop.f32.mrb[0].mxu0
        %v1309 = vpop.f32.mrb[0].mxu0
        %v1310 = vadd.f32 0.0, %v1309
        %v1311 = vpop.f32.mrb[0].mxu0
        %1312 = vmatprep.mubr.bf16.mxu0 0
        %1313 = vmatmul.mubr.bf16.gmra.mrb[0].mxu0 %v912
        %v1314 = vpop.f32.mrb[0].mxu0
        %v1315 = vadd.f32 0.0, %v1314
        %v1316 = vpop.f32.mrb[0].mxu0
        %v1317 = vpop.f32.mrb[0].mxu0
        %v1318 = vadd.f32 0.0, %v1317
        %v1319 = vpop.f32.mrb[0].mxu0
        %1320 = vmatprep.mubr.bf16.mxu0 0
        %1321 = vmatmul.mubr.bf16.gmra.mrb[0].mxu0 %v913
        %v1322 = vpop.f32.mrb[0].mxu0
        %v1323 = vadd.f32 0.0, %v1322
        %v1324 = vpop.f32.mrb[0].mxu0
        %v1325 = vpop.f32.mrb[0].mxu0
        %v1326 = vadd.f32 0.0, %v1325
        %v1327 = vpop.f32.mrb[0].mxu0
        %1328 = vmatprep.mubr.bf16.mxu0 0
        %1329 = vmatmul.mubr.bf16.gmra.mrb[0].mxu0 %v914
        %v1330 = vpop.f32.mrb[0].mxu0
        %v1331 = vadd.f32 0.0, %v1330
        %v1332 = vpop.f32.mrb[0].mxu0
        %v1333 = vpop.f32.mrb[0].mxu0
        %v1334 = vadd.f32 0.0, %v1333
        %v1335 = vpop.f32.mrb[0].mxu0
        %1336 = vmatprep.mubr.bf16.mxu0 0
        %1337 = vmatmul.mubr.bf16.gmra.mrb[0].mxu0 %v915
        %v1338 = vpop.f32.mrb[0].mxu0
        %v1339 = vadd.f32 0.0, %v1338
        %v1340 = vpop.f32.mrb[0].mxu0
        %v1341 = vpop.f32.mrb[0].mxu0
        %v1342 = vadd.f32 0.0, %v1341
        %v1343 = vpop.f32.mrb[0].mxu0
        %1344 = vmatprep.mubr.bf16.mxu0 0
        %1345 = vmatmul.mubr.bf16.gmra.mrb[0].mxu0 %v916
        %v1346 = vpop.f32.mrb[0].mxu0
        %v1347 = vadd.f32 0.0, %v1346
        %v1348 = vpop.f32.mrb[0].mxu0
        %v1349 = vpop.f32.mrb[0].mxu0
        %v1350 = vadd.f32 0.0, %v1349
        %v1351 = vpop.f32.mrb[0].mxu0
        %1352 = vmatprep.mubr.bf16.mxu0 0
        %1353 = vmatmul.mubr.bf16.gmra.mrb[0].mxu0 %v917
        %v1354 = vpop.f32.mrb[0].mxu0
        %v1355 = vadd.f32 0.0, %v1354
        %v1356 = vpop.f32.mrb[0].mxu0
        %v1357 = vpop.f32.mrb[0].mxu0
        %v1358 = vadd.f32 0.0, %v1357
        %v1359 = vpop.f32.mrb[0].mxu0
        %1360 = vmatprep.mubr.bf16.mxu0 0
        %1361 = vmatmul.mubr.bf16.gmra.mrb[0].mxu0 %v918
        %v1362 = vpop.f32.mrb[0].mxu0
        %v1363 = vadd.f32 0.0, %v1362
        %v1364 = vpop.f32.mrb[0].mxu0
        %v1365 = vpop.f32.mrb[0].mxu0
        %v1366 = vadd.f32 0.0, %v1365
        %v1367 = vpop.f32.mrb[0].mxu0
        %1368 = vdwg.mxu0
        %v1369 = vld [vmem:[%s6] sm:$0xf]
        %v1370 = vld [vmem:[%s6 + $0x4] sm:$0xf]
        %v1371 = vld [vmem:[%s6 + $0x8] sm:$0xf]
        %v1372 = vld [vmem:[%s6 + $0xc] sm:$0xf]
        %v1373 = vld [vmem:[%s6 + $0x10] sm:$0xf]
        %v1374 = vld [vmem:[%s6 + $0x14] sm:$0xf]
        %v1375 = vld [vmem:[%s6 + $0x18] sm:$0xf]
        %v1376 = vld [vmem:[%s6 + $0x1c] sm:$0xf]
        %v1377 = vld [vmem:[%s6 + $0x20] sm:$0xf]
        %v1378 = vld [vmem:[%s6 + $0x24] sm:$0xf]
        %v1379 = vld [vmem:[%s6 + $0x28] sm:$0xf]
        %v1380 = vld [vmem:[%s6 + $0x2c] sm:$0xf]
        %v1381 = vld [vmem:[%s6 + $0x30] sm:$0xf]
        %v1382 = vld [vmem:[%s6 + $0x34] sm:$0xf]
        %v1383 = vld [vmem:[%s6 + $0x38] sm:$0xf]
        %v1384 = vld [vmem:[%s6 + $0x3c] sm:$0xf]
        %v1401 = vunpack.c.l.b16 %v1369
        %v1402 = vunpack.c.l.b16 %v1370
        %v1403 = vunpack.c.l.b16 %v1371
        %v1404 = vunpack.c.l.b16 %v1372
        %v1405 = vunpack.c.l.b16 %v1373
        %v1406 = vunpack.c.l.b16 %v1374
        %v1407 = vunpack.c.l.b16 %v1375
        %v1408 = vunpack.c.l.b16 %v1376
        %v1409 = vunpack.c.l.b16 %v1377
        %v1410 = vunpack.c.l.b16 %v1378
        %v1411 = vunpack.c.l.b16 %v1379
        %v1412 = vunpack.c.l.b16 %v1380
        %v1413 = vunpack.c.l.b16 %v1381
        %v1414 = vunpack.c.l.b16 %v1382
        %v1415 = vunpack.c.l.b16 %v1383
        %v1416 = vunpack.c.l.b16 %v1384
        %v1417 = vpack.c.b16 %v1402, %v1401
        %v1418 = vpack.c.b16 %v1404, %v1403
        %v1419 = vpack.c.b16 %v1406, %v1405
        %v1420 = vpack.c.b16 %v1408, %v1407
        %v1421 = vpack.c.b16 %v1410, %v1409
        %v1422 = vpack.c.b16 %v1412, %v1411
        %v1423 = vpack.c.b16 %v1414, %v1413
        %v1424 = vpack.c.b16 %v1416, %v1415
        %1433 = vmatprep.subr.bf16.mxu0 0
        %1434 = vmatpush1.bf16.msra.mxu0 %v1417
        %1435 = vmatprep.subr.bf16.mxu0 0
        %1436 = vmatpush1.bf16.msra.mxu0 %v1418
        %1437 = vmatprep.subr.bf16.mxu0 0
        %1438 = vmatpush1.bf16.msra.mxu0 %v1419
        %1439 = vmatprep.subr.bf16.mxu0 0
        %1440 = vmatpush1.bf16.msra.mxu0 %v1420
        %1441 = vmatprep.subr.bf16.mxu0 0
        %1442 = vmatpush1.bf16.msra.mxu0 %v1421
        %1443 = vmatprep.subr.bf16.mxu0 0
        %1444 = vmatpush1.bf16.msra.mxu0 %v1422
        %1445 = vmatprep.subr.bf16.mxu0 0
        %1446 = vmatpush1.bf16.msra.mxu0 %v1423
        %1447 = vmatprep.subr.bf16.mxu0 0
        %1448 = vmatpush1.bf16.msra.mxu0 %v1424
        %1449 = vmatprep.subr.bf16.mxu0 0
        %1450 = vmatpush1.bf16.msra.mxu0 0
        %1451 = vmatprep.subr.bf16.mxu0 0
        %1452 = vmatpush1.bf16.msra.mxu0 0
        %1453 = vmatprep.subr.bf16.mxu0 0
        %1454 = vmatpush1.bf16.msra.mxu0 0
        %1455 = vmatprep.subr.bf16.mxu0 0
        %1456 = vmatpush1.bf16.msra.mxu0 0
        %1457 = vmatprep.subr.bf16.mxu0 0
        %1458 = vmatpush1.bf16.msra.mxu0 0
        %1459 = vmatprep.subr.bf16.mxu0 0
        %1460 = vmatpush1.bf16.msra.mxu0 0
        %1461 = vmatprep.subr.bf16.mxu0 0
        %1462 = vmatpush1.bf16.msra.mxu0 0
        %1463 = vmatprep.subr.bf16.mxu0 0
        %1464 = vmatpush1.bf16.msra.mxu0 0
        %1465 = vmatprep.mubr.bf16.mxu0 0
        %1466 = vmatmul.mubr.bf16.gmra.mrb[0].mxu0 %v903
        %v1467 = vpop.f32.mrb[0].mxu0
        %v1468 = vadd.f32 0.0, %v1467
        %v1469 = vpop.f32.mrb[0].mxu0
        %v1470 = vpop.f32.mrb[0].mxu0
        %v1471 = vadd.f32 0.0, %v1470
        %v1472 = vpop.f32.mrb[0].mxu0
        %1473 = vmatprep.mubr.bf16.mxu0 0
        %1474 = vmatmul.mubr.bf16.gmra.mrb[0].mxu0 %v904
        %v1475 = vpop.f32.mrb[0].mxu0
        %v1476 = vadd.f32 0.0, %v1475
        %v1477 = vpop.f32.mrb[0].mxu0
        %v1478 = vpop.f32.mrb[0].mxu0
        %v1479 = vadd.f32 0.0, %v1478
        %v1480 = vpop.f32.mrb[0].mxu0
        %1481 = vmatprep.mubr.bf16.mxu0 0
        %1482 = vmatmul.mubr.bf16.gmra.mrb[0].mxu0 %v905
        %v1483 = vpop.f32.mrb[0].mxu0
        %v1484 = vadd.f32 0.0, %v1483
        %v1485 = vpop.f32.mrb[0].mxu0
        %v1486 = vpop.f32.mrb[0].mxu0
        %v1487 = vadd.f32 0.0, %v1486
        %v1488 = vpop.f32.mrb[0].mxu0
        %1489 = vmatprep.mubr.bf16.mxu0 0
        %1490 = vmatmul.mubr.bf16.gmra.mrb[0].mxu0 %v906
        %v1491 = vpop.f32.mrb[0].mxu0
        %v1492 = vadd.f32 0.0, %v1491
        %v1493 = vpop.f32.mrb[0].mxu0
        %v1494 = vpop.f32.mrb[0].mxu0
        %v1495 = vadd.f32 0.0, %v1494
        %v1496 = vpop.f32.mrb[0].mxu0
        %1497 = vmatprep.mubr.bf16.mxu0 0
        %1498 = vmatmul.mubr.bf16.gmra.mrb[0].mxu0 %v907
        %v1499 = vpop.f32.mrb[0].mxu0
        %v1500 = vadd.f32 0.0, %v1499
        %v1501 = vpop.f32.mrb[0].mxu0
        %v1502 = vpop.f32.mrb[0].mxu0
        %v1503 = vadd.f32 0.0, %v1502
        %v1504 = vpop.f32.mrb[0].mxu0
        %1505 = vmatprep.mubr.bf16.mxu0 0
        %1506 = vmatmul.mubr.bf16.gmra.mrb[0].mxu0 %v908
        %v1507 = vpop.f32.mrb[0].mxu0
        %v1508 = vadd.f32 0.0, %v1507
        %v1509 = vpop.f32.mrb[0].mxu0
        %v1510 = vpop.f32.mrb[0].mxu0
        %v1511 = vadd.f32 0.0, %v1510
        %v1512 = vpop.f32.mrb[0].mxu0
        %1513 = vmatprep.mubr.bf16.mxu0 0
        %1514 = vmatmul.mubr.bf16.gmra.mrb[0].mxu0 %v909
        %v1515 = vpop.f32.mrb[0].mxu0
        %v1516 = vadd.f32 0.0, %v1515
        %v1517 = vpop.f32.mrb[0].mxu0
        %v1518 = vpop.f32.mrb[0].mxu0
        %v1519 = vadd.f32 0.0, %v1518
        %v1520 = vpop.f32.mrb[0].mxu0
        %1521 = vmatprep.mubr.bf16.mxu0 0
        %1522 = vmatmul.mubr.bf16.gmra.mrb[0].mxu0 %v910
        %v1523 = vpop.f32.mrb[0].mxu0
        %v1524 = vadd.f32 0.0, %v1523
        %v1525 = vpop.f32.mrb[0].mxu0
        %v1526 = vpop.f32.mrb[0].mxu0
        %v1527 = vadd.f32 0.0, %v1526
        %v1528 = vpop.f32.mrb[0].mxu0
        %1529 = vmatprep.mubr.bf16.mxu0 0
        %1530 = vmatmul.mubr.bf16.gmra.mrb[0].mxu0 %v911
        %v1531 = vpop.f32.mrb[0].mxu0
        %v1532 = vadd.f32 0.0, %v1531
        %v1533 = vpop.f32.mrb[0].mxu0
        %v1534 = vpop.f32.mrb[0].mxu0
        %v1535 = vadd.f32 0.0, %v1534
        %v1536 = vpop.f32.mrb[0].mxu0
        %1537 = vmatprep.mubr.bf16.mxu0 0
        %1538 = vmatmul.mubr.bf16.gmra.mrb[0].mxu0 %v912
        %v1539 = vpop.f32.mrb[0].mxu0
        %v1540 = vadd.f32 0.0, %v1539
        %v1541 = vpop.f32.mrb[0].mxu0
        %v1542 = vpop.f32.mrb[0].mxu0
        %v1543 = vadd.f32 0.0, %v1542
        %v1544 = vpop.f32.mrb[0].mxu0
        %1545 = vmatprep.mubr.bf16.mxu0 0
        %1546 = vmatmul.mubr.bf16.gmra.mrb[0].mxu0 %v913
        %v1547 = vpop.f32.mrb[0].mxu0
        %v1548 = vadd.f32 0.0, %v1547
        %v1549 = vpop.f32.mrb[0].mxu0
        %v1550 = vpop.f32.mrb[0].mxu0
        %v1551 = vadd.f32 0.0, %v1550
        %v1552 = vpop.f32.mrb[0].mxu0
        %1553 = vmatprep.mubr.bf16.mxu0 0
        %1554 = vmatmul.mubr.bf16.gmra.mrb[0].mxu0 %v914
        %v1555 = vpop.f32.mrb[0].mxu0
        %v1556 = vadd.f32 0.0, %v1555
        %v1557 = vpop.f32.mrb[0].mxu0
        %v1558 = vpop.f32.mrb[0].mxu0
        %v1559 = vadd.f32 0.0, %v1558
        %v1560 = vpop.f32.mrb[0].mxu0
        %1561 = vmatprep.mubr.bf16.mxu0 0
        %1562 = vmatmul.mubr.bf16.gmra.mrb[0].mxu0 %v915
        %v1563 = vpop.f32.mrb[0].mxu0
        %v1564 = vadd.f32 0.0, %v1563
        %v1565 = vpop.f32.mrb[0].mxu0
        %v1566 = vpop.f32.mrb[0].mxu0
        %v1567 = vadd.f32 0.0, %v1566
        %v1568 = vpop.f32.mrb[0].mxu0
        %1569 = vmatprep.mubr.bf16.mxu0 0
        %1570 = vmatmul.mubr.bf16.gmra.mrb[0].mxu0 %v916
        %v1571 = vpop.f32.mrb[0].mxu0
        %v1572 = vadd.f32 0.0, %v1571
        %v1573 = vpop.f32.mrb[0].mxu0
        %v1574 = vpop.f32.mrb[0].mxu0
        %v1575 = vadd.f32 0.0, %v1574
        %v1576 = vpop.f32.mrb[0].mxu0
        %1577 = vmatprep.mubr.bf16.mxu0 0
        %1578 = vmatmul.mubr.bf16.gmra.mrb[0].mxu0 %v917
        %v1579 = vpop.f32.mrb[0].mxu0
        %v1580 = vadd.f32 0.0, %v1579
        %v1581 = vpop.f32.mrb[0].mxu0
        %v1582 = vpop.f32.mrb[0].mxu0
        %v1583 = vadd.f32 0.0, %v1582
        %v1584 = vpop.f32.mrb[0].mxu0
        %1585 = vmatprep.mubr.bf16.mxu0 0
        %1586 = vmatmul.mubr.bf16.gmra.mrb[0].mxu0 %v918
        %v1587 = vpop.f32.mrb[0].mxu0
        %v1588 = vadd.f32 0.0, %v1587
        %v1589 = vpop.f32.mrb[0].mxu0
        %v1590 = vpop.f32.mrb[0].mxu0
        %v1591 = vadd.f32 0.0, %v1590
        %v1592 = vpop.f32.mrb[0].mxu0
        %1593 = vdwg.mxu0
        %v1594 = vld [vmem:[%s7] sm:$0xf]
        %v1595 = vld [vmem:[%s7 + $0x4] sm:$0xf]
        %v1596 = vld [vmem:[%s7 + $0x8] sm:$0xf]
        %v1597 = vld [vmem:[%s7 + $0xc] sm:$0xf]
        %v1598 = vld [vmem:[%s7 + $0x10] sm:$0xf]
        %v1599 = vld [vmem:[%s7 + $0x14] sm:$0xf]
        %v1600 = vld [vmem:[%s7 + $0x18] sm:$0xf]
        %v1601 = vld [vmem:[%s7 + $0x1c] sm:$0xf]
        %v1602 = vld [vmem:[%s7 + $0x20] sm:$0xf]
        %v1603 = vld [vmem:[%s7 + $0x24] sm:$0xf]
        %v1604 = vld [vmem:[%s7 + $0x28] sm:$0xf]
        %v1605 = vld [vmem:[%s7 + $0x2c] sm:$0xf]
        %v1606 = vld [vmem:[%s7 + $0x30] sm:$0xf]
        %v1607 = vld [vmem:[%s7 + $0x34] sm:$0xf]
        %v1608 = vld [vmem:[%s7 + $0x38] sm:$0xf]
        %v1609 = vld [vmem:[%s7 + $0x3c] sm:$0xf]
        %v1610 = vld [vmem:[%s8] sm:$0x1]
        %v1612 = vlaneseq
        %v1613 = vshrl.u32 %v1612, 7
        %v1614 = vsub.s32 0, %v1613
        %v1615 = vrot.slane %v1610, %v1614
        %v1633 = vunpack.c.l.b16 %v1594
        %v1634 = vunpack.c.l.b16 %v1595
        %v1635 = vunpack.c.l.b16 %v1596
        %v1636 = vunpack.c.l.b16 %v1597
        %v1637 = vunpack.c.l.b16 %v1598
        %v1638 = vunpack.c.l.b16 %v1599
        %v1639 = vunpack.c.l.b16 %v1600
        %v1640 = vunpack.c.l.b16 %v1601
        %v1641 = vunpack.c.l.b16 %v1602
        %v1642 = vunpack.c.l.b16 %v1603
        %v1643 = vunpack.c.l.b16 %v1604
        %v1644 = vunpack.c.l.b16 %v1605
        %v1645 = vunpack.c.l.b16 %v1606
        %v1646 = vunpack.c.l.b16 %v1607
        %v1647 = vunpack.c.l.b16 %v1608
        %v1648 = vunpack.c.l.b16 %v1609
        %v1649 = vpack.c.b16 %v1634, %v1633
        %v1650 = vpack.c.b16 %v1636, %v1635
        %v1651 = vpack.c.b16 %v1638, %v1637
        %v1652 = vpack.c.b16 %v1640, %v1639
        %v1653 = vpack.c.b16 %v1642, %v1641
        %v1654 = vpack.c.b16 %v1644, %v1643
        %v1655 = vpack.c.b16 %v1646, %v1645
        %v1656 = vpack.c.b16 %v1648, %v1647
        %1665 = vmatprep.subr.bf16.mxu0 0
        %1666 = vmatpush1.bf16.msra.mxu0 %v1649
        %1667 = vmatprep.subr.bf16.mxu0 0
        %1668 = vmatpush1.bf16.msra.mxu0 %v1650
        %1669 = vmatprep.subr.bf16.mxu0 0
        %1670 = vmatpush1.bf16.msra.mxu0 %v1651
        %1671 = vmatprep.subr.bf16.mxu0 0
        %1672 = vmatpush1.bf16.msra.mxu0 %v1652
        %1673 = vmatprep.subr.bf16.mxu0 0
        %1674 = vmatpush1.bf16.msra.mxu0 %v1653
        %1675 = vmatprep.subr.bf16.mxu0 0
        %1676 = vmatpush1.bf16.msra.mxu0 %v1654
        %1677 = vmatprep.subr.bf16.mxu0 0
        %1678 = vmatpush1.bf16.msra.mxu0 %v1655
        %1679 = vmatprep.subr.bf16.mxu0 0
        %1680 = vmatpush1.bf16.msra.mxu0 %v1656
        %1681 = vmatprep.subr.bf16.mxu0 0
        %1682 = vmatpush1.bf16.msra.mxu0 0
        %1683 = vmatprep.subr.bf16.mxu0 0
        %1684 = vmatpush1.bf16.msra.mxu0 0
        %1685 = vmatprep.subr.bf16.mxu0 0
        %1686 = vmatpush1.bf16.msra.mxu0 0
        %1687 = vmatprep.subr.bf16.mxu0 0
        %1688 = vmatpush1.bf16.msra.mxu0 0
        %1689 = vmatprep.subr.bf16.mxu0 0
        %1690 = vmatpush1.bf16.msra.mxu0 0
        %1691 = vmatprep.subr.bf16.mxu0 0
        %1692 = vmatpush1.bf16.msra.mxu0 0
        %1693 = vmatprep.subr.bf16.mxu0 0
        %1694 = vmatpush1.bf16.msra.mxu0 0
        %1695 = vmatprep.subr.bf16.mxu0 0
        %1696 = vmatpush1.bf16.msra.mxu0 0
        %1697 = vmatprep.mubr.bf16.mxu0 0
        %1698 = vmatmul.mubr.bf16.gmra.mrb[0].mxu0 %v903
        %v1699 = vpop.f32.mrb[0].mxu0
        %v1700 = vadd.f32 %v1615, %v1699
        %v1701 = vpop.f32.mrb[0].mxu0
        %v1702 = vpop.f32.mrb[0].mxu0
        %v1703 = vadd.f32 %v1615, %v1702
        %v1704 = vpop.f32.mrb[0].mxu0
        %1705 = vmatprep.mubr.bf16.mxu0 0
        %1706 = vmatmul.mubr.bf16.gmra.mrb[0].mxu0 %v904
        %v1707 = vpop.f32.mrb[0].mxu0
        %v1708 = vadd.f32 %v1615, %v1707
        %v1709 = vpop.f32.mrb[0].mxu0
        %v1710 = vpop.f32.mrb[0].mxu0
        %v1711 = vadd.f32 %v1615, %v1710
        %v1712 = vpop.f32.mrb[0].mxu0
        %1713 = vmatprep.mubr.bf16.mxu0 0
        %1714 = vmatmul.mubr.bf16.gmra.mrb[0].mxu0 %v905
        %v1715 = vpop.f32.mrb[0].mxu0
        %v1716 = vadd.f32 %v1615, %v1715
        %v1717 = vpop.f32.mrb[0].mxu0
        %v1718 = vpop.f32.mrb[0].mxu0
        %v1719 = vadd.f32 %v1615, %v1718
        %v1720 = vpop.f32.mrb[0].mxu0
        %1721 = vmatprep.mubr.bf16.mxu0 0
        %1722 = vmatmul.mubr.bf16.gmra.mrb[0].mxu0 %v906
        %v1723 = vpop.f32.mrb[0].mxu0
        %v1724 = vadd.f32 %v1615, %v1723
        %v1725 = vpop.f32.mrb[0].mxu0
        %v1726 = vpop.f32.mrb[0].mxu0
        %v1727 = vadd.f32 %v1615, %v1726
        %v1728 = vpop.f32.mrb[0].mxu0
        %1729 = vmatprep.mubr.bf16.mxu0 0
        %1730 = vmatmul.mubr.bf16.gmra.mrb[0].mxu0 %v907
        %v1731 = vpop.f32.mrb[0].mxu0
        %v1732 = vadd.f32 %v1615, %v1731
        %v1733 = vpop.f32.mrb[0].mxu0
        %v1734 = vpop.f32.mrb[0].mxu0
        %v1735 = vadd.f32 %v1615, %v1734
        %v1736 = vpop.f32.mrb[0].mxu0
        %1737 = vmatprep.mubr.bf16.mxu0 0
        %1738 = vmatmul.mubr.bf16.gmra.mrb[0].mxu0 %v908
        %v1739 = vpop.f32.mrb[0].mxu0
        %v1740 = vadd.f32 %v1615, %v1739
        %v1741 = vpop.f32.mrb[0].mxu0
        %v1742 = vpop.f32.mrb[0].mxu0
        %v1743 = vadd.f32 %v1615, %v1742
        %v1744 = vpop.f32.mrb[0].mxu0
        %1745 = vmatprep.mubr.bf16.mxu0 0
        %1746 = vmatmul.mubr.bf16.gmra.mrb[0].mxu0 %v909
        %v1747 = vpop.f32.mrb[0].mxu0
        %v1748 = vadd.f32 %v1615, %v1747
        %v1749 = vpop.f32.mrb[0].mxu0
        %v1750 = vpop.f32.mrb[0].mxu0
        %v1751 = vadd.f32 %v1615, %v1750
        %v1752 = vpop.f32.mrb[0].mxu0
        %1753 = vmatprep.mubr.bf16.mxu0 0
        %1754 = vmatmul.mubr.bf16.gmra.mrb[0].mxu0 %v910
        %v1755 = vpop.f32.mrb[0].mxu0
        %v1756 = vadd.f32 %v1615, %v1755
        %v1757 = vpop.f32.mrb[0].mxu0
        %v1758 = vpop.f32.mrb[0].mxu0
        %v1759 = vadd.f32 %v1615, %v1758
        %v1760 = vpop.f32.mrb[0].mxu0
        %1761 = vmatprep.mubr.bf16.mxu0 0
        %1762 = vmatmul.mubr.bf16.gmra.mrb[0].mxu0 %v911
        %v1763 = vpop.f32.mrb[0].mxu0
        %v1764 = vadd.f32 %v1615, %v1763
        %v1765 = vpop.f32.mrb[0].mxu0
        %v1766 = vpop.f32.mrb[0].mxu0
        %v1767 = vadd.f32 %v1615, %v1766
        %v1768 = vpop.f32.mrb[0].mxu0
        %1769 = vmatprep.mubr.bf16.mxu0 0
        %1770 = vmatmul.mubr.bf16.gmra.mrb[0].mxu0 %v912
        %v1771 = vpop.f32.mrb[0].mxu0
        %v1772 = vadd.f32 %v1615, %v1771
        %v1773 = vpop.f32.mrb[0].mxu0
        %v1774 = vpop.f32.mrb[0].mxu0
        %v1775 = vadd.f32 %v1615, %v1774
        %v1776 = vpop.f32.mrb[0].mxu0
        %1777 = vmatprep.mubr.bf16.mxu0 0
        %1778 = vmatmul.mubr.bf16.gmra.mrb[0].mxu0 %v913
        %v1779 = vpop.f32.mrb[0].mxu0
        %v1780 = vadd.f32 %v1615, %v1779
        %v1781 = vpop.f32.mrb[0].mxu0
        %v1782 = vpop.f32.mrb[0].mxu0
        %v1783 = vadd.f32 %v1615, %v1782
        %v1784 = vpop.f32.mrb[0].mxu0
        %1785 = vmatprep.mubr.bf16.mxu0 0
        %1786 = vmatmul.mubr.bf16.gmra.mrb[0].mxu0 %v914
        %v1787 = vpop.f32.mrb[0].mxu0
        %v1788 = vadd.f32 %v1615, %v1787
        %v1789 = vpop.f32.mrb[0].mxu0
        %v1790 = vpop.f32.mrb[0].mxu0
        %v1791 = vadd.f32 %v1615, %v1790
        %v1792 = vpop.f32.mrb[0].mxu0
        %1793 = vmatprep.mubr.bf16.mxu0 0
        %1794 = vmatmul.mubr.bf16.gmra.mrb[0].mxu0 %v915
        %v1795 = vpop.f32.mrb[0].mxu0
        %v1796 = vadd.f32 %v1615, %v1795
        %v1797 = vpop.f32.mrb[0].mxu0
        %v1798 = vpop.f32.mrb[0].mxu0
        %v1799 = vadd.f32 %v1615, %v1798
        %v1800 = vpop.f32.mrb[0].mxu0
        %1801 = vmatprep.mubr.bf16.mxu0 0
        %1802 = vmatmul.mubr.bf16.gmra.mrb[0].mxu0 %v916
        %v1803 = vpop.f32.mrb[0].mxu0
        %v1804 = vadd.f32 %v1615, %v1803
        %v1805 = vpop.f32.mrb[0].mxu0
        %v1806 = vpop.f32.mrb[0].mxu0
        %v1807 = vadd.f32 %v1615, %v1806
        %v1808 = vpop.f32.mrb[0].mxu0
        %1809 = vmatprep.mubr.bf16.mxu0 0
        %1810 = vmatmul.mubr.bf16.gmra.mrb[0].mxu0 %v917
        %v1811 = vpop.f32.mrb[0].mxu0
        %v1812 = vadd.f32 %v1615, %v1811
        %v1813 = vpop.f32.mrb[0].mxu0
        %v1814 = vpop.f32.mrb[0].mxu0
        %v1815 = vadd.f32 %v1615, %v1814
        %v1816 = vpop.f32.mrb[0].mxu0
        %1817 = vmatprep.mubr.bf16.mxu0 0
        %1818 = vmatmul.mubr.bf16.gmra.mrb[0].mxu0 %v918
        %v1819 = vpop.f32.mrb[0].mxu0
        %v1820 = vadd.f32 %v1615, %v1819
        %v1821 = vpop.f32.mrb[0].mxu0
        %v1822 = vpop.f32.mrb[0].mxu0
        %v1823 = vadd.f32 %v1615, %v1822
        %v1824 = vpop.f32.mrb[0].mxu0
        %1825 = vdwg.mxu0
        %v1826 = vxor.u32 %v1700, 2147483648
        %v1827 = vxor.u32 %v1703, 2147483648
        %v1828 = vxor.u32 %v1708, 2147483648
        %v1829 = vxor.u32 %v1711, 2147483648
        %v1830 = vxor.u32 %v1716, 2147483648
        %v1831 = vxor.u32 %v1719, 2147483648
        %v1832 = vxor.u32 %v1724, 2147483648
        %v1833 = vxor.u32 %v1727, 2147483648
        %v1834 = vxor.u32 %v1732, 2147483648
        %v1835 = vxor.u32 %v1735, 2147483648
        %v1836 = vxor.u32 %v1740, 2147483648
        %v1837 = vxor.u32 %v1743, 2147483648
        %v1838 = vxor.u32 %v1748, 2147483648
        %v1839 = vxor.u32 %v1751, 2147483648
        %v1840 = vxor.u32 %v1756, 2147483648
        %v1841 = vxor.u32 %v1759, 2147483648
        %v1842 = vxor.u32 %v1764, 2147483648
        %v1843 = vxor.u32 %v1767, 2147483648
        %v1844 = vxor.u32 %v1772, 2147483648
        %v1845 = vxor.u32 %v1775, 2147483648
        %v1846 = vxor.u32 %v1780, 2147483648
        %v1847 = vxor.u32 %v1783, 2147483648
        %v1848 = vxor.u32 %v1788, 2147483648
        %v1849 = vxor.u32 %v1791, 2147483648
        %v1850 = vxor.u32 %v1796, 2147483648
        %v1851 = vxor.u32 %v1799, 2147483648
        %v1852 = vxor.u32 %v1804, 2147483648
        %v1853 = vxor.u32 %v1807, 2147483648
        %v1854 = vxor.u32 %v1812, 2147483648
        %v1855 = vxor.u32 %v1815, 2147483648
        %v1856 = vxor.u32 %v1820, 2147483648
        %v1857 = vxor.u32 %v1823, 2147483648
        %v1858 = vmul.f32 %v1826, 1.442695
        %v1859 = vpow.pop %v1858
        %v1860 = vmul.f32 %v1827, 1.442695
        %v1861 = vpow.pop %v1860
        %v1862 = vmul.f32 %v1828, 1.442695
        %v1863 = vpow.pop %v1862
        %v1864 = vmul.f32 %v1829, 1.442695
        %v1865 = vpow.pop %v1864
        %v1866 = vmul.f32 %v1830, 1.442695
        %v1867 = vpow.pop %v1866
        %v1868 = vmul.f32 %v1831, 1.442695
        %v1869 = vpow.pop %v1868
        %v1870 = vmul.f32 %v1832, 1.442695
        %v1871 = vpow.pop %v1870
        %v1872 = vmul.f32 %v1833, 1.442695
        %v1873 = vpow.pop %v1872
        %v1874 = vmul.f32 %v1834, 1.442695
        %v1875 = vpow.pop %v1874
        %v1876 = vmul.f32 %v1835, 1.442695
        %v1877 = vpow.pop %v1876
        %v1878 = vmul.f32 %v1836, 1.442695
        %v1879 = vpow.pop %v1878
        %v1880 = vmul.f32 %v1837, 1.442695
        %v1881 = vpow.pop %v1880
        %v1882 = vmul.f32 %v1838, 1.442695
        %v1883 = vpow.pop %v1882
        %v1884 = vmul.f32 %v1839, 1.442695
        %v1885 = vpow.pop %v1884
        %v1886 = vmul.f32 %v1840, 1.442695
        %v1887 = vpow.pop %v1886
        %v1888 = vmul.f32 %v1841, 1.442695
        %v1889 = vpow.pop %v1888
        %v1890 = vmul.f32 %v1842, 1.442695
        %v1891 = vpow.pop %v1890
        %v1892 = vmul.f32 %v1843, 1.442695
        %v1893 = vpow.pop %v1892
        %v1894 = vmul.f32 %v1844, 1.442695
        %v1895 = vpow.pop %v1894
        %v1896 = vmul.f32 %v1845, 1.442695
        %v1897 = vpow.pop %v1896
        %v1898 = vmul.f32 %v1846, 1.442695
        %v1899 = vpow.pop %v1898
        %v1900 = vmul.f32 %v1847, 1.442695
        %v1901 = vpow.pop %v1900
        %v1902 = vmul.f32 %v1848, 1.442695
        %v1903 = vpow.pop %v1902
        %v1904 = vmul.f32 %v1849, 1.442695
        %v1905 = vpow.pop %v1904
        %v1906 = vmul.f32 %v1850, 1.442695
        %v1907 = vpow.pop %v1906
        %v1908 = vmul.f32 %v1851, 1.442695
        %v1909 = vpow.pop %v1908
        %v1910 = vmul.f32 %v1852, 1.442695
        %v1911 = vpow.pop %v1910
        %v1912 = vmul.f32 %v1853, 1.442695
        %v1913 = vpow.pop %v1912
        %v1914 = vmul.f32 %v1854, 1.442695
        %v1915 = vpow.pop %v1914
        %v1916 = vmul.f32 %v1855, 1.442695
        %v1917 = vpow.pop %v1916
        %v1918 = vmul.f32 %v1856, 1.442695
        %v1919 = vpow.pop %v1918
        %v1920 = vmul.f32 %v1857, 1.442695
        %v1921 = vpow.pop %v1920
        %v1922 = vadd.f32 %v1859, 1.0
        %v1923 = vadd.f32 %v1861, 1.0
        %v1924 = vadd.f32 %v1863, 1.0
        %v1925 = vadd.f32 %v1865, 1.0
        %v1926 = vadd.f32 %v1867, 1.0
        %v1927 = vadd.f32 %v1869, 1.0
        %v1928 = vadd.f32 %v1871, 1.0
        %v1929 = vadd.f32 %v1873, 1.0
        %v1930 = vadd.f32 %v1875, 1.0
        %v1931 = vadd.f32 %v1877, 1.0
        %v1932 = vadd.f32 %v1879, 1.0
        %v1933 = vadd.f32 %v1881, 1.0
        %v1934 = vadd.f32 %v1883, 1.0
        %v1935 = vadd.f32 %v1885, 1.0
        %v1936 = vadd.f32 %v1887, 1.0
        %v1937 = vadd.f32 %v1889, 1.0
        %v1938 = vadd.f32 %v1891, 1.0
        %v1939 = vadd.f32 %v1893, 1.0
        %v1940 = vadd.f32 %v1895, 1.0
        %v1941 = vadd.f32 %v1897, 1.0
        %v1942 = vadd.f32 %v1899, 1.0
        %v1943 = vadd.f32 %v1901, 1.0
        %v1944 = vadd.f32 %v1903, 1.0
        %v1945 = vadd.f32 %v1905, 1.0
        %v1946 = vadd.f32 %v1907, 1.0
        %v1947 = vadd.f32 %v1909, 1.0
        %v1948 = vadd.f32 %v1911, 1.0
        %v1949 = vadd.f32 %v1913, 1.0
        %v1950 = vadd.f32 %v1915, 1.0
        %v1951 = vadd.f32 %v1917, 1.0
        %v1952 = vadd.f32 %v1919, 1.0
        %v1953 = vadd.f32 %v1921, 1.0
        %v1954 = vrcp.pop %v1922
        %v1955 = vmul.f32 1.0, %v1954
        %v1956 = vrcp.pop %v1923
        %v1957 = vmul.f32 1.0, %v1956
        %v1958 = vrcp.pop %v1924
        %v1959 = vmul.f32 1.0, %v1958
        %v1960 = vrcp.pop %v1925
        %v1961 = vmul.f32 1.0, %v1960
        %v1962 = vrcp.pop %v1926
        %v1963 = vmul.f32 1.0, %v1962
        %v1964 = vrcp.pop %v1927
        %v1965 = vmul.f32 1.0, %v1964
        %v1966 = vrcp.pop %v1928
        %v1967 = vmul.f32 1.0, %v1966
        %v1968 = vrcp.pop %v1929
        %v1969 = vmul.f32 1.0, %v1968
        %v1970 = vrcp.pop %v1930
        %v1971 = vmul.f32 1.0, %v1970
        %v1972 = vrcp.pop %v1931
        %v1973 = vmul.f32 1.0, %v1972
        %v1974 = vrcp.pop %v1932
        %v1975 = vmul.f32 1.0, %v1974
        %v1976 = vrcp.pop %v1933
        %v1977 = vmul.f32 1.0, %v1976
        %v1978 = vrcp.pop %v1934
        %v1979 = vmul.f32 1.0, %v1978
        %v1980 = vrcp.pop %v1935
        %v1981 = vmul.f32 1.0, %v1980
        %v1982 = vrcp.pop %v1936
        %v1983 = vmul.f32 1.0, %v1982
        %v1984 = vrcp.pop %v1937
        %v1985 = vmul.f32 1.0, %v1984
        %v1986 = vrcp.pop %v1938
        %v1987 = vmul.f32 1.0, %v1986
        %v1988 = vrcp.pop %v1939
        %v1989 = vmul.f32 1.0, %v1988
        %v1990 = vrcp.pop %v1940
        %v1991 = vmul.f32 1.0, %v1990
        %v1992 = vrcp.pop %v1941
        %v1993 = vmul.f32 1.0, %v1992
        %v1994 = vrcp.pop %v1942
        %v1995 = vmul.f32 1.0, %v1994
        %v1996 = vrcp.pop %v1943
        %v1997 = vmul.f32 1.0, %v1996
        %v1998 = vrcp.pop %v1944
        %v1999 = vmul.f32 1.0, %v1998
        %v2000 = vrcp.pop %v1945
        %v2001 = vmul.f32 1.0, %v2000
        %v2002 = vrcp.pop %v1946
        %v2003 = vmul.f32 1.0, %v2002
        %v2004 = vrcp.pop %v1947
        %v2005 = vmul.f32 1.0, %v2004
        %v2006 = vrcp.pop %v1948
        %v2007 = vmul.f32 1.0, %v2006
        %v2008 = vrcp.pop %v1949
        %v2009 = vmul.f32 1.0, %v2008
        %v2010 = vrcp.pop %v1950
        %v2011 = vmul.f32 1.0, %v2010
        %v2012 = vrcp.pop %v1951
        %v2013 = vmul.f32 1.0, %v2012
        %v2014 = vrcp.pop %v1952
        %v2015 = vmul.f32 1.0, %v2014
        %v2016 = vrcp.pop %v1953
        %v2017 = vmul.f32 1.0, %v2016
        %v2018 = vmul.f32 %v1018, 0.17677669
        %v2019 = vmul.f32 %v1021, 0.17677669
        %v2020 = vmul.f32 %v1026, 0.17677669
        %v2021 = vmul.f32 %v1029, 0.17677669
        %v2022 = vmul.f32 %v1034, 0.17677669
        %v2023 = vmul.f32 %v1037, 0.17677669
        %v2024 = vmul.f32 %v1042, 0.17677669
        %v2025 = vmul.f32 %v1045, 0.17677669
        %v2026 = vmul.f32 %v1050, 0.17677669
        %v2027 = vmul.f32 %v1053, 0.17677669
        %v2028 = vmul.f32 %v1058, 0.17677669
        %v2029 = vmul.f32 %v1061, 0.17677669
        %v2030 = vmul.f32 %v1066, 0.17677669
        %v2031 = vmul.f32 %v1069, 0.17677669
        %v2032 = vmul.f32 %v1074, 0.17677669
        %v2033 = vmul.f32 %v1077, 0.17677669
        %v2034 = vmul.f32 %v1082, 0.17677669
        %v2035 = vmul.f32 %v1085, 0.17677669
        %v2036 = vmul.f32 %v1090, 0.17677669
        %v2037 = vmul.f32 %v1093, 0.17677669
        %v2038 = vmul.f32 %v1098, 0.17677669
        %v2039 = vmul.f32 %v1101, 0.17677669
        %v2040 = vmul.f32 %v1106, 0.17677669
        %v2041 = vmul.f32 %v1109, 0.17677669
        %v2042 = vmul.f32 %v1114, 0.17677669
        %v2043 = vmul.f32 %v1117, 0.17677669
        %v2044 = vmul.f32 %v1122, 0.17677669
        %v2045 = vmul.f32 %v1125, 0.17677669
        %v2046 = vmul.f32 %v1130, 0.17677669
        %v2047 = vmul.f32 %v1133, 0.17677669
        %v2048 = vmul.f32 %v1138, 0.17677669
        %v2049 = vmul.f32 %v1141, 0.17677669
        %v2050 = vpack.c.bf16 %v2019, %v2018
        %v2051 = vpack.c.bf16 %v2021, %v2020
        %v2052 = vpack.c.bf16 %v2023, %v2022
        %v2053 = vpack.c.bf16 %v2025, %v2024
        %v2054 = vpack.c.bf16 %v2027, %v2026
        %v2055 = vpack.c.bf16 %v2029, %v2028
        %v2056 = vpack.c.bf16 %v2031, %v2030
        %v2057 = vpack.c.bf16 %v2033, %v2032
        %v2058 = vpack.c.bf16 %v2035, %v2034
        %v2059 = vpack.c.bf16 %v2037, %v2036
        %v2060 = vpack.c.bf16 %v2039, %v2038
        %v2061 = vpack.c.bf16 %v2041, %v2040
        %v2062 = vpack.c.bf16 %v2043, %v2042
        %v2063 = vpack.c.bf16 %v2045, %v2044
        %v2064 = vpack.c.bf16 %v2047, %v2046
        %v2065 = vpack.c.bf16 %v2049, %v2048
        %v2066 = vpack.c.bf16 %v1246, %v1243
        %v2067 = vpack.c.bf16 %v1254, %v1251
        %v2068 = vpack.c.bf16 %v1262, %v1259
        %v2069 = vpack.c.bf16 %v1270, %v1267
        %v2070 = vpack.c.bf16 %v1278, %v1275
        %v2071 = vpack.c.bf16 %v1286, %v1283
        %v2072 = vpack.c.bf16 %v1294, %v1291
        %v2073 = vpack.c.bf16 %v1302, %v1299
        %v2074 = vpack.c.bf16 %v1310, %v1307
        %v2075 = vpack.c.bf16 %v1318, %v1315
        %v2076 = vpack.c.bf16 %v1326, %v1323
        %v2077 = vpack.c.bf16 %v1334, %v1331
        %v2078 = vpack.c.bf16 %v1342, %v1339
        %v2079 = vpack.c.bf16 %v1350, %v1347
        %v2080 = vpack.c.bf16 %v1358, %v1355
        %v2081 = vpack.c.bf16 %v1366, %v1363
        %v2082 = vpack.c.bf16 %v1471, %v1468
        %v2083 = vpack.c.bf16 %v1479, %v1476
        %v2084 = vpack.c.bf16 %v1487, %v1484
        %v2085 = vpack.c.bf16 %v1495, %v1492
        %v2086 = vpack.c.bf16 %v1503, %v1500
        %v2087 = vpack.c.bf16 %v1511, %v1508
        %v2088 = vpack.c.bf16 %v1519, %v1516
        %v2089 = vpack.c.bf16 %v1527, %v1524
        %v2090 = vpack.c.bf16 %v1535, %v1532
        %v2091 = vpack.c.bf16 %v1543, %v1540
        %v2092 = vpack.c.bf16 %v1551, %v1548
        %v2093 = vpack.c.bf16 %v1559, %v1556
        %v2094 = vpack.c.bf16 %v1567, %v1564
        %v2095 = vpack.c.bf16 %v1575, %v1572
        %v2096 = vpack.c.bf16 %v1583, %v1580
        %v2097 = vpack.c.bf16 %v1591, %v1588
        %v2098 = vld [vmem:[%s437] sm:$0xf]
        %v2099 = vld [vmem:[%s437 + $0x4] sm:$0xf]
        %v2100 = vunpack.c.l.bf16 %v2098
        %v2101 = vunpack.c.l.bf16 %v2099
        %vm2102 = vcmask 261120
        %v2104 = vsel %vm2102, %v2050, 0
        %v2107 = vsel %vm2102, %v2066, 0
        %2109 = vmatprep.subr.bf16.mxu0 0
        %2110 = vmatpush1.bf16.xpose.msra.mxu0 %v2107
        %2111 = vmatprep.subr.bf16.mxu0 0
        %2112 = vmatpush1.bf16.xpose.msra.mxu0 0
        %2113 = vmatprep.subr.bf16.mxu0 0
        %2114 = vmatpush1.bf16.xpose.msra.mxu0 0
        %2115 = vmatprep.subr.bf16.mxu0 0
        %2116 = vmatpush1.bf16.xpose.msra.mxu0 0
        %2117 = vmatprep.subr.bf16.mxu0 0
        %2118 = vmatpush1.bf16.xpose.msra.mxu0 0
        %2119 = vmatprep.subr.bf16.mxu0 0
        %2120 = vmatpush1.bf16.xpose.msra.mxu0 0
        %2121 = vmatprep.subr.bf16.mxu0 0
        %2122 = vmatpush1.bf16.xpose.msra.mxu0 0
        %2123 = vmatprep.subr.bf16.mxu0 0
        %2124 = vmatpush1.bf16.xpose.msra.mxu0 0
        %2125 = vmatprep.subr.bf16.mxu0 0
        %2126 = vmatpush1.bf16.xpose.msra.mxu0 0
        %2127 = vmatprep.subr.bf16.mxu0 0
        %2128 = vmatpush1.bf16.xpose.msra.mxu0 0
        %2129 = vmatprep.subr.bf16.mxu0 0
        %2130 = vmatpush1.bf16.xpose.msra.mxu0 0
        %2131 = vmatprep.subr.bf16.mxu0 0
        %2132 = vmatpush1.bf16.xpose.msra.mxu0 0
        %2133 = vmatprep.subr.bf16.mxu0 0
        %2134 = vmatpush1.bf16.xpose.msra.mxu0 0
        %2135 = vmatprep.subr.bf16.mxu0 0
        %2136 = vmatpush1.bf16.xpose.msra.mxu0 0
        %2137 = vmatprep.subr.bf16.mxu0 0
        %2138 = vmatpush1.bf16.xpose.msra.mxu0 0
        %2139 = vmatprep.subr.bf16.mxu0 0
        %2140 = vmatpush1.bf16.xpose.msra.mxu0 0
        %2141 = vmatprep.mubr.bf16.mxu0 0
        %2142 = vmatmul.mubr.bf16.gmra.mrb[0].mxu0 %v2104
        %v2143 = vpop.f32.mrb[0].mxu0
        %v2144 = vadd.f32 %v2100, %v2143
        %v2145 = vpop.f32.mrb[0].mxu0
        %v2146 = vpop.f32.mrb[0].mxu0
        %v2147 = vadd.f32 %v2101, %v2146
        %v2148 = vpop.f32.mrb[0].mxu0
        %2149 = vdwg.mxu0
        %v2151 = vsel %vm2102, %v2051, 0
        %v2154 = vsel %vm2102, %v2067, 0
        %2156 = vmatprep.subr.bf16.mxu0 0
        %2157 = vmatpush1.bf16.xpose.msra.mxu0 %v2154
        %2158 = vmatprep.subr.bf16.mxu0 0
        %2159 = vmatpush1.bf16.xpose.msra.mxu0 0
        %2160 = vmatprep.subr.bf16.mxu0 0
        %2161 = vmatpush1.bf16.xpose.msra.mxu0 0
        %2162 = vmatprep.subr.bf16.mxu0 0
        %2163 = vmatpush1.bf16.xpose.msra.mxu0 0
        %2164 = vmatprep.subr.bf16.mxu0 0
        %2165 = vmatpush1.bf16.xpose.msra.mxu0 0
        %2166 = vmatprep.subr.bf16.mxu0 0
        %2167 = vmatpush1.bf16.xpose.msra.mxu0 0
        %2168 = vmatprep.subr.bf16.mxu0 0
        %2169 = vmatpush1.bf16.xpose.msra.mxu0 0
        %2170 = vmatprep.subr.bf16.mxu0 0
        %2171 = vmatpush1.bf16.xpose.msra.mxu0 0
        %2172 = vmatprep.subr.bf16.mxu0 0
        %2173 = vmatpush1.bf16.xpose.msra.mxu0 0
        %2174 = vmatprep.subr.bf16.mxu0 0
        %2175 = vmatpush1.bf16.xpose.msra.mxu0 0
        %2176 = vmatprep.subr.bf16.mxu0 0
        %2177 = vmatpush1.bf16.xpose.msra.mxu0 0
        %2178 = vmatprep.subr.bf16.mxu0 0
        %2179 = vmatpush1.bf16.xpose.msra.mxu0 0
        %2180 = vmatprep.subr.bf16.mxu0 0
        %2181 = vmatpush1.bf16.xpose.msra.mxu0 0
        %2182 = vmatprep.subr.bf16.mxu0 0
        %2183 = vmatpush1.bf16.xpose.msra.mxu0 0
        %2184 = vmatprep.subr.bf16.mxu0 0
        %2185 = vmatpush1.bf16.xpose.msra.mxu0 0
        %2186 = vmatprep.subr.bf16.mxu0 0
        %2187 = vmatpush1.bf16.xpose.msra.mxu0 0
        %2188 = vmatprep.mubr.bf16.mxu0 0
        %2189 = vmatmul.mubr.bf16.gmra.mrb[0].mxu0 %v2151
        %v2190 = vpop.f32.mrb[0].mxu0
        %v2191 = vadd.f32 %v2100, %v2190
        %v2192 = vpop.f32.mrb[0].mxu0
        %v2193 = vpop.f32.mrb[0].mxu0
        %v2194 = vadd.f32 %v2101, %v2193
        %v2195 = vpop.f32.mrb[0].mxu0
        %2196 = vdwg.mxu0
        %v2198 = vsel %vm2102, %v2052, 0
        %v2201 = vsel %vm2102, %v2068, 0
        %2203 = vmatprep.subr.bf16.mxu0 0
        %2204 = vmatpush1.bf16.xpose.msra.mxu0 %v2201
        %2205 = vmatprep.subr.bf16.mxu0 0
        %2206 = vmatpush1.bf16.xpose.msra.mxu0 0
        %2207 = vmatprep.subr.bf16.mxu0 0
        %2208 = vmatpush1.bf16.xpose.msra.mxu0 0
        %2209 = vmatprep.subr.bf16.mxu0 0
        %2210 = vmatpush1.bf16.xpose.msra.mxu0 0
        %2211 = vmatprep.subr.bf16.mxu0 0
        %2212 = vmatpush1.bf16.xpose.msra.mxu0 0
        %2213 = vmatprep.subr.bf16.mxu0 0
        %2214 = vmatpush1.bf16.xpose.msra.mxu0 0
        %2215 = vmatprep.subr.bf16.mxu0 0
        %2216 = vmatpush1.bf16.xpose.msra.mxu0 0
        %2217 = vmatprep.subr.bf16.mxu0 0
        %2218 = vmatpush1.bf16.xpose.msra.mxu0 0
        %2219 = vmatprep.subr.bf16.mxu0 0
        %2220 = vmatpush1.bf16.xpose.msra.mxu0 0
        %2221 = vmatprep.subr.bf16.mxu0 0
        %2222 = vmatpush1.bf16.xpose.msra.mxu0 0
        %2223 = vmatprep.subr.bf16.mxu0 0
        %2224 = vmatpush1.bf16.xpose.msra.mxu0 0
        %2225 = vmatprep.subr.bf16.mxu0 0
        %2226 = vmatpush1.bf16.xpose.msra.mxu0 0
        %2227 = vmatprep.subr.bf16.mxu0 0
        %2228 = vmatpush1.bf16.xpose.msra.mxu0 0
        %2229 = vmatprep.subr.bf16.mxu0 0
        %2230 = vmatpush1.bf16.xpose.msra.mxu0 0
        %2231 = vmatprep.subr.bf16.mxu0 0
        %2232 = vmatpush1.bf16.xpose.msra.mxu0 0
        %2233 = vmatprep.subr.bf16.mxu0 0
        %2234 = vmatpush1.bf16.xpose.msra.mxu0 0
        %2235 = vmatprep.mubr.bf16.mxu0 0
        %2236 = vmatmul.mubr.bf16.gmra.mrb[0].mxu0 %v2198
        %v2237 = vpop.f32.mrb[0].mxu0
        %v2238 = vadd.f32 %v2100, %v2237
        %v2239 = vpop.f32.mrb[0].mxu0
        %v2240 = vpop.f32.mrb[0].mxu0
        %v2241 = vadd.f32 %v2101, %v2240
        %v2242 = vpop.f32.mrb[0].mxu0
        %2243 = vdwg.mxu0
        %v2245 = vsel %vm2102, %v2053, 0
        %v2248 = vsel %vm2102, %v2069, 0
        %2250 = vmatprep.subr.bf16.mxu0 0
        %2251 = vmatpush1.bf16.xpose.msra.mxu0 %v2248
        %2252 = vmatprep.subr.bf16.mxu0 0
        %2253 = vmatpush1.bf16.xpose.msra.mxu0 0
        %2254 = vmatprep.subr.bf16.mxu0 0
        %2255 = vmatpush1.bf16.xpose.msra.mxu0 0
        %2256 = vmatprep.subr.bf16.mxu0 0
        %2257 = vmatpush1.bf16.xpose.msra.mxu0 0
        %2258 = vmatprep.subr.bf16.mxu0 0
        %2259 = vmatpush1.bf16.xpose.msra.mxu0 0
        %2260 = vmatprep.subr.bf16.mxu0 0
        %2261 = vmatpush1.bf16.xpose.msra.mxu0 0
        %2262 = vmatprep.subr.bf16.mxu0 0
        %2263 = vmatpush1.bf16.xpose.msra.mxu0 0
        %2264 = vmatprep.subr.bf16.mxu0 0
        %2265 = vmatpush1.bf16.xpose.msra.mxu0 0
        %2266 = vmatprep.subr.bf16.mxu0 0
        %2267 = vmatpush1.bf16.xpose.msra.mxu0 0
        %2268 = vmatprep.subr.bf16.mxu0 0
        %2269 = vmatpush1.bf16.xpose.msra.mxu0 0
        %2270 = vmatprep.subr.bf16.mxu0 0
        %2271 = vmatpush1.bf16.xpose.msra.mxu0 0
        %2272 = vmatprep.subr.bf16.mxu0 0
        %2273 = vmatpush1.bf16.xpose.msra.mxu0 0
        %2274 = vmatprep.subr.bf16.mxu0 0
        %2275 = vmatpush1.bf16.xpose.msra.mxu0 0
        %2276 = vmatprep.subr.bf16.mxu0 0
        %2277 = vmatpush1.bf16.xpose.msra.mxu0 0
        %2278 = vmatprep.subr.bf16.mxu0 0
        %2279 = vmatpush1.bf16.xpose.msra.mxu0 0
        %2280 = vmatprep.subr.bf16.mxu0 0
        %2281 = vmatpush1.bf16.xpose.msra.mxu0 0
        %2282 = vmatprep.mubr.bf16.mxu0 0
        %2283 = vmatmul.mubr.bf16.gmra.mrb[0].mxu0 %v2245
        %v2284 = vpop.f32.mrb[0].mxu0
        %v2285 = vadd.f32 %v2100, %v2284
        %v2286 = vpop.f32.mrb[0].mxu0
        %v2287 = vpop.f32.mrb[0].mxu0
        %v2288 = vadd.f32 %v2101, %v2287
        %v2289 = vpop.f32.mrb[0].mxu0
        %2290 = vdwg.mxu0
        %v2292 = vsel %vm2102, %v2054, 0
        %v2295 = vsel %vm2102, %v2070, 0
        %2297 = vmatprep.subr.bf16.mxu0 0
        %2298 = vmatpush1.bf16.xpose.msra.mxu0 %v2295
        %2299 = vmatprep.subr.bf16.mxu0 0
        %2300 = vmatpush1.bf16.xpose.msra.mxu0 0
        %2301 = vmatprep.subr.bf16.mxu0 0
        %2302 = vmatpush1.bf16.xpose.msra.mxu0 0
        %2303 = vmatprep.subr.bf16.mxu0 0
        %2304 = vmatpush1.bf16.xpose.msra.mxu0 0
        %2305 = vmatprep.subr.bf16.mxu0 0
        %2306 = vmatpush1.bf16.xpose.msra.mxu0 0
        %2307 = vmatprep.subr.bf16.mxu0 0
        %2308 = vmatpush1.bf16.xpose.msra.mxu0 0
        %2309 = vmatprep.subr.bf16.mxu0 0
        %2310 = vmatpush1.bf16.xpose.msra.mxu0 0
        %2311 = vmatprep.subr.bf16.mxu0 0
        %2312 = vmatpush1.bf16.xpose.msra.mxu0 0
        %2313 = vmatprep.subr.bf16.mxu0 0
        %2314 = vmatpush1.bf16.xpose.msra.mxu0 0
        %2315 = vmatprep.subr.bf16.mxu0 0
        %2316 = vmatpush1.bf16.xpose.msra.mxu0 0
        %2317 = vmatprep.subr.bf16.mxu0 0
        %2318 = vmatpush1.bf16.xpose.msra.mxu0 0
        %2319 = vmatprep.subr.bf16.mxu0 0
        %2320 = vmatpush1.bf16.xpose.msra.mxu0 0
        %2321 = vmatprep.subr.bf16.mxu0 0
        %2322 = vmatpush1.bf16.xpose.msra.mxu0 0
        %2323 = vmatprep.subr.bf16.mxu0 0
        %2324 = vmatpush1.bf16.xpose.msra.mxu0 0
        %2325 = vmatprep.subr.bf16.mxu0 0
        %2326 = vmatpush1.bf16.xpose.msra.mxu0 0
        %2327 = vmatprep.subr.bf16.mxu0 0
        %2328 = vmatpush1.bf16.xpose.msra.mxu0 0
        %2329 = vmatprep.mubr.bf16.mxu0 0
        %2330 = vmatmul.mubr.bf16.gmra.mrb[0].mxu0 %v2292
        %v2331 = vpop.f32.mrb[0].mxu0
        %v2332 = vadd.f32 %v2100, %v2331
        %v2333 = vpop.f32.mrb[0].mxu0
        %v2334 = vpop.f32.mrb[0].mxu0
        %v2335 = vadd.f32 %v2101, %v2334
        %v2336 = vpop.f32.mrb[0].mxu0
        %2337 = vdwg.mxu0
        %v2339 = vsel %vm2102, %v2055, 0
        %v2342 = vsel %vm2102, %v2071, 0
        %2344 = vmatprep.subr.bf16.mxu0 0
        %2345 = vmatpush1.bf16.xpose.msra.mxu0 %v2342
        %2346 = vmatprep.subr.bf16.mxu0 0
        %2347 = vmatpush1.bf16.xpose.msra.mxu0 0
        %2348 = vmatprep.subr.bf16.mxu0 0
        %2349 = vmatpush1.bf16.xpose.msra.mxu0 0
        %2350 = vmatprep.subr.bf16.mxu0 0
        %2351 = vmatpush1.bf16.xpose.msra.mxu0 0
        %2352 = vmatprep.subr.bf16.mxu0 0
        %2353 = vmatpush1.bf16.xpose.msra.mxu0 0
        %2354 = vmatprep.subr.bf16.mxu0 0
        %2355 = vmatpush1.bf16.xpose.msra.mxu0 0
        %2356 = vmatprep.subr.bf16.mxu0 0
        %2357 = vmatpush1.bf16.xpose.msra.mxu0 0
        %2358 = vmatprep.subr.bf16.mxu0 0
        %2359 = vmatpush1.bf16.xpose.msra.mxu0 0
        %2360 = vmatprep.subr.bf16.mxu0 0
        %2361 = vmatpush1.bf16.xpose.msra.mxu0 0
        %2362 = vmatprep.subr.bf16.mxu0 0
        %2363 = vmatpush1.bf16.xpose.msra.mxu0 0
        %2364 = vmatprep.subr.bf16.mxu0 0
        %2365 = vmatpush1.bf16.xpose.msra.mxu0 0
        %2366 = vmatprep.subr.bf16.mxu0 0
        %2367 = vmatpush1.bf16.xpose.msra.mxu0 0
        %2368 = vmatprep.subr.bf16.mxu0 0
        %2369 = vmatpush1.bf16.xpose.msra.mxu0 0
        %2370 = vmatprep.subr.bf16.mxu0 0
        %2371 = vmatpush1.bf16.xpose.msra.mxu0 0
        %2372 = vmatprep.subr.bf16.mxu0 0
        %2373 = vmatpush1.bf16.xpose.msra.mxu0 0
        %2374 = vmatprep.subr.bf16.mxu0 0
        %2375 = vmatpush1.bf16.xpose.msra.mxu0 0
        %2376 = vmatprep.mubr.bf16.mxu0 0
        %2377 = vmatmul.mubr.bf16.gmra.mrb[0].mxu0 %v2339
        %v2378 = vpop.f32.mrb[0].mxu0
        %v2379 = vadd.f32 %v2100, %v2378
        %v2380 = vpop.f32.mrb[0].mxu0
        %v2381 = vpop.f32.mrb[0].mxu0
        %v2382 = vadd.f32 %v2101, %v2381
        %v2383 = vpop.f32.mrb[0].mxu0
        %2384 = vdwg.mxu0
        %v2386 = vsel %vm2102, %v2056, 0
        %v2389 = vsel %vm2102, %v2072, 0
        %2391 = vmatprep.subr.bf16.mxu0 0
        %2392 = vmatpush1.bf16.xpose.msra.mxu0 %v2389
        %2393 = vmatprep.subr.bf16.mxu0 0
        %2394 = vmatpush1.bf16.xpose.msra.mxu0 0
        %2395 = vmatprep.subr.bf16.mxu0 0
        %2396 = vmatpush1.bf16.xpose.msra.mxu0 0
        %2397 = vmatprep.subr.bf16.mxu0 0
        %2398 = vmatpush1.bf16.xpose.msra.mxu0 0
        %2399 = vmatprep.subr.bf16.mxu0 0
        %2400 = vmatpush1.bf16.xpose.msra.mxu0 0
        %2401 = vmatprep.subr.bf16.mxu0 0
        %2402 = vmatpush1.bf16.xpose.msra.mxu0 0
        %2403 = vmatprep.subr.bf16.mxu0 0
        %2404 = vmatpush1.bf16.xpose.msra.mxu0 0
        %2405 = vmatprep.subr.bf16.mxu0 0
        %2406 = vmatpush1.bf16.xpose.msra.mxu0 0
        %2407 = vmatprep.subr.bf16.mxu0 0
        %2408 = vmatpush1.bf16.xpose.msra.mxu0 0
        %2409 = vmatprep.subr.bf16.mxu0 0
        %2410 = vmatpush1.bf16.xpose.msra.mxu0 0
        %2411 = vmatprep.subr.bf16.mxu0 0
        %2412 = vmatpush1.bf16.xpose.msra.mxu0 0
        %2413 = vmatprep.subr.bf16.mxu0 0
        %2414 = vmatpush1.bf16.xpose.msra.mxu0 0
        %2415 = vmatprep.subr.bf16.mxu0 0
        %2416 = vmatpush1.bf16.xpose.msra.mxu0 0
        %2417 = vmatprep.subr.bf16.mxu0 0
        %2418 = vmatpush1.bf16.xpose.msra.mxu0 0
        %2419 = vmatprep.subr.bf16.mxu0 0
        %2420 = vmatpush1.bf16.xpose.msra.mxu0 0
        %2421 = vmatprep.subr.bf16.mxu0 0
        %2422 = vmatpush1.bf16.xpose.msra.mxu0 0
        %2423 = vmatprep.mubr.bf16.mxu0 0
        %2424 = vmatmul.mubr.bf16.gmra.mrb[0].mxu0 %v2386
        %v2425 = vpop.f32.mrb[0].mxu0
        %v2426 = vadd.f32 %v2100, %v2425
        %v2427 = vpop.f32.mrb[0].mxu0
        %v2428 = vpop.f32.mrb[0].mxu0
        %v2429 = vadd.f32 %v2101, %v2428
        %v2430 = vpop.f32.mrb[0].mxu0
        %2431 = vdwg.mxu0
        %v2433 = vsel %vm2102, %v2057, 0
        %v2436 = vsel %vm2102, %v2073, 0
        %2438 = vmatprep.subr.bf16.mxu0 0
        %2439 = vmatpush1.bf16.xpose.msra.mxu0 %v2436
        %2440 = vmatprep.subr.bf16.mxu0 0
        %2441 = vmatpush1.bf16.xpose.msra.mxu0 0
        %2442 = vmatprep.subr.bf16.mxu0 0
        %2443 = vmatpush1.bf16.xpose.msra.mxu0 0
        %2444 = vmatprep.subr.bf16.mxu0 0
        %2445 = vmatpush1.bf16.xpose.msra.mxu0 0
        %2446 = vmatprep.subr.bf16.mxu0 0
        %2447 = vmatpush1.bf16.xpose.msra.mxu0 0
        %2448 = vmatprep.subr.bf16.mxu0 0
        %2449 = vmatpush1.bf16.xpose.msra.mxu0 0
        %2450 = vmatprep.subr.bf16.mxu0 0
        %2451 = vmatpush1.bf16.xpose.msra.mxu0 0
        %2452 = vmatprep.subr.bf16.mxu0 0
        %2453 = vmatpush1.bf16.xpose.msra.mxu0 0
        %2454 = vmatprep.subr.bf16.mxu0 0
        %2455 = vmatpush1.bf16.xpose.msra.mxu0 0
        %2456 = vmatprep.subr.bf16.mxu0 0
        %2457 = vmatpush1.bf16.xpose.msra.mxu0 0
        %2458 = vmatprep.subr.bf16.mxu0 0
        %2459 = vmatpush1.bf16.xpose.msra.mxu0 0
        %2460 = vmatprep.subr.bf16.mxu0 0
        %2461 = vmatpush1.bf16.xpose.msra.mxu0 0
        %2462 = vmatprep.subr.bf16.mxu0 0
        %2463 = vmatpush1.bf16.xpose.msra.mxu0 0
        %2464 = vmatprep.subr.bf16.mxu0 0
        %2465 = vmatpush1.bf16.xpose.msra.mxu0 0
        %2466 = vmatprep.subr.bf16.mxu0 0
        %2467 = vmatpush1.bf16.xpose.msra.mxu0 0
        %2468 = vmatprep.subr.bf16.mxu0 0
        %2469 = vmatpush1.bf16.xpose.msra.mxu0 0
        %2470 = vmatprep.mubr.bf16.mxu0 0
        %2471 = vmatmul.mubr.bf16.gmra.mrb[0].mxu0 %v2433
        %v2472 = vpop.f32.mrb[0].mxu0
        %v2473 = vadd.f32 %v2100, %v2472
        %v2474 = vpop.f32.mrb[0].mxu0
        %v2475 = vpop.f32.mrb[0].mxu0
        %v2476 = vadd.f32 %v2101, %v2475
        %v2477 = vpop.f32.mrb[0].mxu0
        %2478 = vdwg.mxu0
        %v2480 = vsel %vm2102, %v2058, 0
        %v2483 = vsel %vm2102, %v2074, 0
        %2485 = vmatprep.subr.bf16.mxu0 0
        %2486 = vmatpush1.bf16.xpose.msra.mxu0 %v2483
        %2487 = vmatprep.subr.bf16.mxu0 0
        %2488 = vmatpush1.bf16.xpose.msra.mxu0 0
        %2489 = vmatprep.subr.bf16.mxu0 0
        %2490 = vmatpush1.bf16.xpose.msra.mxu0 0
        %2491 = vmatprep.subr.bf16.mxu0 0
        %2492 = vmatpush1.bf16.xpose.msra.mxu0 0
        %2493 = vmatprep.subr.bf16.mxu0 0
        %2494 = vmatpush1.bf16.xpose.msra.mxu0 0
        %2495 = vmatprep.subr.bf16.mxu0 0
        %2496 = vmatpush1.bf16.xpose.msra.mxu0 0
        %2497 = vmatprep.subr.bf16.mxu0 0
        %2498 = vmatpush1.bf16.xpose.msra.mxu0 0
        %2499 = vmatprep.subr.bf16.mxu0 0
        %2500 = vmatpush1.bf16.xpose.msra.mxu0 0
        %2501 = vmatprep.subr.bf16.mxu0 0
        %2502 = vmatpush1.bf16.xpose.msra.mxu0 0
        %2503 = vmatprep.subr.bf16.mxu0 0
        %2504 = vmatpush1.bf16.xpose.msra.mxu0 0
        %2505 = vmatprep.subr.bf16.mxu0 0
        %2506 = vmatpush1.bf16.xpose.msra.mxu0 0
        %2507 = vmatprep.subr.bf16.mxu0 0
        %2508 = vmatpush1.bf16.xpose.msra.mxu0 0
        %2509 = vmatprep.subr.bf16.mxu0 0
        %2510 = vmatpush1.bf16.xpose.msra.mxu0 0
        %2511 = vmatprep.subr.bf16.mxu0 0
        %2512 = vmatpush1.bf16.xpose.msra.mxu0 0
        %2513 = vmatprep.subr.bf16.mxu0 0
        %2514 = vmatpush1.bf16.xpose.msra.mxu0 0
        %2515 = vmatprep.subr.bf16.mxu0 0
        %2516 = vmatpush1.bf16.xpose.msra.mxu0 0
        %2517 = vmatprep.mubr.bf16.mxu0 0
        %2518 = vmatmul.mubr.bf16.gmra.mrb[0].mxu0 %v2480
        %v2519 = vpop.f32.mrb[0].mxu0
        %v2520 = vadd.f32 %v2100, %v2519
        %v2521 = vpop.f32.mrb[0].mxu0
        %v2522 = vpop.f32.mrb[0].mxu0
        %v2523 = vadd.f32 %v2101, %v2522
        %v2524 = vpop.f32.mrb[0].mxu0
        %2525 = vdwg.mxu0
        %v2527 = vsel %vm2102, %v2059, 0
        %v2530 = vsel %vm2102, %v2075, 0
        %2532 = vmatprep.subr.bf16.mxu0 0
        %2533 = vmatpush1.bf16.xpose.msra.mxu0 %v2530
        %2534 = vmatprep.subr.bf16.mxu0 0
        %2535 = vmatpush1.bf16.xpose.msra.mxu0 0
        %2536 = vmatprep.subr.bf16.mxu0 0
        %2537 = vmatpush1.bf16.xpose.msra.mxu0 0
        %2538 = vmatprep.subr.bf16.mxu0 0
        %2539 = vmatpush1.bf16.xpose.msra.mxu0 0
        %2540 = vmatprep.subr.bf16.mxu0 0
        %2541 = vmatpush1.bf16.xpose.msra.mxu0 0
        %2542 = vmatprep.subr.bf16.mxu0 0
        %2543 = vmatpush1.bf16.xpose.msra.mxu0 0
        %2544 = vmatprep.subr.bf16.mxu0 0
        %2545 = vmatpush1.bf16.xpose.msra.mxu0 0
        %2546 = vmatprep.subr.bf16.mxu0 0
        %2547 = vmatpush1.bf16.xpose.msra.mxu0 0
        %2548 = vmatprep.subr.bf16.mxu0 0
        %2549 = vmatpush1.bf16.xpose.msra.mxu0 0
        %2550 = vmatprep.subr.bf16.mxu0 0
        %2551 = vmatpush1.bf16.xpose.msra.mxu0 0
        %2552 = vmatprep.subr.bf16.mxu0 0
        %2553 = vmatpush1.bf16.xpose.msra.mxu0 0
        %2554 = vmatprep.subr.bf16.mxu0 0
        %2555 = vmatpush1.bf16.xpose.msra.mxu0 0
        %2556 = vmatprep.subr.bf16.mxu0 0
        %2557 = vmatpush1.bf16.xpose.msra.mxu0 0
        %2558 = vmatprep.subr.bf16.mxu0 0
        %2559 = vmatpush1.bf16.xpose.msra.mxu0 0
        %2560 = vmatprep.subr.bf16.mxu0 0
        %2561 = vmatpush1.bf16.xpose.msra.mxu0 0
        %2562 = vmatprep.subr.bf16.mxu0 0
        %2563 = vmatpush1.bf16.xpose.msra.mxu0 0
        %2564 = vmatprep.mubr.bf16.mxu0 0
        %2565 = vmatmul.mubr.bf16.gmra.mrb[0].mxu0 %v2527
        %v2566 = vpop.f32.mrb[0].mxu0
        %v2567 = vadd.f32 %v2100, %v2566
        %v2568 = vpop.f32.mrb[0].mxu0
        %v2569 = vpop.f32.mrb[0].mxu0
        %v2570 = vadd.f32 %v2101, %v2569
        %v2571 = vpop.f32.mrb[0].mxu0
        %2572 = vdwg.mxu0
        %v2574 = vsel %vm2102, %v2060, 0
        %v2577 = vsel %vm2102, %v2076, 0
        %2579 = vmatprep.subr.bf16.mxu0 0
        %2580 = vmatpush1.bf16.xpose.msra.mxu0 %v2577
        %2581 = vmatprep.subr.bf16.mxu0 0
        %2582 = vmatpush1.bf16.xpose.msra.mxu0 0
        %2583 = vmatprep.subr.bf16.mxu0 0
        %2584 = vmatpush1.bf16.xpose.msra.mxu0 0
        %2585 = vmatprep.subr.bf16.mxu0 0
        %2586 = vmatpush1.bf16.xpose.msra.mxu0 0
        %2587 = vmatprep.subr.bf16.mxu0 0
        %2588 = vmatpush1.bf16.xpose.msra.mxu0 0
        %2589 = vmatprep.subr.bf16.mxu0 0
        %2590 = vmatpush1.bf16.xpose.msra.mxu0 0
        %2591 = vmatprep.subr.bf16.mxu0 0
        %2592 = vmatpush1.bf16.xpose.msra.mxu0 0
        %2593 = vmatprep.subr.bf16.mxu0 0
        %2594 = vmatpush1.bf16.xpose.msra.mxu0 0
        %2595 = vmatprep.subr.bf16.mxu0 0
        %2596 = vmatpush1.bf16.xpose.msra.mxu0 0
        %2597 = vmatprep.subr.bf16.mxu0 0
        %2598 = vmatpush1.bf16.xpose.msra.mxu0 0
        %2599 = vmatprep.subr.bf16.mxu0 0
        %2600 = vmatpush1.bf16.xpose.msra.mxu0 0
        %2601 = vmatprep.subr.bf16.mxu0 0
        %2602 = vmatpush1.bf16.xpose.msra.mxu0 0
        %2603 = vmatprep.subr.bf16.mxu0 0
        %2604 = vmatpush1.bf16.xpose.msra.mxu0 0
        %2605 = vmatprep.subr.bf16.mxu0 0
        %2606 = vmatpush1.bf16.xpose.msra.mxu0 0
        %2607 = vmatprep.subr.bf16.mxu0 0
        %2608 = vmatpush1.bf16.xpose.msra.mxu0 0
        %2609 = vmatprep.subr.bf16.mxu0 0
        %2610 = vmatpush1.bf16.xpose.msra.mxu0 0
        %2611 = vmatprep.mubr.bf16.mxu0 0
        %2612 = vmatmul.mubr.bf16.gmra.mrb[0].mxu0 %v2574
        %v2613 = vpop.f32.mrb[0].mxu0
        %v2614 = vadd.f32 %v2100, %v2613
        %v2615 = vpop.f32.mrb[0].mxu0
        %v2616 = vpop.f32.mrb[0].mxu0
        %v2617 = vadd.f32 %v2101, %v2616
        %v2618 = vpop.f32.mrb[0].mxu0
        %2619 = vdwg.mxu0
        %v2621 = vsel %vm2102, %v2061, 0
        %v2624 = vsel %vm2102, %v2077, 0
        %2626 = vmatprep.subr.bf16.mxu0 0
        %2627 = vmatpush1.bf16.xpose.msra.mxu0 %v2624
        %2628 = vmatprep.subr.bf16.mxu0 0
        %2629 = vmatpush1.bf16.xpose.msra.mxu0 0
        %2630 = vmatprep.subr.bf16.mxu0 0
        %2631 = vmatpush1.bf16.xpose.msra.mxu0 0
        %2632 = vmatprep.subr.bf16.mxu0 0
        %2633 = vmatpush1.bf16.xpose.msra.mxu0 0
        %2634 = vmatprep.subr.bf16.mxu0 0
        %2635 = vmatpush1.bf16.xpose.msra.mxu0 0
        %2636 = vmatprep.subr.bf16.mxu0 0
        %2637 = vmatpush1.bf16.xpose.msra.mxu0 0
        %2638 = vmatprep.subr.bf16.mxu0 0
        %2639 = vmatpush1.bf16.xpose.msra.mxu0 0
        %2640 = vmatprep.subr.bf16.mxu0 0
        %2641 = vmatpush1.bf16.xpose.msra.mxu0 0
        %2642 = vmatprep.subr.bf16.mxu0 0
        %2643 = vmatpush1.bf16.xpose.msra.mxu0 0
        %2644 = vmatprep.subr.bf16.mxu0 0
        %2645 = vmatpush1.bf16.xpose.msra.mxu0 0
        %2646 = vmatprep.subr.bf16.mxu0 0
        %2647 = vmatpush1.bf16.xpose.msra.mxu0 0
        %2648 = vmatprep.subr.bf16.mxu0 0
        %2649 = vmatpush1.bf16.xpose.msra.mxu0 0
        %2650 = vmatprep.subr.bf16.mxu0 0
        %2651 = vmatpush1.bf16.xpose.msra.mxu0 0
        %2652 = vmatprep.subr.bf16.mxu0 0
        %2653 = vmatpush1.bf16.xpose.msra.mxu0 0
        %2654 = vmatprep.subr.bf16.mxu0 0
        %2655 = vmatpush1.bf16.xpose.msra.mxu0 0
        %2656 = vmatprep.subr.bf16.mxu0 0
        %2657 = vmatpush1.bf16.xpose.msra.mxu0 0
        %2658 = vmatprep.mubr.bf16.mxu0 0
        %2659 = vmatmul.mubr.bf16.gmra.mrb[0].mxu0 %v2621
        %v2660 = vpop.f32.mrb[0].mxu0
        %v2661 = vadd.f32 %v2100, %v2660
        %v2662 = vpop.f32.mrb[0].mxu0
        %v2663 = vpop.f32.mrb[0].mxu0
        %v2664 = vadd.f32 %v2101, %v2663
        %v2665 = vpop.f32.mrb[0].mxu0
        %2666 = vdwg.mxu0
        %v2668 = vsel %vm2102, %v2062, 0
        %v2671 = vsel %vm2102, %v2078, 0
        %2673 = vmatprep.subr.bf16.mxu0 0
        %2674 = vmatpush1.bf16.xpose.msra.mxu0 %v2671
        %2675 = vmatprep.subr.bf16.mxu0 0
        %2676 = vmatpush1.bf16.xpose.msra.mxu0 0
        %2677 = vmatprep.subr.bf16.mxu0 0
        %2678 = vmatpush1.bf16.xpose.msra.mxu0 0
        %2679 = vmatprep.subr.bf16.mxu0 0
        %2680 = vmatpush1.bf16.xpose.msra.mxu0 0
        %2681 = vmatprep.subr.bf16.mxu0 0
        %2682 = vmatpush1.bf16.xpose.msra.mxu0 0
        %2683 = vmatprep.subr.bf16.mxu0 0
        %2684 = vmatpush1.bf16.xpose.msra.mxu0 0
        %2685 = vmatprep.subr.bf16.mxu0 0
        %2686 = vmatpush1.bf16.xpose.msra.mxu0 0
        %2687 = vmatprep.subr.bf16.mxu0 0
        %2688 = vmatpush1.bf16.xpose.msra.mxu0 0
        %2689 = vmatprep.subr.bf16.mxu0 0
        %2690 = vmatpush1.bf16.xpose.msra.mxu0 0
        %2691 = vmatprep.subr.bf16.mxu0 0
        %2692 = vmatpush1.bf16.xpose.msra.mxu0 0
        %2693 = vmatprep.subr.bf16.mxu0 0
        %2694 = vmatpush1.bf16.xpose.msra.mxu0 0
        %2695 = vmatprep.subr.bf16.mxu0 0
        %2696 = vmatpush1.bf16.xpose.msra.mxu0 0
        %2697 = vmatprep.subr.bf16.mxu0 0
        %2698 = vmatpush1.bf16.xpose.msra.mxu0 0
        %2699 = vmatprep.subr.bf16.mxu0 0
        %2700 = vmatpush1.bf16.xpose.msra.mxu0 0
        %2701 = vmatprep.subr.bf16.mxu0 0
        %2702 = vmatpush1.bf16.xpose.msra.mxu0 0
        %2703 = vmatprep.subr.bf16.mxu0 0
        %2704 = vmatpush1.bf16.xpose.msra.mxu0 0
        %2705 = vmatprep.mubr.bf16.mxu0 0
        %2706 = vmatmul.mubr.bf16.gmra.mrb[0].mxu0 %v2668
        %v2707 = vpop.f32.mrb[0].mxu0
        %v2708 = vadd.f32 %v2100, %v2707
        %v2709 = vpop.f32.mrb[0].mxu0
        %v2710 = vpop.f32.mrb[0].mxu0
        %v2711 = vadd.f32 %v2101, %v2710
        %v2712 = vpop.f32.mrb[0].mxu0
        %2713 = vdwg.mxu0
        %v2715 = vsel %vm2102, %v2063, 0
        %v2718 = vsel %vm2102, %v2079, 0
        %2720 = vmatprep.subr.bf16.mxu0 0
        %2721 = vmatpush1.bf16.xpose.msra.mxu0 %v2718
        %2722 = vmatprep.subr.bf16.mxu0 0
        %2723 = vmatpush1.bf16.xpose.msra.mxu0 0
        %2724 = vmatprep.subr.bf16.mxu0 0
        %2725 = vmatpush1.bf16.xpose.msra.mxu0 0
        %2726 = vmatprep.subr.bf16.mxu0 0
        %2727 = vmatpush1.bf16.xpose.msra.mxu0 0
        %2728 = vmatprep.subr.bf16.mxu0 0
        %2729 = vmatpush1.bf16.xpose.msra.mxu0 0
        %2730 = vmatprep.subr.bf16.mxu0 0
        %2731 = vmatpush1.bf16.xpose.msra.mxu0 0
        %2732 = vmatprep.subr.bf16.mxu0 0
        %2733 = vmatpush1.bf16.xpose.msra.mxu0 0
        %2734 = vmatprep.subr.bf16.mxu0 0
        %2735 = vmatpush1.bf16.xpose.msra.mxu0 0
        %2736 = vmatprep.subr.bf16.mxu0 0
        %2737 = vmatpush1.bf16.xpose.msra.mxu0 0
        %2738 = vmatprep.subr.bf16.mxu0 0
        %2739 = vmatpush1.bf16.xpose.msra.mxu0 0
        %2740 = vmatprep.subr.bf16.mxu0 0
        %2741 = vmatpush1.bf16.xpose.msra.mxu0 0
        %2742 = vmatprep.subr.bf16.mxu0 0
        %2743 = vmatpush1.bf16.xpose.msra.mxu0 0
        %2744 = vmatprep.subr.bf16.mxu0 0
        %2745 = vmatpush1.bf16.xpose.msra.mxu0 0
        %2746 = vmatprep.subr.bf16.mxu0 0
        %2747 = vmatpush1.bf16.xpose.msra.mxu0 0
        %2748 = vmatprep.subr.bf16.mxu0 0
        %2749 = vmatpush1.bf16.xpose.msra.mxu0 0
        %2750 = vmatprep.subr.bf16.mxu0 0
        %2751 = vmatpush1.bf16.xpose.msra.mxu0 0
        %2752 = vmatprep.mubr.bf16.mxu0 0
        %2753 = vmatmul.mubr.bf16.gmra.mrb[0].mxu0 %v2715
        %v2754 = vpop.f32.mrb[0].mxu0
        %v2755 = vadd.f32 %v2100, %v2754
        %v2756 = vpop.f32.mrb[0].mxu0
        %v2757 = vpop.f32.mrb[0].mxu0
        %v2758 = vadd.f32 %v2101, %v2757
        %v2759 = vpop.f32.mrb[0].mxu0
        %2760 = vdwg.mxu0
        %v2762 = vsel %vm2102, %v2064, 0
        %v2765 = vsel %vm2102, %v2080, 0
        %2767 = vmatprep.subr.bf16.mxu0 0
        %2768 = vmatpush1.bf16.xpose.msra.mxu0 %v2765
        %2769 = vmatprep.subr.bf16.mxu0 0
        %2770 = vmatpush1.bf16.xpose.msra.mxu0 0
        %2771 = vmatprep.subr.bf16.mxu0 0
        %2772 = vmatpush1.bf16.xpose.msra.mxu0 0
        %2773 = vmatprep.subr.bf16.mxu0 0
        %2774 = vmatpush1.bf16.xpose.msra.mxu0 0
        %2775 = vmatprep.subr.bf16.mxu0 0
        %2776 = vmatpush1.bf16.xpose.msra.mxu0 0
        %2777 = vmatprep.subr.bf16.mxu0 0
        %2778 = vmatpush1.bf16.xpose.msra.mxu0 0
        %2779 = vmatprep.subr.bf16.mxu0 0
        %2780 = vmatpush1.bf16.xpose.msra.mxu0 0
        %2781 = vmatprep.subr.bf16.mxu0 0
        %2782 = vmatpush1.bf16.xpose.msra.mxu0 0
        %2783 = vmatprep.subr.bf16.mxu0 0
        %2784 = vmatpush1.bf16.xpose.msra.mxu0 0
        %2785 = vmatprep.subr.bf16.mxu0 0
        %2786 = vmatpush1.bf16.xpose.msra.mxu0 0
        %2787 = vmatprep.subr.bf16.mxu0 0
        %2788 = vmatpush1.bf16.xpose.msra.mxu0 0
        %2789 = vmatprep.subr.bf16.mxu0 0
        %2790 = vmatpush1.bf16.xpose.msra.mxu0 0
        %2791 = vmatprep.subr.bf16.mxu0 0
        %2792 = vmatpush1.bf16.xpose.msra.mxu0 0
        %2793 = vmatprep.subr.bf16.mxu0 0
        %2794 = vmatpush1.bf16.xpose.msra.mxu0 0
        %2795 = vmatprep.subr.bf16.mxu0 0
        %2796 = vmatpush1.bf16.xpose.msra.mxu0 0
        %2797 = vmatprep.subr.bf16.mxu0 0
        %2798 = vmatpush1.bf16.xpose.msra.mxu0 0
        %2799 = vmatprep.mubr.bf16.mxu0 0
        %2800 = vmatmul.mubr.bf16.gmra.mrb[0].mxu0 %v2762
        %v2801 = vpop.f32.mrb[0].mxu0
        %v2802 = vadd.f32 %v2100, %v2801
        %v2803 = vpop.f32.mrb[0].mxu0
        %v2804 = vpop.f32.mrb[0].mxu0
        %v2805 = vadd.f32 %v2101, %v2804
        %v2806 = vpop.f32.mrb[0].mxu0
        %2807 = vdwg.mxu0
        %v2809 = vsel %vm2102, %v2065, 0
        %v2812 = vsel %vm2102, %v2081, 0
        %2814 = vmatprep.subr.bf16.mxu0 0
        %2815 = vmatpush1.bf16.xpose.msra.mxu0 %v2812
        %2816 = vmatprep.subr.bf16.mxu0 0
        %2817 = vmatpush1.bf16.xpose.msra.mxu0 0
        %2818 = vmatprep.subr.bf16.mxu0 0
        %2819 = vmatpush1.bf16.xpose.msra.mxu0 0
        %2820 = vmatprep.subr.bf16.mxu0 0
        %2821 = vmatpush1.bf16.xpose.msra.mxu0 0
        %2822 = vmatprep.subr.bf16.mxu0 0
        %2823 = vmatpush1.bf16.xpose.msra.mxu0 0
        %2824 = vmatprep.subr.bf16.mxu0 0
        %2825 = vmatpush1.bf16.xpose.msra.mxu0 0
        %2826 = vmatprep.subr.bf16.mxu0 0
        %2827 = vmatpush1.bf16.xpose.msra.mxu0 0
        %2828 = vmatprep.subr.bf16.mxu0 0
        %2829 = vmatpush1.bf16.xpose.msra.mxu0 0
        %2830 = vmatprep.subr.bf16.mxu0 0
        %2831 = vmatpush1.bf16.xpose.msra.mxu0 0
        %2832 = vmatprep.subr.bf16.mxu0 0
        %2833 = vmatpush1.bf16.xpose.msra.mxu0 0
        %2834 = vmatprep.subr.bf16.mxu0 0
        %2835 = vmatpush1.bf16.xpose.msra.mxu0 0
        %2836 = vmatprep.subr.bf16.mxu0 0
        %2837 = vmatpush1.bf16.xpose.msra.mxu0 0
        %2838 = vmatprep.subr.bf16.mxu0 0
        %2839 = vmatpush1.bf16.xpose.msra.mxu0 0
        %2840 = vmatprep.subr.bf16.mxu0 0
        %2841 = vmatpush1.bf16.xpose.msra.mxu0 0
        %2842 = vmatprep.subr.bf16.mxu0 0
        %2843 = vmatpush1.bf16.xpose.msra.mxu0 0
        %2844 = vmatprep.subr.bf16.mxu0 0
        %2845 = vmatpush1.bf16.xpose.msra.mxu0 0
        %2846 = vmatprep.mubr.bf16.mxu0 0
        %2847 = vmatmul.mubr.bf16.gmra.mrb[0].mxu0 %v2809
        %v2848 = vpop.f32.mrb[0].mxu0
        %v2849 = vadd.f32 %v2100, %v2848
        %v2850 = vpop.f32.mrb[0].mxu0
        %v2851 = vpop.f32.mrb[0].mxu0
        %v2852 = vadd.f32 %v2101, %v2851
        %v2853 = vpop.f32.mrb[0].mxu0
        %2854 = vdwg.mxu0
        %vm2855 = vcmask 130048
        %v2856 = vsel %vm2855, %v2144, -inf
        %2857 = vmax.xlane.f32.xlu0 %v2856
        %v2858 = vpop.xlane.xlu0 %2857
        %v2859 = vsel %vm2855, %v2147, -inf
        %2860 = vmax.xlane.f32.xlu0 %v2859
        %v2861 = vpop.xlane.xlu0 %2860
        %v2862 = vsel %vm2855, %v2191, -inf
        %2863 = vmax.xlane.f32.xlu0 %v2862
        %v2864 = vpop.xlane.xlu0 %2863
        %v2865 = vsel %vm2855, %v2194, -inf
        %2866 = vmax.xlane.f32.xlu0 %v2865
        %v2867 = vpop.xlane.xlu0 %2866
        %v2868 = vsel %vm2855, %v2238, -inf
        %2869 = vmax.xlane.f32.xlu0 %v2868
        %v2870 = vpop.xlane.xlu0 %2869
        %v2871 = vsel %vm2855, %v2241, -inf
        %2872 = vmax.xlane.f32.xlu0 %v2871
        %v2873 = vpop.xlane.xlu0 %2872
        %v2874 = vsel %vm2855, %v2285, -inf
        %2875 = vmax.xlane.f32.xlu0 %v2874
        %v2876 = vpop.xlane.xlu0 %2875
        %v2877 = vsel %vm2855, %v2288, -inf
        %2878 = vmax.xlane.f32.xlu0 %v2877
        %v2879 = vpop.xlane.xlu0 %2878
        %v2880 = vsel %vm2855, %v2332, -inf
        %2881 = vmax.xlane.f32.xlu0 %v2880
        %v2882 = vpop.xlane.xlu0 %2881
        %v2883 = vsel %vm2855, %v2335, -inf
        %2884 = vmax.xlane.f32.xlu0 %v2883
        %v2885 = vpop.xlane.xlu0 %2884
        %v2886 = vsel %vm2855, %v2379, -inf
        %2887 = vmax.xlane.f32.xlu0 %v2886
        %v2888 = vpop.xlane.xlu0 %2887
        %v2889 = vsel %vm2855, %v2382, -inf
        %2890 = vmax.xlane.f32.xlu0 %v2889
        %v2891 = vpop.xlane.xlu0 %2890
        %v2892 = vsel %vm2855, %v2426, -inf
        %2893 = vmax.xlane.f32.xlu0 %v2892
        %v2894 = vpop.xlane.xlu0 %2893
        %v2895 = vsel %vm2855, %v2429, -inf
        %2896 = vmax.xlane.f32.xlu0 %v2895
        %v2897 = vpop.xlane.xlu0 %2896
        %v2898 = vsel %vm2855, %v2473, -inf
        %2899 = vmax.xlane.f32.xlu0 %v2898
        %v2900 = vpop.xlane.xlu0 %2899
        %v2901 = vsel %vm2855, %v2476, -inf
        %2902 = vmax.xlane.f32.xlu0 %v2901
        %v2903 = vpop.xlane.xlu0 %2902
        %v2904 = vsel %vm2855, %v2520, -inf
        %2905 = vmax.xlane.f32.xlu0 %v2904
        %v2906 = vpop.xlane.xlu0 %2905
        %v2907 = vsel %vm2855, %v2523, -inf
        %2908 = vmax.xlane.f32.xlu0 %v2907
        %v2909 = vpop.xlane.xlu0 %2908
        %v2910 = vsel %vm2855, %v2567, -inf
        %2911 = vmax.xlane.f32.xlu0 %v2910
        %v2912 = vpop.xlane.xlu0 %2911
        %v2913 = vsel %vm2855, %v2570, -inf
        %2914 = vmax.xlane.f32.xlu0 %v2913
        %v2915 = vpop.xlane.xlu0 %2914
        %v2916 = vsel %vm2855, %v2614, -inf
        %2917 = vmax.xlane.f32.xlu0 %v2916
        %v2918 = vpop.xlane.xlu0 %2917
        %v2919 = vsel %vm2855, %v2617, -inf
        %2920 = vmax.xlane.f32.xlu0 %v2919
        %v2921 = vpop.xlane.xlu0 %2920
        %v2922 = vsel %vm2855, %v2661, -inf
        %2923 = vmax.xlane.f32.xlu0 %v2922
        %v2924 = vpop.xlane.xlu0 %2923
        %v2925 = vsel %vm2855, %v2664, -inf
        %2926 = vmax.xlane.f32.xlu0 %v2925
        %v2927 = vpop.xlane.xlu0 %2926
        %v2928 = vsel %vm2855, %v2708, -inf
        %2929 = vmax.xlane.f32.xlu0 %v2928
        %v2930 = vpop.xlane.xlu0 %2929
        %v2931 = vsel %vm2855, %v2711, -inf
        %2932 = vmax.xlane.f32.xlu0 %v2931
        %v2933 = vpop.xlane.xlu0 %2932
        %v2934 = vsel %vm2855, %v2755, -inf
        %2935 = vmax.xlane.f32.xlu0 %v2934
        %v2936 = vpop.xlane.xlu0 %2935
        %v2937 = vsel %vm2855, %v2758, -inf
        %2938 = vmax.xlane.f32.xlu0 %v2937
        %v2939 = vpop.xlane.xlu0 %2938
        %v2940 = vsel %vm2855, %v2802, -inf
        %2941 = vmax.xlane.f32.xlu0 %v2940
        %v2942 = vpop.xlane.xlu0 %2941
        %v2943 = vsel %vm2855, %v2805, -inf
        %2944 = vmax.xlane.f32.xlu0 %v2943
        %v2945 = vpop.xlane.xlu0 %2944
        %v2946 = vsel %vm2855, %v2849, -inf
        %2947 = vmax.xlane.f32.xlu0 %v2946
        %v2948 = vpop.xlane.xlu0 %2947
        %v2949 = vsel %vm2855, %v2852, -inf
        %2950 = vmax.xlane.f32.xlu0 %v2949
        %v2951 = vpop.xlane.xlu0 %2950
        %v2952 = vsub.f32 %v2144, %v2858
        %v2953 = vsub.f32 %v2147, %v2861
        %v2954 = vsub.f32 %v2191, %v2864
        %v2955 = vsub.f32 %v2194, %v2867
        %v2956 = vsub.f32 %v2238, %v2870
        %v2957 = vsub.f32 %v2241, %v2873
        %v2958 = vsub.f32 %v2285, %v2876
        %v2959 = vsub.f32 %v2288, %v2879
        %v2960 = vsub.f32 %v2332, %v2882
        %v2961 = vsub.f32 %v2335, %v2885
        %v2962 = vsub.f32 %v2379, %v2888
        %v2963 = vsub.f32 %v2382, %v2891
        %v2964 = vsub.f32 %v2426, %v2894
        %v2965 = vsub.f32 %v2429, %v2897
        %v2966 = vsub.f32 %v2473, %v2900
        %v2967 = vsub.f32 %v2476, %v2903
        %v2968 = vsub.f32 %v2520, %v2906
        %v2969 = vsub.f32 %v2523, %v2909
        %v2970 = vsub.f32 %v2567, %v2912
        %v2971 = vsub.f32 %v2570, %v2915
        %v2972 = vsub.f32 %v2614, %v2918
        %v2973 = vsub.f32 %v2617, %v2921
        %v2974 = vsub.f32 %v2661, %v2924
        %v2975 = vsub.f32 %v2664, %v2927
        %v2976 = vsub.f32 %v2708, %v2930
        %v2977 = vsub.f32 %v2711, %v2933
        %v2978 = vsub.f32 %v2755, %v2936
        %v2979 = vsub.f32 %v2758, %v2939
        %v2980 = vsub.f32 %v2802, %v2942
        %v2981 = vsub.f32 %v2805, %v2945
        %v2982 = vsub.f32 %v2849, %v2948
        %v2983 = vsub.f32 %v2852, %v2951
        %v2984 = vmul.f32 %v2952, 1.442695
        %v2985 = vpow.pop %v2984
        %v2986 = vmul.f32 %v2953, 1.442695
        %v2987 = vpow.pop %v2986
        %v2988 = vmul.f32 %v2954, 1.442695
        %v2989 = vpow.pop %v2988
        %v2990 = vmul.f32 %v2955, 1.442695
        %v2991 = vpow.pop %v2990
        %v2992 = vmul.f32 %v2956, 1.442695
        %v2993 = vpow.pop %v2992
        %v2994 = vmul.f32 %v2957, 1.442695
        %v2995 = vpow.pop %v2994
        %v2996 = vmul.f32 %v2958, 1.442695
        %v2997 = vpow.pop %v2996
        %v2998 = vmul.f32 %v2959, 1.442695
        %v2999 = vpow.pop %v2998
        %v3000 = vmul.f32 %v2960, 1.442695
        %v3001 = vpow.pop %v3000
        %v3002 = vmul.f32 %v2961, 1.442695
        %v3003 = vpow.pop %v3002
        %v3004 = vmul.f32 %v2962, 1.442695
        %v3005 = vpow.pop %v3004
        %v3006 = vmul.f32 %v2963, 1.442695
        %v3007 = vpow.pop %v3006
        %v3008 = vmul.f32 %v2964, 1.442695
        %v3009 = vpow.pop %v3008
        %v3010 = vmul.f32 %v2965, 1.442695
        %v3011 = vpow.pop %v3010
        %v3012 = vmul.f32 %v2966, 1.442695
        %v3013 = vpow.pop %v3012
        %v3014 = vmul.f32 %v2967, 1.442695
        %v3015 = vpow.pop %v3014
        %v3016 = vmul.f32 %v2968, 1.442695
        %v3017 = vpow.pop %v3016
        %v3018 = vmul.f32 %v2969, 1.442695
        %v3019 = vpow.pop %v3018
        %v3020 = vmul.f32 %v2970, 1.442695
        %v3021 = vpow.pop %v3020
        %v3022 = vmul.f32 %v2971, 1.442695
        %v3023 = vpow.pop %v3022
        %v3024 = vmul.f32 %v2972, 1.442695
        %v3025 = vpow.pop %v3024
        %v3026 = vmul.f32 %v2973, 1.442695
        %v3027 = vpow.pop %v3026
        %v3028 = vmul.f32 %v2974, 1.442695
        %v3029 = vpow.pop %v3028
        %v3030 = vmul.f32 %v2975, 1.442695
        %v3031 = vpow.pop %v3030
        %v3032 = vmul.f32 %v2976, 1.442695
        %v3033 = vpow.pop %v3032
        %v3034 = vmul.f32 %v2977, 1.442695
        %v3035 = vpow.pop %v3034
        %v3036 = vmul.f32 %v2978, 1.442695
        %v3037 = vpow.pop %v3036
        %v3038 = vmul.f32 %v2979, 1.442695
        %v3039 = vpow.pop %v3038
        %v3040 = vmul.f32 %v2980, 1.442695
        %v3041 = vpow.pop %v3040
        %v3042 = vmul.f32 %v2981, 1.442695
        %v3043 = vpow.pop %v3042
        %v3044 = vmul.f32 %v2982, 1.442695
        %v3045 = vpow.pop %v3044
        %v3046 = vmul.f32 %v2983, 1.442695
        %v3047 = vpow.pop %v3046
        %v3048 = vsel %vm2855, %v2985, 0.0
        %3049 = vadd.xlane.f32.xlu0 %v3048
        %v3050 = vpop.xlane.xlu0 %3049
        %v3051 = vsel %vm2855, %v2987, 0.0
        %3052 = vadd.xlane.f32.xlu0 %v3051
        %v3053 = vpop.xlane.xlu0 %3052
        %v3054 = vsel %vm2855, %v2989, 0.0
        %3055 = vadd.xlane.f32.xlu0 %v3054
        %v3056 = vpop.xlane.xlu0 %3055
        %v3057 = vsel %vm2855, %v2991, 0.0
        %3058 = vadd.xlane.f32.xlu0 %v3057
        %v3059 = vpop.xlane.xlu0 %3058
        %v3060 = vsel %vm2855, %v2993, 0.0
        %3061 = vadd.xlane.f32.xlu0 %v3060
        %v3062 = vpop.xlane.xlu0 %3061
        %v3063 = vsel %vm2855, %v2995, 0.0
        %3064 = vadd.xlane.f32.xlu0 %v3063
        %v3065 = vpop.xlane.xlu0 %3064
        %v3066 = vsel %vm2855, %v2997, 0.0
        %3067 = vadd.xlane.f32.xlu0 %v3066
        %v3068 = vpop.xlane.xlu0 %3067
        %v3069 = vsel %vm2855, %v2999, 0.0
        %3070 = vadd.xlane.f32.xlu0 %v3069
        %v3071 = vpop.xlane.xlu0 %3070
        %v3072 = vsel %vm2855, %v3001, 0.0
        %3073 = vadd.xlane.f32.xlu0 %v3072
        %v3074 = vpop.xlane.xlu0 %3073
        %v3075 = vsel %vm2855, %v3003, 0.0
        %3076 = vadd.xlane.f32.xlu0 %v3075
        %v3077 = vpop.xlane.xlu0 %3076
        %v3078 = vsel %vm2855, %v3005, 0.0
        %3079 = vadd.xlane.f32.xlu0 %v3078
        %v3080 = vpop.xlane.xlu0 %3079
        %v3081 = vsel %vm2855, %v3007, 0.0
        %3082 = vadd.xlane.f32.xlu0 %v3081
        %v3083 = vpop.xlane.xlu0 %3082
        %v3084 = vsel %vm2855, %v3009, 0.0
        %3085 = vadd.xlane.f32.xlu0 %v3084
        %v3086 = vpop.xlane.xlu0 %3085
        %v3087 = vsel %vm2855, %v3011, 0.0
        %3088 = vadd.xlane.f32.xlu0 %v3087
        %v3089 = vpop.xlane.xlu0 %3088
        %v3090 = vsel %vm2855, %v3013, 0.0
        %3091 = vadd.xlane.f32.xlu0 %v3090
        %v3092 = vpop.xlane.xlu0 %3091
        %v3093 = vsel %vm2855, %v3015, 0.0
        %3094 = vadd.xlane.f32.xlu0 %v3093
        %v3095 = vpop.xlane.xlu0 %3094
        %v3096 = vsel %vm2855, %v3017, 0.0
        %3097 = vadd.xlane.f32.xlu0 %v3096
        %v3098 = vpop.xlane.xlu0 %3097
        %v3099 = vsel %vm2855, %v3019, 0.0
        %3100 = vadd.xlane.f32.xlu0 %v3099
        %v3101 = vpop.xlane.xlu0 %3100
        %v3102 = vsel %vm2855, %v3021, 0.0
        %3103 = vadd.xlane.f32.xlu0 %v3102
        %v3104 = vpop.xlane.xlu0 %3103
        %v3105 = vsel %vm2855, %v3023, 0.0
        %3106 = vadd.xlane.f32.xlu0 %v3105
        %v3107 = vpop.xlane.xlu0 %3106
        %v3108 = vsel %vm2855, %v3025, 0.0
        %3109 = vadd.xlane.f32.xlu0 %v3108
        %v3110 = vpop.xlane.xlu0 %3109
        %v3111 = vsel %vm2855, %v3027, 0.0
        %3112 = vadd.xlane.f32.xlu0 %v3111
        %v3113 = vpop.xlane.xlu0 %3112
        %v3114 = vsel %vm2855, %v3029, 0.0
        %3115 = vadd.xlane.f32.xlu0 %v3114
        %v3116 = vpop.xlane.xlu0 %3115
        %v3117 = vsel %vm2855, %v3031, 0.0
        %3118 = vadd.xlane.f32.xlu0 %v3117
        %v3119 = vpop.xlane.xlu0 %3118
        %v3120 = vsel %vm2855, %v3033, 0.0
        %3121 = vadd.xlane.f32.xlu0 %v3120
        %v3122 = vpop.xlane.xlu0 %3121
        %v3123 = vsel %vm2855, %v3035, 0.0
        %3124 = vadd.xlane.f32.xlu0 %v3123
        %v3125 = vpop.xlane.xlu0 %3124
        %v3126 = vsel %vm2855, %v3037, 0.0
        %3127 = vadd.xlane.f32.xlu0 %v3126
        %v3128 = vpop.xlane.xlu0 %3127
        %v3129 = vsel %vm2855, %v3039, 0.0
        %3130 = vadd.xlane.f32.xlu0 %v3129
        %v3131 = vpop.xlane.xlu0 %3130
        %v3132 = vsel %vm2855, %v3041, 0.0
        %3133 = vadd.xlane.f32.xlu0 %v3132
        %v3134 = vpop.xlane.xlu0 %3133
        %v3135 = vsel %vm2855, %v3043, 0.0
        %3136 = vadd.xlane.f32.xlu0 %v3135
        %v3137 = vpop.xlane.xlu0 %3136
        %v3138 = vsel %vm2855, %v3045, 0.0
        %3139 = vadd.xlane.f32.xlu0 %v3138
        %v3140 = vpop.xlane.xlu0 %3139
        %v3141 = vsel %vm2855, %v3047, 0.0
        %3142 = vadd.xlane.f32.xlu0 %v3141
        %v3143 = vpop.xlane.xlu0 %3142
        %v3144 = vpack.c.bf16 %v2987, %v2985
        %v3145 = vpack.c.bf16 %v2991, %v2989
        %v3146 = vpack.c.bf16 %v2995, %v2993
        %v3147 = vpack.c.bf16 %v2999, %v2997
        %v3148 = vpack.c.bf16 %v3003, %v3001
        %v3149 = vpack.c.bf16 %v3007, %v3005
        %v3150 = vpack.c.bf16 %v3011, %v3009
        %v3151 = vpack.c.bf16 %v3015, %v3013
        %v3152 = vpack.c.bf16 %v3019, %v3017
        %v3153 = vpack.c.bf16 %v3023, %v3021
        %v3154 = vpack.c.bf16 %v3027, %v3025
        %v3155 = vpack.c.bf16 %v3031, %v3029
        %v3156 = vpack.c.bf16 %v3035, %v3033
        %v3157 = vpack.c.bf16 %v3039, %v3037
        %v3158 = vpack.c.bf16 %v3043, %v3041
        %v3159 = vpack.c.bf16 %v3047, %v3045
        %v3161 = vsel %vm2855, %v3144, 0
        %3163 = vmatprep.subr.bf16.mxu0 0
        %3164 = vmatpush1.bf16.msra.mxu0 %v2082
        %3165 = vmatprep.subr.bf16.mxu0 0
        %3166 = vmatpush1.bf16.msra.mxu0 0
        %3167 = vmatprep.subr.bf16.mxu0 0
        %3168 = vmatpush1.bf16.msra.mxu0 0
        %3169 = vmatprep.subr.bf16.mxu0 0
        %3170 = vmatpush1.bf16.msra.mxu0 0
        %3171 = vmatprep.subr.bf16.mxu0 0
        %3172 = vmatpush1.bf16.msra.mxu0 0
        %3173 = vmatprep.subr.bf16.mxu0 0
        %3174 = vmatpush1.bf16.msra.mxu0 0
        %3175 = vmatprep.subr.bf16.mxu0 0
        %3176 = vmatpush1.bf16.msra.mxu0 0
        %3177 = vmatprep.subr.bf16.mxu0 0
        %3178 = vmatpush1.bf16.msra.mxu0 0
        %3179 = vmatprep.subr.bf16.mxu0 0
        %3180 = vmatpush1.bf16.msra.mxu0 0
        %3181 = vmatprep.subr.bf16.mxu0 0
        %3182 = vmatpush1.bf16.msra.mxu0 0
        %3183 = vmatprep.subr.bf16.mxu0 0
        %3184 = vmatpush1.bf16.msra.mxu0 0
        %3185 = vmatprep.subr.bf16.mxu0 0
        %3186 = vmatpush1.bf16.msra.mxu0 0
        %3187 = vmatprep.subr.bf16.mxu0 0
        %3188 = vmatpush1.bf16.msra.mxu0 0
        %3189 = vmatprep.subr.bf16.mxu0 0
        %3190 = vmatpush1.bf16.msra.mxu0 0
        %3191 = vmatprep.subr.bf16.mxu0 0
        %3192 = vmatpush1.bf16.msra.mxu0 0
        %3193 = vmatprep.subr.bf16.mxu0 0
        %3194 = vmatpush1.bf16.msra.mxu0 0
        %3195 = vmatprep.mubr.bf16.mxu0 0
        %3196 = vmatmul.mubr.bf16.gmra.mrb[0].mxu0 %v3161
        %v3197 = vpop.f32.mrb[0].mxu0
        %v3198 = vadd.f32 0.0, %v3197
        %v3199 = vpop.f32.mrb[0].mxu0
        %v3200 = vpop.f32.mrb[0].mxu0
        %v3201 = vadd.f32 0.0, %v3200
        %v3202 = vpop.f32.mrb[0].mxu0
        %3203 = vdwg.mxu0
        %v3205 = vsel %vm2855, %v3145, 0
        %3207 = vmatprep.subr.bf16.mxu0 0
        %3208 = vmatpush1.bf16.msra.mxu0 %v2083
        %3209 = vmatprep.subr.bf16.mxu0 0
        %3210 = vmatpush1.bf16.msra.mxu0 0
        %3211 = vmatprep.subr.bf16.mxu0 0
        %3212 = vmatpush1.bf16.msra.mxu0 0
        %3213 = vmatprep.subr.bf16.mxu0 0
        %3214 = vmatpush1.bf16.msra.mxu0 0
        %3215 = vmatprep.subr.bf16.mxu0 0
        %3216 = vmatpush1.bf16.msra.mxu0 0
        %3217 = vmatprep.subr.bf16.mxu0 0
        %3218 = vmatpush1.bf16.msra.mxu0 0
        %3219 = vmatprep.subr.bf16.mxu0 0
        %3220 = vmatpush1.bf16.msra.mxu0 0
        %3221 = vmatprep.subr.bf16.mxu0 0
        %3222 = vmatpush1.bf16.msra.mxu0 0
        %3223 = vmatprep.subr.bf16.mxu0 0
        %3224 = vmatpush1.bf16.msra.mxu0 0
        %3225 = vmatprep.subr.bf16.mxu0 0
        %3226 = vmatpush1.bf16.msra.mxu0 0
        %3227 = vmatprep.subr.bf16.mxu0 0
        %3228 = vmatpush1.bf16.msra.mxu0 0
        %3229 = vmatprep.subr.bf16.mxu0 0
        %3230 = vmatpush1.bf16.msra.mxu0 0
        %3231 = vmatprep.subr.bf16.mxu0 0
        %3232 = vmatpush1.bf16.msra.mxu0 0
        %3233 = vmatprep.subr.bf16.mxu0 0
        %3234 = vmatpush1.bf16.msra.mxu0 0
        %3235 = vmatprep.subr.bf16.mxu0 0
        %3236 = vmatpush1.bf16.msra.mxu0 0
        %3237 = vmatprep.subr.bf16.mxu0 0
        %3238 = vmatpush1.bf16.msra.mxu0 0
        %3239 = vmatprep.mubr.bf16.mxu0 0
        %3240 = vmatmul.mubr.bf16.gmra.mrb[0].mxu0 %v3205
        %v3241 = vpop.f32.mrb[0].mxu0
        %v3242 = vadd.f32 0.0, %v3241
        %v3243 = vpop.f32.mrb[0].mxu0
        %v3244 = vpop.f32.mrb[0].mxu0
        %v3245 = vadd.f32 0.0, %v3244
        %v3246 = vpop.f32.mrb[0].mxu0
        %3247 = vdwg.mxu0
        %v3249 = vsel %vm2855, %v3146, 0
        %3251 = vmatprep.subr.bf16.mxu0 0
        %3252 = vmatpush1.bf16.msra.mxu0 %v2084
        %3253 = vmatprep.subr.bf16.mxu0 0
        %3254 = vmatpush1.bf16.msra.mxu0 0
        %3255 = vmatprep.subr.bf16.mxu0 0
        %3256 = vmatpush1.bf16.msra.mxu0 0
        %3257 = vmatprep.subr.bf16.mxu0 0
        %3258 = vmatpush1.bf16.msra.mxu0 0
        %3259 = vmatprep.subr.bf16.mxu0 0
        %3260 = vmatpush1.bf16.msra.mxu0 0
        %3261 = vmatprep.subr.bf16.mxu0 0
        %3262 = vmatpush1.bf16.msra.mxu0 0
        %3263 = vmatprep.subr.bf16.mxu0 0
        %3264 = vmatpush1.bf16.msra.mxu0 0
        %3265 = vmatprep.subr.bf16.mxu0 0
        %3266 = vmatpush1.bf16.msra.mxu0 0
        %3267 = vmatprep.subr.bf16.mxu0 0
        %3268 = vmatpush1.bf16.msra.mxu0 0
        %3269 = vmatprep.subr.bf16.mxu0 0
        %3270 = vmatpush1.bf16.msra.mxu0 0
        %3271 = vmatprep.subr.bf16.mxu0 0
        %3272 = vmatpush1.bf16.msra.mxu0 0
        %3273 = vmatprep.subr.bf16.mxu0 0
        %3274 = vmatpush1.bf16.msra.mxu0 0
        %3275 = vmatprep.subr.bf16.mxu0 0
        %3276 = vmatpush1.bf16.msra.mxu0 0
        %3277 = vmatprep.subr.bf16.mxu0 0
        %3278 = vmatpush1.bf16.msra.mxu0 0
        %3279 = vmatprep.subr.bf16.mxu0 0
        %3280 = vmatpush1.bf16.msra.mxu0 0
        %3281 = vmatprep.subr.bf16.mxu0 0
        %3282 = vmatpush1.bf16.msra.mxu0 0
        %3283 = vmatprep.mubr.bf16.mxu0 0
        %3284 = vmatmul.mubr.bf16.gmra.mrb[0].mxu0 %v3249
        %v3285 = vpop.f32.mrb[0].mxu0
        %v3286 = vadd.f32 0.0, %v3285
        %v3287 = vpop.f32.mrb[0].mxu0
        %v3288 = vpop.f32.mrb[0].mxu0
        %v3289 = vadd.f32 0.0, %v3288
        %v3290 = vpop.f32.mrb[0].mxu0
        %3291 = vdwg.mxu0
        %v3293 = vsel %vm2855, %v3147, 0
        %3295 = vmatprep.subr.bf16.mxu0 0
        %3296 = vmatpush1.bf16.msra.mxu0 %v2085
        %3297 = vmatprep.subr.bf16.mxu0 0
        %3298 = vmatpush1.bf16.msra.mxu0 0
        %3299 = vmatprep.subr.bf16.mxu0 0
        %3300 = vmatpush1.bf16.msra.mxu0 0
        %3301 = vmatprep.subr.bf16.mxu0 0
        %3302 = vmatpush1.bf16.msra.mxu0 0
        %3303 = vmatprep.subr.bf16.mxu0 0
        %3304 = vmatpush1.bf16.msra.mxu0 0
        %3305 = vmatprep.subr.bf16.mxu0 0
        %3306 = vmatpush1.bf16.msra.mxu0 0
        %3307 = vmatprep.subr.bf16.mxu0 0
        %3308 = vmatpush1.bf16.msra.mxu0 0
        %3309 = vmatprep.subr.bf16.mxu0 0
        %3310 = vmatpush1.bf16.msra.mxu0 0
        %3311 = vmatprep.subr.bf16.mxu0 0
        %3312 = vmatpush1.bf16.msra.mxu0 0
        %3313 = vmatprep.subr.bf16.mxu0 0
        %3314 = vmatpush1.bf16.msra.mxu0 0
        %3315 = vmatprep.subr.bf16.mxu0 0
        %3316 = vmatpush1.bf16.msra.mxu0 0
        %3317 = vmatprep.subr.bf16.mxu0 0
        %3318 = vmatpush1.bf16.msra.mxu0 0
        %3319 = vmatprep.subr.bf16.mxu0 0
        %3320 = vmatpush1.bf16.msra.mxu0 0
        %3321 = vmatprep.subr.bf16.mxu0 0
        %3322 = vmatpush1.bf16.msra.mxu0 0
        %3323 = vmatprep.subr.bf16.mxu0 0
        %3324 = vmatpush1.bf16.msra.mxu0 0
        %3325 = vmatprep.subr.bf16.mxu0 0
        %3326 = vmatpush1.bf16.msra.mxu0 0
        %3327 = vmatprep.mubr.bf16.mxu0 0
        %3328 = vmatmul.mubr.bf16.gmra.mrb[0].mxu0 %v3293
        %v3329 = vpop.f32.mrb[0].mxu0
        %v3330 = vadd.f32 0.0, %v3329
        %v3331 = vpop.f32.mrb[0].mxu0
        %v3332 = vpop.f32.mrb[0].mxu0
        %v3333 = vadd.f32 0.0, %v3332
        %v3334 = vpop.f32.mrb[0].mxu0
        %3335 = vdwg.mxu0
        %v3337 = vsel %vm2855, %v3148, 0
        %3339 = vmatprep.subr.bf16.mxu0 0
        %3340 = vmatpush1.bf16.msra.mxu0 %v2086
        %3341 = vmatprep.subr.bf16.mxu0 0
        %3342 = vmatpush1.bf16.msra.mxu0 0
        %3343 = vmatprep.subr.bf16.mxu0 0
        %3344 = vmatpush1.bf16.msra.mxu0 0
        %3345 = vmatprep.subr.bf16.mxu0 0
        %3346 = vmatpush1.bf16.msra.mxu0 0
        %3347 = vmatprep.subr.bf16.mxu0 0
        %3348 = vmatpush1.bf16.msra.mxu0 0
        %3349 = vmatprep.subr.bf16.mxu0 0
        %3350 = vmatpush1.bf16.msra.mxu0 0
        %3351 = vmatprep.subr.bf16.mxu0 0
        %3352 = vmatpush1.bf16.msra.mxu0 0
        %3353 = vmatprep.subr.bf16.mxu0 0
        %3354 = vmatpush1.bf16.msra.mxu0 0
        %3355 = vmatprep.subr.bf16.mxu0 0
        %3356 = vmatpush1.bf16.msra.mxu0 0
        %3357 = vmatprep.subr.bf16.mxu0 0
        %3358 = vmatpush1.bf16.msra.mxu0 0
        %3359 = vmatprep.subr.bf16.mxu0 0
        %3360 = vmatpush1.bf16.msra.mxu0 0
        %3361 = vmatprep.subr.bf16.mxu0 0
        %3362 = vmatpush1.bf16.msra.mxu0 0
        %3363 = vmatprep.subr.bf16.mxu0 0
        %3364 = vmatpush1.bf16.msra.mxu0 0
        %3365 = vmatprep.subr.bf16.mxu0 0
        %3366 = vmatpush1.bf16.msra.mxu0 0
        %3367 = vmatprep.subr.bf16.mxu0 0
        %3368 = vmatpush1.bf16.msra.mxu0 0
        %3369 = vmatprep.subr.bf16.mxu0 0
        %3370 = vmatpush1.bf16.msra.mxu0 0
        %3371 = vmatprep.mubr.bf16.mxu0 0
        %3372 = vmatmul.mubr.bf16.gmra.mrb[0].mxu0 %v3337
        %v3373 = vpop.f32.mrb[0].mxu0
        %v3374 = vadd.f32 0.0, %v3373
        %v3375 = vpop.f32.mrb[0].mxu0
        %v3376 = vpop.f32.mrb[0].mxu0
        %v3377 = vadd.f32 0.0, %v3376
        %v3378 = vpop.f32.mrb[0].mxu0
        %3379 = vdwg.mxu0
        %v3381 = vsel %vm2855, %v3149, 0
        %3383 = vmatprep.subr.bf16.mxu0 0
        %3384 = vmatpush1.bf16.msra.mxu0 %v2087
        %3385 = vmatprep.subr.bf16.mxu0 0
        %3386 = vmatpush1.bf16.msra.mxu0 0
        %3387 = vmatprep.subr.bf16.mxu0 0
        %3388 = vmatpush1.bf16.msra.mxu0 0
        %3389 = vmatprep.subr.bf16.mxu0 0
        %3390 = vmatpush1.bf16.msra.mxu0 0
        %3391 = vmatprep.subr.bf16.mxu0 0
        %3392 = vmatpush1.bf16.msra.mxu0 0
        %3393 = vmatprep.subr.bf16.mxu0 0
        %3394 = vmatpush1.bf16.msra.mxu0 0
        %3395 = vmatprep.subr.bf16.mxu0 0
        %3396 = vmatpush1.bf16.msra.mxu0 0
        %3397 = vmatprep.subr.bf16.mxu0 0
        %3398 = vmatpush1.bf16.msra.mxu0 0
        %3399 = vmatprep.subr.bf16.mxu0 0
        %3400 = vmatpush1.bf16.msra.mxu0 0
        %3401 = vmatprep.subr.bf16.mxu0 0
        %3402 = vmatpush1.bf16.msra.mxu0 0
        %3403 = vmatprep.subr.bf16.mxu0 0
        %3404 = vmatpush1.bf16.msra.mxu0 0
        %3405 = vmatprep.subr.bf16.mxu0 0
        %3406 = vmatpush1.bf16.msra.mxu0 0
        %3407 = vmatprep.subr.bf16.mxu0 0
        %3408 = vmatpush1.bf16.msra.mxu0 0
        %3409 = vmatprep.subr.bf16.mxu0 0
        %3410 = vmatpush1.bf16.msra.mxu0 0
        %3411 = vmatprep.subr.bf16.mxu0 0
        %3412 = vmatpush1.bf16.msra.mxu0 0
        %3413 = vmatprep.subr.bf16.mxu0 0
        %3414 = vmatpush1.bf16.msra.mxu0 0
        %3415 = vmatprep.mubr.bf16.mxu0 0
        %3416 = vmatmul.mubr.bf16.gmra.mrb[0].mxu0 %v3381
        %v3417 = vpop.f32.mrb[0].mxu0
        %v3418 = vadd.f32 0.0, %v3417
        %v3419 = vpop.f32.mrb[0].mxu0
        %v3420 = vpop.f32.mrb[0].mxu0
        %v3421 = vadd.f32 0.0, %v3420
        %v3422 = vpop.f32.mrb[0].mxu0
        %3423 = vdwg.mxu0
        %v3425 = vsel %vm2855, %v3150, 0
        %3427 = vmatprep.subr.bf16.mxu0 0
        %3428 = vmatpush1.bf16.msra.mxu0 %v2088
        %3429 = vmatprep.subr.bf16.mxu0 0
        %3430 = vmatpush1.bf16.msra.mxu0 0
        %3431 = vmatprep.subr.bf16.mxu0 0
        %3432 = vmatpush1.bf16.msra.mxu0 0
        %3433 = vmatprep.subr.bf16.mxu0 0
        %3434 = vmatpush1.bf16.msra.mxu0 0
        %3435 = vmatprep.subr.bf16.mxu0 0
        %3436 = vmatpush1.bf16.msra.mxu0 0
        %3437 = vmatprep.subr.bf16.mxu0 0
        %3438 = vmatpush1.bf16.msra.mxu0 0
        %3439 = vmatprep.subr.bf16.mxu0 0
        %3440 = vmatpush1.bf16.msra.mxu0 0
        %3441 = vmatprep.subr.bf16.mxu0 0
        %3442 = vmatpush1.bf16.msra.mxu0 0
        %3443 = vmatprep.subr.bf16.mxu0 0
        %3444 = vmatpush1.bf16.msra.mxu0 0
        %3445 = vmatprep.subr.bf16.mxu0 0
        %3446 = vmatpush1.bf16.msra.mxu0 0
        %3447 = vmatprep.subr.bf16.mxu0 0
        %3448 = vmatpush1.bf16.msra.mxu0 0
        %3449 = vmatprep.subr.bf16.mxu0 0
        %3450 = vmatpush1.bf16.msra.mxu0 0
        %3451 = vmatprep.subr.bf16.mxu0 0
        %3452 = vmatpush1.bf16.msra.mxu0 0
        %3453 = vmatprep.subr.bf16.mxu0 0
        %3454 = vmatpush1.bf16.msra.mxu0 0
        %3455 = vmatprep.subr.bf16.mxu0 0
        %3456 = vmatpush1.bf16.msra.mxu0 0
        %3457 = vmatprep.subr.bf16.mxu0 0
        %3458 = vmatpush1.bf16.msra.mxu0 0
        %3459 = vmatprep.mubr.bf16.mxu0 0
        %3460 = vmatmul.mubr.bf16.gmra.mrb[0].mxu0 %v3425
        %v3461 = vpop.f32.mrb[0].mxu0
        %v3462 = vadd.f32 0.0, %v3461
        %v3463 = vpop.f32.mrb[0].mxu0
        %v3464 = vpop.f32.mrb[0].mxu0
        %v3465 = vadd.f32 0.0, %v3464
        %v3466 = vpop.f32.mrb[0].mxu0
        %3467 = vdwg.mxu0
        %v3469 = vsel %vm2855, %v3151, 0
        %3471 = vmatprep.subr.bf16.mxu0 0
        %3472 = vmatpush1.bf16.msra.mxu0 %v2089
        %3473 = vmatprep.subr.bf16.mxu0 0
        %3474 = vmatpush1.bf16.msra.mxu0 0
        %3475 = vmatprep.subr.bf16.mxu0 0
        %3476 = vmatpush1.bf16.msra.mxu0 0
        %3477 = vmatprep.subr.bf16.mxu0 0
        %3478 = vmatpush1.bf16.msra.mxu0 0
        %3479 = vmatprep.subr.bf16.mxu0 0
        %3480 = vmatpush1.bf16.msra.mxu0 0
        %3481 = vmatprep.subr.bf16.mxu0 0
        %3482 = vmatpush1.bf16.msra.mxu0 0
        %3483 = vmatprep.subr.bf16.mxu0 0
        %3484 = vmatpush1.bf16.msra.mxu0 0
        %3485 = vmatprep.subr.bf16.mxu0 0
        %3486 = vmatpush1.bf16.msra.mxu0 0
        %3487 = vmatprep.subr.bf16.mxu0 0
        %3488 = vmatpush1.bf16.msra.mxu0 0
        %3489 = vmatprep.subr.bf16.mxu0 0
        %3490 = vmatpush1.bf16.msra.mxu0 0
        %3491 = vmatprep.subr.bf16.mxu0 0
        %3492 = vmatpush1.bf16.msra.mxu0 0
        %3493 = vmatprep.subr.bf16.mxu0 0
        %3494 = vmatpush1.bf16.msra.mxu0 0
        %3495 = vmatprep.subr.bf16.mxu0 0
        %3496 = vmatpush1.bf16.msra.mxu0 0
        %3497 = vmatprep.subr.bf16.mxu0 0
        %3498 = vmatpush1.bf16.msra.mxu0 0
        %3499 = vmatprep.subr.bf16.mxu0 0
        %3500 = vmatpush1.bf16.msra.mxu0 0
        %3501 = vmatprep.subr.bf16.mxu0 0
        %3502 = vmatpush1.bf16.msra.mxu0 0
        %3503 = vmatprep.mubr.bf16.mxu0 0
        %3504 = vmatmul.mubr.bf16.gmra.mrb[0].mxu0 %v3469
        %v3505 = vpop.f32.mrb[0].mxu0
        %v3506 = vadd.f32 0.0, %v3505
        %v3507 = vpop.f32.mrb[0].mxu0
        %v3508 = vpop.f32.mrb[0].mxu0
        %v3509 = vadd.f32 0.0, %v3508
        %v3510 = vpop.f32.mrb[0].mxu0
        %3511 = vdwg.mxu0
        %v3513 = vsel %vm2855, %v3152, 0
        %3515 = vmatprep.subr.bf16.mxu0 0
        %3516 = vmatpush1.bf16.msra.mxu0 %v2090
        %3517 = vmatprep.subr.bf16.mxu0 0
        %3518 = vmatpush1.bf16.msra.mxu0 0
        %3519 = vmatprep.subr.bf16.mxu0 0
        %3520 = vmatpush1.bf16.msra.mxu0 0
        %3521 = vmatprep.subr.bf16.mxu0 0
        %3522 = vmatpush1.bf16.msra.mxu0 0
        %3523 = vmatprep.subr.bf16.mxu0 0
        %3524 = vmatpush1.bf16.msra.mxu0 0
        %3525 = vmatprep.subr.bf16.mxu0 0
        %3526 = vmatpush1.bf16.msra.mxu0 0
        %3527 = vmatprep.subr.bf16.mxu0 0
        %3528 = vmatpush1.bf16.msra.mxu0 0
        %3529 = vmatprep.subr.bf16.mxu0 0
        %3530 = vmatpush1.bf16.msra.mxu0 0
        %3531 = vmatprep.subr.bf16.mxu0 0
        %3532 = vmatpush1.bf16.msra.mxu0 0
        %3533 = vmatprep.subr.bf16.mxu0 0
        %3534 = vmatpush1.bf16.msra.mxu0 0
        %3535 = vmatprep.subr.bf16.mxu0 0
        %3536 = vmatpush1.bf16.msra.mxu0 0
        %3537 = vmatprep.subr.bf16.mxu0 0
        %3538 = vmatpush1.bf16.msra.mxu0 0
        %3539 = vmatprep.subr.bf16.mxu0 0
        %3540 = vmatpush1.bf16.msra.mxu0 0
        %3541 = vmatprep.subr.bf16.mxu0 0
        %3542 = vmatpush1.bf16.msra.mxu0 0
        %3543 = vmatprep.subr.bf16.mxu0 0
        %3544 = vmatpush1.bf16.msra.mxu0 0
        %3545 = vmatprep.subr.bf16.mxu0 0
        %3546 = vmatpush1.bf16.msra.mxu0 0
        %3547 = vmatprep.mubr.bf16.mxu0 0
        %3548 = vmatmul.mubr.bf16.gmra.mrb[0].mxu0 %v3513
        %v3549 = vpop.f32.mrb[0].mxu0
        %v3550 = vadd.f32 0.0, %v3549
        %v3551 = vpop.f32.mrb[0].mxu0
        %v3552 = vpop.f32.mrb[0].mxu0
        %v3553 = vadd.f32 0.0, %v3552
        %v3554 = vpop.f32.mrb[0].mxu0
        %3555 = vdwg.mxu0
        %v3557 = vsel %vm2855, %v3153, 0
        %3559 = vmatprep.subr.bf16.mxu0 0
        %3560 = vmatpush1.bf16.msra.mxu0 %v2091
        %3561 = vmatprep.subr.bf16.mxu0 0
        %3562 = vmatpush1.bf16.msra.mxu0 0
        %3563 = vmatprep.subr.bf16.mxu0 0
        %3564 = vmatpush1.bf16.msra.mxu0 0
        %3565 = vmatprep.subr.bf16.mxu0 0
        %3566 = vmatpush1.bf16.msra.mxu0 0
        %3567 = vmatprep.subr.bf16.mxu0 0
        %3568 = vmatpush1.bf16.msra.mxu0 0
        %3569 = vmatprep.subr.bf16.mxu0 0
        %3570 = vmatpush1.bf16.msra.mxu0 0
        %3571 = vmatprep.subr.bf16.mxu0 0
        %3572 = vmatpush1.bf16.msra.mxu0 0
        %3573 = vmatprep.subr.bf16.mxu0 0
        %3574 = vmatpush1.bf16.msra.mxu0 0
        %3575 = vmatprep.subr.bf16.mxu0 0
        %3576 = vmatpush1.bf16.msra.mxu0 0
        %3577 = vmatprep.subr.bf16.mxu0 0
        %3578 = vmatpush1.bf16.msra.mxu0 0
        %3579 = vmatprep.subr.bf16.mxu0 0
        %3580 = vmatpush1.bf16.msra.mxu0 0
        %3581 = vmatprep.subr.bf16.mxu0 0
        %3582 = vmatpush1.bf16.msra.mxu0 0
        %3583 = vmatprep.subr.bf16.mxu0 0
        %3584 = vmatpush1.bf16.msra.mxu0 0
        %3585 = vmatprep.subr.bf16.mxu0 0
        %3586 = vmatpush1.bf16.msra.mxu0 0
        %3587 = vmatprep.subr.bf16.mxu0 0
        %3588 = vmatpush1.bf16.msra.mxu0 0
        %3589 = vmatprep.subr.bf16.mxu0 0
        %3590 = vmatpush1.bf16.msra.mxu0 0
        %3591 = vmatprep.mubr.bf16.mxu0 0
        %3592 = vmatmul.mubr.bf16.gmra.mrb[0].mxu0 %v3557
        %v3593 = vpop.f32.mrb[0].mxu0
        %v3594 = vadd.f32 0.0, %v3593
        %v3595 = vpop.f32.mrb[0].mxu0
        %v3596 = vpop.f32.mrb[0].mxu0
        %v3597 = vadd.f32 0.0, %v3596
        %v3598 = vpop.f32.mrb[0].mxu0
        %3599 = vdwg.mxu0
        %v3601 = vsel %vm2855, %v3154, 0
        %3603 = vmatprep.subr.bf16.mxu0 0
        %3604 = vmatpush1.bf16.msra.mxu0 %v2092
        %3605 = vmatprep.subr.bf16.mxu0 0
        %3606 = vmatpush1.bf16.msra.mxu0 0
        %3607 = vmatprep.subr.bf16.mxu0 0
        %3608 = vmatpush1.bf16.msra.mxu0 0
        %3609 = vmatprep.subr.bf16.mxu0 0
        %3610 = vmatpush1.bf16.msra.mxu0 0
        %3611 = vmatprep.subr.bf16.mxu0 0
        %3612 = vmatpush1.bf16.msra.mxu0 0
        %3613 = vmatprep.subr.bf16.mxu0 0
        %3614 = vmatpush1.bf16.msra.mxu0 0
        %3615 = vmatprep.subr.bf16.mxu0 0
        %3616 = vmatpush1.bf16.msra.mxu0 0
        %3617 = vmatprep.subr.bf16.mxu0 0
        %3618 = vmatpush1.bf16.msra.mxu0 0
        %3619 = vmatprep.subr.bf16.mxu0 0
        %3620 = vmatpush1.bf16.msra.mxu0 0
        %3621 = vmatprep.subr.bf16.mxu0 0
        %3622 = vmatpush1.bf16.msra.mxu0 0
        %3623 = vmatprep.subr.bf16.mxu0 0
        %3624 = vmatpush1.bf16.msra.mxu0 0
        %3625 = vmatprep.subr.bf16.mxu0 0
        %3626 = vmatpush1.bf16.msra.mxu0 0
        %3627 = vmatprep.subr.bf16.mxu0 0
        %3628 = vmatpush1.bf16.msra.mxu0 0
        %3629 = vmatprep.subr.bf16.mxu0 0
        %3630 = vmatpush1.bf16.msra.mxu0 0
        %3631 = vmatprep.subr.bf16.mxu0 0
        %3632 = vmatpush1.bf16.msra.mxu0 0
        %3633 = vmatprep.subr.bf16.mxu0 0
        %3634 = vmatpush1.bf16.msra.mxu0 0
        %3635 = vmatprep.mubr.bf16.mxu0 0
        %3636 = vmatmul.mubr.bf16.gmra.mrb[0].mxu0 %v3601
        %v3637 = vpop.f32.mrb[0].mxu0
        %v3638 = vadd.f32 0.0, %v3637
        %v3639 = vpop.f32.mrb[0].mxu0
        %v3640 = vpop.f32.mrb[0].mxu0
        %v3641 = vadd.f32 0.0, %v3640
        %v3642 = vpop.f32.mrb[0].mxu0
        %3643 = vdwg.mxu0
        %v3645 = vsel %vm2855, %v3155, 0
        %3647 = vmatprep.subr.bf16.mxu0 0
        %3648 = vmatpush1.bf16.msra.mxu0 %v2093
        %3649 = vmatprep.subr.bf16.mxu0 0
        %3650 = vmatpush1.bf16.msra.mxu0 0
        %3651 = vmatprep.subr.bf16.mxu0 0
        %3652 = vmatpush1.bf16.msra.mxu0 0
        %3653 = vmatprep.subr.bf16.mxu0 0
        %3654 = vmatpush1.bf16.msra.mxu0 0
        %3655 = vmatprep.subr.bf16.mxu0 0
        %3656 = vmatpush1.bf16.msra.mxu0 0
        %3657 = vmatprep.subr.bf16.mxu0 0
        %3658 = vmatpush1.bf16.msra.mxu0 0
        %3659 = vmatprep.subr.bf16.mxu0 0
        %3660 = vmatpush1.bf16.msra.mxu0 0
        %3661 = vmatprep.subr.bf16.mxu0 0
        %3662 = vmatpush1.bf16.msra.mxu0 0
        %3663 = vmatprep.subr.bf16.mxu0 0
        %3664 = vmatpush1.bf16.msra.mxu0 0
        %3665 = vmatprep.subr.bf16.mxu0 0
        %3666 = vmatpush1.bf16.msra.mxu0 0
        %3667 = vmatprep.subr.bf16.mxu0 0
        %3668 = vmatpush1.bf16.msra.mxu0 0
        %3669 = vmatprep.subr.bf16.mxu0 0
        %3670 = vmatpush1.bf16.msra.mxu0 0
        %3671 = vmatprep.subr.bf16.mxu0 0
        %3672 = vmatpush1.bf16.msra.mxu0 0
        %3673 = vmatprep.subr.bf16.mxu0 0
        %3674 = vmatpush1.bf16.msra.mxu0 0
        %3675 = vmatprep.subr.bf16.mxu0 0
        %3676 = vmatpush1.bf16.msra.mxu0 0
        %3677 = vmatprep.subr.bf16.mxu0 0
        %3678 = vmatpush1.bf16.msra.mxu0 0
        %3679 = vmatprep.mubr.bf16.mxu0 0
        %3680 = vmatmul.mubr.bf16.gmra.mrb[0].mxu0 %v3645
        %v3681 = vpop.f32.mrb[0].mxu0
        %v3682 = vadd.f32 0.0, %v3681
        %v3683 = vpop.f32.mrb[0].mxu0
        %v3684 = vpop.f32.mrb[0].mxu0
        %v3685 = vadd.f32 0.0, %v3684
        %v3686 = vpop.f32.mrb[0].mxu0
        %3687 = vdwg.mxu0
        %v3689 = vsel %vm2855, %v3156, 0
        %3691 = vmatprep.subr.bf16.mxu0 0
        %3692 = vmatpush1.bf16.msra.mxu0 %v2094
        %3693 = vmatprep.subr.bf16.mxu0 0
        %3694 = vmatpush1.bf16.msra.mxu0 0
        %3695 = vmatprep.subr.bf16.mxu0 0
        %3696 = vmatpush1.bf16.msra.mxu0 0
        %3697 = vmatprep.subr.bf16.mxu0 0
        %3698 = vmatpush1.bf16.msra.mxu0 0
        %3699 = vmatprep.subr.bf16.mxu0 0
        %3700 = vmatpush1.bf16.msra.mxu0 0
        %3701 = vmatprep.subr.bf16.mxu0 0
        %3702 = vmatpush1.bf16.msra.mxu0 0
        %3703 = vmatprep.subr.bf16.mxu0 0
        %3704 = vmatpush1.bf16.msra.mxu0 0
        %3705 = vmatprep.subr.bf16.mxu0 0
        %3706 = vmatpush1.bf16.msra.mxu0 0
        %3707 = vmatprep.subr.bf16.mxu0 0
        %3708 = vmatpush1.bf16.msra.mxu0 0
        %3709 = vmatprep.subr.bf16.mxu0 0
        %3710 = vmatpush1.bf16.msra.mxu0 0
        %3711 = vmatprep.subr.bf16.mxu0 0
        %3712 = vmatpush1.bf16.msra.mxu0 0
        %3713 = vmatprep.subr.bf16.mxu0 0
        %3714 = vmatpush1.bf16.msra.mxu0 0
        %3715 = vmatprep.subr.bf16.mxu0 0
        %3716 = vmatpush1.bf16.msra.mxu0 0
        %3717 = vmatprep.subr.bf16.mxu0 0
        %3718 = vmatpush1.bf16.msra.mxu0 0
        %3719 = vmatprep.subr.bf16.mxu0 0
        %3720 = vmatpush1.bf16.msra.mxu0 0
        %3721 = vmatprep.subr.bf16.mxu0 0
        %3722 = vmatpush1.bf16.msra.mxu0 0
        %3723 = vmatprep.mubr.bf16.mxu0 0
        %3724 = vmatmul.mubr.bf16.gmra.mrb[0].mxu0 %v3689
        %v3725 = vpop.f32.mrb[0].mxu0
        %v3726 = vadd.f32 0.0, %v3725
        %v3727 = vpop.f32.mrb[0].mxu0
        %v3728 = vpop.f32.mrb[0].mxu0
        %v3729 = vadd.f32 0.0, %v3728
        %v3730 = vpop.f32.mrb[0].mxu0
        %3731 = vdwg.mxu0
        %v3733 = vsel %vm2855, %v3157, 0
        %3735 = vmatprep.subr.bf16.mxu0 0
        %3736 = vmatpush1.bf16.msra.mxu0 %v2095
        %3737 = vmatprep.subr.bf16.mxu0 0
        %3738 = vmatpush1.bf16.msra.mxu0 0
        %3739 = vmatprep.subr.bf16.mxu0 0
        %3740 = vmatpush1.bf16.msra.mxu0 0
        %3741 = vmatprep.subr.bf16.mxu0 0
        %3742 = vmatpush1.bf16.msra.mxu0 0
        %3743 = vmatprep.subr.bf16.mxu0 0
        %3744 = vmatpush1.bf16.msra.mxu0 0
        %3745 = vmatprep.subr.bf16.mxu0 0
        %3746 = vmatpush1.bf16.msra.mxu0 0
        %3747 = vmatprep.subr.bf16.mxu0 0
        %3748 = vmatpush1.bf16.msra.mxu0 0
        %3749 = vmatprep.subr.bf16.mxu0 0
        %3750 = vmatpush1.bf16.msra.mxu0 0
        %3751 = vmatprep.subr.bf16.mxu0 0
        %3752 = vmatpush1.bf16.msra.mxu0 0
        %3753 = vmatprep.subr.bf16.mxu0 0
        %3754 = vmatpush1.bf16.msra.mxu0 0
        %3755 = vmatprep.subr.bf16.mxu0 0
        %3756 = vmatpush1.bf16.msra.mxu0 0
        %3757 = vmatprep.subr.bf16.mxu0 0
        %3758 = vmatpush1.bf16.msra.mxu0 0
        %3759 = vmatprep.subr.bf16.mxu0 0
        %3760 = vmatpush1.bf16.msra.mxu0 0
        %3761 = vmatprep.subr.bf16.mxu0 0
        %3762 = vmatpush1.bf16.msra.mxu0 0
        %3763 = vmatprep.subr.bf16.mxu0 0
        %3764 = vmatpush1.bf16.msra.mxu0 0
        %3765 = vmatprep.subr.bf16.mxu0 0
        %3766 = vmatpush1.bf16.msra.mxu0 0
        %3767 = vmatprep.mubr.bf16.mxu0 0
        %3768 = vmatmul.mubr.bf16.gmra.mrb[0].mxu0 %v3733
        %v3769 = vpop.f32.mrb[0].mxu0
        %v3770 = vadd.f32 0.0, %v3769
        %v3771 = vpop.f32.mrb[0].mxu0
        %v3772 = vpop.f32.mrb[0].mxu0
        %v3773 = vadd.f32 0.0, %v3772
        %v3774 = vpop.f32.mrb[0].mxu0
        %3775 = vdwg.mxu0
        %v3777 = vsel %vm2855, %v3158, 0
        %3779 = vmatprep.subr.bf16.mxu0 0
        %3780 = vmatpush1.bf16.msra.mxu0 %v2096
        %3781 = vmatprep.subr.bf16.mxu0 0
        %3782 = vmatpush1.bf16.msra.mxu0 0
        %3783 = vmatprep.subr.bf16.mxu0 0
        %3784 = vmatpush1.bf16.msra.mxu0 0
        %3785 = vmatprep.subr.bf16.mxu0 0
        %3786 = vmatpush1.bf16.msra.mxu0 0
        %3787 = vmatprep.subr.bf16.mxu0 0
        %3788 = vmatpush1.bf16.msra.mxu0 0
        %3789 = vmatprep.subr.bf16.mxu0 0
        %3790 = vmatpush1.bf16.msra.mxu0 0
        %3791 = vmatprep.subr.bf16.mxu0 0
        %3792 = vmatpush1.bf16.msra.mxu0 0
        %3793 = vmatprep.subr.bf16.mxu0 0
        %3794 = vmatpush1.bf16.msra.mxu0 0
        %3795 = vmatprep.subr.bf16.mxu0 0
        %3796 = vmatpush1.bf16.msra.mxu0 0
        %3797 = vmatprep.subr.bf16.mxu0 0
        %3798 = vmatpush1.bf16.msra.mxu0 0
        %3799 = vmatprep.subr.bf16.mxu0 0
        %3800 = vmatpush1.bf16.msra.mxu0 0
        %3801 = vmatprep.subr.bf16.mxu0 0
        %3802 = vmatpush1.bf16.msra.mxu0 0
        %3803 = vmatprep.subr.bf16.mxu0 0
        %3804 = vmatpush1.bf16.msra.mxu0 0
        %3805 = vmatprep.subr.bf16.mxu0 0
        %3806 = vmatpush1.bf16.msra.mxu0 0
        %3807 = vmatprep.subr.bf16.mxu0 0
        %3808 = vmatpush1.bf16.msra.mxu0 0
        %3809 = vmatprep.subr.bf16.mxu0 0
        %3810 = vmatpush1.bf16.msra.mxu0 0
        %3811 = vmatprep.mubr.bf16.mxu0 0
        %3812 = vmatmul.mubr.bf16.gmra.mrb[0].mxu0 %v3777
        %v3813 = vpop.f32.mrb[0].mxu0
        %v3814 = vadd.f32 0.0, %v3813
        %v3815 = vpop.f32.mrb[0].mxu0
        %v3816 = vpop.f32.mrb[0].mxu0
        %v3817 = vadd.f32 0.0, %v3816
        %v3818 = vpop.f32.mrb[0].mxu0
        %3819 = vdwg.mxu0
        %v3821 = vsel %vm2855, %v3159, 0
        %3823 = vmatprep.subr.bf16.mxu0 0
        %3824 = vmatpush1.bf16.msra.mxu0 %v2097
        %3825 = vmatprep.subr.bf16.mxu0 0
        %3826 = vmatpush1.bf16.msra.mxu0 0
        %3827 = vmatprep.subr.bf16.mxu0 0
        %3828 = vmatpush1.bf16.msra.mxu0 0
        %3829 = vmatprep.subr.bf16.mxu0 0
        %3830 = vmatpush1.bf16.msra.mxu0 0
        %3831 = vmatprep.subr.bf16.mxu0 0
        %3832 = vmatpush1.bf16.msra.mxu0 0
        %3833 = vmatprep.subr.bf16.mxu0 0
        %3834 = vmatpush1.bf16.msra.mxu0 0
        %3835 = vmatprep.subr.bf16.mxu0 0
        %3836 = vmatpush1.bf16.msra.mxu0 0
        %3837 = vmatprep.subr.bf16.mxu0 0
        %3838 = vmatpush1.bf16.msra.mxu0 0
        %3839 = vmatprep.subr.bf16.mxu0 0
        %3840 = vmatpush1.bf16.msra.mxu0 0
        %3841 = vmatprep.subr.bf16.mxu0 0
        %3842 = vmatpush1.bf16.msra.mxu0 0
        %3843 = vmatprep.subr.bf16.mxu0 0
        %3844 = vmatpush1.bf16.msra.mxu0 0
        %3845 = vmatprep.subr.bf16.mxu0 0
        %3846 = vmatpush1.bf16.msra.mxu0 0
        %3847 = vmatprep.subr.bf16.mxu0 0
        %3848 = vmatpush1.bf16.msra.mxu0 0
        %3849 = vmatprep.subr.bf16.mxu0 0
        %3850 = vmatpush1.bf16.msra.mxu0 0
        %3851 = vmatprep.subr.bf16.mxu0 0
        %3852 = vmatpush1.bf16.msra.mxu0 0
        %3853 = vmatprep.subr.bf16.mxu0 0
        %3854 = vmatpush1.bf16.msra.mxu0 0
        %3855 = vmatprep.mubr.bf16.mxu0 0
        %3856 = vmatmul.mubr.bf16.gmra.mrb[0].mxu0 %v3821
        %v3857 = vpop.f32.mrb[0].mxu0
        %v3858 = vadd.f32 0.0, %v3857
        %v3859 = vpop.f32.mrb[0].mxu0
        %v3860 = vpop.f32.mrb[0].mxu0
        %v3861 = vadd.f32 0.0, %v3860
        %v3862 = vpop.f32.mrb[0].mxu0
        %3863 = vdwg.mxu0
        %v3864 = vrcp.pop %v3050
        %v3865 = vrcp.pop %v3053
        %v3866 = vrcp.pop %v3056
        %v3867 = vrcp.pop %v3059
        %v3868 = vrcp.pop %v3062
        %v3869 = vrcp.pop %v3065
        %v3870 = vrcp.pop %v3068
        %v3871 = vrcp.pop %v3071
        %v3872 = vrcp.pop %v3074
        %v3873 = vrcp.pop %v3077
        %v3874 = vrcp.pop %v3080
        %v3875 = vrcp.pop %v3083
        %v3876 = vrcp.pop %v3086
        %v3877 = vrcp.pop %v3089
        %v3878 = vrcp.pop %v3092
        %v3879 = vrcp.pop %v3095
        %v3880 = vrcp.pop %v3098
        %v3881 = vrcp.pop %v3101
        %v3882 = vrcp.pop %v3104
        %v3883 = vrcp.pop %v3107
        %v3884 = vrcp.pop %v3110
        %v3885 = vrcp.pop %v3113
        %v3886 = vrcp.pop %v3116
        %v3887 = vrcp.pop %v3119
        %v3888 = vrcp.pop %v3122
        %v3889 = vrcp.pop %v3125
        %v3890 = vrcp.pop %v3128
        %v3891 = vrcp.pop %v3131
        %v3892 = vrcp.pop %v3134
        %v3893 = vrcp.pop %v3137
        %v3894 = vrcp.pop %v3140
        %v3895 = vrcp.pop %v3143
        %v3896 = vmul.f32 %v3198, %v3864
        %v3897 = vmul.f32 %v3201, %v3865
        %v3898 = vmul.f32 %v3242, %v3866
        %v3899 = vmul.f32 %v3245, %v3867
        %v3900 = vmul.f32 %v3286, %v3868
        %v3901 = vmul.f32 %v3289, %v3869
        %v3902 = vmul.f32 %v3330, %v3870
        %v3903 = vmul.f32 %v3333, %v3871
        %v3904 = vmul.f32 %v3374, %v3872
        %v3905 = vmul.f32 %v3377, %v3873
        %v3906 = vmul.f32 %v3418, %v3874
        %v3907 = vmul.f32 %v3421, %v3875
        %v3908 = vmul.f32 %v3462, %v3876
        %v3909 = vmul.f32 %v3465, %v3877
        %v3910 = vmul.f32 %v3506, %v3878
        %v3911 = vmul.f32 %v3509, %v3879
        %v3912 = vmul.f32 %v3550, %v3880
        %v3913 = vmul.f32 %v3553, %v3881
        %v3914 = vmul.f32 %v3594, %v3882
        %v3915 = vmul.f32 %v3597, %v3883
        %v3916 = vmul.f32 %v3638, %v3884
        %v3917 = vmul.f32 %v3641, %v3885
        %v3918 = vmul.f32 %v3682, %v3886
        %v3919 = vmul.f32 %v3685, %v3887
        %v3920 = vmul.f32 %v3726, %v3888
        %v3921 = vmul.f32 %v3729, %v3889
        %v3922 = vmul.f32 %v3770, %v3890
        %v3923 = vmul.f32 %v3773, %v3891
        %v3924 = vmul.f32 %v3814, %v3892
        %v3925 = vmul.f32 %v3817, %v3893
        %v3926 = vmul.f32 %v3858, %v3894
        %v3927 = vmul.f32 %v3861, %v3895
        %v3928 = vmul.f32 %v3896, %v1955
        %v3929 = vmul.f32 %v3897, %v1957
        %v3930 = vmul.f32 %v3898, %v1959
        %v3931 = vmul.f32 %v3899, %v1961
        %v3932 = vmul.f32 %v3900, %v1963
        %v3933 = vmul.f32 %v3901, %v1965
        %v3934 = vmul.f32 %v3902, %v1967
        %v3935 = vmul.f32 %v3903, %v1969
        %v3936 = vmul.f32 %v3904, %v1971
        %v3937 = vmul.f32 %v3905, %v1973
        %v3938 = vmul.f32 %v3906, %v1975
        %v3939 = vmul.f32 %v3907, %v1977
        %v3940 = vmul.f32 %v3908, %v1979
        %v3941 = vmul.f32 %v3909, %v1981
        %v3942 = vmul.f32 %v3910, %v1983
        %v3943 = vmul.f32 %v3911, %v1985
        %v3944 = vmul.f32 %v3912, %v1987
        %v3945 = vmul.f32 %v3913, %v1989
        %v3946 = vmul.f32 %v3914, %v1991
        %v3947 = vmul.f32 %v3915, %v1993
        %v3948 = vmul.f32 %v3916, %v1995
        %v3949 = vmul.f32 %v3917, %v1997
        %v3950 = vmul.f32 %v3918, %v1999
        %v3951 = vmul.f32 %v3919, %v2001
        %v3952 = vmul.f32 %v3920, %v2003
        %v3953 = vmul.f32 %v3921, %v2005
        %v3954 = vmul.f32 %v3922, %v2007
        %v3955 = vmul.f32 %v3923, %v2009
        %v3956 = vmul.f32 %v3924, %v2011
        %v3957 = vmul.f32 %v3925, %v2013
        %v3958 = vmul.f32 %v3926, %v2015
        %v3959 = vmul.f32 %v3927, %v2017
        %v3960 = vpack.c.bf16 %v3929, %v3928
        %v3961 = vpack.c.bf16 %v3931, %v3930
        %v3962 = vpack.c.bf16 %v3933, %v3932
        %v3963 = vpack.c.bf16 %v3935, %v3934
        %v3964 = vpack.c.bf16 %v3937, %v3936
        %v3965 = vpack.c.bf16 %v3939, %v3938
        %v3966 = vpack.c.bf16 %v3941, %v3940
        %v3967 = vpack.c.bf16 %v3943, %v3942
        %v3968 = vpack.c.bf16 %v3945, %v3944
        %v3969 = vpack.c.bf16 %v3947, %v3946
        %v3970 = vpack.c.bf16 %v3949, %v3948
        %v3971 = vpack.c.bf16 %v3951, %v3950
        %v3972 = vpack.c.bf16 %v3953, %v3952
        %v3973 = vpack.c.bf16 %v3955, %v3954
        %v3974 = vpack.c.bf16 %v3957, %v3956
        %v3975 = vpack.c.bf16 %v3959, %v3958
        %v3976 = vld [vmem:[%s9] sm:$0xf]
        %v3977 = vld [vmem:[%s9 + $0x4] sm:$0xf]
        %v3978 = vld [vmem:[%s9 + $0x8] sm:$0xf]
        %v3979 = vld [vmem:[%s9 + $0xc] sm:$0xf]
        %s3980 = scalar_lea.vmem %s437, 8
        %v3981 = vld [vmem:[%s3980] sm:$0xf]
        %v3982 = vld [vmem:[%s3980 + $0x4] sm:$0xf]
        %v3983 = vunpack.c.l.bf16 %v3981
        %v3984 = vunpack.c.l.bf16 %v3982
        %3986 = vrot.lane.b32.xlu0 %v2050, 96
        %v3987 = vpop.permute.xlu0 %3986
        %3989 = vrot.lane.b32.xlu0 %v2066, 96
        %v3990 = vpop.permute.xlu0 %3989
        %v3992 = vsel %vm2102, %v3987, 0
        %v3995 = vsel %vm2102, %v3990, 0
        %3997 = vmatprep.subr.bf16.mxu0 0
        %3998 = vmatpush1.bf16.xpose.msra.mxu0 %v3995
        %3999 = vmatprep.subr.bf16.mxu0 0
        %4000 = vmatpush1.bf16.xpose.msra.mxu0 0
        %4001 = vmatprep.subr.bf16.mxu0 0
        %4002 = vmatpush1.bf16.xpose.msra.mxu0 0
        %4003 = vmatprep.subr.bf16.mxu0 0
        %4004 = vmatpush1.bf16.xpose.msra.mxu0 0
        %4005 = vmatprep.subr.bf16.mxu0 0
        %4006 = vmatpush1.bf16.xpose.msra.mxu0 0
        %4007 = vmatprep.subr.bf16.mxu0 0
        %4008 = vmatpush1.bf16.xpose.msra.mxu0 0
        %4009 = vmatprep.subr.bf16.mxu0 0
        %4010 = vmatpush1.bf16.xpose.msra.mxu0 0
        %4011 = vmatprep.subr.bf16.mxu0 0
        %4012 = vmatpush1.bf16.xpose.msra.mxu0 0
        %4013 = vmatprep.subr.bf16.mxu0 0
        %4014 = vmatpush1.bf16.xpose.msra.mxu0 0
        %4015 = vmatprep.subr.bf16.mxu0 0
        %4016 = vmatpush1.bf16.xpose.msra.mxu0 0
        %4017 = vmatprep.subr.bf16.mxu0 0
        %4018 = vmatpush1.bf16.xpose.msra.mxu0 0
        %4019 = vmatprep.subr.bf16.mxu0 0
        %4020 = vmatpush1.bf16.xpose.msra.mxu0 0
        %4021 = vmatprep.subr.bf16.mxu0 0
        %4022 = vmatpush1.bf16.xpose.msra.mxu0 0
        %4023 = vmatprep.subr.bf16.mxu0 0
        %4024 = vmatpush1.bf16.xpose.msra.mxu0 0
        %4025 = vmatprep.subr.bf16.mxu0 0
        %4026 = vmatpush1.bf16.xpose.msra.mxu0 0
        %4027 = vmatprep.subr.bf16.mxu0 0
        %4028 = vmatpush1.bf16.xpose.msra.mxu0 0
        %4029 = vmatprep.mubr.bf16.mxu0 0
        %4030 = vmatmul.mubr.bf16.gmra.mrb[0].mxu0 %v3992
        %v4031 = vpop.f32.mrb[0].mxu0
        %v4032 = vadd.f32 %v3983, %v4031
        %v4033 = vpop.f32.mrb[0].mxu0
        %v4034 = vpop.f32.mrb[0].mxu0
        %v4035 = vadd.f32 %v3984, %v4034
        %v4036 = vpop.f32.mrb[0].mxu0
        %4037 = vdwg.mxu0
        %4039 = vrot.lane.b32.xlu0 %v2051, 96
        %v4040 = vpop.permute.xlu0 %4039
        %4042 = vrot.lane.b32.xlu0 %v2067, 96
        %v4043 = vpop.permute.xlu0 %4042
        %v4045 = vsel %vm2102, %v4040, 0
        %v4048 = vsel %vm2102, %v4043, 0
        %4050 = vmatprep.subr.bf16.mxu0 0
        %4051 = vmatpush1.bf16.xpose.msra.mxu0 %v4048
        %4052 = vmatprep.subr.bf16.mxu0 0
        %4053 = vmatpush1.bf16.xpose.msra.mxu0 0
        %4054 = vmatprep.subr.bf16.mxu0 0
        %4055 = vmatpush1.bf16.xpose.msra.mxu0 0
        %4056 = vmatprep.subr.bf16.mxu0 0
        %4057 = vmatpush1.bf16.xpose.msra.mxu0 0
        %4058 = vmatprep.subr.bf16.mxu0 0
        %4059 = vmatpush1.bf16.xpose.msra.mxu0 0
        %4060 = vmatprep.subr.bf16.mxu0 0
        %4061 = vmatpush1.bf16.xpose.msra.mxu0 0
        %4062 = vmatprep.subr.bf16.mxu0 0
        %4063 = vmatpush1.bf16.xpose.msra.mxu0 0
        %4064 = vmatprep.subr.bf16.mxu0 0
        %4065 = vmatpush1.bf16.xpose.msra.mxu0 0
        %4066 = vmatprep.subr.bf16.mxu0 0
        %4067 = vmatpush1.bf16.xpose.msra.mxu0 0
        %4068 = vmatprep.subr.bf16.mxu0 0
        %4069 = vmatpush1.bf16.xpose.msra.mxu0 0
        %4070 = vmatprep.subr.bf16.mxu0 0
        %4071 = vmatpush1.bf16.xpose.msra.mxu0 0
        %4072 = vmatprep.subr.bf16.mxu0 0
        %4073 = vmatpush1.bf16.xpose.msra.mxu0 0
        %4074 = vmatprep.subr.bf16.mxu0 0
        %4075 = vmatpush1.bf16.xpose.msra.mxu0 0
        %4076 = vmatprep.subr.bf16.mxu0 0
        %4077 = vmatpush1.bf16.xpose.msra.mxu0 0
        %4078 = vmatprep.subr.bf16.mxu0 0
        %4079 = vmatpush1.bf16.xpose.msra.mxu0 0
        %4080 = vmatprep.subr.bf16.mxu0 0
        %4081 = vmatpush1.bf16.xpose.msra.mxu0 0
        %4082 = vmatprep.mubr.bf16.mxu0 0
        %4083 = vmatmul.mubr.bf16.gmra.mrb[0].mxu0 %v4045
        %v4084 = vpop.f32.mrb[0].mxu0
        %v4085 = vadd.f32 %v3983, %v4084
        %v4086 = vpop.f32.mrb[0].mxu0
        %v4087 = vpop.f32.mrb[0].mxu0
        %v4088 = vadd.f32 %v3984, %v4087
        %v4089 = vpop.f32.mrb[0].mxu0
        %4090 = vdwg.mxu0
        %4092 = vrot.lane.b32.xlu0 %v2052, 96
        %v4093 = vpop.permute.xlu0 %4092
        %4095 = vrot.lane.b32.xlu0 %v2068, 96
        %v4096 = vpop.permute.xlu0 %4095
        %v4098 = vsel %vm2102, %v4093, 0
        %v4101 = vsel %vm2102, %v4096, 0
        %4103 = vmatprep.subr.bf16.mxu0 0
        %4104 = vmatpush1.bf16.xpose.msra.mxu0 %v4101
        %4105 = vmatprep.subr.bf16.mxu0 0
        %4106 = vmatpush1.bf16.xpose.msra.mxu0 0
        %4107 = vmatprep.subr.bf16.mxu0 0
        %4108 = vmatpush1.bf16.xpose.msra.mxu0 0
        %4109 = vmatprep.subr.bf16.mxu0 0
        %4110 = vmatpush1.bf16.xpose.msra.mxu0 0
        %4111 = vmatprep.subr.bf16.mxu0 0
        %4112 = vmatpush1.bf16.xpose.msra.mxu0 0
        %4113 = vmatprep.subr.bf16.mxu0 0
        %4114 = vmatpush1.bf16.xpose.msra.mxu0 0
        %4115 = vmatprep.subr.bf16.mxu0 0
        %4116 = vmatpush1.bf16.xpose.msra.mxu0 0
        %4117 = vmatprep.subr.bf16.mxu0 0
        %4118 = vmatpush1.bf16.xpose.msra.mxu0 0
        %4119 = vmatprep.subr.bf16.mxu0 0
        %4120 = vmatpush1.bf16.xpose.msra.mxu0 0
        %4121 = vmatprep.subr.bf16.mxu0 0
        %4122 = vmatpush1.bf16.xpose.msra.mxu0 0
        %4123 = vmatprep.subr.bf16.mxu0 0
        %4124 = vmatpush1.bf16.xpose.msra.mxu0 0
        %4125 = vmatprep.subr.bf16.mxu0 0
        %4126 = vmatpush1.bf16.xpose.msra.mxu0 0
        %4127 = vmatprep.subr.bf16.mxu0 0
        %4128 = vmatpush1.bf16.xpose.msra.mxu0 0
        %4129 = vmatprep.subr.bf16.mxu0 0
        %4130 = vmatpush1.bf16.xpose.msra.mxu0 0
        %4131 = vmatprep.subr.bf16.mxu0 0
        %4132 = vmatpush1.bf16.xpose.msra.mxu0 0
        %4133 = vmatprep.subr.bf16.mxu0 0
        %4134 = vmatpush1.bf16.xpose.msra.mxu0 0
        %4135 = vmatprep.mubr.bf16.mxu0 0
        %4136 = vmatmul.mubr.bf16.gmra.mrb[0].mxu0 %v4098
        %v4137 = vpop.f32.mrb[0].mxu0
        %v4138 = vadd.f32 %v3983, %v4137
        %v4139 = vpop.f32.mrb[0].mxu0
        %v4140 = vpop.f32.mrb[0].mxu0
        %v4141 = vadd.f32 %v3984, %v4140
        %v4142 = vpop.f32.mrb[0].mxu0
        %4143 = vdwg.mxu0
        %4145 = vrot.lane.b32.xlu0 %v2053, 96
        %v4146 = vpop.permute.xlu0 %4145
        %4148 = vrot.lane.b32.xlu0 %v2069, 96
        %v4149 = vpop.permute.xlu0 %4148
        %v4151 = vsel %vm2102, %v4146, 0
        %v4154 = vsel %vm2102, %v4149, 0
        %4156 = vmatprep.subr.bf16.mxu0 0
        %4157 = vmatpush1.bf16.xpose.msra.mxu0 %v4154
        %4158 = vmatprep.subr.bf16.mxu0 0
        %4159 = vmatpush1.bf16.xpose.msra.mxu0 0
        %4160 = vmatprep.subr.bf16.mxu0 0
        %4161 = vmatpush1.bf16.xpose.msra.mxu0 0
        %4162 = vmatprep.subr.bf16.mxu0 0
        %4163 = vmatpush1.bf16.xpose.msra.mxu0 0
        %4164 = vmatprep.subr.bf16.mxu0 0
        %4165 = vmatpush1.bf16.xpose.msra.mxu0 0
        %4166 = vmatprep.subr.bf16.mxu0 0
        %4167 = vmatpush1.bf16.xpose.msra.mxu0 0
        %4168 = vmatprep.subr.bf16.mxu0 0
        %4169 = vmatpush1.bf16.xpose.msra.mxu0 0
        %4170 = vmatprep.subr.bf16.mxu0 0
        %4171 = vmatpush1.bf16.xpose.msra.mxu0 0
        %4172 = vmatprep.subr.bf16.mxu0 0
        %4173 = vmatpush1.bf16.xpose.msra.mxu0 0
        %4174 = vmatprep.subr.bf16.mxu0 0
        %4175 = vmatpush1.bf16.xpose.msra.mxu0 0
        %4176 = vmatprep.subr.bf16.mxu0 0
        %4177 = vmatpush1.bf16.xpose.msra.mxu0 0
        %4178 = vmatprep.subr.bf16.mxu0 0
        %4179 = vmatpush1.bf16.xpose.msra.mxu0 0
        %4180 = vmatprep.subr.bf16.mxu0 0
        %4181 = vmatpush1.bf16.xpose.msra.mxu0 0
        %4182 = vmatprep.subr.bf16.mxu0 0
        %4183 = vmatpush1.bf16.xpose.msra.mxu0 0
        %4184 = vmatprep.subr.bf16.mxu0 0
        %4185 = vmatpush1.bf16.xpose.msra.mxu0 0
        %4186 = vmatprep.subr.bf16.mxu0 0
        %4187 = vmatpush1.bf16.xpose.msra.mxu0 0
        %4188 = vmatprep.mubr.bf16.mxu0 0
        %4189 = vmatmul.mubr.bf16.gmra.mrb[0].mxu0 %v4151
        %v4190 = vpop.f32.mrb[0].mxu0
        %v4191 = vadd.f32 %v3983, %v4190
        %v4192 = vpop.f32.mrb[0].mxu0
        %v4193 = vpop.f32.mrb[0].mxu0
        %v4194 = vadd.f32 %v3984, %v4193
        %v4195 = vpop.f32.mrb[0].mxu0
        %4196 = vdwg.mxu0
        %4198 = vrot.lane.b32.xlu0 %v2054, 96
        %v4199 = vpop.permute.xlu0 %4198
        %4201 = vrot.lane.b32.xlu0 %v2070, 96
        %v4202 = vpop.permute.xlu0 %4201
        %v4204 = vsel %vm2102, %v4199, 0
        %v4207 = vsel %vm2102, %v4202, 0
        %4209 = vmatprep.subr.bf16.mxu0 0
        %4210 = vmatpush1.bf16.xpose.msra.mxu0 %v4207
        %4211 = vmatprep.subr.bf16.mxu0 0
        %4212 = vmatpush1.bf16.xpose.msra.mxu0 0
        %4213 = vmatprep.subr.bf16.mxu0 0
        %4214 = vmatpush1.bf16.xpose.msra.mxu0 0
        %4215 = vmatprep.subr.bf16.mxu0 0
        %4216 = vmatpush1.bf16.xpose.msra.mxu0 0
        %4217 = vmatprep.subr.bf16.mxu0 0
        %4218 = vmatpush1.bf16.xpose.msra.mxu0 0
        %4219 = vmatprep.subr.bf16.mxu0 0
        %4220 = vmatpush1.bf16.xpose.msra.mxu0 0
        %4221 = vmatprep.subr.bf16.mxu0 0
        %4222 = vmatpush1.bf16.xpose.msra.mxu0 0
        %4223 = vmatprep.subr.bf16.mxu0 0
        %4224 = vmatpush1.bf16.xpose.msra.mxu0 0
        %4225 = vmatprep.subr.bf16.mxu0 0
        %4226 = vmatpush1.bf16.xpose.msra.mxu0 0
        %4227 = vmatprep.subr.bf16.mxu0 0
        %4228 = vmatpush1.bf16.xpose.msra.mxu0 0
        %4229 = vmatprep.subr.bf16.mxu0 0
        %4230 = vmatpush1.bf16.xpose.msra.mxu0 0
        %4231 = vmatprep.subr.bf16.mxu0 0
        %4232 = vmatpush1.bf16.xpose.msra.mxu0 0
        %4233 = vmatprep.subr.bf16.mxu0 0
        %4234 = vmatpush1.bf16.xpose.msra.mxu0 0
        %4235 = vmatprep.subr.bf16.mxu0 0
        %4236 = vmatpush1.bf16.xpose.msra.mxu0 0
        %4237 = vmatprep.subr.bf16.mxu0 0
        %4238 = vmatpush1.bf16.xpose.msra.mxu0 0
        %4239 = vmatprep.subr.bf16.mxu0 0
        %4240 = vmatpush1.bf16.xpose.msra.mxu0 0
        %4241 = vmatprep.mubr.bf16.mxu0 0
        %4242 = vmatmul.mubr.bf16.gmra.mrb[0].mxu0 %v4204
        %v4243 = vpop.f32.mrb[0].mxu0
        %v4244 = vadd.f32 %v3983, %v4243
        %v4245 = vpop.f32.mrb[0].mxu0
        %v4246 = vpop.f32.mrb[0].mxu0
        %v4247 = vadd.f32 %v3984, %v4246
        %v4248 = vpop.f32.mrb[0].mxu0
        %4249 = vdwg.mxu0
        %4251 = vrot.lane.b32.xlu0 %v2055, 96
        %v4252 = vpop.permute.xlu0 %4251
        %4254 = vrot.lane.b32.xlu0 %v2071, 96
        %v4255 = vpop.permute.xlu0 %4254
        %v4257 = vsel %vm2102, %v4252, 0
        %v4260 = vsel %vm2102, %v4255, 0
        %4262 = vmatprep.subr.bf16.mxu0 0
        %4263 = vmatpush1.bf16.xpose.msra.mxu0 %v4260
        %4264 = vmatprep.subr.bf16.mxu0 0
        %4265 = vmatpush1.bf16.xpose.msra.mxu0 0
        %4266 = vmatprep.subr.bf16.mxu0 0
        %4267 = vmatpush1.bf16.xpose.msra.mxu0 0
        %4268 = vmatprep.subr.bf16.mxu0 0
        %4269 = vmatpush1.bf16.xpose.msra.mxu0 0
        %4270 = vmatprep.subr.bf16.mxu0 0
        %4271 = vmatpush1.bf16.xpose.msra.mxu0 0
        %4272 = vmatprep.subr.bf16.mxu0 0
        %4273 = vmatpush1.bf16.xpose.msra.mxu0 0
        %4274 = vmatprep.subr.bf16.mxu0 0
        %4275 = vmatpush1.bf16.xpose.msra.mxu0 0
        %4276 = vmatprep.subr.bf16.mxu0 0
        %4277 = vmatpush1.bf16.xpose.msra.mxu0 0
        %4278 = vmatprep.subr.bf16.mxu0 0
        %4279 = vmatpush1.bf16.xpose.msra.mxu0 0
        %4280 = vmatprep.subr.bf16.mxu0 0
        %4281 = vmatpush1.bf16.xpose.msra.mxu0 0
        %4282 = vmatprep.subr.bf16.mxu0 0
        %4283 = vmatpush1.bf16.xpose.msra.mxu0 0
        %4284 = vmatprep.subr.bf16.mxu0 0
        %4285 = vmatpush1.bf16.xpose.msra.mxu0 0
        %4286 = vmatprep.subr.bf16.mxu0 0
        %4287 = vmatpush1.bf16.xpose.msra.mxu0 0
        %4288 = vmatprep.subr.bf16.mxu0 0
        %4289 = vmatpush1.bf16.xpose.msra.mxu0 0
        %4290 = vmatprep.subr.bf16.mxu0 0
        %4291 = vmatpush1.bf16.xpose.msra.mxu0 0
        %4292 = vmatprep.subr.bf16.mxu0 0
        %4293 = vmatpush1.bf16.xpose.msra.mxu0 0
        %4294 = vmatprep.mubr.bf16.mxu0 0
        %4295 = vmatmul.mubr.bf16.gmra.mrb[0].mxu0 %v4257
        %v4296 = vpop.f32.mrb[0].mxu0
        %v4297 = vadd.f32 %v3983, %v4296
        %v4298 = vpop.f32.mrb[0].mxu0
        %v4299 = vpop.f32.mrb[0].mxu0
        %v4300 = vadd.f32 %v3984, %v4299
        %v4301 = vpop.f32.mrb[0].mxu0
        %4302 = vdwg.mxu0
        %4304 = vrot.lane.b32.xlu0 %v2056, 96
        %v4305 = vpop.permute.xlu0 %4304
        %4307 = vrot.lane.b32.xlu0 %v2072, 96
        %v4308 = vpop.permute.xlu0 %4307
        %v4310 = vsel %vm2102, %v4305, 0
        %v4313 = vsel %vm2102, %v4308, 0
        %4315 = vmatprep.subr.bf16.mxu0 0
        %4316 = vmatpush1.bf16.xpose.msra.mxu0 %v4313
        %4317 = vmatprep.subr.bf16.mxu0 0
        %4318 = vmatpush1.bf16.xpose.msra.mxu0 0
        %4319 = vmatprep.subr.bf16.mxu0 0
        %4320 = vmatpush1.bf16.xpose.msra.mxu0 0
        %4321 = vmatprep.subr.bf16.mxu0 0
        %4322 = vmatpush1.bf16.xpose.msra.mxu0 0
        %4323 = vmatprep.subr.bf16.mxu0 0
        %4324 = vmatpush1.bf16.xpose.msra.mxu0 0
        %4325 = vmatprep.subr.bf16.mxu0 0
        %4326 = vmatpush1.bf16.xpose.msra.mxu0 0
        %4327 = vmatprep.subr.bf16.mxu0 0
        %4328 = vmatpush1.bf16.xpose.msra.mxu0 0
        %4329 = vmatprep.subr.bf16.mxu0 0
        %4330 = vmatpush1.bf16.xpose.msra.mxu0 0
        %4331 = vmatprep.subr.bf16.mxu0 0
        %4332 = vmatpush1.bf16.xpose.msra.mxu0 0
        %4333 = vmatprep.subr.bf16.mxu0 0
        %4334 = vmatpush1.bf16.xpose.msra.mxu0 0
        %4335 = vmatprep.subr.bf16.mxu0 0
        %4336 = vmatpush1.bf16.xpose.msra.mxu0 0
        %4337 = vmatprep.subr.bf16.mxu0 0
        %4338 = vmatpush1.bf16.xpose.msra.mxu0 0
        %4339 = vmatprep.subr.bf16.mxu0 0
        %4340 = vmatpush1.bf16.xpose.msra.mxu0 0
        %4341 = vmatprep.subr.bf16.mxu0 0
        %4342 = vmatpush1.bf16.xpose.msra.mxu0 0
        %4343 = vmatprep.subr.bf16.mxu0 0
        %4344 = vmatpush1.bf16.xpose.msra.mxu0 0
        %4345 = vmatprep.subr.bf16.mxu0 0
        %4346 = vmatpush1.bf16.xpose.msra.mxu0 0
        %4347 = vmatprep.mubr.bf16.mxu0 0
        %4348 = vmatmul.mubr.bf16.gmra.mrb[0].mxu0 %v4310
        %v4349 = vpop.f32.mrb[0].mxu0
        %v4350 = vadd.f32 %v3983, %v4349
        %v4351 = vpop.f32.mrb[0].mxu0
        %v4352 = vpop.f32.mrb[0].mxu0
        %v4353 = vadd.f32 %v3984, %v4352
        %v4354 = vpop.f32.mrb[0].mxu0
        %4355 = vdwg.mxu0
        %4357 = vrot.lane.b32.xlu0 %v2057, 96
        %v4358 = vpop.permute.xlu0 %4357
        %4360 = vrot.lane.b32.xlu0 %v2073, 96
        %v4361 = vpop.permute.xlu0 %4360
        %v4363 = vsel %vm2102, %v4358, 0
        %v4366 = vsel %vm2102, %v4361, 0
        %4368 = vmatprep.subr.bf16.mxu0 0
        %4369 = vmatpush1.bf16.xpose.msra.mxu0 %v4366
        %4370 = vmatprep.subr.bf16.mxu0 0
        %4371 = vmatpush1.bf16.xpose.msra.mxu0 0
        %4372 = vmatprep.subr.bf16.mxu0 0
        %4373 = vmatpush1.bf16.xpose.msra.mxu0 0
        %4374 = vmatprep.subr.bf16.mxu0 0
        %4375 = vmatpush1.bf16.xpose.msra.mxu0 0
        %4376 = vmatprep.subr.bf16.mxu0 0
        %4377 = vmatpush1.bf16.xpose.msra.mxu0 0
        %4378 = vmatprep.subr.bf16.mxu0 0
        %4379 = vmatpush1.bf16.xpose.msra.mxu0 0
        %4380 = vmatprep.subr.bf16.mxu0 0
        %4381 = vmatpush1.bf16.xpose.msra.mxu0 0
        %4382 = vmatprep.subr.bf16.mxu0 0
        %4383 = vmatpush1.bf16.xpose.msra.mxu0 0
        %4384 = vmatprep.subr.bf16.mxu0 0
        %4385 = vmatpush1.bf16.xpose.msra.mxu0 0
        %4386 = vmatprep.subr.bf16.mxu0 0
        %4387 = vmatpush1.bf16.xpose.msra.mxu0 0
        %4388 = vmatprep.subr.bf16.mxu0 0
        %4389 = vmatpush1.bf16.xpose.msra.mxu0 0
        %4390 = vmatprep.subr.bf16.mxu0 0
        %4391 = vmatpush1.bf16.xpose.msra.mxu0 0
        %4392 = vmatprep.subr.bf16.mxu0 0
        %4393 = vmatpush1.bf16.xpose.msra.mxu0 0
        %4394 = vmatprep.subr.bf16.mxu0 0
        %4395 = vmatpush1.bf16.xpose.msra.mxu0 0
        %4396 = vmatprep.subr.bf16.mxu0 0
        %4397 = vmatpush1.bf16.xpose.msra.mxu0 0
        %4398 = vmatprep.subr.bf16.mxu0 0
        %4399 = vmatpush1.bf16.xpose.msra.mxu0 0
        %4400 = vmatprep.mubr.bf16.mxu0 0
        %4401 = vmatmul.mubr.bf16.gmra.mrb[0].mxu0 %v4363
        %v4402 = vpop.f32.mrb[0].mxu0
        %v4403 = vadd.f32 %v3983, %v4402
        %v4404 = vpop.f32.mrb[0].mxu0
        %v4405 = vpop.f32.mrb[0].mxu0
        %v4406 = vadd.f32 %v3984, %v4405
        %v4407 = vpop.f32.mrb[0].mxu0
        %4408 = vdwg.mxu0
        %4410 = vrot.lane.b32.xlu0 %v2058, 96
        %v4411 = vpop.permute.xlu0 %4410
        %4413 = vrot.lane.b32.xlu0 %v2074, 96
        %v4414 = vpop.permute.xlu0 %4413
        %v4416 = vsel %vm2102, %v4411, 0
        %v4419 = vsel %vm2102, %v4414, 0
        %4421 = vmatprep.subr.bf16.mxu0 0
        %4422 = vmatpush1.bf16.xpose.msra.mxu0 %v4419
        %4423 = vmatprep.subr.bf16.mxu0 0
        %4424 = vmatpush1.bf16.xpose.msra.mxu0 0
        %4425 = vmatprep.subr.bf16.mxu0 0
        %4426 = vmatpush1.bf16.xpose.msra.mxu0 0
        %4427 = vmatprep.subr.bf16.mxu0 0
        %4428 = vmatpush1.bf16.xpose.msra.mxu0 0
        %4429 = vmatprep.subr.bf16.mxu0 0
        %4430 = vmatpush1.bf16.xpose.msra.mxu0 0
        %4431 = vmatprep.subr.bf16.mxu0 0
        %4432 = vmatpush1.bf16.xpose.msra.mxu0 0
        %4433 = vmatprep.subr.bf16.mxu0 0
        %4434 = vmatpush1.bf16.xpose.msra.mxu0 0
        %4435 = vmatprep.subr.bf16.mxu0 0
        %4436 = vmatpush1.bf16.xpose.msra.mxu0 0
        %4437 = vmatprep.subr.bf16.mxu0 0
        %4438 = vmatpush1.bf16.xpose.msra.mxu0 0
        %4439 = vmatprep.subr.bf16.mxu0 0
        %4440 = vmatpush1.bf16.xpose.msra.mxu0 0
        %4441 = vmatprep.subr.bf16.mxu0 0
        %4442 = vmatpush1.bf16.xpose.msra.mxu0 0
        %4443 = vmatprep.subr.bf16.mxu0 0
        %4444 = vmatpush1.bf16.xpose.msra.mxu0 0
        %4445 = vmatprep.subr.bf16.mxu0 0
        %4446 = vmatpush1.bf16.xpose.msra.mxu0 0
        %4447 = vmatprep.subr.bf16.mxu0 0
        %4448 = vmatpush1.bf16.xpose.msra.mxu0 0
        %4449 = vmatprep.subr.bf16.mxu0 0
        %4450 = vmatpush1.bf16.xpose.msra.mxu0 0
        %4451 = vmatprep.subr.bf16.mxu0 0
        %4452 = vmatpush1.bf16.xpose.msra.mxu0 0
        %4453 = vmatprep.mubr.bf16.mxu0 0
        %4454 = vmatmul.mubr.bf16.gmra.mrb[0].mxu0 %v4416
        %v4455 = vpop.f32.mrb[0].mxu0
        %v4456 = vadd.f32 %v3983, %v4455
        %v4457 = vpop.f32.mrb[0].mxu0
        %v4458 = vpop.f32.mrb[0].mxu0
        %v4459 = vadd.f32 %v3984, %v4458
        %v4460 = vpop.f32.mrb[0].mxu0
        %4461 = vdwg.mxu0
        %4463 = vrot.lane.b32.xlu0 %v2059, 96
        %v4464 = vpop.permute.xlu0 %4463
        %4466 = vrot.lane.b32.xlu0 %v2075, 96
        %v4467 = vpop.permute.xlu0 %4466
        %v4469 = vsel %vm2102, %v4464, 0
        %v4472 = vsel %vm2102, %v4467, 0
        %4474 = vmatprep.subr.bf16.mxu0 0
        %4475 = vmatpush1.bf16.xpose.msra.mxu0 %v4472
        %4476 = vmatprep.subr.bf16.mxu0 0
        %4477 = vmatpush1.bf16.xpose.msra.mxu0 0
        %4478 = vmatprep.subr.bf16.mxu0 0
        %4479 = vmatpush1.bf16.xpose.msra.mxu0 0
        %4480 = vmatprep.subr.bf16.mxu0 0
        %4481 = vmatpush1.bf16.xpose.msra.mxu0 0
        %4482 = vmatprep.subr.bf16.mxu0 0
        %4483 = vmatpush1.bf16.xpose.msra.mxu0 0
        %4484 = vmatprep.subr.bf16.mxu0 0
        %4485 = vmatpush1.bf16.xpose.msra.mxu0 0
        %4486 = vmatprep.subr.bf16.mxu0 0
        %4487 = vmatpush1.bf16.xpose.msra.mxu0 0
        %4488 = vmatprep.subr.bf16.mxu0 0
        %4489 = vmatpush1.bf16.xpose.msra.mxu0 0
        %4490 = vmatprep.subr.bf16.mxu0 0
        %4491 = vmatpush1.bf16.xpose.msra.mxu0 0
        %4492 = vmatprep.subr.bf16.mxu0 0
        %4493 = vmatpush1.bf16.xpose.msra.mxu0 0
        %4494 = vmatprep.subr.bf16.mxu0 0
        %4495 = vmatpush1.bf16.xpose.msra.mxu0 0
        %4496 = vmatprep.subr.bf16.mxu0 0
        %4497 = vmatpush1.bf16.xpose.msra.mxu0 0
        %4498 = vmatprep.subr.bf16.mxu0 0
        %4499 = vmatpush1.bf16.xpose.msra.mxu0 0
        %4500 = vmatprep.subr.bf16.mxu0 0
        %4501 = vmatpush1.bf16.xpose.msra.mxu0 0
        %4502 = vmatprep.subr.bf16.mxu0 0
        %4503 = vmatpush1.bf16.xpose.msra.mxu0 0
        %4504 = vmatprep.subr.bf16.mxu0 0
        %4505 = vmatpush1.bf16.xpose.msra.mxu0 0
        %4506 = vmatprep.mubr.bf16.mxu0 0
        %4507 = vmatmul.mubr.bf16.gmra.mrb[0].mxu0 %v4469
        %v4508 = vpop.f32.mrb[0].mxu0
        %v4509 = vadd.f32 %v3983, %v4508
        %v4510 = vpop.f32.mrb[0].mxu0
        %v4511 = vpop.f32.mrb[0].mxu0
        %v4512 = vadd.f32 %v3984, %v4511
        %v4513 = vpop.f32.mrb[0].mxu0
        %4514 = vdwg.mxu0
        %4516 = vrot.lane.b32.xlu0 %v2060, 96
        %v4517 = vpop.permute.xlu0 %4516
        %4519 = vrot.lane.b32.xlu0 %v2076, 96
        %v4520 = vpop.permute.xlu0 %4519
        %v4522 = vsel %vm2102, %v4517, 0
        %v4525 = vsel %vm2102, %v4520, 0
        %4527 = vmatprep.subr.bf16.mxu0 0
        %4528 = vmatpush1.bf16.xpose.msra.mxu0 %v4525
        %4529 = vmatprep.subr.bf16.mxu0 0
        %4530 = vmatpush1.bf16.xpose.msra.mxu0 0
        %4531 = vmatprep.subr.bf16.mxu0 0
        %4532 = vmatpush1.bf16.xpose.msra.mxu0 0
        %4533 = vmatprep.subr.bf16.mxu0 0
        %4534 = vmatpush1.bf16.xpose.msra.mxu0 0
        %4535 = vmatprep.subr.bf16.mxu0 0
        %4536 = vmatpush1.bf16.xpose.msra.mxu0 0
        %4537 = vmatprep.subr.bf16.mxu0 0
        %4538 = vmatpush1.bf16.xpose.msra.mxu0 0
        %4539 = vmatprep.subr.bf16.mxu0 0
        %4540 = vmatpush1.bf16.xpose.msra.mxu0 0
        %4541 = vmatprep.subr.bf16.mxu0 0
        %4542 = vmatpush1.bf16.xpose.msra.mxu0 0
        %4543 = vmatprep.subr.bf16.mxu0 0
        %4544 = vmatpush1.bf16.xpose.msra.mxu0 0
        %4545 = vmatprep.subr.bf16.mxu0 0
        %4546 = vmatpush1.bf16.xpose.msra.mxu0 0
        %4547 = vmatprep.subr.bf16.mxu0 0
        %4548 = vmatpush1.bf16.xpose.msra.mxu0 0
        %4549 = vmatprep.subr.bf16.mxu0 0
        %4550 = vmatpush1.bf16.xpose.msra.mxu0 0
        %4551 = vmatprep.subr.bf16.mxu0 0
        %4552 = vmatpush1.bf16.xpose.msra.mxu0 0
        %4553 = vmatprep.subr.bf16.mxu0 0
        %4554 = vmatpush1.bf16.xpose.msra.mxu0 0
        %4555 = vmatprep.subr.bf16.mxu0 0
        %4556 = vmatpush1.bf16.xpose.msra.mxu0 0
        %4557 = vmatprep.subr.bf16.mxu0 0
        %4558 = vmatpush1.bf16.xpose.msra.mxu0 0
        %4559 = vmatprep.mubr.bf16.mxu0 0
        %4560 = vmatmul.mubr.bf16.gmra.mrb[0].mxu0 %v4522
        %v4561 = vpop.f32.mrb[0].mxu0
        %v4562 = vadd.f32 %v3983, %v4561
        %v4563 = vpop.f32.mrb[0].mxu0
        %v4564 = vpop.f32.mrb[0].mxu0
        %v4565 = vadd.f32 %v3984, %v4564
        %v4566 = vpop.f32.mrb[0].mxu0
        %4567 = vdwg.mxu0
        %4569 = vrot.lane.b32.xlu0 %v2061, 96
        %v4570 = vpop.permute.xlu0 %4569
        %4572 = vrot.lane.b32.xlu0 %v2077, 96
        %v4573 = vpop.permute.xlu0 %4572
        %v4575 = vsel %vm2102, %v4570, 0
        %v4578 = vsel %vm2102, %v4573, 0
        %4580 = vmatprep.subr.bf16.mxu0 0
        %4581 = vmatpush1.bf16.xpose.msra.mxu0 %v4578
        %4582 = vmatprep.subr.bf16.mxu0 0
        %4583 = vmatpush1.bf16.xpose.msra.mxu0 0
        %4584 = vmatprep.subr.bf16.mxu0 0
        %4585 = vmatpush1.bf16.xpose.msra.mxu0 0
        %4586 = vmatprep.subr.bf16.mxu0 0
        %4587 = vmatpush1.bf16.xpose.msra.mxu0 0
        %4588 = vmatprep.subr.bf16.mxu0 0
        %4589 = vmatpush1.bf16.xpose.msra.mxu0 0
        %4590 = vmatprep.subr.bf16.mxu0 0
        %4591 = vmatpush1.bf16.xpose.msra.mxu0 0
        %4592 = vmatprep.subr.bf16.mxu0 0
        %4593 = vmatpush1.bf16.xpose.msra.mxu0 0
        %4594 = vmatprep.subr.bf16.mxu0 0
        %4595 = vmatpush1.bf16.xpose.msra.mxu0 0
        %4596 = vmatprep.subr.bf16.mxu0 0
        %4597 = vmatpush1.bf16.xpose.msra.mxu0 0
        %4598 = vmatprep.subr.bf16.mxu0 0
        %4599 = vmatpush1.bf16.xpose.msra.mxu0 0
        %4600 = vmatprep.subr.bf16.mxu0 0
        %4601 = vmatpush1.bf16.xpose.msra.mxu0 0
        %4602 = vmatprep.subr.bf16.mxu0 0
        %4603 = vmatpush1.bf16.xpose.msra.mxu0 0
        %4604 = vmatprep.subr.bf16.mxu0 0
        %4605 = vmatpush1.bf16.xpose.msra.mxu0 0
        %4606 = vmatprep.subr.bf16.mxu0 0
        %4607 = vmatpush1.bf16.xpose.msra.mxu0 0
        %4608 = vmatprep.subr.bf16.mxu0 0
        %4609 = vmatpush1.bf16.xpose.msra.mxu0 0
        %4610 = vmatprep.subr.bf16.mxu0 0
        %4611 = vmatpush1.bf16.xpose.msra.mxu0 0
        %4612 = vmatprep.mubr.bf16.mxu0 0
        %4613 = vmatmul.mubr.bf16.gmra.mrb[0].mxu0 %v4575
        %v4614 = vpop.f32.mrb[0].mxu0
        %v4615 = vadd.f32 %v3983, %v4614
        %v4616 = vpop.f32.mrb[0].mxu0
        %v4617 = vpop.f32.mrb[0].mxu0
        %v4618 = vadd.f32 %v3984, %v4617
        %v4619 = vpop.f32.mrb[0].mxu0
        %4620 = vdwg.mxu0
        %4622 = vrot.lane.b32.xlu0 %v2062, 96
        %v4623 = vpop.permute.xlu0 %4622
        %4625 = vrot.lane.b32.xlu0 %v2078, 96
        %v4626 = vpop.permute.xlu0 %4625
        %v4628 = vsel %vm2102, %v4623, 0
        %v4631 = vsel %vm2102, %v4626, 0
        %4633 = vmatprep.subr.bf16.mxu0 0
        %4634 = vmatpush1.bf16.xpose.msra.mxu0 %v4631
        %4635 = vmatprep.subr.bf16.mxu0 0
        %4636 = vmatpush1.bf16.xpose.msra.mxu0 0
        %4637 = vmatprep.subr.bf16.mxu0 0
        %4638 = vmatpush1.bf16.xpose.msra.mxu0 0
        %4639 = vmatprep.subr.bf16.mxu0 0
        %4640 = vmatpush1.bf16.xpose.msra.mxu0 0
        %4641 = vmatprep.subr.bf16.mxu0 0
        %4642 = vmatpush1.bf16.xpose.msra.mxu0 0
        %4643 = vmatprep.subr.bf16.mxu0 0
        %4644 = vmatpush1.bf16.xpose.msra.mxu0 0
        %4645 = vmatprep.subr.bf16.mxu0 0
        %4646 = vmatpush1.bf16.xpose.msra.mxu0 0
        %4647 = vmatprep.subr.bf16.mxu0 0
        %4648 = vmatpush1.bf16.xpose.msra.mxu0 0
        %4649 = vmatprep.subr.bf16.mxu0 0
        %4650 = vmatpush1.bf16.xpose.msra.mxu0 0
        %4651 = vmatprep.subr.bf16.mxu0 0
        %4652 = vmatpush1.bf16.xpose.msra.mxu0 0
        %4653 = vmatprep.subr.bf16.mxu0 0
        %4654 = vmatpush1.bf16.xpose.msra.mxu0 0
        %4655 = vmatprep.subr.bf16.mxu0 0
        %4656 = vmatpush1.bf16.xpose.msra.mxu0 0
        %4657 = vmatprep.subr.bf16.mxu0 0
        %4658 = vmatpush1.bf16.xpose.msra.mxu0 0
        %4659 = vmatprep.subr.bf16.mxu0 0
        %4660 = vmatpush1.bf16.xpose.msra.mxu0 0
        %4661 = vmatprep.subr.bf16.mxu0 0
        %4662 = vmatpush1.bf16.xpose.msra.mxu0 0
        %4663 = vmatprep.subr.bf16.mxu0 0
        %4664 = vmatpush1.bf16.xpose.msra.mxu0 0
        %4665 = vmatprep.mubr.bf16.mxu0 0
        %4666 = vmatmul.mubr.bf16.gmra.mrb[0].mxu0 %v4628
        %v4667 = vpop.f32.mrb[0].mxu0
        %v4668 = vadd.f32 %v3983, %v4667
        %v4669 = vpop.f32.mrb[0].mxu0
        %v4670 = vpop.f32.mrb[0].mxu0
        %v4671 = vadd.f32 %v3984, %v4670
        %v4672 = vpop.f32.mrb[0].mxu0
        %4673 = vdwg.mxu0
        %4675 = vrot.lane.b32.xlu0 %v2063, 96
        %v4676 = vpop.permute.xlu0 %4675
        %4678 = vrot.lane.b32.xlu0 %v2079, 96
        %v4679 = vpop.permute.xlu0 %4678
        %v4681 = vsel %vm2102, %v4676, 0
        %v4684 = vsel %vm2102, %v4679, 0
        %4686 = vmatprep.subr.bf16.mxu0 0
        %4687 = vmatpush1.bf16.xpose.msra.mxu0 %v4684
        %4688 = vmatprep.subr.bf16.mxu0 0
        %4689 = vmatpush1.bf16.xpose.msra.mxu0 0
        %4690 = vmatprep.subr.bf16.mxu0 0
        %4691 = vmatpush1.bf16.xpose.msra.mxu0 0
        %4692 = vmatprep.subr.bf16.mxu0 0
        %4693 = vmatpush1.bf16.xpose.msra.mxu0 0
        %4694 = vmatprep.subr.bf16.mxu0 0
        %4695 = vmatpush1.bf16.xpose.msra.mxu0 0
        %4696 = vmatprep.subr.bf16.mxu0 0
        %4697 = vmatpush1.bf16.xpose.msra.mxu0 0
        %4698 = vmatprep.subr.bf16.mxu0 0
        %4699 = vmatpush1.bf16.xpose.msra.mxu0 0
        %4700 = vmatprep.subr.bf16.mxu0 0
        %4701 = vmatpush1.bf16.xpose.msra.mxu0 0
        %4702 = vmatprep.subr.bf16.mxu0 0
        %4703 = vmatpush1.bf16.xpose.msra.mxu0 0
        %4704 = vmatprep.subr.bf16.mxu0 0
        %4705 = vmatpush1.bf16.xpose.msra.mxu0 0
        %4706 = vmatprep.subr.bf16.mxu0 0
        %4707 = vmatpush1.bf16.xpose.msra.mxu0 0
        %4708 = vmatprep.subr.bf16.mxu0 0
        %4709 = vmatpush1.bf16.xpose.msra.mxu0 0
        %4710 = vmatprep.subr.bf16.mxu0 0
        %4711 = vmatpush1.bf16.xpose.msra.mxu0 0
        %4712 = vmatprep.subr.bf16.mxu0 0
        %4713 = vmatpush1.bf16.xpose.msra.mxu0 0
        %4714 = vmatprep.subr.bf16.mxu0 0
        %4715 = vmatpush1.bf16.xpose.msra.mxu0 0
        %4716 = vmatprep.subr.bf16.mxu0 0
        %4717 = vmatpush1.bf16.xpose.msra.mxu0 0
        %4718 = vmatprep.mubr.bf16.mxu0 0
        %4719 = vmatmul.mubr.bf16.gmra.mrb[0].mxu0 %v4681
        %v4720 = vpop.f32.mrb[0].mxu0
        %v4721 = vadd.f32 %v3983, %v4720
        %v4722 = vpop.f32.mrb[0].mxu0
        %v4723 = vpop.f32.mrb[0].mxu0
        %v4724 = vadd.f32 %v3984, %v4723
        %v4725 = vpop.f32.mrb[0].mxu0
        %4726 = vdwg.mxu0
        %4728 = vrot.lane.b32.xlu0 %v2064, 96
        %v4729 = vpop.permute.xlu0 %4728
        %4731 = vrot.lane.b32.xlu0 %v2080, 96
        %v4732 = vpop.permute.xlu0 %4731
        %v4734 = vsel %vm2102, %v4729, 0
        %v4737 = vsel %vm2102, %v4732, 0
        %4739 = vmatprep.subr.bf16.mxu0 0
        %4740 = vmatpush1.bf16.xpose.msra.mxu0 %v4737
        %4741 = vmatprep.subr.bf16.mxu0 0
        %4742 = vmatpush1.bf16.xpose.msra.mxu0 0
        %4743 = vmatprep.subr.bf16.mxu0 0
        %4744 = vmatpush1.bf16.xpose.msra.mxu0 0
        %4745 = vmatprep.subr.bf16.mxu0 0
        %4746 = vmatpush1.bf16.xpose.msra.mxu0 0
        %4747 = vmatprep.subr.bf16.mxu0 0
        %4748 = vmatpush1.bf16.xpose.msra.mxu0 0
        %4749 = vmatprep.subr.bf16.mxu0 0
        %4750 = vmatpush1.bf16.xpose.msra.mxu0 0
        %4751 = vmatprep.subr.bf16.mxu0 0
        %4752 = vmatpush1.bf16.xpose.msra.mxu0 0
        %4753 = vmatprep.subr.bf16.mxu0 0
        %4754 = vmatpush1.bf16.xpose.msra.mxu0 0
        %4755 = vmatprep.subr.bf16.mxu0 0
        %4756 = vmatpush1.bf16.xpose.msra.mxu0 0
        %4757 = vmatprep.subr.bf16.mxu0 0
        %4758 = vmatpush1.bf16.xpose.msra.mxu0 0
        %4759 = vmatprep.subr.bf16.mxu0 0
        %4760 = vmatpush1.bf16.xpose.msra.mxu0 0
        %4761 = vmatprep.subr.bf16.mxu0 0
        %4762 = vmatpush1.bf16.xpose.msra.mxu0 0
        %4763 = vmatprep.subr.bf16.mxu0 0
        %4764 = vmatpush1.bf16.xpose.msra.mxu0 0
        %4765 = vmatprep.subr.bf16.mxu0 0
        %4766 = vmatpush1.bf16.xpose.msra.mxu0 0
        %4767 = vmatprep.subr.bf16.mxu0 0
        %4768 = vmatpush1.bf16.xpose.msra.mxu0 0
        %4769 = vmatprep.subr.bf16.mxu0 0
        %4770 = vmatpush1.bf16.xpose.msra.mxu0 0
        %4771 = vmatprep.mubr.bf16.mxu0 0
        %4772 = vmatmul.mubr.bf16.gmra.mrb[0].mxu0 %v4734
        %v4773 = vpop.f32.mrb[0].mxu0
        %v4774 = vadd.f32 %v3983, %v4773
        %v4775 = vpop.f32.mrb[0].mxu0
        %v4776 = vpop.f32.mrb[0].mxu0
        %v4777 = vadd.f32 %v3984, %v4776
        %v4778 = vpop.f32.mrb[0].mxu0
        %4779 = vdwg.mxu0
        %4781 = vrot.lane.b32.xlu0 %v2065, 96
        %v4782 = vpop.permute.xlu0 %4781
        %4784 = vrot.lane.b32.xlu0 %v2081, 96
        %v4785 = vpop.permute.xlu0 %4784
        %v4787 = vsel %vm2102, %v4782, 0
        %v4790 = vsel %vm2102, %v4785, 0
        %4792 = vmatprep.subr.bf16.mxu0 0
        %4793 = vmatpush1.bf16.xpose.msra.mxu0 %v4790
        %4794 = vmatprep.subr.bf16.mxu0 0
        %4795 = vmatpush1.bf16.xpose.msra.mxu0 0
        %4796 = vmatprep.subr.bf16.mxu0 0
        %4797 = vmatpush1.bf16.xpose.msra.mxu0 0
        %4798 = vmatprep.subr.bf16.mxu0 0
        %4799 = vmatpush1.bf16.xpose.msra.mxu0 0
        %4800 = vmatprep.subr.bf16.mxu0 0
        %4801 = vmatpush1.bf16.xpose.msra.mxu0 0
        %4802 = vmatprep.subr.bf16.mxu0 0
        %4803 = vmatpush1.bf16.xpose.msra.mxu0 0
        %4804 = vmatprep.subr.bf16.mxu0 0
        %4805 = vmatpush1.bf16.xpose.msra.mxu0 0
        %4806 = vmatprep.subr.bf16.mxu0 0
        %4807 = vmatpush1.bf16.xpose.msra.mxu0 0
        %4808 = vmatprep.subr.bf16.mxu0 0
        %4809 = vmatpush1.bf16.xpose.msra.mxu0 0
        %4810 = vmatprep.subr.bf16.mxu0 0
        %4811 = vmatpush1.bf16.xpose.msra.mxu0 0
        %4812 = vmatprep.subr.bf16.mxu0 0
        %4813 = vmatpush1.bf16.xpose.msra.mxu0 0
        %4814 = vmatprep.subr.bf16.mxu0 0
        %4815 = vmatpush1.bf16.xpose.msra.mxu0 0
        %4816 = vmatprep.subr.bf16.mxu0 0
        %4817 = vmatpush1.bf16.xpose.msra.mxu0 0
        %4818 = vmatprep.subr.bf16.mxu0 0
        %4819 = vmatpush1.bf16.xpose.msra.mxu0 0
        %4820 = vmatprep.subr.bf16.mxu0 0
        %4821 = vmatpush1.bf16.xpose.msra.mxu0 0
        %4822 = vmatprep.subr.bf16.mxu0 0
        %4823 = vmatpush1.bf16.xpose.msra.mxu0 0
        %4824 = vmatprep.mubr.bf16.mxu0 0
        %4825 = vmatmul.mubr.bf16.gmra.mrb[0].mxu0 %v4787
        %v4826 = vpop.f32.mrb[0].mxu0
        %v4827 = vadd.f32 %v3983, %v4826
        %v4828 = vpop.f32.mrb[0].mxu0
        %v4829 = vpop.f32.mrb[0].mxu0
        %v4830 = vadd.f32 %v3984, %v4829
        %v4831 = vpop.f32.mrb[0].mxu0
        %4832 = vdwg.mxu0
        %v4833 = vsel %vm2855, %v4032, -inf
        %4834 = vmax.xlane.f32.xlu0 %v4833
        %v4835 = vpop.xlane.xlu0 %4834
        %v4836 = vsel %vm2855, %v4035, -inf
        %4837 = vmax.xlane.f32.xlu0 %v4836
        %v4838 = vpop.xlane.xlu0 %4837
        %v4839 = vsel %vm2855, %v4085, -inf
        %4840 = vmax.xlane.f32.xlu0 %v4839
        %v4841 = vpop.xlane.xlu0 %4840
        %v4842 = vsel %vm2855, %v4088, -inf
        %4843 = vmax.xlane.f32.xlu0 %v4842
        %v4844 = vpop.xlane.xlu0 %4843
        %v4845 = vsel %vm2855, %v4138, -inf
        %4846 = vmax.xlane.f32.xlu0 %v4845
        %v4847 = vpop.xlane.xlu0 %4846
        %v4848 = vsel %vm2855, %v4141, -inf
        %4849 = vmax.xlane.f32.xlu0 %v4848
        %v4850 = vpop.xlane.xlu0 %4849
        %v4851 = vsel %vm2855, %v4191, -inf
        %4852 = vmax.xlane.f32.xlu0 %v4851
        %v4853 = vpop.xlane.xlu0 %4852
        %v4854 = vsel %vm2855, %v4194, -inf
        %4855 = vmax.xlane.f32.xlu0 %v4854
        %v4856 = vpop.xlane.xlu0 %4855
        %v4857 = vsel %vm2855, %v4244, -inf
        %4858 = vmax.xlane.f32.xlu0 %v4857
        %v4859 = vpop.xlane.xlu0 %4858
        %v4860 = vsel %vm2855, %v4247, -inf
        %4861 = vmax.xlane.f32.xlu0 %v4860
        %v4862 = vpop.xlane.xlu0 %4861
        %v4863 = vsel %vm2855, %v4297, -inf
        %4864 = vmax.xlane.f32.xlu0 %v4863
        %v4865 = vpop.xlane.xlu0 %4864
        %v4866 = vsel %vm2855, %v4300, -inf
        %4867 = vmax.xlane.f32.xlu0 %v4866
        %v4868 = vpop.xlane.xlu0 %4867
        %v4869 = vsel %vm2855, %v4350, -inf
        %4870 = vmax.xlane.f32.xlu0 %v4869
        %v4871 = vpop.xlane.xlu0 %4870
        %v4872 = vsel %vm2855, %v4353, -inf
        %4873 = vmax.xlane.f32.xlu0 %v4872
        %v4874 = vpop.xlane.xlu0 %4873
        %v4875 = vsel %vm2855, %v4403, -inf
        %4876 = vmax.xlane.f32.xlu0 %v4875
        %v4877 = vpop.xlane.xlu0 %4876
        %v4878 = vsel %vm2855, %v4406, -inf
        %4879 = vmax.xlane.f32.xlu0 %v4878
        %v4880 = vpop.xlane.xlu0 %4879
        %v4881 = vsel %vm2855, %v4456, -inf
        %4882 = vmax.xlane.f32.xlu0 %v4881
        %v4883 = vpop.xlane.xlu0 %4882
        %v4884 = vsel %vm2855, %v4459, -inf
        %4885 = vmax.xlane.f32.xlu0 %v4884
        %v4886 = vpop.xlane.xlu0 %4885
        %v4887 = vsel %vm2855, %v4509, -inf
        %4888 = vmax.xlane.f32.xlu0 %v4887
        %v4889 = vpop.xlane.xlu0 %4888
        %v4890 = vsel %vm2855, %v4512, -inf
        %4891 = vmax.xlane.f32.xlu0 %v4890
        %v4892 = vpop.xlane.xlu0 %4891
        %v4893 = vsel %vm2855, %v4562, -inf
        %4894 = vmax.xlane.f32.xlu0 %v4893
        %v4895 = vpop.xlane.xlu0 %4894
        %v4896 = vsel %vm2855, %v4565, -inf
        %4897 = vmax.xlane.f32.xlu0 %v4896
        %v4898 = vpop.xlane.xlu0 %4897
        %v4899 = vsel %vm2855, %v4615, -inf
        %4900 = vmax.xlane.f32.xlu0 %v4899
        %v4901 = vpop.xlane.xlu0 %4900
        %v4902 = vsel %vm2855, %v4618, -inf
        %4903 = vmax.xlane.f32.xlu0 %v4902
        %v4904 = vpop.xlane.xlu0 %4903
        %v4905 = vsel %vm2855, %v4668, -inf
        %4906 = vmax.xlane.f32.xlu0 %v4905
        %v4907 = vpop.xlane.xlu0 %4906
        %v4908 = vsel %vm2855, %v4671, -inf
        %4909 = vmax.xlane.f32.xlu0 %v4908
        %v4910 = vpop.xlane.xlu0 %4909
        %v4911 = vsel %vm2855, %v4721, -inf
        %4912 = vmax.xlane.f32.xlu0 %v4911
        %v4913 = vpop.xlane.xlu0 %4912
        %v4914 = vsel %vm2855, %v4724, -inf
        %4915 = vmax.xlane.f32.xlu0 %v4914
        %v4916 = vpop.xlane.xlu0 %4915
        %v4917 = vsel %vm2855, %v4774, -inf
        %4918 = vmax.xlane.f32.xlu0 %v4917
        %v4919 = vpop.xlane.xlu0 %4918
        %v4920 = vsel %vm2855, %v4777, -inf
        %4921 = vmax.xlane.f32.xlu0 %v4920
        %v4922 = vpop.xlane.xlu0 %4921
        %v4923 = vsel %vm2855, %v4827, -inf
        %4924 = vmax.xlane.f32.xlu0 %v4923
        %v4925 = vpop.xlane.xlu0 %4924
        %v4926 = vsel %vm2855, %v4830, -inf
        %4927 = vmax.xlane.f32.xlu0 %v4926
        %v4928 = vpop.xlane.xlu0 %4927
        %v4929 = vsub.f32 %v4032, %v4835
        %v4930 = vsub.f32 %v4035, %v4838
        %v4931 = vsub.f32 %v4085, %v4841
        %v4932 = vsub.f32 %v4088, %v4844
        %v4933 = vsub.f32 %v4138, %v4847
        %v4934 = vsub.f32 %v4141, %v4850
        %v4935 = vsub.f32 %v4191, %v4853
        %v4936 = vsub.f32 %v4194, %v4856
        %v4937 = vsub.f32 %v4244, %v4859
        %v4938 = vsub.f32 %v4247, %v4862
        %v4939 = vsub.f32 %v4297, %v4865
        %v4940 = vsub.f32 %v4300, %v4868
        %v4941 = vsub.f32 %v4350, %v4871
        %v4942 = vsub.f32 %v4353, %v4874
        %v4943 = vsub.f32 %v4403, %v4877
        %v4944 = vsub.f32 %v4406, %v4880
        %v4945 = vsub.f32 %v4456, %v4883
        %v4946 = vsub.f32 %v4459, %v4886
        %v4947 = vsub.f32 %v4509, %v4889
        %v4948 = vsub.f32 %v4512, %v4892
        %v4949 = vsub.f32 %v4562, %v4895
        %v4950 = vsub.f32 %v4565, %v4898
        %v4951 = vsub.f32 %v4615, %v4901
        %v4952 = vsub.f32 %v4618, %v4904
        %v4953 = vsub.f32 %v4668, %v4907
        %v4954 = vsub.f32 %v4671, %v4910
        %v4955 = vsub.f32 %v4721, %v4913
        %v4956 = vsub.f32 %v4724, %v4916
        %v4957 = vsub.f32 %v4774, %v4919
        %v4958 = vsub.f32 %v4777, %v4922
        %v4959 = vsub.f32 %v4827, %v4925
        %v4960 = vsub.f32 %v4830, %v4928
        %v4961 = vmul.f32 %v4929, 1.442695
        %v4962 = vpow.pop %v4961
        %v4963 = vmul.f32 %v4930, 1.442695
        %v4964 = vpow.pop %v4963
        %v4965 = vmul.f32 %v4931, 1.442695
        %v4966 = vpow.pop %v4965
        %v4967 = vmul.f32 %v4932, 1.442695
        %v4968 = vpow.pop %v4967
        %v4969 = vmul.f32 %v4933, 1.442695
        %v4970 = vpow.pop %v4969
        %v4971 = vmul.f32 %v4934, 1.442695
        %v4972 = vpow.pop %v4971
        %v4973 = vmul.f32 %v4935, 1.442695
        %v4974 = vpow.pop %v4973
        %v4975 = vmul.f32 %v4936, 1.442695
        %v4976 = vpow.pop %v4975
        %v4977 = vmul.f32 %v4937, 1.442695
        %v4978 = vpow.pop %v4977
        %v4979 = vmul.f32 %v4938, 1.442695
        %v4980 = vpow.pop %v4979
        %v4981 = vmul.f32 %v4939, 1.442695
        %v4982 = vpow.pop %v4981
        %v4983 = vmul.f32 %v4940, 1.442695
        %v4984 = vpow.pop %v4983
        %v4985 = vmul.f32 %v4941, 1.442695
        %v4986 = vpow.pop %v4985
        %v4987 = vmul.f32 %v4942, 1.442695
        %v4988 = vpow.pop %v4987
        %v4989 = vmul.f32 %v4943, 1.442695
        %v4990 = vpow.pop %v4989
        %v4991 = vmul.f32 %v4944, 1.442695
        %v4992 = vpow.pop %v4991
        %v4993 = vmul.f32 %v4945, 1.442695
        %v4994 = vpow.pop %v4993
        %v4995 = vmul.f32 %v4946, 1.442695
        %v4996 = vpow.pop %v4995
        %v4997 = vmul.f32 %v4947, 1.442695
        %v4998 = vpow.pop %v4997
        %v4999 = vmul.f32 %v4948, 1.442695
        %v5000 = vpow.pop %v4999
        %v5001 = vmul.f32 %v4949, 1.442695
        %v5002 = vpow.pop %v5001
        %v5003 = vmul.f32 %v4950, 1.442695
        %v5004 = vpow.pop %v5003
        %v5005 = vmul.f32 %v4951, 1.442695
        %v5006 = vpow.pop %v5005
        %v5007 = vmul.f32 %v4952, 1.442695
        %v5008 = vpow.pop %v5007
        %v5009 = vmul.f32 %v4953, 1.442695
        %v5010 = vpow.pop %v5009
        %v5011 = vmul.f32 %v4954, 1.442695
        %v5012 = vpow.pop %v5011
        %v5013 = vmul.f32 %v4955, 1.442695
        %v5014 = vpow.pop %v5013
        %v5015 = vmul.f32 %v4956, 1.442695
        %v5016 = vpow.pop %v5015
        %v5017 = vmul.f32 %v4957, 1.442695
        %v5018 = vpow.pop %v5017
        %v5019 = vmul.f32 %v4958, 1.442695
        %v5020 = vpow.pop %v5019
        %v5021 = vmul.f32 %v4959, 1.442695
        %v5022 = vpow.pop %v5021
        %v5023 = vmul.f32 %v4960, 1.442695
        %v5024 = vpow.pop %v5023
        %v5025 = vsel %vm2855, %v4962, 0.0
        %5026 = vadd.xlane.f32.xlu0 %v5025
        %v5027 = vpop.xlane.xlu0 %5026
        %v5028 = vsel %vm2855, %v4964, 0.0
        %5029 = vadd.xlane.f32.xlu0 %v5028
        %v5030 = vpop.xlane.xlu0 %5029
        %v5031 = vsel %vm2855, %v4966, 0.0
        %5032 = vadd.xlane.f32.xlu0 %v5031
        %v5033 = vpop.xlane.xlu0 %5032
        %v5034 = vsel %vm2855, %v4968, 0.0
        %5035 = vadd.xlane.f32.xlu0 %v5034
        %v5036 = vpop.xlane.xlu0 %5035
        %v5037 = vsel %vm2855, %v4970, 0.0
        %5038 = vadd.xlane.f32.xlu0 %v5037
        %v5039 = vpop.xlane.xlu0 %5038
        %v5040 = vsel %vm2855, %v4972, 0.0
        %5041 = vadd.xlane.f32.xlu0 %v5040
        %v5042 = vpop.xlane.xlu0 %5041
        %v5043 = vsel %vm2855, %v4974, 0.0
        %5044 = vadd.xlane.f32.xlu0 %v5043
        %v5045 = vpop.xlane.xlu0 %5044
        %v5046 = vsel %vm2855, %v4976, 0.0
        %5047 = vadd.xlane.f32.xlu0 %v5046
        %v5048 = vpop.xlane.xlu0 %5047
        %v5049 = vsel %vm2855, %v4978, 0.0
        %5050 = vadd.xlane.f32.xlu0 %v5049
        %v5051 = vpop.xlane.xlu0 %5050
        %v5052 = vsel %vm2855, %v4980, 0.0
        %5053 = vadd.xlane.f32.xlu0 %v5052
        %v5054 = vpop.xlane.xlu0 %5053
        %v5055 = vsel %vm2855, %v4982, 0.0
        %5056 = vadd.xlane.f32.xlu0 %v5055
        %v5057 = vpop.xlane.xlu0 %5056
        %v5058 = vsel %vm2855, %v4984, 0.0
        %5059 = vadd.xlane.f32.xlu0 %v5058
        %v5060 = vpop.xlane.xlu0 %5059
        %v5061 = vsel %vm2855, %v4986, 0.0
        %5062 = vadd.xlane.f32.xlu0 %v5061
        %v5063 = vpop.xlane.xlu0 %5062
        %v5064 = vsel %vm2855, %v4988, 0.0
        %5065 = vadd.xlane.f32.xlu0 %v5064
        %v5066 = vpop.xlane.xlu0 %5065
        %v5067 = vsel %vm2855, %v4990, 0.0
        %5068 = vadd.xlane.f32.xlu0 %v5067
        %v5069 = vpop.xlane.xlu0 %5068
        %v5070 = vsel %vm2855, %v4992, 0.0
        %5071 = vadd.xlane.f32.xlu0 %v5070
        %v5072 = vpop.xlane.xlu0 %5071
        %v5073 = vsel %vm2855, %v4994, 0.0
        %5074 = vadd.xlane.f32.xlu0 %v5073
        %v5075 = vpop.xlane.xlu0 %5074
        %v5076 = vsel %vm2855, %v4996, 0.0
        %5077 = vadd.xlane.f32.xlu0 %v5076
        %v5078 = vpop.xlane.xlu0 %5077
        %v5079 = vsel %vm2855, %v4998, 0.0
        %5080 = vadd.xlane.f32.xlu0 %v5079
        %v5081 = vpop.xlane.xlu0 %5080
        %v5082 = vsel %vm2855, %v5000, 0.0
        %5083 = vadd.xlane.f32.xlu0 %v5082
        %v5084 = vpop.xlane.xlu0 %5083
        %v5085 = vsel %vm2855, %v5002, 0.0
        %5086 = vadd.xlane.f32.xlu0 %v5085
        %v5087 = vpop.xlane.xlu0 %5086
        %v5088 = vsel %vm2855, %v5004, 0.0
        %5089 = vadd.xlane.f32.xlu0 %v5088
        %v5090 = vpop.xlane.xlu0 %5089
        %v5091 = vsel %vm2855, %v5006, 0.0
        %5092 = vadd.xlane.f32.xlu0 %v5091
        %v5093 = vpop.xlane.xlu0 %5092
        %v5094 = vsel %vm2855, %v5008, 0.0
        %5095 = vadd.xlane.f32.xlu0 %v5094
        %v5096 = vpop.xlane.xlu0 %5095
        %v5097 = vsel %vm2855, %v5010, 0.0
        %5098 = vadd.xlane.f32.xlu0 %v5097
        %v5099 = vpop.xlane.xlu0 %5098
        %v5100 = vsel %vm2855, %v5012, 0.0
        %5101 = vadd.xlane.f32.xlu0 %v5100
        %v5102 = vpop.xlane.xlu0 %5101
        %v5103 = vsel %vm2855, %v5014, 0.0
        %5104 = vadd.xlane.f32.xlu0 %v5103
        %v5105 = vpop.xlane.xlu0 %5104
        %v5106 = vsel %vm2855, %v5016, 0.0
        %5107 = vadd.xlane.f32.xlu0 %v5106
        %v5108 = vpop.xlane.xlu0 %5107
        %v5109 = vsel %vm2855, %v5018, 0.0
        %5110 = vadd.xlane.f32.xlu0 %v5109
        %v5111 = vpop.xlane.xlu0 %5110
        %v5112 = vsel %vm2855, %v5020, 0.0
        %5113 = vadd.xlane.f32.xlu0 %v5112
        %v5114 = vpop.xlane.xlu0 %5113
        %v5115 = vsel %vm2855, %v5022, 0.0
        %5116 = vadd.xlane.f32.xlu0 %v5115
        %v5117 = vpop.xlane.xlu0 %5116
        %v5118 = vsel %vm2855, %v5024, 0.0
        %5119 = vadd.xlane.f32.xlu0 %v5118
        %v5120 = vpop.xlane.xlu0 %5119
        %v5121 = vpack.c.bf16 %v4964, %v4962
        %v5122 = vpack.c.bf16 %v4968, %v4966
        %v5123 = vpack.c.bf16 %v4972, %v4970
        %v5124 = vpack.c.bf16 %v4976, %v4974
        %v5125 = vpack.c.bf16 %v4980, %v4978
        %v5126 = vpack.c.bf16 %v4984, %v4982
        %v5127 = vpack.c.bf16 %v4988, %v4986
        %v5128 = vpack.c.bf16 %v4992, %v4990
        %v5129 = vpack.c.bf16 %v4996, %v4994
        %v5130 = vpack.c.bf16 %v5000, %v4998
        %v5131 = vpack.c.bf16 %v5004, %v5002
        %v5132 = vpack.c.bf16 %v5008, %v5006
        %v5133 = vpack.c.bf16 %v5012, %v5010
        %v5134 = vpack.c.bf16 %v5016, %v5014
        %v5135 = vpack.c.bf16 %v5020, %v5018
        %v5136 = vpack.c.bf16 %v5024, %v5022
        %5138 = vrot.lane.b32.xlu0 %v2082, 96
        %v5139 = vpop.permute.xlu0 %5138
        %v5142 = vsel %vm2855, %v5121, 0
        %5144 = vmatprep.subr.bf16.mxu0 0
        %5145 = vmatpush1.bf16.msra.mxu0 %v5139
        %5146 = vmatprep.subr.bf16.mxu0 0
        %5147 = vmatpush1.bf16.msra.mxu0 0
        %5148 = vmatprep.subr.bf16.mxu0 0
        %5149 = vmatpush1.bf16.msra.mxu0 0
        %5150 = vmatprep.subr.bf16.mxu0 0
        %5151 = vmatpush1.bf16.msra.mxu0 0
        %5152 = vmatprep.subr.bf16.mxu0 0
        %5153 = vmatpush1.bf16.msra.mxu0 0
        %5154 = vmatprep.subr.bf16.mxu0 0
        %5155 = vmatpush1.bf16.msra.mxu0 0
        %5156 = vmatprep.subr.bf16.mxu0 0
        %5157 = vmatpush1.bf16.msra.mxu0 0
        %5158 = vmatprep.subr.bf16.mxu0 0
        %5159 = vmatpush1.bf16.msra.mxu0 0
        %5160 = vmatprep.subr.bf16.mxu0 0
        %5161 = vmatpush1.bf16.msra.mxu0 0
        %5162 = vmatprep.subr.bf16.mxu0 0
        %5163 = vmatpush1.bf16.msra.mxu0 0
        %5164 = vmatprep.subr.bf16.mxu0 0
        %5165 = vmatpush1.bf16.msra.mxu0 0
        %5166 = vmatprep.subr.bf16.mxu0 0
        %5167 = vmatpush1.bf16.msra.mxu0 0
        %5168 = vmatprep.subr.bf16.mxu0 0
        %5169 = vmatpush1.bf16.msra.mxu0 0
        %5170 = vmatprep.subr.bf16.mxu0 0
        %5171 = vmatpush1.bf16.msra.mxu0 0
        %5172 = vmatprep.subr.bf16.mxu0 0
        %5173 = vmatpush1.bf16.msra.mxu0 0
        %5174 = vmatprep.subr.bf16.mxu0 0
        %5175 = vmatpush1.bf16.msra.mxu0 0
        %5176 = vmatprep.mubr.bf16.mxu0 0
        %5177 = vmatmul.mubr.bf16.gmra.mrb[0].mxu0 %v5142
        %v5178 = vpop.f32.mrb[0].mxu0
        %v5179 = vadd.f32 0.0, %v5178
        %v5180 = vpop.f32.mrb[0].mxu0
        %v5181 = vpop.f32.mrb[0].mxu0
        %v5182 = vadd.f32 0.0, %v5181
        %v5183 = vpop.f32.mrb[0].mxu0
        %5184 = vdwg.mxu0
        %5186 = vrot.lane.b32.xlu0 %v2083, 96
        %v5187 = vpop.permute.xlu0 %5186
        %v5190 = vsel %vm2855, %v5122, 0
        %5192 = vmatprep.subr.bf16.mxu0 0
        %5193 = vmatpush1.bf16.msra.mxu0 %v5187
        %5194 = vmatprep.subr.bf16.mxu0 0
        %5195 = vmatpush1.bf16.msra.mxu0 0
        %5196 = vmatprep.subr.bf16.mxu0 0
        %5197 = vmatpush1.bf16.msra.mxu0 0
        %5198 = vmatprep.subr.bf16.mxu0 0
        %5199 = vmatpush1.bf16.msra.mxu0 0
        %5200 = vmatprep.subr.bf16.mxu0 0
        %5201 = vmatpush1.bf16.msra.mxu0 0
        %5202 = vmatprep.subr.bf16.mxu0 0
        %5203 = vmatpush1.bf16.msra.mxu0 0
        %5204 = vmatprep.subr.bf16.mxu0 0
        %5205 = vmatpush1.bf16.msra.mxu0 0
        %5206 = vmatprep.subr.bf16.mxu0 0
        %5207 = vmatpush1.bf16.msra.mxu0 0
        %5208 = vmatprep.subr.bf16.mxu0 0
        %5209 = vmatpush1.bf16.msra.mxu0 0
        %5210 = vmatprep.subr.bf16.mxu0 0
        %5211 = vmatpush1.bf16.msra.mxu0 0
        %5212 = vmatprep.subr.bf16.mxu0 0
        %5213 = vmatpush1.bf16.msra.mxu0 0
        %5214 = vmatprep.subr.bf16.mxu0 0
        %5215 = vmatpush1.bf16.msra.mxu0 0
        %5216 = vmatprep.subr.bf16.mxu0 0
        %5217 = vmatpush1.bf16.msra.mxu0 0
        %5218 = vmatprep.subr.bf16.mxu0 0
        %5219 = vmatpush1.bf16.msra.mxu0 0
        %5220 = vmatprep.subr.bf16.mxu0 0
        %5221 = vmatpush1.bf16.msra.mxu0 0
        %5222 = vmatprep.subr.bf16.mxu0 0
        %5223 = vmatpush1.bf16.msra.mxu0 0
        %5224 = vmatprep.mubr.bf16.mxu0 0
        %5225 = vmatmul.mubr.bf16.gmra.mrb[0].mxu0 %v5190
        %v5226 = vpop.f32.mrb[0].mxu0
        %v5227 = vadd.f32 0.0, %v5226
        %v5228 = vpop.f32.mrb[0].mxu0
        %v5229 = vpop.f32.mrb[0].mxu0
        %v5230 = vadd.f32 0.0, %v5229
        %v5231 = vpop.f32.mrb[0].mxu0
        %5232 = vdwg.mxu0
        %5234 = vrot.lane.b32.xlu0 %v2084, 96
        %v5235 = vpop.permute.xlu0 %5234
        %v5238 = vsel %vm2855, %v5123, 0
        %5240 = vmatprep.subr.bf16.mxu0 0
        %5241 = vmatpush1.bf16.msra.mxu0 %v5235
        %5242 = vmatprep.subr.bf16.mxu0 0
        %5243 = vmatpush1.bf16.msra.mxu0 0
        %5244 = vmatprep.subr.bf16.mxu0 0
        %5245 = vmatpush1.bf16.msra.mxu0 0
        %5246 = vmatprep.subr.bf16.mxu0 0
        %5247 = vmatpush1.bf16.msra.mxu0 0
        %5248 = vmatprep.subr.bf16.mxu0 0
        %5249 = vmatpush1.bf16.msra.mxu0 0
        %5250 = vmatprep.subr.bf16.mxu0 0
        %5251 = vmatpush1.bf16.msra.mxu0 0
        %5252 = vmatprep.subr.bf16.mxu0 0
        %5253 = vmatpush1.bf16.msra.mxu0 0
        %5254 = vmatprep.subr.bf16.mxu0 0
        %5255 = vmatpush1.bf16.msra.mxu0 0
        %5256 = vmatprep.subr.bf16.mxu0 0
        %5257 = vmatpush1.bf16.msra.mxu0 0
        %5258 = vmatprep.subr.bf16.mxu0 0
        %5259 = vmatpush1.bf16.msra.mxu0 0
        %5260 = vmatprep.subr.bf16.mxu0 0
        %5261 = vmatpush1.bf16.msra.mxu0 0
        %5262 = vmatprep.subr.bf16.mxu0 0
        %5263 = vmatpush1.bf16.msra.mxu0 0
        %5264 = vmatprep.subr.bf16.mxu0 0
        %5265 = vmatpush1.bf16.msra.mxu0 0
        %5266 = vmatprep.subr.bf16.mxu0 0
        %5267 = vmatpush1.bf16.msra.mxu0 0
        %5268 = vmatprep.subr.bf16.mxu0 0
        %5269 = vmatpush1.bf16.msra.mxu0 0
        %5270 = vmatprep.subr.bf16.mxu0 0
        %5271 = vmatpush1.bf16.msra.mxu0 0
        %5272 = vmatprep.mubr.bf16.mxu0 0
        %5273 = vmatmul.mubr.bf16.gmra.mrb[0].mxu0 %v5238
        %v5274 = vpop.f32.mrb[0].mxu0
        %v5275 = vadd.f32 0.0, %v5274
        %v5276 = vpop.f32.mrb[0].mxu0
        %v5277 = vpop.f32.mrb[0].mxu0
        %v5278 = vadd.f32 0.0, %v5277
        %v5279 = vpop.f32.mrb[0].mxu0
        %5280 = vdwg.mxu0
        %5282 = vrot.lane.b32.xlu0 %v2085, 96
        %v5283 = vpop.permute.xlu0 %5282
        %v5286 = vsel %vm2855, %v5124, 0
        %5288 = vmatprep.subr.bf16.mxu0 0
        %5289 = vmatpush1.bf16.msra.mxu0 %v5283
        %5290 = vmatprep.subr.bf16.mxu0 0
        %5291 = vmatpush1.bf16.msra.mxu0 0
        %5292 = vmatprep.subr.bf16.mxu0 0
        %5293 = vmatpush1.bf16.msra.mxu0 0
        %5294 = vmatprep.subr.bf16.mxu0 0
        %5295 = vmatpush1.bf16.msra.mxu0 0
        %5296 = vmatprep.subr.bf16.mxu0 0
        %5297 = vmatpush1.bf16.msra.mxu0 0
        %5298 = vmatprep.subr.bf16.mxu0 0
        %5299 = vmatpush1.bf16.msra.mxu0 0
        %5300 = vmatprep.subr.bf16.mxu0 0
        %5301 = vmatpush1.bf16.msra.mxu0 0
        %5302 = vmatprep.subr.bf16.mxu0 0
        %5303 = vmatpush1.bf16.msra.mxu0 0
        %5304 = vmatprep.subr.bf16.mxu0 0
        %5305 = vmatpush1.bf16.msra.mxu0 0
        %5306 = vmatprep.subr.bf16.mxu0 0
        %5307 = vmatpush1.bf16.msra.mxu0 0
        %5308 = vmatprep.subr.bf16.mxu0 0
        %5309 = vmatpush1.bf16.msra.mxu0 0
        %5310 = vmatprep.subr.bf16.mxu0 0
        %5311 = vmatpush1.bf16.msra.mxu0 0
        %5312 = vmatprep.subr.bf16.mxu0 0
        %5313 = vmatpush1.bf16.msra.mxu0 0
        %5314 = vmatprep.subr.bf16.mxu0 0
        %5315 = vmatpush1.bf16.msra.mxu0 0
        %5316 = vmatprep.subr.bf16.mxu0 0
        %5317 = vmatpush1.bf16.msra.mxu0 0
        %5318 = vmatprep.subr.bf16.mxu0 0
        %5319 = vmatpush1.bf16.msra.mxu0 0
        %5320 = vmatprep.mubr.bf16.mxu0 0
        %5321 = vmatmul.mubr.bf16.gmra.mrb[0].mxu0 %v5286
        %v5322 = vpop.f32.mrb[0].mxu0
        %v5323 = vadd.f32 0.0, %v5322
        %v5324 = vpop.f32.mrb[0].mxu0
        %v5325 = vpop.f32.mrb[0].mxu0
        %v5326 = vadd.f32 0.0, %v5325
        %v5327 = vpop.f32.mrb[0].mxu0
        %5328 = vdwg.mxu0
        %5330 = vrot.lane.b32.xlu0 %v2086, 96
        %v5331 = vpop.permute.xlu0 %5330
        %v5334 = vsel %vm2855, %v5125, 0
        %5336 = vmatprep.subr.bf16.mxu0 0
        %5337 = vmatpush1.bf16.msra.mxu0 %v5331
        %5338 = vmatprep.subr.bf16.mxu0 0
        %5339 = vmatpush1.bf16.msra.mxu0 0
        %5340 = vmatprep.subr.bf16.mxu0 0
        %5341 = vmatpush1.bf16.msra.mxu0 0
        %5342 = vmatprep.subr.bf16.mxu0 0
        %5343 = vmatpush1.bf16.msra.mxu0 0
        %5344 = vmatprep.subr.bf16.mxu0 0
        %5345 = vmatpush1.bf16.msra.mxu0 0
        %5346 = vmatprep.subr.bf16.mxu0 0
        %5347 = vmatpush1.bf16.msra.mxu0 0
        %5348 = vmatprep.subr.bf16.mxu0 0
        %5349 = vmatpush1.bf16.msra.mxu0 0
        %5350 = vmatprep.subr.bf16.mxu0 0
        %5351 = vmatpush1.bf16.msra.mxu0 0
        %5352 = vmatprep.subr.bf16.mxu0 0
        %5353 = vmatpush1.bf16.msra.mxu0 0
        %5354 = vmatprep.subr.bf16.mxu0 0
        %5355 = vmatpush1.bf16.msra.mxu0 0
        %5356 = vmatprep.subr.bf16.mxu0 0
        %5357 = vmatpush1.bf16.msra.mxu0 0
        %5358 = vmatprep.subr.bf16.mxu0 0
        %5359 = vmatpush1.bf16.msra.mxu0 0
        %5360 = vmatprep.subr.bf16.mxu0 0
        %5361 = vmatpush1.bf16.msra.mxu0 0
        %5362 = vmatprep.subr.bf16.mxu0 0
        %5363 = vmatpush1.bf16.msra.mxu0 0
        %5364 = vmatprep.subr.bf16.mxu0 0
        %5365 = vmatpush1.bf16.msra.mxu0 0
        %5366 = vmatprep.subr.bf16.mxu0 0
        %5367 = vmatpush1.bf16.msra.mxu0 0
        %5368 = vmatprep.mubr.bf16.mxu0 0
        %5369 = vmatmul.mubr.bf16.gmra.mrb[0].mxu0 %v5334
        %v5370 = vpop.f32.mrb[0].mxu0
        %v5371 = vadd.f32 0.0, %v5370
        %v5372 = vpop.f32.mrb[0].mxu0
        %v5373 = vpop.f32.mrb[0].mxu0
        %v5374 = vadd.f32 0.0, %v5373
        %v5375 = vpop.f32.mrb[0].mxu0
        %5376 = vdwg.mxu0
        %5378 = vrot.lane.b32.xlu0 %v2087, 96
        %v5379 = vpop.permute.xlu0 %5378
        %v5382 = vsel %vm2855, %v5126, 0
        %5384 = vmatprep.subr.bf16.mxu0 0
        %5385 = vmatpush1.bf16.msra.mxu0 %v5379
        %5386 = vmatprep.subr.bf16.mxu0 0
        %5387 = vmatpush1.bf16.msra.mxu0 0
        %5388 = vmatprep.subr.bf16.mxu0 0
        %5389 = vmatpush1.bf16.msra.mxu0 0
        %5390 = vmatprep.subr.bf16.mxu0 0
        %5391 = vmatpush1.bf16.msra.mxu0 0
        %5392 = vmatprep.subr.bf16.mxu0 0
        %5393 = vmatpush1.bf16.msra.mxu0 0
        %5394 = vmatprep.subr.bf16.mxu0 0
        %5395 = vmatpush1.bf16.msra.mxu0 0
        %5396 = vmatprep.subr.bf16.mxu0 0
        %5397 = vmatpush1.bf16.msra.mxu0 0
        %5398 = vmatprep.subr.bf16.mxu0 0
        %5399 = vmatpush1.bf16.msra.mxu0 0
        %5400 = vmatprep.subr.bf16.mxu0 0
        %5401 = vmatpush1.bf16.msra.mxu0 0
        %5402 = vmatprep.subr.bf16.mxu0 0
        %5403 = vmatpush1.bf16.msra.mxu0 0
        %5404 = vmatprep.subr.bf16.mxu0 0
        %5405 = vmatpush1.bf16.msra.mxu0 0
        %5406 = vmatprep.subr.bf16.mxu0 0
        %5407 = vmatpush1.bf16.msra.mxu0 0
        %5408 = vmatprep.subr.bf16.mxu0 0
        %5409 = vmatpush1.bf16.msra.mxu0 0
        %5410 = vmatprep.subr.bf16.mxu0 0
        %5411 = vmatpush1.bf16.msra.mxu0 0
        %5412 = vmatprep.subr.bf16.mxu0 0
        %5413 = vmatpush1.bf16.msra.mxu0 0
        %5414 = vmatprep.subr.bf16.mxu0 0
        %5415 = vmatpush1.bf16.msra.mxu0 0
        %5416 = vmatprep.mubr.bf16.mxu0 0
        %5417 = vmatmul.mubr.bf16.gmra.mrb[0].mxu0 %v5382
        %v5418 = vpop.f32.mrb[0].mxu0
        %v5419 = vadd.f32 0.0, %v5418
        %v5420 = vpop.f32.mrb[0].mxu0
        %v5421 = vpop.f32.mrb[0].mxu0
        %v5422 = vadd.f32 0.0, %v5421
        %v5423 = vpop.f32.mrb[0].mxu0
        %5424 = vdwg.mxu0
        %5426 = vrot.lane.b32.xlu0 %v2088, 96
        %v5427 = vpop.permute.xlu0 %5426
        %v5430 = vsel %vm2855, %v5127, 0
        %5432 = vmatprep.subr.bf16.mxu0 0
        %5433 = vmatpush1.bf16.msra.mxu0 %v5427
        %5434 = vmatprep.subr.bf16.mxu0 0
        %5435 = vmatpush1.bf16.msra.mxu0 0
        %5436 = vmatprep.subr.bf16.mxu0 0
        %5437 = vmatpush1.bf16.msra.mxu0 0
        %5438 = vmatprep.subr.bf16.mxu0 0
        %5439 = vmatpush1.bf16.msra.mxu0 0
        %5440 = vmatprep.subr.bf16.mxu0 0
        %5441 = vmatpush1.bf16.msra.mxu0 0
        %5442 = vmatprep.subr.bf16.mxu0 0
        %5443 = vmatpush1.bf16.msra.mxu0 0
        %5444 = vmatprep.subr.bf16.mxu0 0
        %5445 = vmatpush1.bf16.msra.mxu0 0
        %5446 = vmatprep.subr.bf16.mxu0 0
        %5447 = vmatpush1.bf16.msra.mxu0 0
        %5448 = vmatprep.subr.bf16.mxu0 0
        %5449 = vmatpush1.bf16.msra.mxu0 0
        %5450 = vmatprep.subr.bf16.mxu0 0
        %5451 = vmatpush1.bf16.msra.mxu0 0
        %5452 = vmatprep.subr.bf16.mxu0 0
        %5453 = vmatpush1.bf16.msra.mxu0 0
        %5454 = vmatprep.subr.bf16.mxu0 0
        %5455 = vmatpush1.bf16.msra.mxu0 0
        %5456 = vmatprep.subr.bf16.mxu0 0
        %5457 = vmatpush1.bf16.msra.mxu0 0
        %5458 = vmatprep.subr.bf16.mxu0 0
        %5459 = vmatpush1.bf16.msra.mxu0 0
        %5460 = vmatprep.subr.bf16.mxu0 0
        %5461 = vmatpush1.bf16.msra.mxu0 0
        %5462 = vmatprep.subr.bf16.mxu0 0
        %5463 = vmatpush1.bf16.msra.mxu0 0
        %5464 = vmatprep.mubr.bf16.mxu0 0
        %5465 = vmatmul.mubr.bf16.gmra.mrb[0].mxu0 %v5430
        %v5466 = vpop.f32.mrb[0].mxu0
        %v5467 = vadd.f32 0.0, %v5466
        %v5468 = vpop.f32.mrb[0].mxu0
        %v5469 = vpop.f32.mrb[0].mxu0
        %v5470 = vadd.f32 0.0, %v5469
        %v5471 = vpop.f32.mrb[0].mxu0
        %5472 = vdwg.mxu0
        %5474 = vrot.lane.b32.xlu0 %v2089, 96
        %v5475 = vpop.permute.xlu0 %5474
        %v5478 = vsel %vm2855, %v5128, 0
        %5480 = vmatprep.subr.bf16.mxu0 0
        %5481 = vmatpush1.bf16.msra.mxu0 %v5475
        %5482 = vmatprep.subr.bf16.mxu0 0
        %5483 = vmatpush1.bf16.msra.mxu0 0
        %5484 = vmatprep.subr.bf16.mxu0 0
        %5485 = vmatpush1.bf16.msra.mxu0 0
        %5486 = vmatprep.subr.bf16.mxu0 0
        %5487 = vmatpush1.bf16.msra.mxu0 0
        %5488 = vmatprep.subr.bf16.mxu0 0
        %5489 = vmatpush1.bf16.msra.mxu0 0
        %5490 = vmatprep.subr.bf16.mxu0 0
        %5491 = vmatpush1.bf16.msra.mxu0 0
        %5492 = vmatprep.subr.bf16.mxu0 0
        %5493 = vmatpush1.bf16.msra.mxu0 0
        %5494 = vmatprep.subr.bf16.mxu0 0
        %5495 = vmatpush1.bf16.msra.mxu0 0
        %5496 = vmatprep.subr.bf16.mxu0 0
        %5497 = vmatpush1.bf16.msra.mxu0 0
        %5498 = vmatprep.subr.bf16.mxu0 0
        %5499 = vmatpush1.bf16.msra.mxu0 0
        %5500 = vmatprep.subr.bf16.mxu0 0
        %5501 = vmatpush1.bf16.msra.mxu0 0
        %5502 = vmatprep.subr.bf16.mxu0 0
        %5503 = vmatpush1.bf16.msra.mxu0 0
        %5504 = vmatprep.subr.bf16.mxu0 0
        %5505 = vmatpush1.bf16.msra.mxu0 0
        %5506 = vmatprep.subr.bf16.mxu0 0
        %5507 = vmatpush1.bf16.msra.mxu0 0
        %5508 = vmatprep.subr.bf16.mxu0 0
        %5509 = vmatpush1.bf16.msra.mxu0 0
        %5510 = vmatprep.subr.bf16.mxu0 0
        %5511 = vmatpush1.bf16.msra.mxu0 0
        %5512 = vmatprep.mubr.bf16.mxu0 0
        %5513 = vmatmul.mubr.bf16.gmra.mrb[0].mxu0 %v5478
        %v5514 = vpop.f32.mrb[0].mxu0
        %v5515 = vadd.f32 0.0, %v5514
        %v5516 = vpop.f32.mrb[0].mxu0
        %v5517 = vpop.f32.mrb[0].mxu0
        %v5518 = vadd.f32 0.0, %v5517
        %v5519 = vpop.f32.mrb[0].mxu0
        %5520 = vdwg.mxu0
        %5522 = vrot.lane.b32.xlu0 %v2090, 96
        %v5523 = vpop.permute.xlu0 %5522
        %v5526 = vsel %vm2855, %v5129, 0
        %5528 = vmatprep.subr.bf16.mxu0 0
        %5529 = vmatpush1.bf16.msra.mxu0 %v5523
        %5530 = vmatprep.subr.bf16.mxu0 0
        %5531 = vmatpush1.bf16.msra.mxu0 0
        %5532 = vmatprep.subr.bf16.mxu0 0
        %5533 = vmatpush1.bf16.msra.mxu0 0
        %5534 = vmatprep.subr.bf16.mxu0 0
        %5535 = vmatpush1.bf16.msra.mxu0 0
        %5536 = vmatprep.subr.bf16.mxu0 0
        %5537 = vmatpush1.bf16.msra.mxu0 0
        %5538 = vmatprep.subr.bf16.mxu0 0
        %5539 = vmatpush1.bf16.msra.mxu0 0
        %5540 = vmatprep.subr.bf16.mxu0 0
        %5541 = vmatpush1.bf16.msra.mxu0 0
        %5542 = vmatprep.subr.bf16.mxu0 0
        %5543 = vmatpush1.bf16.msra.mxu0 0
        %5544 = vmatprep.subr.bf16.mxu0 0
        %5545 = vmatpush1.bf16.msra.mxu0 0
        %5546 = vmatprep.subr.bf16.mxu0 0
        %5547 = vmatpush1.bf16.msra.mxu0 0
        %5548 = vmatprep.subr.bf16.mxu0 0
        %5549 = vmatpush1.bf16.msra.mxu0 0
        %5550 = vmatprep.subr.bf16.mxu0 0
        %5551 = vmatpush1.bf16.msra.mxu0 0
        %5552 = vmatprep.subr.bf16.mxu0 0
        %5553 = vmatpush1.bf16.msra.mxu0 0
        %5554 = vmatprep.subr.bf16.mxu0 0
        %5555 = vmatpush1.bf16.msra.mxu0 0
        %5556 = vmatprep.subr.bf16.mxu0 0
        %5557 = vmatpush1.bf16.msra.mxu0 0
        %5558 = vmatprep.subr.bf16.mxu0 0
        %5559 = vmatpush1.bf16.msra.mxu0 0
        %5560 = vmatprep.mubr.bf16.mxu0 0
        %5561 = vmatmul.mubr.bf16.gmra.mrb[0].mxu0 %v5526
        %v5562 = vpop.f32.mrb[0].mxu0
        %v5563 = vadd.f32 0.0, %v5562
        %v5564 = vpop.f32.mrb[0].mxu0
        %v5565 = vpop.f32.mrb[0].mxu0
        %v5566 = vadd.f32 0.0, %v5565
        %v5567 = vpop.f32.mrb[0].mxu0
        %5568 = vdwg.mxu0
        %5570 = vrot.lane.b32.xlu0 %v2091, 96
        %v5571 = vpop.permute.xlu0 %5570
        %v5574 = vsel %vm2855, %v5130, 0
        %5576 = vmatprep.subr.bf16.mxu0 0
        %5577 = vmatpush1.bf16.msra.mxu0 %v5571
        %5578 = vmatprep.subr.bf16.mxu0 0
        %5579 = vmatpush1.bf16.msra.mxu0 0
        %5580 = vmatprep.subr.bf16.mxu0 0
        %5581 = vmatpush1.bf16.msra.mxu0 0
        %5582 = vmatprep.subr.bf16.mxu0 0
        %5583 = vmatpush1.bf16.msra.mxu0 0
        %5584 = vmatprep.subr.bf16.mxu0 0
        %5585 = vmatpush1.bf16.msra.mxu0 0
        %5586 = vmatprep.subr.bf16.mxu0 0
        %5587 = vmatpush1.bf16.msra.mxu0 0
        %5588 = vmatprep.subr.bf16.mxu0 0
        %5589 = vmatpush1.bf16.msra.mxu0 0
        %5590 = vmatprep.subr.bf16.mxu0 0
        %5591 = vmatpush1.bf16.msra.mxu0 0
        %5592 = vmatprep.subr.bf16.mxu0 0
        %5593 = vmatpush1.bf16.msra.mxu0 0
        %5594 = vmatprep.subr.bf16.mxu0 0
        %5595 = vmatpush1.bf16.msra.mxu0 0
        %5596 = vmatprep.subr.bf16.mxu0 0
        %5597 = vmatpush1.bf16.msra.mxu0 0
        %5598 = vmatprep.subr.bf16.mxu0 0
        %5599 = vmatpush1.bf16.msra.mxu0 0
        %5600 = vmatprep.subr.bf16.mxu0 0
        %5601 = vmatpush1.bf16.msra.mxu0 0
        %5602 = vmatprep.subr.bf16.mxu0 0
        %5603 = vmatpush1.bf16.msra.mxu0 0
        %5604 = vmatprep.subr.bf16.mxu0 0
        %5605 = vmatpush1.bf16.msra.mxu0 0
        %5606 = vmatprep.subr.bf16.mxu0 0
        %5607 = vmatpush1.bf16.msra.mxu0 0
        %5608 = vmatprep.mubr.bf16.mxu0 0
        %5609 = vmatmul.mubr.bf16.gmra.mrb[0].mxu0 %v5574
        %v5610 = vpop.f32.mrb[0].mxu0
        %v5611 = vadd.f32 0.0, %v5610
        %v5612 = vpop.f32.mrb[0].mxu0
        %v5613 = vpop.f32.mrb[0].mxu0
        %v5614 = vadd.f32 0.0, %v5613
        %v5615 = vpop.f32.mrb[0].mxu0
        %5616 = vdwg.mxu0
        %5618 = vrot.lane.b32.xlu0 %v2092, 96
        %v5619 = vpop.permute.xlu0 %5618
        %v5622 = vsel %vm2855, %v5131, 0
        %5624 = vmatprep.subr.bf16.mxu0 0
        %5625 = vmatpush1.bf16.msra.mxu0 %v5619
        %5626 = vmatprep.subr.bf16.mxu0 0
        %5627 = vmatpush1.bf16.msra.mxu0 0
        %5628 = vmatprep.subr.bf16.mxu0 0
        %5629 = vmatpush1.bf16.msra.mxu0 0
        %5630 = vmatprep.subr.bf16.mxu0 0
        %5631 = vmatpush1.bf16.msra.mxu0 0
        %5632 = vmatprep.subr.bf16.mxu0 0
        %5633 = vmatpush1.bf16.msra.mxu0 0
        %5634 = vmatprep.subr.bf16.mxu0 0
        %5635 = vmatpush1.bf16.msra.mxu0 0
        %5636 = vmatprep.subr.bf16.mxu0 0
        %5637 = vmatpush1.bf16.msra.mxu0 0
        %5638 = vmatprep.subr.bf16.mxu0 0
        %5639 = vmatpush1.bf16.msra.mxu0 0
        %5640 = vmatprep.subr.bf16.mxu0 0
        %5641 = vmatpush1.bf16.msra.mxu0 0
        %5642 = vmatprep.subr.bf16.mxu0 0
        %5643 = vmatpush1.bf16.msra.mxu0 0
        %5644 = vmatprep.subr.bf16.mxu0 0
        %5645 = vmatpush1.bf16.msra.mxu0 0
        %5646 = vmatprep.subr.bf16.mxu0 0
        %5647 = vmatpush1.bf16.msra.mxu0 0
        %5648 = vmatprep.subr.bf16.mxu0 0
        %5649 = vmatpush1.bf16.msra.mxu0 0
        %5650 = vmatprep.subr.bf16.mxu0 0
        %5651 = vmatpush1.bf16.msra.mxu0 0
        %5652 = vmatprep.subr.bf16.mxu0 0
        %5653 = vmatpush1.bf16.msra.mxu0 0
        %5654 = vmatprep.subr.bf16.mxu0 0
        %5655 = vmatpush1.bf16.msra.mxu0 0
        %5656 = vmatprep.mubr.bf16.mxu0 0
        %5657 = vmatmul.mubr.bf16.gmra.mrb[0].mxu0 %v5622
        %v5658 = vpop.f32.mrb[0].mxu0
        %v5659 = vadd.f32 0.0, %v5658
        %v5660 = vpop.f32.mrb[0].mxu0
        %v5661 = vpop.f32.mrb[0].mxu0
        %v5662 = vadd.f32 0.0, %v5661
        %v5663 = vpop.f32.mrb[0].mxu0
        %5664 = vdwg.mxu0
        %5666 = vrot.lane.b32.xlu0 %v2093, 96
        %v5667 = vpop.permute.xlu0 %5666
        %v5670 = vsel %vm2855, %v5132, 0
        %5672 = vmatprep.subr.bf16.mxu0 0
        %5673 = vmatpush1.bf16.msra.mxu0 %v5667
        %5674 = vmatprep.subr.bf16.mxu0 0
        %5675 = vmatpush1.bf16.msra.mxu0 0
        %5676 = vmatprep.subr.bf16.mxu0 0
        %5677 = vmatpush1.bf16.msra.mxu0 0
        %5678 = vmatprep.subr.bf16.mxu0 0
        %5679 = vmatpush1.bf16.msra.mxu0 0
        %5680 = vmatprep.subr.bf16.mxu0 0
        %5681 = vmatpush1.bf16.msra.mxu0 0
        %5682 = vmatprep.subr.bf16.mxu0 0
        %5683 = vmatpush1.bf16.msra.mxu0 0
        %5684 = vmatprep.subr.bf16.mxu0 0
        %5685 = vmatpush1.bf16.msra.mxu0 0
        %5686 = vmatprep.subr.bf16.mxu0 0
        %5687 = vmatpush1.bf16.msra.mxu0 0
        %5688 = vmatprep.subr.bf16.mxu0 0
        %5689 = vmatpush1.bf16.msra.mxu0 0
        %5690 = vmatprep.subr.bf16.mxu0 0
        %5691 = vmatpush1.bf16.msra.mxu0 0
        %5692 = vmatprep.subr.bf16.mxu0 0
        %5693 = vmatpush1.bf16.msra.mxu0 0
        %5694 = vmatprep.subr.bf16.mxu0 0
        %5695 = vmatpush1.bf16.msra.mxu0 0
        %5696 = vmatprep.subr.bf16.mxu0 0
        %5697 = vmatpush1.bf16.msra.mxu0 0
        %5698 = vmatprep.subr.bf16.mxu0 0
        %5699 = vmatpush1.bf16.msra.mxu0 0
        %5700 = vmatprep.subr.bf16.mxu0 0
        %5701 = vmatpush1.bf16.msra.mxu0 0
        %5702 = vmatprep.subr.bf16.mxu0 0
        %5703 = vmatpush1.bf16.msra.mxu0 0
        %5704 = vmatprep.mubr.bf16.mxu0 0
        %5705 = vmatmul.mubr.bf16.gmra.mrb[0].mxu0 %v5670
        %v5706 = vpop.f32.mrb[0].mxu0
        %v5707 = vadd.f32 0.0, %v5706
        %v5708 = vpop.f32.mrb[0].mxu0
        %v5709 = vpop.f32.mrb[0].mxu0
        %v5710 = vadd.f32 0.0, %v5709
        %v5711 = vpop.f32.mrb[0].mxu0
        %5712 = vdwg.mxu0
        %5714 = vrot.lane.b32.xlu0 %v2094, 96
        %v5715 = vpop.permute.xlu0 %5714
        %v5718 = vsel %vm2855, %v5133, 0
        %5720 = vmatprep.subr.bf16.mxu0 0
        %5721 = vmatpush1.bf16.msra.mxu0 %v5715
        %5722 = vmatprep.subr.bf16.mxu0 0
        %5723 = vmatpush1.bf16.msra.mxu0 0
        %5724 = vmatprep.subr.bf16.mxu0 0
        %5725 = vmatpush1.bf16.msra.mxu0 0
        %5726 = vmatprep.subr.bf16.mxu0 0
        %5727 = vmatpush1.bf16.msra.mxu0 0
        %5728 = vmatprep.subr.bf16.mxu0 0
        %5729 = vmatpush1.bf16.msra.mxu0 0
        %5730 = vmatprep.subr.bf16.mxu0 0
        %5731 = vmatpush1.bf16.msra.mxu0 0
        %5732 = vmatprep.subr.bf16.mxu0 0
        %5733 = vmatpush1.bf16.msra.mxu0 0
        %5734 = vmatprep.subr.bf16.mxu0 0
        %5735 = vmatpush1.bf16.msra.mxu0 0
        %5736 = vmatprep.subr.bf16.mxu0 0
        %5737 = vmatpush1.bf16.msra.mxu0 0
        %5738 = vmatprep.subr.bf16.mxu0 0
        %5739 = vmatpush1.bf16.msra.mxu0 0
        %5740 = vmatprep.subr.bf16.mxu0 0
        %5741 = vmatpush1.bf16.msra.mxu0 0
        %5742 = vmatprep.subr.bf16.mxu0 0
        %5743 = vmatpush1.bf16.msra.mxu0 0
        %5744 = vmatprep.subr.bf16.mxu0 0
        %5745 = vmatpush1.bf16.msra.mxu0 0
        %5746 = vmatprep.subr.bf16.mxu0 0
        %5747 = vmatpush1.bf16.msra.mxu0 0
        %5748 = vmatprep.subr.bf16.mxu0 0
        %5749 = vmatpush1.bf16.msra.mxu0 0
        %5750 = vmatprep.subr.bf16.mxu0 0
        %5751 = vmatpush1.bf16.msra.mxu0 0
        %5752 = vmatprep.mubr.bf16.mxu0 0
        %5753 = vmatmul.mubr.bf16.gmra.mrb[0].mxu0 %v5718
        %v5754 = vpop.f32.mrb[0].mxu0
        %v5755 = vadd.f32 0.0, %v5754
        %v5756 = vpop.f32.mrb[0].mxu0
        %v5757 = vpop.f32.mrb[0].mxu0
        %v5758 = vadd.f32 0.0, %v5757
        %v5759 = vpop.f32.mrb[0].mxu0
        %5760 = vdwg.mxu0
        %5762 = vrot.lane.b32.xlu0 %v2095, 96
        %v5763 = vpop.permute.xlu0 %5762
        %v5766 = vsel %vm2855, %v5134, 0
        %5768 = vmatprep.subr.bf16.mxu0 0
        %5769 = vmatpush1.bf16.msra.mxu0 %v5763
        %5770 = vmatprep.subr.bf16.mxu0 0
        %5771 = vmatpush1.bf16.msra.mxu0 0
        %5772 = vmatprep.subr.bf16.mxu0 0
        %5773 = vmatpush1.bf16.msra.mxu0 0
        %5774 = vmatprep.subr.bf16.mxu0 0
        %5775 = vmatpush1.bf16.msra.mxu0 0
        %5776 = vmatprep.subr.bf16.mxu0 0
        %5777 = vmatpush1.bf16.msra.mxu0 0
        %5778 = vmatprep.subr.bf16.mxu0 0
        %5779 = vmatpush1.bf16.msra.mxu0 0
        %5780 = vmatprep.subr.bf16.mxu0 0
        %5781 = vmatpush1.bf16.msra.mxu0 0
        %5782 = vmatprep.subr.bf16.mxu0 0
        %5783 = vmatpush1.bf16.msra.mxu0 0
        %5784 = vmatprep.subr.bf16.mxu0 0
        %5785 = vmatpush1.bf16.msra.mxu0 0
        %5786 = vmatprep.subr.bf16.mxu0 0
        %5787 = vmatpush1.bf16.msra.mxu0 0
        %5788 = vmatprep.subr.bf16.mxu0 0
        %5789 = vmatpush1.bf16.msra.mxu0 0
        %5790 = vmatprep.subr.bf16.mxu0 0
        %5791 = vmatpush1.bf16.msra.mxu0 0
        %5792 = vmatprep.subr.bf16.mxu0 0
        %5793 = vmatpush1.bf16.msra.mxu0 0
        %5794 = vmatprep.subr.bf16.mxu0 0
        %5795 = vmatpush1.bf16.msra.mxu0 0
        %5796 = vmatprep.subr.bf16.mxu0 0
        %5797 = vmatpush1.bf16.msra.mxu0 0
        %5798 = vmatprep.subr.bf16.mxu0 0
        %5799 = vmatpush1.bf16.msra.mxu0 0
        %5800 = vmatprep.mubr.bf16.mxu0 0
        %5801 = vmatmul.mubr.bf16.gmra.mrb[0].mxu0 %v5766
        %v5802 = vpop.f32.mrb[0].mxu0
        %v5803 = vadd.f32 0.0, %v5802
        %v5804 = vpop.f32.mrb[0].mxu0
        %v5805 = vpop.f32.mrb[0].mxu0
        %v5806 = vadd.f32 0.0, %v5805
        %v5807 = vpop.f32.mrb[0].mxu0
        %5808 = vdwg.mxu0
        %5810 = vrot.lane.b32.xlu0 %v2096, 96
        %v5811 = vpop.permute.xlu0 %5810
        %v5814 = vsel %vm2855, %v5135, 0
        %5816 = vmatprep.subr.bf16.mxu0 0
        %5817 = vmatpush1.bf16.msra.mxu0 %v5811
        %5818 = vmatprep.subr.bf16.mxu0 0
        %5819 = vmatpush1.bf16.msra.mxu0 0
        %5820 = vmatprep.subr.bf16.mxu0 0
        %5821 = vmatpush1.bf16.msra.mxu0 0
        %5822 = vmatprep.subr.bf16.mxu0 0
        %5823 = vmatpush1.bf16.msra.mxu0 0
        %5824 = vmatprep.subr.bf16.mxu0 0
        %5825 = vmatpush1.bf16.msra.mxu0 0
        %5826 = vmatprep.subr.bf16.mxu0 0
        %5827 = vmatpush1.bf16.msra.mxu0 0
        %5828 = vmatprep.subr.bf16.mxu0 0
        %5829 = vmatpush1.bf16.msra.mxu0 0
        %5830 = vmatprep.subr.bf16.mxu0 0
        %5831 = vmatpush1.bf16.msra.mxu0 0
        %5832 = vmatprep.subr.bf16.mxu0 0
        %5833 = vmatpush1.bf16.msra.mxu0 0
        %5834 = vmatprep.subr.bf16.mxu0 0
        %5835 = vmatpush1.bf16.msra.mxu0 0
        %5836 = vmatprep.subr.bf16.mxu0 0
        %5837 = vmatpush1.bf16.msra.mxu0 0
        %5838 = vmatprep.subr.bf16.mxu0 0
        %5839 = vmatpush1.bf16.msra.mxu0 0
        %5840 = vmatprep.subr.bf16.mxu0 0
        %5841 = vmatpush1.bf16.msra.mxu0 0
        %5842 = vmatprep.subr.bf16.mxu0 0
        %5843 = vmatpush1.bf16.msra.mxu0 0
        %5844 = vmatprep.subr.bf16.mxu0 0
        %5845 = vmatpush1.bf16.msra.mxu0 0
        %5846 = vmatprep.subr.bf16.mxu0 0
        %5847 = vmatpush1.bf16.msra.mxu0 0
        %5848 = vmatprep.mubr.bf16.mxu0 0
        %5849 = vmatmul.mubr.bf16.gmra.mrb[0].mxu0 %v5814
        %v5850 = vpop.f32.mrb[0].mxu0
        %v5851 = vadd.f32 0.0, %v5850
        %v5852 = vpop.f32.mrb[0].mxu0
        %v5853 = vpop.f32.mrb[0].mxu0
        %v5854 = vadd.f32 0.0, %v5853
        %v5855 = vpop.f32.mrb[0].mxu0
        %5856 = vdwg.mxu0
        %5858 = vrot.lane.b32.xlu0 %v2097, 96
        %v5859 = vpop.permute.xlu0 %5858
        %v5862 = vsel %vm2855, %v5136, 0
        %5864 = vmatprep.subr.bf16.mxu0 0
        %5865 = vmatpush1.bf16.msra.mxu0 %v5859
        %5866 = vmatprep.subr.bf16.mxu0 0
        %5867 = vmatpush1.bf16.msra.mxu0 0
        %5868 = vmatprep.subr.bf16.mxu0 0
        %5869 = vmatpush1.bf16.msra.mxu0 0
        %5870 = vmatprep.subr.bf16.mxu0 0
        %5871 = vmatpush1.bf16.msra.mxu0 0
        %5872 = vmatprep.subr.bf16.mxu0 0
        %5873 = vmatpush1.bf16.msra.mxu0 0
        %5874 = vmatprep.subr.bf16.mxu0 0
        %5875 = vmatpush1.bf16.msra.mxu0 0
        %5876 = vmatprep.subr.bf16.mxu0 0
        %5877 = vmatpush1.bf16.msra.mxu0 0
        %5878 = vmatprep.subr.bf16.mxu0 0
        %5879 = vmatpush1.bf16.msra.mxu0 0
        %5880 = vmatprep.subr.bf16.mxu0 0
        %5881 = vmatpush1.bf16.msra.mxu0 0
        %5882 = vmatprep.subr.bf16.mxu0 0
        %5883 = vmatpush1.bf16.msra.mxu0 0
        %5884 = vmatprep.subr.bf16.mxu0 0
        %5885 = vmatpush1.bf16.msra.mxu0 0
        %5886 = vmatprep.subr.bf16.mxu0 0
        %5887 = vmatpush1.bf16.msra.mxu0 0
        %5888 = vmatprep.subr.bf16.mxu0 0
        %5889 = vmatpush1.bf16.msra.mxu0 0
        %5890 = vmatprep.subr.bf16.mxu0 0
        %5891 = vmatpush1.bf16.msra.mxu0 0
        %5892 = vmatprep.subr.bf16.mxu0 0
        %5893 = vmatpush1.bf16.msra.mxu0 0
        %5894 = vmatprep.subr.bf16.mxu0 0
        %5895 = vmatpush1.bf16.msra.mxu0 0
        %5896 = vmatprep.mubr.bf16.mxu0 0
        %5897 = vmatmul.mubr.bf16.gmra.mrb[0].mxu0 %v5862
        %v5898 = vpop.f32.mrb[0].mxu0
        %v5899 = vadd.f32 0.0, %v5898
        %v5900 = vpop.f32.mrb[0].mxu0
        %v5901 = vpop.f32.mrb[0].mxu0
        %v5902 = vadd.f32 0.0, %v5901
        %v5903 = vpop.f32.mrb[0].mxu0
        %5904 = vdwg.mxu0
        %v5905 = vrcp.pop %v5027
        %v5906 = vrcp.pop %v5030
        %v5907 = vrcp.pop %v5033
        %v5908 = vrcp.pop %v5036
        %v5909 = vrcp.pop %v5039
        %v5910 = vrcp.pop %v5042
        %v5911 = vrcp.pop %v5045
        %v5912 = vrcp.pop %v5048
        %v5913 = vrcp.pop %v5051
        %v5914 = vrcp.pop %v5054
        %v5915 = vrcp.pop %v5057
        %v5916 = vrcp.pop %v5060
        %v5917 = vrcp.pop %v5063
        %v5918 = vrcp.pop %v5066
        %v5919 = vrcp.pop %v5069
        %v5920 = vrcp.pop %v5072
        %v5921 = vrcp.pop %v5075
        %v5922 = vrcp.pop %v5078
        %v5923 = vrcp.pop %v5081
        %v5924 = vrcp.pop %v5084
        %v5925 = vrcp.pop %v5087
        %v5926 = vrcp.pop %v5090
        %v5927 = vrcp.pop %v5093
        %v5928 = vrcp.pop %v5096
        %v5929 = vrcp.pop %v5099
        %v5930 = vrcp.pop %v5102
        %v5931 = vrcp.pop %v5105
        %v5932 = vrcp.pop %v5108
        %v5933 = vrcp.pop %v5111
        %v5934 = vrcp.pop %v5114
        %v5935 = vrcp.pop %v5117
        %v5936 = vrcp.pop %v5120
        %v5937 = vmul.f32 %v5179, %v5905
        %v5938 = vmul.f32 %v5182, %v5906
        %v5939 = vmul.f32 %v5227, %v5907
        %v5940 = vmul.f32 %v5230, %v5908
        %v5941 = vmul.f32 %v5275, %v5909
        %v5942 = vmul.f32 %v5278, %v5910
        %v5943 = vmul.f32 %v5323, %v5911
        %v5944 = vmul.f32 %v5326, %v5912
        %v5945 = vmul.f32 %v5371, %v5913
        %v5946 = vmul.f32 %v5374, %v5914
        %v5947 = vmul.f32 %v5419, %v5915
        %v5948 = vmul.f32 %v5422, %v5916
        %v5949 = vmul.f32 %v5467, %v5917
        %v5950 = vmul.f32 %v5470, %v5918
        %v5951 = vmul.f32 %v5515, %v5919
        %v5952 = vmul.f32 %v5518, %v5920
        %v5953 = vmul.f32 %v5563, %v5921
        %v5954 = vmul.f32 %v5566, %v5922
        %v5955 = vmul.f32 %v5611, %v5923
        %v5956 = vmul.f32 %v5614, %v5924
        %v5957 = vmul.f32 %v5659, %v5925
        %v5958 = vmul.f32 %v5662, %v5926
        %v5959 = vmul.f32 %v5707, %v5927
        %v5960 = vmul.f32 %v5710, %v5928
        %v5961 = vmul.f32 %v5755, %v5929
        %v5962 = vmul.f32 %v5758, %v5930
        %v5963 = vmul.f32 %v5803, %v5931
        %v5964 = vmul.f32 %v5806, %v5932
        %v5965 = vmul.f32 %v5851, %v5933
        %v5966 = vmul.f32 %v5854, %v5934
        %v5967 = vmul.f32 %v5899, %v5935
        %v5968 = vmul.f32 %v5902, %v5936
        %6001 = vrot.lane.b32.xlu0 %v1955, 96
        %v6002 = vpop.permute.xlu0 %6001
        %6003 = vrot.lane.b32.xlu0 %v1957, 96
        %v6004 = vpop.permute.xlu0 %6003
        %6005 = vrot.lane.b32.xlu0 %v1959, 96
        %v6006 = vpop.permute.xlu0 %6005
        %6007 = vrot.lane.b32.xlu0 %v1961, 96
        %v6008 = vpop.permute.xlu0 %6007
        %6009 = vrot.lane.b32.xlu0 %v1963, 96
        %v6010 = vpop.permute.xlu0 %6009
        %6011 = vrot.lane.b32.xlu0 %v1965, 96
        %v6012 = vpop.permute.xlu0 %6011
        %6013 = vrot.lane.b32.xlu0 %v1967, 96
        %v6014 = vpop.permute.xlu0 %6013
        %6015 = vrot.lane.b32.xlu0 %v1969, 96
        %v6016 = vpop.permute.xlu0 %6015
        %6017 = vrot.lane.b32.xlu0 %v1971, 96
        %v6018 = vpop.permute.xlu0 %6017
        %6019 = vrot.lane.b32.xlu0 %v1973, 96
        %v6020 = vpop.permute.xlu0 %6019
        %6021 = vrot.lane.b32.xlu0 %v1975, 96
        %v6022 = vpop.permute.xlu0 %6021
        %6023 = vrot.lane.b32.xlu0 %v1977, 96
        %v6024 = vpop.permute.xlu0 %6023
        %6025 = vrot.lane.b32.xlu0 %v1979, 96
        %v6026 = vpop.permute.xlu0 %6025
        %6027 = vrot.lane.b32.xlu0 %v1981, 96
        %v6028 = vpop.permute.xlu0 %6027
        %6029 = vrot.lane.b32.xlu0 %v1983, 96
        %v6030 = vpop.permute.xlu0 %6029
        %6031 = vrot.lane.b32.xlu0 %v1985, 96
        %v6032 = vpop.permute.xlu0 %6031
        %6033 = vrot.lane.b32.xlu0 %v1987, 96
        %v6034 = vpop.permute.xlu0 %6033
        %6035 = vrot.lane.b32.xlu0 %v1989, 96
        %v6036 = vpop.permute.xlu0 %6035
        %6037 = vrot.lane.b32.xlu0 %v1991, 96
        %v6038 = vpop.permute.xlu0 %6037
        %6039 = vrot.lane.b32.xlu0 %v1993, 96
        %v6040 = vpop.permute.xlu0 %6039
        %6041 = vrot.lane.b32.xlu0 %v1995, 96
        %v6042 = vpop.permute.xlu0 %6041
        %6043 = vrot.lane.b32.xlu0 %v1997, 96
        %v6044 = vpop.permute.xlu0 %6043
        %6045 = vrot.lane.b32.xlu0 %v1999, 96
        %v6046 = vpop.permute.xlu0 %6045
        %6047 = vrot.lane.b32.xlu0 %v2001, 96
        %v6048 = vpop.permute.xlu0 %6047
        %6049 = vrot.lane.b32.xlu0 %v2003, 96
        %v6050 = vpop.permute.xlu0 %6049
        %6051 = vrot.lane.b32.xlu0 %v2005, 96
        %v6052 = vpop.permute.xlu0 %6051
        %6053 = vrot.lane.b32.xlu0 %v2007, 96
        %v6054 = vpop.permute.xlu0 %6053
        %6055 = vrot.lane.b32.xlu0 %v2009, 96
        %v6056 = vpop.permute.xlu0 %6055
        %6057 = vrot.lane.b32.xlu0 %v2011, 96
        %v6058 = vpop.permute.xlu0 %6057
        %6059 = vrot.lane.b32.xlu0 %v2013, 96
        %v6060 = vpop.permute.xlu0 %6059
        %6061 = vrot.lane.b32.xlu0 %v2015, 96
        %v6062 = vpop.permute.xlu0 %6061
        %6063 = vrot.lane.b32.xlu0 %v2017, 96
        %v6064 = vpop.permute.xlu0 %6063
        %v6097 = vmul.f32 %v5937, %v6002
        %v6098 = vmul.f32 %v5938, %v6004
        %v6099 = vmul.f32 %v5939, %v6006
        %v6100 = vmul.f32 %v5940, %v6008
        %v6101 = vmul.f32 %v5941, %v6010
        %v6102 = vmul.f32 %v5942, %v6012
        %v6103 = vmul.f32 %v5943, %v6014
        %v6104 = vmul.f32 %v5944, %v6016
        %v6105 = vmul.f32 %v5945, %v6018
        %v6106 = vmul.f32 %v5946, %v6020
        %v6107 = vmul.f32 %v5947, %v6022
        %v6108 = vmul.f32 %v5948, %v6024
        %v6109 = vmul.f32 %v5949, %v6026
        %v6110 = vmul.f32 %v5950, %v6028
        %v6111 = vmul.f32 %v5951, %v6030
        %v6112 = vmul.f32 %v5952, %v6032
        %v6113 = vmul.f32 %v5953, %v6034
        %v6114 = vmul.f32 %v5954, %v6036
        %v6115 = vmul.f32 %v5955, %v6038
        %v6116 = vmul.f32 %v5956, %v6040
        %v6117 = vmul.f32 %v5957, %v6042
        %v6118 = vmul.f32 %v5958, %v6044
        %v6119 = vmul.f32 %v5959, %v6046
        %v6120 = vmul.f32 %v5960, %v6048
        %v6121 = vmul.f32 %v5961, %v6050
        %v6122 = vmul.f32 %v5962, %v6052
        %v6123 = vmul.f32 %v5963, %v6054
        %v6124 = vmul.f32 %v5964, %v6056
        %v6125 = vmul.f32 %v5965, %v6058
        %v6126 = vmul.f32 %v5966, %v6060
        %v6127 = vmul.f32 %v5967, %v6062
        %v6128 = vmul.f32 %v5968, %v6064
        %v6129 = vpack.c.bf16 %v6098, %v6097
        %v6130 = vpack.c.bf16 %v6100, %v6099
        %v6131 = vpack.c.bf16 %v6102, %v6101
        %v6132 = vpack.c.bf16 %v6104, %v6103
        %v6133 = vpack.c.bf16 %v6106, %v6105
        %v6134 = vpack.c.bf16 %v6108, %v6107
        %v6135 = vpack.c.bf16 %v6110, %v6109
        %v6136 = vpack.c.bf16 %v6112, %v6111
        %v6137 = vpack.c.bf16 %v6114, %v6113
        %v6138 = vpack.c.bf16 %v6116, %v6115
        %v6139 = vpack.c.bf16 %v6118, %v6117
        %v6140 = vpack.c.bf16 %v6120, %v6119
        %v6141 = vpack.c.bf16 %v6122, %v6121
        %v6142 = vpack.c.bf16 %v6124, %v6123
        %v6143 = vpack.c.bf16 %v6126, %v6125
        %v6144 = vpack.c.bf16 %v6128, %v6127
        %v6145 = vld [vmem:[%s9 + $0x10] sm:$0xf]
        %v6146 = vld [vmem:[%s9 + $0x14] sm:$0xf]
        %v6147 = vld [vmem:[%s9 + $0x18] sm:$0xf]
        %v6148 = vld [vmem:[%s9 + $0x1c] sm:$0xf]
        %v6153 = vunpack.c.l.b16 %v6145
        %v6154 = vunpack.c.l.b16 %v6146
        %v6155 = vunpack.c.l.b16 %v6147
        %v6156 = vunpack.c.l.b16 %v6148
        %v6157 = vpack.c.b16 %v6154, %v6153
        %v6158 = vpack.c.b16 %v6156, %v6155
        %v6162 = vsel %vm2102, %v6129, 0
        %v6165 = vsel %vm2102, %v6130, 0
        %v6168 = vsel %vm2102, %v6131, 0
        %v6171 = vsel %vm2102, %v6132, 0
        %v6174 = vsel %vm2102, %v6133, 0
        %v6177 = vsel %vm2102, %v6134, 0
        %v6180 = vsel %vm2102, %v6135, 0
        %v6183 = vsel %vm2102, %v6136, 0
        %v6186 = vsel %vm2102, %v6137, 0
        %v6189 = vsel %vm2102, %v6138, 0
        %v6192 = vsel %vm2102, %v6139, 0
        %v6195 = vsel %vm2102, %v6140, 0
        %v6198 = vsel %vm2102, %v6141, 0
        %v6201 = vsel %vm2102, %v6142, 0
        %v6204 = vsel %vm2102, %v6143, 0
        %v6207 = vsel %vm2102, %v6144, 0
        %6209 = vmatprep.subr.bf16.mxu0 0
        %6210 = vmatpush1.bf16.msra.mxu0 %v6157
        %6211 = vmatprep.subr.bf16.mxu0 0
        %6212 = vmatpush1.bf16.msra.mxu0 %v6158
        %6213 = vmatprep.subr.bf16.mxu0 0
        %6214 = vmatpush1.bf16.msra.mxu0 0
        %6215 = vmatprep.subr.bf16.mxu0 0
        %6216 = vmatpush1.bf16.msra.mxu0 0
        %6217 = vmatprep.subr.bf16.mxu0 0
        %6218 = vmatpush1.bf16.msra.mxu0 0
        %6219 = vmatprep.subr.bf16.mxu0 0
        %6220 = vmatpush1.bf16.msra.mxu0 0
        %6221 = vmatprep.subr.bf16.mxu0 0
        %6222 = vmatpush1.bf16.msra.mxu0 0
        %6223 = vmatprep.subr.bf16.mxu0 0
        %6224 = vmatpush1.bf16.msra.mxu0 0
        %6225 = vmatprep.subr.bf16.mxu0 0
        %6226 = vmatpush1.bf16.msra.mxu0 0
        %6227 = vmatprep.subr.bf16.mxu0 0
        %6228 = vmatpush1.bf16.msra.mxu0 0
        %6229 = vmatprep.subr.bf16.mxu0 0
        %6230 = vmatpush1.bf16.msra.mxu0 0
        %6231 = vmatprep.subr.bf16.mxu0 0
        %6232 = vmatpush1.bf16.msra.mxu0 0
        %6233 = vmatprep.subr.bf16.mxu0 0
        %6234 = vmatpush1.bf16.msra.mxu0 0
        %6235 = vmatprep.subr.bf16.mxu0 0
        %6236 = vmatpush1.bf16.msra.mxu0 0
        %6237 = vmatprep.subr.bf16.mxu0 0
        %6238 = vmatpush1.bf16.msra.mxu0 0
        %6239 = vmatprep.subr.bf16.mxu0 0
        %6240 = vmatpush1.bf16.msra.mxu0 0
        %6241 = vmatprep.mubr.bf16.mxu0 0
        %6242 = vmatmul.mubr.bf16.gmra.mrb[0].mxu0 %v6162
        %v6243 = vpop.f32.mrb[0].mxu0
        %v6244 = vadd.f32 0.0, %v6243
        %v6245 = vpop.f32.mrb[0].mxu0
        %v6246 = vpop.f32.mrb[0].mxu0
        %v6247 = vadd.f32 0.0, %v6246
        %v6248 = vpop.f32.mrb[0].mxu0
        %6249 = vmatprep.mubr.bf16.mxu0 0
        %6250 = vmatmul.mubr.bf16.gmra.mrb[0].mxu0 %v6165
        %v6251 = vpop.f32.mrb[0].mxu0
        %v6252 = vadd.f32 0.0, %v6251
        %v6253 = vpop.f32.mrb[0].mxu0
        %v6254 = vpop.f32.mrb[0].mxu0
        %v6255 = vadd.f32 0.0, %v6254
        %v6256 = vpop.f32.mrb[0].mxu0
        %6257 = vmatprep.mubr.bf16.mxu0 0
        %6258 = vmatmul.mubr.bf16.gmra.mrb[0].mxu0 %v6168
        %v6259 = vpop.f32.mrb[0].mxu0
        %v6260 = vadd.f32 0.0, %v6259
        %v6261 = vpop.f32.mrb[0].mxu0
        %v6262 = vpop.f32.mrb[0].mxu0
        %v6263 = vadd.f32 0.0, %v6262
        %v6264 = vpop.f32.mrb[0].mxu0
        %6265 = vmatprep.mubr.bf16.mxu0 0
        %6266 = vmatmul.mubr.bf16.gmra.mrb[0].mxu0 %v6171
        %v6267 = vpop.f32.mrb[0].mxu0
        %v6268 = vadd.f32 0.0, %v6267
        %v6269 = vpop.f32.mrb[0].mxu0
        %v6270 = vpop.f32.mrb[0].mxu0
        %v6271 = vadd.f32 0.0, %v6270
        %v6272 = vpop.f32.mrb[0].mxu0
        %6273 = vmatprep.mubr.bf16.mxu0 0
        %6274 = vmatmul.mubr.bf16.gmra.mrb[0].mxu0 %v6174
        %v6275 = vpop.f32.mrb[0].mxu0
        %v6276 = vadd.f32 0.0, %v6275
        %v6277 = vpop.f32.mrb[0].mxu0
        %v6278 = vpop.f32.mrb[0].mxu0
        %v6279 = vadd.f32 0.0, %v6278
        %v6280 = vpop.f32.mrb[0].mxu0
        %6281 = vmatprep.mubr.bf16.mxu0 0
        %6282 = vmatmul.mubr.bf16.gmra.mrb[0].mxu0 %v6177
        %v6283 = vpop.f32.mrb[0].mxu0
        %v6284 = vadd.f32 0.0, %v6283
        %v6285 = vpop.f32.mrb[0].mxu0
        %v6286 = vpop.f32.mrb[0].mxu0
        %v6287 = vadd.f32 0.0, %v6286
        %v6288 = vpop.f32.mrb[0].mxu0
        %6289 = vmatprep.mubr.bf16.mxu0 0
        %6290 = vmatmul.mubr.bf16.gmra.mrb[0].mxu0 %v6180
        %v6291 = vpop.f32.mrb[0].mxu0
        %v6292 = vadd.f32 0.0, %v6291
        %v6293 = vpop.f32.mrb[0].mxu0
        %v6294 = vpop.f32.mrb[0].mxu0
        %v6295 = vadd.f32 0.0, %v6294
        %v6296 = vpop.f32.mrb[0].mxu0
        %6297 = vmatprep.mubr.bf16.mxu0 0
        %6298 = vmatmul.mubr.bf16.gmra.mrb[0].mxu0 %v6183
        %v6299 = vpop.f32.mrb[0].mxu0
        %v6300 = vadd.f32 0.0, %v6299
        %v6301 = vpop.f32.mrb[0].mxu0
        %v6302 = vpop.f32.mrb[0].mxu0
        %v6303 = vadd.f32 0.0, %v6302
        %v6304 = vpop.f32.mrb[0].mxu0
        %6305 = vmatprep.mubr.bf16.mxu0 0
        %6306 = vmatmul.mubr.bf16.gmra.mrb[0].mxu0 %v6186
        %v6307 = vpop.f32.mrb[0].mxu0
        %v6308 = vadd.f32 0.0, %v6307
        %v6309 = vpop.f32.mrb[0].mxu0
        %v6310 = vpop.f32.mrb[0].mxu0
        %v6311 = vadd.f32 0.0, %v6310
        %v6312 = vpop.f32.mrb[0].mxu0
        %6313 = vmatprep.mubr.bf16.mxu0 0
        %6314 = vmatmul.mubr.bf16.gmra.mrb[0].mxu0 %v6189
        %v6315 = vpop.f32.mrb[0].mxu0
        %v6316 = vadd.f32 0.0, %v6315
        %v6317 = vpop.f32.mrb[0].mxu0
        %v6318 = vpop.f32.mrb[0].mxu0
        %v6319 = vadd.f32 0.0, %v6318
        %v6320 = vpop.f32.mrb[0].mxu0
        %6321 = vmatprep.mubr.bf16.mxu0 0
        %6322 = vmatmul.mubr.bf16.gmra.mrb[0].mxu0 %v6192
        %v6323 = vpop.f32.mrb[0].mxu0
        %v6324 = vadd.f32 0.0, %v6323
        %v6325 = vpop.f32.mrb[0].mxu0
        %v6326 = vpop.f32.mrb[0].mxu0
        %v6327 = vadd.f32 0.0, %v6326
        %v6328 = vpop.f32.mrb[0].mxu0
        %6329 = vmatprep.mubr.bf16.mxu0 0
        %6330 = vmatmul.mubr.bf16.gmra.mrb[0].mxu0 %v6195
        %v6331 = vpop.f32.mrb[0].mxu0
        %v6332 = vadd.f32 0.0, %v6331
        %v6333 = vpop.f32.mrb[0].mxu0
        %v6334 = vpop.f32.mrb[0].mxu0
        %v6335 = vadd.f32 0.0, %v6334
        %v6336 = vpop.f32.mrb[0].mxu0
        %6337 = vmatprep.mubr.bf16.mxu0 0
        %6338 = vmatmul.mubr.bf16.gmra.mrb[0].mxu0 %v6198
        %v6339 = vpop.f32.mrb[0].mxu0
        %v6340 = vadd.f32 0.0, %v6339
        %v6341 = vpop.f32.mrb[0].mxu0
        %v6342 = vpop.f32.mrb[0].mxu0
        %v6343 = vadd.f32 0.0, %v6342
        %v6344 = vpop.f32.mrb[0].mxu0
        %6345 = vmatprep.mubr.bf16.mxu0 0
        %6346 = vmatmul.mubr.bf16.gmra.mrb[0].mxu0 %v6201
        %v6347 = vpop.f32.mrb[0].mxu0
        %v6348 = vadd.f32 0.0, %v6347
        %v6349 = vpop.f32.mrb[0].mxu0
        %v6350 = vpop.f32.mrb[0].mxu0
        %v6351 = vadd.f32 0.0, %v6350
        %v6352 = vpop.f32.mrb[0].mxu0
        %6353 = vmatprep.mubr.bf16.mxu0 0
        %6354 = vmatmul.mubr.bf16.gmra.mrb[0].mxu0 %v6204
        %v6355 = vpop.f32.mrb[0].mxu0
        %v6356 = vadd.f32 0.0, %v6355
        %v6357 = vpop.f32.mrb[0].mxu0
        %v6358 = vpop.f32.mrb[0].mxu0
        %v6359 = vadd.f32 0.0, %v6358
        %v6360 = vpop.f32.mrb[0].mxu0
        %6361 = vmatprep.mubr.bf16.mxu0 0
        %6362 = vmatmul.mubr.bf16.gmra.mrb[0].mxu0 %v6207
        %v6363 = vpop.f32.mrb[0].mxu0
        %v6364 = vadd.f32 0.0, %v6363
        %v6365 = vpop.f32.mrb[0].mxu0
        %v6366 = vpop.f32.mrb[0].mxu0
        %v6367 = vadd.f32 0.0, %v6366
        %v6368 = vpop.f32.mrb[0].mxu0
        %6369 = vdwg.mxu0
        %v6374 = vunpack.c.l.b16 %v3976
        %v6375 = vunpack.c.l.b16 %v3977
        %v6376 = vunpack.c.l.b16 %v3978
        %v6377 = vunpack.c.l.b16 %v3979
        %v6378 = vpack.c.b16 %v6375, %v6374
        %v6379 = vpack.c.b16 %v6377, %v6376
        %v6383 = vsel %vm2102, %v3960, 0
        %v6386 = vsel %vm2102, %v3961, 0
        %v6389 = vsel %vm2102, %v3962, 0
        %v6392 = vsel %vm2102, %v3963, 0
        %v6395 = vsel %vm2102, %v3964, 0
        %v6398 = vsel %vm2102, %v3965, 0
        %v6401 = vsel %vm2102, %v3966, 0
        %v6404 = vsel %vm2102, %v3967, 0
        %v6407 = vsel %vm2102, %v3968, 0
        %v6410 = vsel %vm2102, %v3969, 0
        %v6413 = vsel %vm2102, %v3970, 0
        %v6416 = vsel %vm2102, %v3971, 0
        %v6419 = vsel %vm2102, %v3972, 0
        %v6422 = vsel %vm2102, %v3973, 0
        %v6425 = vsel %vm2102, %v3974, 0
        %v6428 = vsel %vm2102, %v3975, 0
        %6430 = vmatprep.subr.bf16.mxu0 0
        %6431 = vmatpush1.bf16.msra.mxu0 %v6378
        %6432 = vmatprep.subr.bf16.mxu0 0
        %6433 = vmatpush1.bf16.msra.mxu0 %v6379
        %6434 = vmatprep.subr.bf16.mxu0 0
        %6435 = vmatpush1.bf16.msra.mxu0 0
        %6436 = vmatprep.subr.bf16.mxu0 0
        %6437 = vmatpush1.bf16.msra.mxu0 0
        %6438 = vmatprep.subr.bf16.mxu0 0
        %6439 = vmatpush1.bf16.msra.mxu0 0
        %6440 = vmatprep.subr.bf16.mxu0 0
        %6441 = vmatpush1.bf16.msra.mxu0 0
        %6442 = vmatprep.subr.bf16.mxu0 0
        %6443 = vmatpush1.bf16.msra.mxu0 0
        %6444 = vmatprep.subr.bf16.mxu0 0
        %6445 = vmatpush1.bf16.msra.mxu0 0
        %6446 = vmatprep.subr.bf16.mxu0 0
        %6447 = vmatpush1.bf16.msra.mxu0 0
        %6448 = vmatprep.subr.bf16.mxu0 0
        %6449 = vmatpush1.bf16.msra.mxu0 0
        %6450 = vmatprep.subr.bf16.mxu0 0
        %6451 = vmatpush1.bf16.msra.mxu0 0
        %6452 = vmatprep.subr.bf16.mxu0 0
        %6453 = vmatpush1.bf16.msra.mxu0 0
        %6454 = vmatprep.subr.bf16.mxu0 0
        %6455 = vmatpush1.bf16.msra.mxu0 0
        %6456 = vmatprep.subr.bf16.mxu0 0
        %6457 = vmatpush1.bf16.msra.mxu0 0
        %6458 = vmatprep.subr.bf16.mxu0 0
        %6459 = vmatpush1.bf16.msra.mxu0 0
        %6460 = vmatprep.subr.bf16.mxu0 0
        %6461 = vmatpush1.bf16.msra.mxu0 0
        %6462 = vmatprep.mubr.bf16.mxu0 0
        %6463 = vmatmul.mubr.bf16.gmra.mrb[0].mxu0 %v6383
        %v6464 = vpop.f32.mrb[0].mxu0
        %v6465 = vadd.f32 %v6244, %v6464
        %v6466 = vpop.f32.mrb[0].mxu0
        %v6467 = vpop.f32.mrb[0].mxu0
        %v6468 = vadd.f32 %v6247, %v6467
        %v6469 = vpop.f32.mrb[0].mxu0
        %6470 = vmatprep.mubr.bf16.mxu0 0
        %6471 = vmatmul.mubr.bf16.gmra.mrb[0].mxu0 %v6386
        %v6472 = vpop.f32.mrb[0].mxu0
        %v6473 = vadd.f32 %v6252, %v6472
        %v6474 = vpop.f32.mrb[0].mxu0
        %v6475 = vpop.f32.mrb[0].mxu0
        %v6476 = vadd.f32 %v6255, %v6475
        %v6477 = vpop.f32.mrb[0].mxu0
        %6478 = vmatprep.mubr.bf16.mxu0 0
        %6479 = vmatmul.mubr.bf16.gmra.mrb[0].mxu0 %v6389
        %v6480 = vpop.f32.mrb[0].mxu0
        %v6481 = vadd.f32 %v6260, %v6480
        %v6482 = vpop.f32.mrb[0].mxu0
        %v6483 = vpop.f32.mrb[0].mxu0
        %v6484 = vadd.f32 %v6263, %v6483
        %v6485 = vpop.f32.mrb[0].mxu0
        %6486 = vmatprep.mubr.bf16.mxu0 0
        %6487 = vmatmul.mubr.bf16.gmra.mrb[0].mxu0 %v6392
        %v6488 = vpop.f32.mrb[0].mxu0
        %v6489 = vadd.f32 %v6268, %v6488
        %v6490 = vpop.f32.mrb[0].mxu0
        %v6491 = vpop.f32.mrb[0].mxu0
        %v6492 = vadd.f32 %v6271, %v6491
        %v6493 = vpop.f32.mrb[0].mxu0
        %6494 = vmatprep.mubr.bf16.mxu0 0
        %6495 = vmatmul.mubr.bf16.gmra.mrb[0].mxu0 %v6395
        %v6496 = vpop.f32.mrb[0].mxu0
        %v6497 = vadd.f32 %v6276, %v6496
        %v6498 = vpop.f32.mrb[0].mxu0
        %v6499 = vpop.f32.mrb[0].mxu0
        %v6500 = vadd.f32 %v6279, %v6499
        %v6501 = vpop.f32.mrb[0].mxu0
        %6502 = vmatprep.mubr.bf16.mxu0 0
        %6503 = vmatmul.mubr.bf16.gmra.mrb[0].mxu0 %v6398
        %v6504 = vpop.f32.mrb[0].mxu0
        %v6505 = vadd.f32 %v6284, %v6504
        %v6506 = vpop.f32.mrb[0].mxu0
        %v6507 = vpop.f32.mrb[0].mxu0
        %v6508 = vadd.f32 %v6287, %v6507
        %v6509 = vpop.f32.mrb[0].mxu0
        %6510 = vmatprep.mubr.bf16.mxu0 0
        %6511 = vmatmul.mubr.bf16.gmra.mrb[0].mxu0 %v6401
        %v6512 = vpop.f32.mrb[0].mxu0
        %v6513 = vadd.f32 %v6292, %v6512
        %v6514 = vpop.f32.mrb[0].mxu0
        %v6515 = vpop.f32.mrb[0].mxu0
        %v6516 = vadd.f32 %v6295, %v6515
        %v6517 = vpop.f32.mrb[0].mxu0
        %6518 = vmatprep.mubr.bf16.mxu0 0
        %6519 = vmatmul.mubr.bf16.gmra.mrb[0].mxu0 %v6404
        %v6520 = vpop.f32.mrb[0].mxu0
        %v6521 = vadd.f32 %v6300, %v6520
        %v6522 = vpop.f32.mrb[0].mxu0
        %v6523 = vpop.f32.mrb[0].mxu0
        %v6524 = vadd.f32 %v6303, %v6523
        %v6525 = vpop.f32.mrb[0].mxu0
        %6526 = vmatprep.mubr.bf16.mxu0 0
        %6527 = vmatmul.mubr.bf16.gmra.mrb[0].mxu0 %v6407
        %v6528 = vpop.f32.mrb[0].mxu0
        %v6529 = vadd.f32 %v6308, %v6528
        %v6530 = vpop.f32.mrb[0].mxu0
        %v6531 = vpop.f32.mrb[0].mxu0
        %v6532 = vadd.f32 %v6311, %v6531
        %v6533 = vpop.f32.mrb[0].mxu0
        %6534 = vmatprep.mubr.bf16.mxu0 0
        %6535 = vmatmul.mubr.bf16.gmra.mrb[0].mxu0 %v6410
        %v6536 = vpop.f32.mrb[0].mxu0
        %v6537 = vadd.f32 %v6316, %v6536
        %v6538 = vpop.f32.mrb[0].mxu0
        %v6539 = vpop.f32.mrb[0].mxu0
        %v6540 = vadd.f32 %v6319, %v6539
        %v6541 = vpop.f32.mrb[0].mxu0
        %6542 = vmatprep.mubr.bf16.mxu0 0
        %6543 = vmatmul.mubr.bf16.gmra.mrb[0].mxu0 %v6413
        %v6544 = vpop.f32.mrb[0].mxu0
        %v6545 = vadd.f32 %v6324, %v6544
        %v6546 = vpop.f32.mrb[0].mxu0
        %v6547 = vpop.f32.mrb[0].mxu0
        %v6548 = vadd.f32 %v6327, %v6547
        %v6549 = vpop.f32.mrb[0].mxu0
        %6550 = vmatprep.mubr.bf16.mxu0 0
        %6551 = vmatmul.mubr.bf16.gmra.mrb[0].mxu0 %v6416
        %v6552 = vpop.f32.mrb[0].mxu0
        %v6553 = vadd.f32 %v6332, %v6552
        %v6554 = vpop.f32.mrb[0].mxu0
        %v6555 = vpop.f32.mrb[0].mxu0
        %v6556 = vadd.f32 %v6335, %v6555
        %v6557 = vpop.f32.mrb[0].mxu0
        %6558 = vmatprep.mubr.bf16.mxu0 0
        %6559 = vmatmul.mubr.bf16.gmra.mrb[0].mxu0 %v6419
        %v6560 = vpop.f32.mrb[0].mxu0
        %v6561 = vadd.f32 %v6340, %v6560
        %v6562 = vpop.f32.mrb[0].mxu0
        %v6563 = vpop.f32.mrb[0].mxu0
        %v6564 = vadd.f32 %v6343, %v6563
        %v6565 = vpop.f32.mrb[0].mxu0
        %6566 = vmatprep.mubr.bf16.mxu0 0
        %6567 = vmatmul.mubr.bf16.gmra.mrb[0].mxu0 %v6422
        %v6568 = vpop.f32.mrb[0].mxu0
        %v6569 = vadd.f32 %v6348, %v6568
        %v6570 = vpop.f32.mrb[0].mxu0
        %v6571 = vpop.f32.mrb[0].mxu0
        %v6572 = vadd.f32 %v6351, %v6571
        %v6573 = vpop.f32.mrb[0].mxu0
        %6574 = vmatprep.mubr.bf16.mxu0 0
        %6575 = vmatmul.mubr.bf16.gmra.mrb[0].mxu0 %v6425
        %v6576 = vpop.f32.mrb[0].mxu0
        %v6577 = vadd.f32 %v6356, %v6576
        %v6578 = vpop.f32.mrb[0].mxu0
        %v6579 = vpop.f32.mrb[0].mxu0
        %v6580 = vadd.f32 %v6359, %v6579
        %v6581 = vpop.f32.mrb[0].mxu0
        %6582 = vmatprep.mubr.bf16.mxu0 0
        %6583 = vmatmul.mubr.bf16.gmra.mrb[0].mxu0 %v6428
        %v6584 = vpop.f32.mrb[0].mxu0
        %v6585 = vadd.f32 %v6364, %v6584
        %v6586 = vpop.f32.mrb[0].mxu0
        %v6587 = vpop.f32.mrb[0].mxu0
        %v6588 = vadd.f32 %v6367, %v6587
        %v6589 = vpop.f32.mrb[0].mxu0
        %6590 = vdwg.mxu0
        %s6591 = scalar_lea.vmem %s437, 16
        %v6592 = vld [vmem:[%s6591] sm:$0xf]
        %v6593 = vld [vmem:[%s6591 + $0x4] sm:$0xf]
        %v6594 = vunpack.c.l.bf16 %v6592
        %v6595 = vunpack.c.l.bf16 %v6593
        %6596 = vrot.lane.b32.xlu0 %v2050, 64
        %v6597 = vpop.permute.xlu0 %6596
        %6598 = vrot.lane.b32.xlu0 %v2066, 64
        %v6599 = vpop.permute.xlu0 %6598
        %v6601 = vsel %vm2102, %v6597, 0
        %v6604 = vsel %vm2102, %v6599, 0
        %6606 = vmatprep.subr.bf16.mxu0 0
        %6607 = vmatpush1.bf16.xpose.msra.mxu0 %v6604
        %6608 = vmatprep.subr.bf16.mxu0 0
        %6609 = vmatpush1.bf16.xpose.msra.mxu0 0
        %6610 = vmatprep.subr.bf16.mxu0 0
        %6611 = vmatpush1.bf16.xpose.msra.mxu0 0
        %6612 = vmatprep.subr.bf16.mxu0 0
        %6613 = vmatpush1.bf16.xpose.msra.mxu0 0
        %6614 = vmatprep.subr.bf16.mxu0 0
        %6615 = vmatpush1.bf16.xpose.msra.mxu0 0
        %6616 = vmatprep.subr.bf16.mxu0 0
        %6617 = vmatpush1.bf16.xpose.msra.mxu0 0
        %6618 = vmatprep.subr.bf16.mxu0 0
        %6619 = vmatpush1.bf16.xpose.msra.mxu0 0
        %6620 = vmatprep.subr.bf16.mxu0 0
        %6621 = vmatpush1.bf16.xpose.msra.mxu0 0
        %6622 = vmatprep.subr.bf16.mxu0 0
        %6623 = vmatpush1.bf16.xpose.msra.mxu0 0
        %6624 = vmatprep.subr.bf16.mxu0 0
        %6625 = vmatpush1.bf16.xpose.msra.mxu0 0
        %6626 = vmatprep.subr.bf16.mxu0 0
        %6627 = vmatpush1.bf16.xpose.msra.mxu0 0
        %6628 = vmatprep.subr.bf16.mxu0 0
        %6629 = vmatpush1.bf16.xpose.msra.mxu0 0
        %6630 = vmatprep.subr.bf16.mxu0 0
        %6631 = vmatpush1.bf16.xpose.msra.mxu0 0
        %6632 = vmatprep.subr.bf16.mxu0 0
        %6633 = vmatpush1.bf16.xpose.msra.mxu0 0
        %6634 = vmatprep.subr.bf16.mxu0 0
        %6635 = vmatpush1.bf16.xpose.msra.mxu0 0
        %6636 = vmatprep.subr.bf16.mxu0 0
        %6637 = vmatpush1.bf16.xpose.msra.mxu0 0
        %6638 = vmatprep.mubr.bf16.mxu0 0
        %6639 = vmatmul.mubr.bf16.gmra.mrb[0].mxu0 %v6601
        %v6640 = vpop.f32.mrb[0].mxu0
        %v6641 = vadd.f32 %v6594, %v6640
        %v6642 = vpop.f32.mrb[0].mxu0
        %v6643 = vpop.f32.mrb[0].mxu0
        %v6644 = vadd.f32 %v6595, %v6643
        %v6645 = vpop.f32.mrb[0].mxu0
        %6646 = vdwg.mxu0
        %6647 = vrot.lane.b32.xlu0 %v2051, 64
        %v6648 = vpop.permute.xlu0 %6647
        %6649 = vrot.lane.b32.xlu0 %v2067, 64
        %v6650 = vpop.permute.xlu0 %6649
        %v6652 = vsel %vm2102, %v6648, 0
        %v6655 = vsel %vm2102, %v6650, 0
        %6657 = vmatprep.subr.bf16.mxu0 0
        %6658 = vmatpush1.bf16.xpose.msra.mxu0 %v6655
        %6659 = vmatprep.subr.bf16.mxu0 0
        %6660 = vmatpush1.bf16.xpose.msra.mxu0 0
        %6661 = vmatprep.subr.bf16.mxu0 0
        %6662 = vmatpush1.bf16.xpose.msra.mxu0 0
        %6663 = vmatprep.subr.bf16.mxu0 0
        %6664 = vmatpush1.bf16.xpose.msra.mxu0 0
        %6665 = vmatprep.subr.bf16.mxu0 0
        %6666 = vmatpush1.bf16.xpose.msra.mxu0 0
        %6667 = vmatprep.subr.bf16.mxu0 0
        %6668 = vmatpush1.bf16.xpose.msra.mxu0 0
        %6669 = vmatprep.subr.bf16.mxu0 0
        %6670 = vmatpush1.bf16.xpose.msra.mxu0 0
        %6671 = vmatprep.subr.bf16.mxu0 0
        %6672 = vmatpush1.bf16.xpose.msra.mxu0 0
        %6673 = vmatprep.subr.bf16.mxu0 0
        %6674 = vmatpush1.bf16.xpose.msra.mxu0 0
        %6675 = vmatprep.subr.bf16.mxu0 0
        %6676 = vmatpush1.bf16.xpose.msra.mxu0 0
        %6677 = vmatprep.subr.bf16.mxu0 0
        %6678 = vmatpush1.bf16.xpose.msra.mxu0 0
        %6679 = vmatprep.subr.bf16.mxu0 0
        %6680 = vmatpush1.bf16.xpose.msra.mxu0 0
        %6681 = vmatprep.subr.bf16.mxu0 0
        %6682 = vmatpush1.bf16.xpose.msra.mxu0 0
        %6683 = vmatprep.subr.bf16.mxu0 0
        %6684 = vmatpush1.bf16.xpose.msra.mxu0 0
        %6685 = vmatprep.subr.bf16.mxu0 0
        %6686 = vmatpush1.bf16.xpose.msra.mxu0 0
        %6687 = vmatprep.subr.bf16.mxu0 0
        %6688 = vmatpush1.bf16.xpose.msra.mxu0 0
        %6689 = vmatprep.mubr.bf16.mxu0 0
        %6690 = vmatmul.mubr.bf16.gmra.mrb[0].mxu0 %v6652
        %v6691 = vpop.f32.mrb[0].mxu0
        %v6692 = vadd.f32 %v6594, %v6691
        %v6693 = vpop.f32.mrb[0].mxu0
        %v6694 = vpop.f32.mrb[0].mxu0
        %v6695 = vadd.f32 %v6595, %v6694
        %v6696 = vpop.f32.mrb[0].mxu0
        %6697 = vdwg.mxu0
        %6698 = vrot.lane.b32.xlu0 %v2052, 64
        %v6699 = vpop.permute.xlu0 %6698
        %6700 = vrot.lane.b32.xlu0 %v2068, 64
        %v6701 = vpop.permute.xlu0 %6700
        %v6703 = vsel %vm2102, %v6699, 0
        %v6706 = vsel %vm2102, %v6701, 0
        %6708 = vmatprep.subr.bf16.mxu0 0
        %6709 = vmatpush1.bf16.xpose.msra.mxu0 %v6706
        %6710 = vmatprep.subr.bf16.mxu0 0
        %6711 = vmatpush1.bf16.xpose.msra.mxu0 0
        %6712 = vmatprep.subr.bf16.mxu0 0
        %6713 = vmatpush1.bf16.xpose.msra.mxu0 0
        %6714 = vmatprep.subr.bf16.mxu0 0
        %6715 = vmatpush1.bf16.xpose.msra.mxu0 0
        %6716 = vmatprep.subr.bf16.mxu0 0
        %6717 = vmatpush1.bf16.xpose.msra.mxu0 0
        %6718 = vmatprep.subr.bf16.mxu0 0
        %6719 = vmatpush1.bf16.xpose.msra.mxu0 0
        %6720 = vmatprep.subr.bf16.mxu0 0
        %6721 = vmatpush1.bf16.xpose.msra.mxu0 0
        %6722 = vmatprep.subr.bf16.mxu0 0
        %6723 = vmatpush1.bf16.xpose.msra.mxu0 0
        %6724 = vmatprep.subr.bf16.mxu0 0
        %6725 = vmatpush1.bf16.xpose.msra.mxu0 0
        %6726 = vmatprep.subr.bf16.mxu0 0
        %6727 = vmatpush1.bf16.xpose.msra.mxu0 0
        %6728 = vmatprep.subr.bf16.mxu0 0
        %6729 = vmatpush1.bf16.xpose.msra.mxu0 0
        %6730 = vmatprep.subr.bf16.mxu0 0
        %6731 = vmatpush1.bf16.xpose.msra.mxu0 0
        %6732 = vmatprep.subr.bf16.mxu0 0
        %6733 = vmatpush1.bf16.xpose.msra.mxu0 0
        %6734 = vmatprep.subr.bf16.mxu0 0
        %6735 = vmatpush1.bf16.xpose.msra.mxu0 0
        %6736 = vmatprep.subr.bf16.mxu0 0
        %6737 = vmatpush1.bf16.xpose.msra.mxu0 0
        %6738 = vmatprep.subr.bf16.mxu0 0
        %6739 = vmatpush1.bf16.xpose.msra.mxu0 0
        %6740 = vmatprep.mubr.bf16.mxu0 0
        %6741 = vmatmul.mubr.bf16.gmra.mrb[0].mxu0 %v6703
        %v6742 = vpop.f32.mrb[0].mxu0
        %v6743 = vadd.f32 %v6594, %v6742
        %v6744 = vpop.f32.mrb[0].mxu0
        %v6745 = vpop.f32.mrb[0].mxu0
        %v6746 = vadd.f32 %v6595, %v6745
        %v6747 = vpop.f32.mrb[0].mxu0
        %6748 = vdwg.mxu0
        %6749 = vrot.lane.b32.xlu0 %v2053, 64
        %v6750 = vpop.permute.xlu0 %6749
        %6751 = vrot.lane.b32.xlu0 %v2069, 64
        %v6752 = vpop.permute.xlu0 %6751
        %v6754 = vsel %vm2102, %v6750, 0
        %v6757 = vsel %vm2102, %v6752, 0
        %6759 = vmatprep.subr.bf16.mxu0 0
        %6760 = vmatpush1.bf16.xpose.msra.mxu0 %v6757
        %6761 = vmatprep.subr.bf16.mxu0 0
        %6762 = vmatpush1.bf16.xpose.msra.mxu0 0
        %6763 = vmatprep.subr.bf16.mxu0 0
        %6764 = vmatpush1.bf16.xpose.msra.mxu0 0
        %6765 = vmatprep.subr.bf16.mxu0 0
        %6766 = vmatpush1.bf16.xpose.msra.mxu0 0
        %6767 = vmatprep.subr.bf16.mxu0 0
        %6768 = vmatpush1.bf16.xpose.msra.mxu0 0
        %6769 = vmatprep.subr.bf16.mxu0 0
        %6770 = vmatpush1.bf16.xpose.msra.mxu0 0
        %6771 = vmatprep.subr.bf16.mxu0 0
        %6772 = vmatpush1.bf16.xpose.msra.mxu0 0
        %6773 = vmatprep.subr.bf16.mxu0 0
        %6774 = vmatpush1.bf16.xpose.msra.mxu0 0
        %6775 = vmatprep.subr.bf16.mxu0 0
        %6776 = vmatpush1.bf16.xpose.msra.mxu0 0
        %6777 = vmatprep.subr.bf16.mxu0 0
        %6778 = vmatpush1.bf16.xpose.msra.mxu0 0
        %6779 = vmatprep.subr.bf16.mxu0 0
        %6780 = vmatpush1.bf16.xpose.msra.mxu0 0
        %6781 = vmatprep.subr.bf16.mxu0 0
        %6782 = vmatpush1.bf16.xpose.msra.mxu0 0
        %6783 = vmatprep.subr.bf16.mxu0 0
        %6784 = vmatpush1.bf16.xpose.msra.mxu0 0
        %6785 = vmatprep.subr.bf16.mxu0 0
        %6786 = vmatpush1.bf16.xpose.msra.mxu0 0
        %6787 = vmatprep.subr.bf16.mxu0 0
        %6788 = vmatpush1.bf16.xpose.msra.mxu0 0
        %6789 = vmatprep.subr.bf16.mxu0 0
        %6790 = vmatpush1.bf16.xpose.msra.mxu0 0
        %6791 = vmatprep.mubr.bf16.mxu0 0
        %6792 = vmatmul.mubr.bf16.gmra.mrb[0].mxu0 %v6754
        %v6793 = vpop.f32.mrb[0].mxu0
        %v6794 = vadd.f32 %v6594, %v6793
        %v6795 = vpop.f32.mrb[0].mxu0
        %v6796 = vpop.f32.mrb[0].mxu0
        %v6797 = vadd.f32 %v6595, %v6796
        %v6798 = vpop.f32.mrb[0].mxu0
        %6799 = vdwg.mxu0
        %6800 = vrot.lane.b32.xlu0 %v2054, 64
        %v6801 = vpop.permute.xlu0 %6800
        %6802 = vrot.lane.b32.xlu0 %v2070, 64
        %v6803 = vpop.permute.xlu0 %6802
        %v6805 = vsel %vm2102, %v6801, 0
        %v6808 = vsel %vm2102, %v6803, 0
        %6810 = vmatprep.subr.bf16.mxu0 0
        %6811 = vmatpush1.bf16.xpose.msra.mxu0 %v6808
        %6812 = vmatprep.subr.bf16.mxu0 0
        %6813 = vmatpush1.bf16.xpose.msra.mxu0 0
        %6814 = vmatprep.subr.bf16.mxu0 0
        %6815 = vmatpush1.bf16.xpose.msra.mxu0 0
        %6816 = vmatprep.subr.bf16.mxu0 0
        %6817 = vmatpush1.bf16.xpose.msra.mxu0 0
        %6818 = vmatprep.subr.bf16.mxu0 0
        %6819 = vmatpush1.bf16.xpose.msra.mxu0 0
        %6820 = vmatprep.subr.bf16.mxu0 0
        %6821 = vmatpush1.bf16.xpose.msra.mxu0 0
        %6822 = vmatprep.subr.bf16.mxu0 0
        %6823 = vmatpush1.bf16.xpose.msra.mxu0 0
        %6824 = vmatprep.subr.bf16.mxu0 0
        %6825 = vmatpush1.bf16.xpose.msra.mxu0 0
        %6826 = vmatprep.subr.bf16.mxu0 0
        %6827 = vmatpush1.bf16.xpose.msra.mxu0 0
        %6828 = vmatprep.subr.bf16.mxu0 0
        %6829 = vmatpush1.bf16.xpose.msra.mxu0 0
        %6830 = vmatprep.subr.bf16.mxu0 0
        %6831 = vmatpush1.bf16.xpose.msra.mxu0 0
        %6832 = vmatprep.subr.bf16.mxu0 0
        %6833 = vmatpush1.bf16.xpose.msra.mxu0 0
        %6834 = vmatprep.subr.bf16.mxu0 0
        %6835 = vmatpush1.bf16.xpose.msra.mxu0 0
        %6836 = vmatprep.subr.bf16.mxu0 0
        %6837 = vmatpush1.bf16.xpose.msra.mxu0 0
        %6838 = vmatprep.subr.bf16.mxu0 0
        %6839 = vmatpush1.bf16.xpose.msra.mxu0 0
        %6840 = vmatprep.subr.bf16.mxu0 0
        %6841 = vmatpush1.bf16.xpose.msra.mxu0 0
        %6842 = vmatprep.mubr.bf16.mxu0 0
        %6843 = vmatmul.mubr.bf16.gmra.mrb[0].mxu0 %v6805
        %v6844 = vpop.f32.mrb[0].mxu0
        %v6845 = vadd.f32 %v6594, %v6844
        %v6846 = vpop.f32.mrb[0].mxu0
        %v6847 = vpop.f32.mrb[0].mxu0
        %v6848 = vadd.f32 %v6595, %v6847
        %v6849 = vpop.f32.mrb[0].mxu0
        %6850 = vdwg.mxu0
        %6851 = vrot.lane.b32.xlu0 %v2055, 64
        %v6852 = vpop.permute.xlu0 %6851
        %6853 = vrot.lane.b32.xlu0 %v2071, 64
        %v6854 = vpop.permute.xlu0 %6853
        %v6856 = vsel %vm2102, %v6852, 0
        %v6859 = vsel %vm2102, %v6854, 0
        %6861 = vmatprep.subr.bf16.mxu0 0
        %6862 = vmatpush1.bf16.xpose.msra.mxu0 %v6859
        %6863 = vmatprep.subr.bf16.mxu0 0
        %6864 = vmatpush1.bf16.xpose.msra.mxu0 0
        %6865 = vmatprep.subr.bf16.mxu0 0
        %6866 = vmatpush1.bf16.xpose.msra.mxu0 0
        %6867 = vmatprep.subr.bf16.mxu0 0
        %6868 = vmatpush1.bf16.xpose.msra.mxu0 0
        %6869 = vmatprep.subr.bf16.mxu0 0
        %6870 = vmatpush1.bf16.xpose.msra.mxu0 0
        %6871 = vmatprep.subr.bf16.mxu0 0
        %6872 = vmatpush1.bf16.xpose.msra.mxu0 0
        %6873 = vmatprep.subr.bf16.mxu0 0
        %6874 = vmatpush1.bf16.xpose.msra.mxu0 0
        %6875 = vmatprep.subr.bf16.mxu0 0
        %6876 = vmatpush1.bf16.xpose.msra.mxu0 0
        %6877 = vmatprep.subr.bf16.mxu0 0
        %6878 = vmatpush1.bf16.xpose.msra.mxu0 0
        %6879 = vmatprep.subr.bf16.mxu0 0
        %6880 = vmatpush1.bf16.xpose.msra.mxu0 0
        %6881 = vmatprep.subr.bf16.mxu0 0
        %6882 = vmatpush1.bf16.xpose.msra.mxu0 0
        %6883 = vmatprep.subr.bf16.mxu0 0
        %6884 = vmatpush1.bf16.xpose.msra.mxu0 0
        %6885 = vmatprep.subr.bf16.mxu0 0
        %6886 = vmatpush1.bf16.xpose.msra.mxu0 0
        %6887 = vmatprep.subr.bf16.mxu0 0
        %6888 = vmatpush1.bf16.xpose.msra.mxu0 0
        %6889 = vmatprep.subr.bf16.mxu0 0
        %6890 = vmatpush1.bf16.xpose.msra.mxu0 0
        %6891 = vmatprep.subr.bf16.mxu0 0
        %6892 = vmatpush1.bf16.xpose.msra.mxu0 0
        %6893 = vmatprep.mubr.bf16.mxu0 0
        %6894 = vmatmul.mubr.bf16.gmra.mrb[0].mxu0 %v6856
        %v6895 = vpop.f32.mrb[0].mxu0
        %v6896 = vadd.f32 %v6594, %v6895
        %v6897 = vpop.f32.mrb[0].mxu0
        %v6898 = vpop.f32.mrb[0].mxu0
        %v6899 = vadd.f32 %v6595, %v6898
        %v6900 = vpop.f32.mrb[0].mxu0
        %6901 = vdwg.mxu0
        %6902 = vrot.lane.b32.xlu0 %v2056, 64
        %v6903 = vpop.permute.xlu0 %6902
        %6904 = vrot.lane.b32.xlu0 %v2072, 64
        %v6905 = vpop.permute.xlu0 %6904
        %v6907 = vsel %vm2102, %v6903, 0
        %v6910 = vsel %vm2102, %v6905, 0
        %6912 = vmatprep.subr.bf16.mxu0 0
        %6913 = vmatpush1.bf16.xpose.msra.mxu0 %v6910
        %6914 = vmatprep.subr.bf16.mxu0 0
        %6915 = vmatpush1.bf16.xpose.msra.mxu0 0
        %6916 = vmatprep.subr.bf16.mxu0 0
        %6917 = vmatpush1.bf16.xpose.msra.mxu0 0
        %6918 = vmatprep.subr.bf16.mxu0 0
        %6919 = vmatpush1.bf16.xpose.msra.mxu0 0
        %6920 = vmatprep.subr.bf16.mxu0 0
        %6921 = vmatpush1.bf16.xpose.msra.mxu0 0
        %6922 = vmatprep.subr.bf16.mxu0 0
        %6923 = vmatpush1.bf16.xpose.msra.mxu0 0
        %6924 = vmatprep.subr.bf16.mxu0 0
        %6925 = vmatpush1.bf16.xpose.msra.mxu0 0
        %6926 = vmatprep.subr.bf16.mxu0 0
        %6927 = vmatpush1.bf16.xpose.msra.mxu0 0
        %6928 = vmatprep.subr.bf16.mxu0 0
        %6929 = vmatpush1.bf16.xpose.msra.mxu0 0
        %6930 = vmatprep.subr.bf16.mxu0 0
        %6931 = vmatpush1.bf16.xpose.msra.mxu0 0
        %6932 = vmatprep.subr.bf16.mxu0 0
        %6933 = vmatpush1.bf16.xpose.msra.mxu0 0
        %6934 = vmatprep.subr.bf16.mxu0 0
        %6935 = vmatpush1.bf16.xpose.msra.mxu0 0
        %6936 = vmatprep.subr.bf16.mxu0 0
        %6937 = vmatpush1.bf16.xpose.msra.mxu0 0
        %6938 = vmatprep.subr.bf16.mxu0 0
        %6939 = vmatpush1.bf16.xpose.msra.mxu0 0
        %6940 = vmatprep.subr.bf16.mxu0 0
        %6941 = vmatpush1.bf16.xpose.msra.mxu0 0
        %6942 = vmatprep.subr.bf16.mxu0 0
        %6943 = vmatpush1.bf16.xpose.msra.mxu0 0
        %6944 = vmatprep.mubr.bf16.mxu0 0
        %6945 = vmatmul.mubr.bf16.gmra.mrb[0].mxu0 %v6907
        %v6946 = vpop.f32.mrb[0].mxu0
        %v6947 = vadd.f32 %v6594, %v6946
        %v6948 = vpop.f32.mrb[0].mxu0
        %v6949 = vpop.f32.mrb[0].mxu0
        %v6950 = vadd.f32 %v6595, %v6949
        %v6951 = vpop.f32.mrb[0].mxu0
        %6952 = vdwg.mxu0
        %6953 = vrot.lane.b32.xlu0 %v2057, 64
        %v6954 = vpop.permute.xlu0 %6953
        %6955 = vrot.lane.b32.xlu0 %v2073, 64
        %v6956 = vpop.permute.xlu0 %6955
        %v6958 = vsel %vm2102, %v6954, 0
        %v6961 = vsel %vm2102, %v6956, 0
        %6963 = vmatprep.subr.bf16.mxu0 0
        %6964 = vmatpush1.bf16.xpose.msra.mxu0 %v6961
        %6965 = vmatprep.subr.bf16.mxu0 0
        %6966 = vmatpush1.bf16.xpose.msra.mxu0 0
        %6967 = vmatprep.subr.bf16.mxu0 0
        %6968 = vmatpush1.bf16.xpose.msra.mxu0 0
        %6969 = vmatprep.subr.bf16.mxu0 0
        %6970 = vmatpush1.bf16.xpose.msra.mxu0 0
        %6971 = vmatprep.subr.bf16.mxu0 0
        %6972 = vmatpush1.bf16.xpose.msra.mxu0 0
        %6973 = vmatprep.subr.bf16.mxu0 0
        %6974 = vmatpush1.bf16.xpose.msra.mxu0 0
        %6975 = vmatprep.subr.bf16.mxu0 0
        %6976 = vmatpush1.bf16.xpose.msra.mxu0 0
        %6977 = vmatprep.subr.bf16.mxu0 0
        %6978 = vmatpush1.bf16.xpose.msra.mxu0 0
        %6979 = vmatprep.subr.bf16.mxu0 0
        %6980 = vmatpush1.bf16.xpose.msra.mxu0 0
        %6981 = vmatprep.subr.bf16.mxu0 0
        %6982 = vmatpush1.bf16.xpose.msra.mxu0 0
        %6983 = vmatprep.subr.bf16.mxu0 0
        %6984 = vmatpush1.bf16.xpose.msra.mxu0 0
        %6985 = vmatprep.subr.bf16.mxu0 0
        %6986 = vmatpush1.bf16.xpose.msra.mxu0 0
        %6987 = vmatprep.subr.bf16.mxu0 0
        %6988 = vmatpush1.bf16.xpose.msra.mxu0 0
        %6989 = vmatprep.subr.bf16.mxu0 0
        %6990 = vmatpush1.bf16.xpose.msra.mxu0 0
        %6991 = vmatprep.subr.bf16.mxu0 0
        %6992 = vmatpush1.bf16.xpose.msra.mxu0 0
        %6993 = vmatprep.subr.bf16.mxu0 0
        %6994 = vmatpush1.bf16.xpose.msra.mxu0 0
        %6995 = vmatprep.mubr.bf16.mxu0 0
        %6996 = vmatmul.mubr.bf16.gmra.mrb[0].mxu0 %v6958
        %v6997 = vpop.f32.mrb[0].mxu0
        %v6998 = vadd.f32 %v6594, %v6997
        %v6999 = vpop.f32.mrb[0].mxu0
        %v7000 = vpop.f32.mrb[0].mxu0
        %v7001 = vadd.f32 %v6595, %v7000
        %v7002 = vpop.f32.mrb[0].mxu0
        %7003 = vdwg.mxu0
        %7004 = vrot.lane.b32.xlu0 %v2058, 64
        %v7005 = vpop.permute.xlu0 %7004
        %7006 = vrot.lane.b32.xlu0 %v2074, 64
        %v7007 = vpop.permute.xlu0 %7006
        %v7009 = vsel %vm2102, %v7005, 0
        %v7012 = vsel %vm2102, %v7007, 0
        %7014 = vmatprep.subr.bf16.mxu0 0
        %7015 = vmatpush1.bf16.xpose.msra.mxu0 %v7012
        %7016 = vmatprep.subr.bf16.mxu0 0
        %7017 = vmatpush1.bf16.xpose.msra.mxu0 0
        %7018 = vmatprep.subr.bf16.mxu0 0
        %7019 = vmatpush1.bf16.xpose.msra.mxu0 0
        %7020 = vmatprep.subr.bf16.mxu0 0
        %7021 = vmatpush1.bf16.xpose.msra.mxu0 0
        %7022 = vmatprep.subr.bf16.mxu0 0
        %7023 = vmatpush1.bf16.xpose.msra.mxu0 0
        %7024 = vmatprep.subr.bf16.mxu0 0
        %7025 = vmatpush1.bf16.xpose.msra.mxu0 0
        %7026 = vmatprep.subr.bf16.mxu0 0
        %7027 = vmatpush1.bf16.xpose.msra.mxu0 0
        %7028 = vmatprep.subr.bf16.mxu0 0
        %7029 = vmatpush1.bf16.xpose.msra.mxu0 0
        %7030 = vmatprep.subr.bf16.mxu0 0
        %7031 = vmatpush1.bf16.xpose.msra.mxu0 0
        %7032 = vmatprep.subr.bf16.mxu0 0
        %7033 = vmatpush1.bf16.xpose.msra.mxu0 0
        %7034 = vmatprep.subr.bf16.mxu0 0
        %7035 = vmatpush1.bf16.xpose.msra.mxu0 0
        %7036 = vmatprep.subr.bf16.mxu0 0
        %7037 = vmatpush1.bf16.xpose.msra.mxu0 0
        %7038 = vmatprep.subr.bf16.mxu0 0
        %7039 = vmatpush1.bf16.xpose.msra.mxu0 0
        %7040 = vmatprep.subr.bf16.mxu0 0
        %7041 = vmatpush1.bf16.xpose.msra.mxu0 0
        %7042 = vmatprep.subr.bf16.mxu0 0
        %7043 = vmatpush1.bf16.xpose.msra.mxu0 0
        %7044 = vmatprep.subr.bf16.mxu0 0
        %7045 = vmatpush1.bf16.xpose.msra.mxu0 0
        %7046 = vmatprep.mubr.bf16.mxu0 0
        %7047 = vmatmul.mubr.bf16.gmra.mrb[0].mxu0 %v7009
        %v7048 = vpop.f32.mrb[0].mxu0
        %v7049 = vadd.f32 %v6594, %v7048
        %v7050 = vpop.f32.mrb[0].mxu0
        %v7051 = vpop.f32.mrb[0].mxu0
        %v7052 = vadd.f32 %v6595, %v7051
        %v7053 = vpop.f32.mrb[0].mxu0
        %7054 = vdwg.mxu0
        %7055 = vrot.lane.b32.xlu0 %v2059, 64
        %v7056 = vpop.permute.xlu0 %7055
        %7057 = vrot.lane.b32.xlu0 %v2075, 64
        %v7058 = vpop.permute.xlu0 %7057
        %v7060 = vsel %vm2102, %v7056, 0
        %v7063 = vsel %vm2102, %v7058, 0
        %7065 = vmatprep.subr.bf16.mxu0 0
        %7066 = vmatpush1.bf16.xpose.msra.mxu0 %v7063
        %7067 = vmatprep.subr.bf16.mxu0 0
        %7068 = vmatpush1.bf16.xpose.msra.mxu0 0
        %7069 = vmatprep.subr.bf16.mxu0 0
        %7070 = vmatpush1.bf16.xpose.msra.mxu0 0
        %7071 = vmatprep.subr.bf16.mxu0 0
        %7072 = vmatpush1.bf16.xpose.msra.mxu0 0
        %7073 = vmatprep.subr.bf16.mxu0 0
        %7074 = vmatpush1.bf16.xpose.msra.mxu0 0
        %7075 = vmatprep.subr.bf16.mxu0 0
        %7076 = vmatpush1.bf16.xpose.msra.mxu0 0
        %7077 = vmatprep.subr.bf16.mxu0 0
        %7078 = vmatpush1.bf16.xpose.msra.mxu0 0
        %7079 = vmatprep.subr.bf16.mxu0 0
        %7080 = vmatpush1.bf16.xpose.msra.mxu0 0
        %7081 = vmatprep.subr.bf16.mxu0 0
        %7082 = vmatpush1.bf16.xpose.msra.mxu0 0
        %7083 = vmatprep.subr.bf16.mxu0 0
        %7084 = vmatpush1.bf16.xpose.msra.mxu0 0
        %7085 = vmatprep.subr.bf16.mxu0 0
        %7086 = vmatpush1.bf16.xpose.msra.mxu0 0
        %7087 = vmatprep.subr.bf16.mxu0 0
        %7088 = vmatpush1.bf16.xpose.msra.mxu0 0
        %7089 = vmatprep.subr.bf16.mxu0 0
        %7090 = vmatpush1.bf16.xpose.msra.mxu0 0
        %7091 = vmatprep.subr.bf16.mxu0 0
        %7092 = vmatpush1.bf16.xpose.msra.mxu0 0
        %7093 = vmatprep.subr.bf16.mxu0 0
        %7094 = vmatpush1.bf16.xpose.msra.mxu0 0
        %7095 = vmatprep.subr.bf16.mxu0 0
        %7096 = vmatpush1.bf16.xpose.msra.mxu0 0
        %7097 = vmatprep.mubr.bf16.mxu0 0
        %7098 = vmatmul.mubr.bf16.gmra.mrb[0].mxu0 %v7060
        %v7099 = vpop.f32.mrb[0].mxu0
        %v7100 = vadd.f32 %v6594, %v7099
        %v7101 = vpop.f32.mrb[0].mxu0
        %v7102 = vpop.f32.mrb[0].mxu0
        %v7103 = vadd.f32 %v6595, %v7102
        %v7104 = vpop.f32.mrb[0].mxu0
        %7105 = vdwg.mxu0
        %7106 = vrot.lane.b32.xlu0 %v2060, 64
        %v7107 = vpop.permute.xlu0 %7106
        %7108 = vrot.lane.b32.xlu0 %v2076, 64
        %v7109 = vpop.permute.xlu0 %7108
        %v7111 = vsel %vm2102, %v7107, 0
        %v7114 = vsel %vm2102, %v7109, 0
        %7116 = vmatprep.subr.bf16.mxu0 0
        %7117 = vmatpush1.bf16.xpose.msra.mxu0 %v7114
        %7118 = vmatprep.subr.bf16.mxu0 0
        %7119 = vmatpush1.bf16.xpose.msra.mxu0 0
        %7120 = vmatprep.subr.bf16.mxu0 0
        %7121 = vmatpush1.bf16.xpose.msra.mxu0 0
        %7122 = vmatprep.subr.bf16.mxu0 0
        %7123 = vmatpush1.bf16.xpose.msra.mxu0 0
        %7124 = vmatprep.subr.bf16.mxu0 0
        %7125 = vmatpush1.bf16.xpose.msra.mxu0 0
        %7126 = vmatprep.subr.bf16.mxu0 0
        %7127 = vmatpush1.bf16.xpose.msra.mxu0 0
        %7128 = vmatprep.subr.bf16.mxu0 0
        %7129 = vmatpush1.bf16.xpose.msra.mxu0 0
        %7130 = vmatprep.subr.bf16.mxu0 0
        %7131 = vmatpush1.bf16.xpose.msra.mxu0 0
        %7132 = vmatprep.subr.bf16.mxu0 0
        %7133 = vmatpush1.bf16.xpose.msra.mxu0 0
        %7134 = vmatprep.subr.bf16.mxu0 0
        %7135 = vmatpush1.bf16.xpose.msra.mxu0 0
        %7136 = vmatprep.subr.bf16.mxu0 0
        %7137 = vmatpush1.bf16.xpose.msra.mxu0 0
        %7138 = vmatprep.subr.bf16.mxu0 0
        %7139 = vmatpush1.bf16.xpose.msra.mxu0 0
        %7140 = vmatprep.subr.bf16.mxu0 0
        %7141 = vmatpush1.bf16.xpose.msra.mxu0 0
        %7142 = vmatprep.subr.bf16.mxu0 0
        %7143 = vmatpush1.bf16.xpose.msra.mxu0 0
        %7144 = vmatprep.subr.bf16.mxu0 0
        %7145 = vmatpush1.bf16.xpose.msra.mxu0 0
        %7146 = vmatprep.subr.bf16.mxu0 0
        %7147 = vmatpush1.bf16.xpose.msra.mxu0 0
        %7148 = vmatprep.mubr.bf16.mxu0 0
        %7149 = vmatmul.mubr.bf16.gmra.mrb[0].mxu0 %v7111
        %v7150 = vpop.f32.mrb[0].mxu0
        %v7151 = vadd.f32 %v6594, %v7150
        %v7152 = vpop.f32.mrb[0].mxu0
        %v7153 = vpop.f32.mrb[0].mxu0
        %v7154 = vadd.f32 %v6595, %v7153
        %v7155 = vpop.f32.mrb[0].mxu0
        %7156 = vdwg.mxu0
        %7157 = vrot.lane.b32.xlu0 %v2061, 64
        %v7158 = vpop.permute.xlu0 %7157
        %7159 = vrot.lane.b32.xlu0 %v2077, 64
        %v7160 = vpop.permute.xlu0 %7159
        %v7162 = vsel %vm2102, %v7158, 0
        %v7165 = vsel %vm2102, %v7160, 0
        %7167 = vmatprep.subr.bf16.mxu0 0
        %7168 = vmatpush1.bf16.xpose.msra.mxu0 %v7165
        %7169 = vmatprep.subr.bf16.mxu0 0
        %7170 = vmatpush1.bf16.xpose.msra.mxu0 0
        %7171 = vmatprep.subr.bf16.mxu0 0
        %7172 = vmatpush1.bf16.xpose.msra.mxu0 0
        %7173 = vmatprep.subr.bf16.mxu0 0
        %7174 = vmatpush1.bf16.xpose.msra.mxu0 0
        %7175 = vmatprep.subr.bf16.mxu0 0
        %7176 = vmatpush1.bf16.xpose.msra.mxu0 0
        %7177 = vmatprep.subr.bf16.mxu0 0
        %7178 = vmatpush1.bf16.xpose.msra.mxu0 0
        %7179 = vmatprep.subr.bf16.mxu0 0
        %7180 = vmatpush1.bf16.xpose.msra.mxu0 0
        %7181 = vmatprep.subr.bf16.mxu0 0
        %7182 = vmatpush1.bf16.xpose.msra.mxu0 0
        %7183 = vmatprep.subr.bf16.mxu0 0
        %7184 = vmatpush1.bf16.xpose.msra.mxu0 0
        %7185 = vmatprep.subr.bf16.mxu0 0
        %7186 = vmatpush1.bf16.xpose.msra.mxu0 0
        %7187 = vmatprep.subr.bf16.mxu0 0
        %7188 = vmatpush1.bf16.xpose.msra.mxu0 0
        %7189 = vmatprep.subr.bf16.mxu0 0
        %7190 = vmatpush1.bf16.xpose.msra.mxu0 0
        %7191 = vmatprep.subr.bf16.mxu0 0
        %7192 = vmatpush1.bf16.xpose.msra.mxu0 0
        %7193 = vmatprep.subr.bf16.mxu0 0
        %7194 = vmatpush1.bf16.xpose.msra.mxu0 0
        %7195 = vmatprep.subr.bf16.mxu0 0
        %7196 = vmatpush1.bf16.xpose.msra.mxu0 0
        %7197 = vmatprep.subr.bf16.mxu0 0
        %7198 = vmatpush1.bf16.xpose.msra.mxu0 0
        %7199 = vmatprep.mubr.bf16.mxu0 0
        %7200 = vmatmul.mubr.bf16.gmra.mrb[0].mxu0 %v7162
        %v7201 = vpop.f32.mrb[0].mxu0
        %v7202 = vadd.f32 %v6594, %v7201
        %v7203 = vpop.f32.mrb[0].mxu0
        %v7204 = vpop.f32.mrb[0].mxu0
        %v7205 = vadd.f32 %v6595, %v7204
        %v7206 = vpop.f32.mrb[0].mxu0
        %7207 = vdwg.mxu0
        %7208 = vrot.lane.b32.xlu0 %v2062, 64
        %v7209 = vpop.permute.xlu0 %7208
        %7210 = vrot.lane.b32.xlu0 %v2078, 64
        %v7211 = vpop.permute.xlu0 %7210
        %v7213 = vsel %vm2102, %v7209, 0
        %v7216 = vsel %vm2102, %v7211, 0
        %7218 = vmatprep.subr.bf16.mxu0 0
        %7219 = vmatpush1.bf16.xpose.msra.mxu0 %v7216
        %7220 = vmatprep.subr.bf16.mxu0 0
        %7221 = vmatpush1.bf16.xpose.msra.mxu0 0
        %7222 = vmatprep.subr.bf16.mxu0 0
        %7223 = vmatpush1.bf16.xpose.msra.mxu0 0
        %7224 = vmatprep.subr.bf16.mxu0 0
        %7225 = vmatpush1.bf16.xpose.msra.mxu0 0
        %7226 = vmatprep.subr.bf16.mxu0 0
        %7227 = vmatpush1.bf16.xpose.msra.mxu0 0
        %7228 = vmatprep.subr.bf16.mxu0 0
        %7229 = vmatpush1.bf16.xpose.msra.mxu0 0
        %7230 = vmatprep.subr.bf16.mxu0 0
        %7231 = vmatpush1.bf16.xpose.msra.mxu0 0
        %7232 = vmatprep.subr.bf16.mxu0 0
        %7233 = vmatpush1.bf16.xpose.msra.mxu0 0
        %7234 = vmatprep.subr.bf16.mxu0 0
        %7235 = vmatpush1.bf16.xpose.msra.mxu0 0
        %7236 = vmatprep.subr.bf16.mxu0 0
        %7237 = vmatpush1.bf16.xpose.msra.mxu0 0
        %7238 = vmatprep.subr.bf16.mxu0 0
        %7239 = vmatpush1.bf16.xpose.msra.mxu0 0
        %7240 = vmatprep.subr.bf16.mxu0 0
        %7241 = vmatpush1.bf16.xpose.msra.mxu0 0
        %7242 = vmatprep.subr.bf16.mxu0 0
        %7243 = vmatpush1.bf16.xpose.msra.mxu0 0
        %7244 = vmatprep.subr.bf16.mxu0 0
        %7245 = vmatpush1.bf16.xpose.msra.mxu0 0
        %7246 = vmatprep.subr.bf16.mxu0 0
        %7247 = vmatpush1.bf16.xpose.msra.mxu0 0
        %7248 = vmatprep.subr.bf16.mxu0 0
        %7249 = vmatpush1.bf16.xpose.msra.mxu0 0
        %7250 = vmatprep.mubr.bf16.mxu0 0
        %7251 = vmatmul.mubr.bf16.gmra.mrb[0].mxu0 %v7213
        %v7252 = vpop.f32.mrb[0].mxu0
        %v7253 = vadd.f32 %v6594, %v7252
        %v7254 = vpop.f32.mrb[0].mxu0
        %v7255 = vpop.f32.mrb[0].mxu0
        %v7256 = vadd.f32 %v6595, %v7255
        %v7257 = vpop.f32.mrb[0].mxu0
        %7258 = vdwg.mxu0
        %7259 = vrot.lane.b32.xlu0 %v2063, 64
        %v7260 = vpop.permute.xlu0 %7259
        %7261 = vrot.lane.b32.xlu0 %v2079, 64
        %v7262 = vpop.permute.xlu0 %7261
        %v7264 = vsel %vm2102, %v7260, 0
        %v7267 = vsel %vm2102, %v7262, 0
        %7269 = vmatprep.subr.bf16.mxu0 0
        %7270 = vmatpush1.bf16.xpose.msra.mxu0 %v7267
        %7271 = vmatprep.subr.bf16.mxu0 0
        %7272 = vmatpush1.bf16.xpose.msra.mxu0 0
        %7273 = vmatprep.subr.bf16.mxu0 0
        %7274 = vmatpush1.bf16.xpose.msra.mxu0 0
        %7275 = vmatprep.subr.bf16.mxu0 0
        %7276 = vmatpush1.bf16.xpose.msra.mxu0 0
        %7277 = vmatprep.subr.bf16.mxu0 0
        %7278 = vmatpush1.bf16.xpose.msra.mxu0 0
        %7279 = vmatprep.subr.bf16.mxu0 0
        %7280 = vmatpush1.bf16.xpose.msra.mxu0 0
        %7281 = vmatprep.subr.bf16.mxu0 0
        %7282 = vmatpush1.bf16.xpose.msra.mxu0 0
        %7283 = vmatprep.subr.bf16.mxu0 0
        %7284 = vmatpush1.bf16.xpose.msra.mxu0 0
        %7285 = vmatprep.subr.bf16.mxu0 0
        %7286 = vmatpush1.bf16.xpose.msra.mxu0 0
        %7287 = vmatprep.subr.bf16.mxu0 0
        %7288 = vmatpush1.bf16.xpose.msra.mxu0 0
        %7289 = vmatprep.subr.bf16.mxu0 0
        %7290 = vmatpush1.bf16.xpose.msra.mxu0 0
        %7291 = vmatprep.subr.bf16.mxu0 0
        %7292 = vmatpush1.bf16.xpose.msra.mxu0 0
        %7293 = vmatprep.subr.bf16.mxu0 0
        %7294 = vmatpush1.bf16.xpose.msra.mxu0 0
        %7295 = vmatprep.subr.bf16.mxu0 0
        %7296 = vmatpush1.bf16.xpose.msra.mxu0 0
        %7297 = vmatprep.subr.bf16.mxu0 0
        %7298 = vmatpush1.bf16.xpose.msra.mxu0 0
        %7299 = vmatprep.subr.bf16.mxu0 0
        %7300 = vmatpush1.bf16.xpose.msra.mxu0 0
        %7301 = vmatprep.mubr.bf16.mxu0 0
        %7302 = vmatmul.mubr.bf16.gmra.mrb[0].mxu0 %v7264
        %v7303 = vpop.f32.mrb[0].mxu0
        %v7304 = vadd.f32 %v6594, %v7303
        %v7305 = vpop.f32.mrb[0].mxu0
        %v7306 = vpop.f32.mrb[0].mxu0
        %v7307 = vadd.f32 %v6595, %v7306
        %v7308 = vpop.f32.mrb[0].mxu0
        %7309 = vdwg.mxu0
        %7310 = vrot.lane.b32.xlu0 %v2064, 64
        %v7311 = vpop.permute.xlu0 %7310
        %7312 = vrot.lane.b32.xlu0 %v2080, 64
        %v7313 = vpop.permute.xlu0 %7312
        %v7315 = vsel %vm2102, %v7311, 0
        %v7318 = vsel %vm2102, %v7313, 0
        %7320 = vmatprep.subr.bf16.mxu0 0
        %7321 = vmatpush1.bf16.xpose.msra.mxu0 %v7318
        %7322 = vmatprep.subr.bf16.mxu0 0
        %7323 = vmatpush1.bf16.xpose.msra.mxu0 0
        %7324 = vmatprep.subr.bf16.mxu0 0
        %7325 = vmatpush1.bf16.xpose.msra.mxu0 0
        %7326 = vmatprep.subr.bf16.mxu0 0
        %7327 = vmatpush1.bf16.xpose.msra.mxu0 0
        %7328 = vmatprep.subr.bf16.mxu0 0
        %7329 = vmatpush1.bf16.xpose.msra.mxu0 0
        %7330 = vmatprep.subr.bf16.mxu0 0
        %7331 = vmatpush1.bf16.xpose.msra.mxu0 0
        %7332 = vmatprep.subr.bf16.mxu0 0
        %7333 = vmatpush1.bf16.xpose.msra.mxu0 0
        %7334 = vmatprep.subr.bf16.mxu0 0
        %7335 = vmatpush1.bf16.xpose.msra.mxu0 0
        %7336 = vmatprep.subr.bf16.mxu0 0
        %7337 = vmatpush1.bf16.xpose.msra.mxu0 0
        %7338 = vmatprep.subr.bf16.mxu0 0
        %7339 = vmatpush1.bf16.xpose.msra.mxu0 0
        %7340 = vmatprep.subr.bf16.mxu0 0
        %7341 = vmatpush1.bf16.xpose.msra.mxu0 0
        %7342 = vmatprep.subr.bf16.mxu0 0
        %7343 = vmatpush1.bf16.xpose.msra.mxu0 0
        %7344 = vmatprep.subr.bf16.mxu0 0
        %7345 = vmatpush1.bf16.xpose.msra.mxu0 0
        %7346 = vmatprep.subr.bf16.mxu0 0
        %7347 = vmatpush1.bf16.xpose.msra.mxu0 0
        %7348 = vmatprep.subr.bf16.mxu0 0
        %7349 = vmatpush1.bf16.xpose.msra.mxu0 0
        %7350 = vmatprep.subr.bf16.mxu0 0
        %7351 = vmatpush1.bf16.xpose.msra.mxu0 0
        %7352 = vmatprep.mubr.bf16.mxu0 0
        %7353 = vmatmul.mubr.bf16.gmra.mrb[0].mxu0 %v7315
        %v7354 = vpop.f32.mrb[0].mxu0
        %v7355 = vadd.f32 %v6594, %v7354
        %v7356 = vpop.f32.mrb[0].mxu0
        %v7357 = vpop.f32.mrb[0].mxu0
        %v7358 = vadd.f32 %v6595, %v7357
        %v7359 = vpop.f32.mrb[0].mxu0
        %7360 = vdwg.mxu0
        %7361 = vrot.lane.b32.xlu0 %v2065, 64
        %v7362 = vpop.permute.xlu0 %7361
        %7363 = vrot.lane.b32.xlu0 %v2081, 64
        %v7364 = vpop.permute.xlu0 %7363
        %v7366 = vsel %vm2102, %v7362, 0
        %v7369 = vsel %vm2102, %v7364, 0
        %7371 = vmatprep.subr.bf16.mxu0 0
        %7372 = vmatpush1.bf16.xpose.msra.mxu0 %v7369
        %7373 = vmatprep.subr.bf16.mxu0 0
        %7374 = vmatpush1.bf16.xpose.msra.mxu0 0
        %7375 = vmatprep.subr.bf16.mxu0 0
        %7376 = vmatpush1.bf16.xpose.msra.mxu0 0
        %7377 = vmatprep.subr.bf16.mxu0 0
        %7378 = vmatpush1.bf16.xpose.msra.mxu0 0
        %7379 = vmatprep.subr.bf16.mxu0 0
        %7380 = vmatpush1.bf16.xpose.msra.mxu0 0
        %7381 = vmatprep.subr.bf16.mxu0 0
        %7382 = vmatpush1.bf16.xpose.msra.mxu0 0
        %7383 = vmatprep.subr.bf16.mxu0 0
        %7384 = vmatpush1.bf16.xpose.msra.mxu0 0
        %7385 = vmatprep.subr.bf16.mxu0 0
        %7386 = vmatpush1.bf16.xpose.msra.mxu0 0
        %7387 = vmatprep.subr.bf16.mxu0 0
        %7388 = vmatpush1.bf16.xpose.msra.mxu0 0
        %7389 = vmatprep.subr.bf16.mxu0 0
        %7390 = vmatpush1.bf16.xpose.msra.mxu0 0
        %7391 = vmatprep.subr.bf16.mxu0 0
        %7392 = vmatpush1.bf16.xpose.msra.mxu0 0
        %7393 = vmatprep.subr.bf16.mxu0 0
        %7394 = vmatpush1.bf16.xpose.msra.mxu0 0
        %7395 = vmatprep.subr.bf16.mxu0 0
        %7396 = vmatpush1.bf16.xpose.msra.mxu0 0
        %7397 = vmatprep.subr.bf16.mxu0 0
        %7398 = vmatpush1.bf16.xpose.msra.mxu0 0
        %7399 = vmatprep.subr.bf16.mxu0 0
        %7400 = vmatpush1.bf16.xpose.msra.mxu0 0
        %7401 = vmatprep.subr.bf16.mxu0 0
        %7402 = vmatpush1.bf16.xpose.msra.mxu0 0
        %7403 = vmatprep.mubr.bf16.mxu0 0
        %7404 = vmatmul.mubr.bf16.gmra.mrb[0].mxu0 %v7366
        %v7405 = vpop.f32.mrb[0].mxu0
        %v7406 = vadd.f32 %v6594, %v7405
        %v7407 = vpop.f32.mrb[0].mxu0
        %v7408 = vpop.f32.mrb[0].mxu0
        %v7409 = vadd.f32 %v6595, %v7408
        %v7410 = vpop.f32.mrb[0].mxu0
        %7411 = vdwg.mxu0
        %v7412 = vsel %vm2855, %v6641, -inf
        %7413 = vmax.xlane.f32.xlu0 %v7412
        %v7414 = vpop.xlane.xlu0 %7413
        %v7415 = vsel %vm2855, %v6644, -inf
        %7416 = vmax.xlane.f32.xlu0 %v7415
        %v7417 = vpop.xlane.xlu0 %7416
        %v7418 = vsel %vm2855, %v6692, -inf
        %7419 = vmax.xlane.f32.xlu0 %v7418
        %v7420 = vpop.xlane.xlu0 %7419
        %v7421 = vsel %vm2855, %v6695, -inf
        %7422 = vmax.xlane.f32.xlu0 %v7421
        %v7423 = vpop.xlane.xlu0 %7422
        %v7424 = vsel %vm2855, %v6743, -inf
        %7425 = vmax.xlane.f32.xlu0 %v7424
        %v7426 = vpop.xlane.xlu0 %7425
        %v7427 = vsel %vm2855, %v6746, -inf
        %7428 = vmax.xlane.f32.xlu0 %v7427
        %v7429 = vpop.xlane.xlu0 %7428
        %v7430 = vsel %vm2855, %v6794, -inf
        %7431 = vmax.xlane.f32.xlu0 %v7430
        %v7432 = vpop.xlane.xlu0 %7431
        %v7433 = vsel %vm2855, %v6797, -inf
        %7434 = vmax.xlane.f32.xlu0 %v7433
        %v7435 = vpop.xlane.xlu0 %7434
        %v7436 = vsel %vm2855, %v6845, -inf
        %7437 = vmax.xlane.f32.xlu0 %v7436
        %v7438 = vpop.xlane.xlu0 %7437
        %v7439 = vsel %vm2855, %v6848, -inf
        %7440 = vmax.xlane.f32.xlu0 %v7439
        %v7441 = vpop.xlane.xlu0 %7440
        %v7442 = vsel %vm2855, %v6896, -inf
        %7443 = vmax.xlane.f32.xlu0 %v7442
        %v7444 = vpop.xlane.xlu0 %7443
        %v7445 = vsel %vm2855, %v6899, -inf
        %7446 = vmax.xlane.f32.xlu0 %v7445
        %v7447 = vpop.xlane.xlu0 %7446
        %v7448 = vsel %vm2855, %v6947, -inf
        %7449 = vmax.xlane.f32.xlu0 %v7448
        %v7450 = vpop.xlane.xlu0 %7449
        %v7451 = vsel %vm2855, %v6950, -inf
        %7452 = vmax.xlane.f32.xlu0 %v7451
        %v7453 = vpop.xlane.xlu0 %7452
        %v7454 = vsel %vm2855, %v6998, -inf
        %7455 = vmax.xlane.f32.xlu0 %v7454
        %v7456 = vpop.xlane.xlu0 %7455
        %v7457 = vsel %vm2855, %v7001, -inf
        %7458 = vmax.xlane.f32.xlu0 %v7457
        %v7459 = vpop.xlane.xlu0 %7458
        %v7460 = vsel %vm2855, %v7049, -inf
        %7461 = vmax.xlane.f32.xlu0 %v7460
        %v7462 = vpop.xlane.xlu0 %7461
        %v7463 = vsel %vm2855, %v7052, -inf
        %7464 = vmax.xlane.f32.xlu0 %v7463
        %v7465 = vpop.xlane.xlu0 %7464
        %v7466 = vsel %vm2855, %v7100, -inf
        %7467 = vmax.xlane.f32.xlu0 %v7466
        %v7468 = vpop.xlane.xlu0 %7467
        %v7469 = vsel %vm2855, %v7103, -inf
        %7470 = vmax.xlane.f32.xlu0 %v7469
        %v7471 = vpop.xlane.xlu0 %7470
        %v7472 = vsel %vm2855, %v7151, -inf
        %7473 = vmax.xlane.f32.xlu0 %v7472
        %v7474 = vpop.xlane.xlu0 %7473
        %v7475 = vsel %vm2855, %v7154, -inf
        %7476 = vmax.xlane.f32.xlu0 %v7475
        %v7477 = vpop.xlane.xlu0 %7476
        %v7478 = vsel %vm2855, %v7202, -inf
        %7479 = vmax.xlane.f32.xlu0 %v7478
        %v7480 = vpop.xlane.xlu0 %7479
        %v7481 = vsel %vm2855, %v7205, -inf
        %7482 = vmax.xlane.f32.xlu0 %v7481
        %v7483 = vpop.xlane.xlu0 %7482
        %v7484 = vsel %vm2855, %v7253, -inf
        %7485 = vmax.xlane.f32.xlu0 %v7484
        %v7486 = vpop.xlane.xlu0 %7485
        %v7487 = vsel %vm2855, %v7256, -inf
        %7488 = vmax.xlane.f32.xlu0 %v7487
        %v7489 = vpop.xlane.xlu0 %7488
        %v7490 = vsel %vm2855, %v7304, -inf
        %7491 = vmax.xlane.f32.xlu0 %v7490
        %v7492 = vpop.xlane.xlu0 %7491
        %v7493 = vsel %vm2855, %v7307, -inf
        %7494 = vmax.xlane.f32.xlu0 %v7493
        %v7495 = vpop.xlane.xlu0 %7494
        %v7496 = vsel %vm2855, %v7355, -inf
        %7497 = vmax.xlane.f32.xlu0 %v7496
        %v7498 = vpop.xlane.xlu0 %7497
        %v7499 = vsel %vm2855, %v7358, -inf
        %7500 = vmax.xlane.f32.xlu0 %v7499
        %v7501 = vpop.xlane.xlu0 %7500
        %v7502 = vsel %vm2855, %v7406, -inf
        %7503 = vmax.xlane.f32.xlu0 %v7502
        %v7504 = vpop.xlane.xlu0 %7503
        %v7505 = vsel %vm2855, %v7409, -inf
        %7506 = vmax.xlane.f32.xlu0 %v7505
        %v7507 = vpop.xlane.xlu0 %7506
        %v7508 = vsub.f32 %v6641, %v7414
        %v7509 = vsub.f32 %v6644, %v7417
        %v7510 = vsub.f32 %v6692, %v7420
        %v7511 = vsub.f32 %v6695, %v7423
        %v7512 = vsub.f32 %v6743, %v7426
        %v7513 = vsub.f32 %v6746, %v7429
        %v7514 = vsub.f32 %v6794, %v7432
        %v7515 = vsub.f32 %v6797, %v7435
        %v7516 = vsub.f32 %v6845, %v7438
        %v7517 = vsub.f32 %v6848, %v7441
        %v7518 = vsub.f32 %v6896, %v7444
        %v7519 = vsub.f32 %v6899, %v7447
        %v7520 = vsub.f32 %v6947, %v7450
        %v7521 = vsub.f32 %v6950, %v7453
        %v7522 = vsub.f32 %v6998, %v7456
        %v7523 = vsub.f32 %v7001, %v7459
        %v7524 = vsub.f32 %v7049, %v7462
        %v7525 = vsub.f32 %v7052, %v7465
        %v7526 = vsub.f32 %v7100, %v7468
        %v7527 = vsub.f32 %v7103, %v7471
        %v7528 = vsub.f32 %v7151, %v7474
        %v7529 = vsub.f32 %v7154, %v7477
        %v7530 = vsub.f32 %v7202, %v7480
        %v7531 = vsub.f32 %v7205, %v7483
        %v7532 = vsub.f32 %v7253, %v7486
        %v7533 = vsub.f32 %v7256, %v7489
        %v7534 = vsub.f32 %v7304, %v7492
        %v7535 = vsub.f32 %v7307, %v7495
        %v7536 = vsub.f32 %v7355, %v7498
        %v7537 = vsub.f32 %v7358, %v7501
        %v7538 = vsub.f32 %v7406, %v7504
        %v7539 = vsub.f32 %v7409, %v7507
        %v7540 = vmul.f32 %v7508, 1.442695
        %v7541 = vpow.pop %v7540
        %v7542 = vmul.f32 %v7509, 1.442695
        %v7543 = vpow.pop %v7542
        %v7544 = vmul.f32 %v7510, 1.442695
        %v7545 = vpow.pop %v7544
        %v7546 = vmul.f32 %v7511, 1.442695
        %v7547 = vpow.pop %v7546
        %v7548 = vmul.f32 %v7512, 1.442695
        %v7549 = vpow.pop %v7548
        %v7550 = vmul.f32 %v7513, 1.442695
        %v7551 = vpow.pop %v7550
        %v7552 = vmul.f32 %v7514, 1.442695
        %v7553 = vpow.pop %v7552
        %v7554 = vmul.f32 %v7515, 1.442695
        %v7555 = vpow.pop %v7554
        %v7556 = vmul.f32 %v7516, 1.442695
        %v7557 = vpow.pop %v7556
        %v7558 = vmul.f32 %v7517, 1.442695
        %v7559 = vpow.pop %v7558
        %v7560 = vmul.f32 %v7518, 1.442695
        %v7561 = vpow.pop %v7560
        %v7562 = vmul.f32 %v7519, 1.442695
        %v7563 = vpow.pop %v7562
        %v7564 = vmul.f32 %v7520, 1.442695
        %v7565 = vpow.pop %v7564
        %v7566 = vmul.f32 %v7521, 1.442695
        %v7567 = vpow.pop %v7566
        %v7568 = vmul.f32 %v7522, 1.442695
        %v7569 = vpow.pop %v7568
        %v7570 = vmul.f32 %v7523, 1.442695
        %v7571 = vpow.pop %v7570
        %v7572 = vmul.f32 %v7524, 1.442695
        %v7573 = vpow.pop %v7572
        %v7574 = vmul.f32 %v7525, 1.442695
        %v7575 = vpow.pop %v7574
        %v7576 = vmul.f32 %v7526, 1.442695
        %v7577 = vpow.pop %v7576
        %v7578 = vmul.f32 %v7527, 1.442695
        %v7579 = vpow.pop %v7578
        %v7580 = vmul.f32 %v7528, 1.442695
        %v7581 = vpow.pop %v7580
        %v7582 = vmul.f32 %v7529, 1.442695
        %v7583 = vpow.pop %v7582
        %v7584 = vmul.f32 %v7530, 1.442695
        %v7585 = vpow.pop %v7584
        %v7586 = vmul.f32 %v7531, 1.442695
        %v7587 = vpow.pop %v7586
        %v7588 = vmul.f32 %v7532, 1.442695
        %v7589 = vpow.pop %v7588
        %v7590 = vmul.f32 %v7533, 1.442695
        %v7591 = vpow.pop %v7590
        %v7592 = vmul.f32 %v7534, 1.442695
        %v7593 = vpow.pop %v7592
        %v7594 = vmul.f32 %v7535, 1.442695
        %v7595 = vpow.pop %v7594
        %v7596 = vmul.f32 %v7536, 1.442695
        %v7597 = vpow.pop %v7596
        %v7598 = vmul.f32 %v7537, 1.442695
        %v7599 = vpow.pop %v7598
        %v7600 = vmul.f32 %v7538, 1.442695
        %v7601 = vpow.pop %v7600
        %v7602 = vmul.f32 %v7539, 1.442695
        %v7603 = vpow.pop %v7602
        %v7604 = vsel %vm2855, %v7541, 0.0
        %7605 = vadd.xlane.f32.xlu0 %v7604
        %v7606 = vpop.xlane.xlu0 %7605
        %v7607 = vsel %vm2855, %v7543, 0.0
        %7608 = vadd.xlane.f32.xlu0 %v7607
        %v7609 = vpop.xlane.xlu0 %7608
        %v7610 = vsel %vm2855, %v7545, 0.0
        %7611 = vadd.xlane.f32.xlu0 %v7610
        %v7612 = vpop.xlane.xlu0 %7611
        %v7613 = vsel %vm2855, %v7547, 0.0
        %7614 = vadd.xlane.f32.xlu0 %v7613
        %v7615 = vpop.xlane.xlu0 %7614
        %v7616 = vsel %vm2855, %v7549, 0.0
        %7617 = vadd.xlane.f32.xlu0 %v7616
        %v7618 = vpop.xlane.xlu0 %7617
        %v7619 = vsel %vm2855, %v7551, 0.0
        %7620 = vadd.xlane.f32.xlu0 %v7619
        %v7621 = vpop.xlane.xlu0 %7620
        %v7622 = vsel %vm2855, %v7553, 0.0
        %7623 = vadd.xlane.f32.xlu0 %v7622
        %v7624 = vpop.xlane.xlu0 %7623
        %v7625 = vsel %vm2855, %v7555, 0.0
        %7626 = vadd.xlane.f32.xlu0 %v7625
        %v7627 = vpop.xlane.xlu0 %7626
        %v7628 = vsel %vm2855, %v7557, 0.0
        %7629 = vadd.xlane.f32.xlu0 %v7628
        %v7630 = vpop.xlane.xlu0 %7629
        %v7631 = vsel %vm2855, %v7559, 0.0
        %7632 = vadd.xlane.f32.xlu0 %v7631
        %v7633 = vpop.xlane.xlu0 %7632
        %v7634 = vsel %vm2855, %v7561, 0.0
        %7635 = vadd.xlane.f32.xlu0 %v7634
        %v7636 = vpop.xlane.xlu0 %7635
        %v7637 = vsel %vm2855, %v7563, 0.0
        %7638 = vadd.xlane.f32.xlu0 %v7637
        %v7639 = vpop.xlane.xlu0 %7638
        %v7640 = vsel %vm2855, %v7565, 0.0
        %7641 = vadd.xlane.f32.xlu0 %v7640
        %v7642 = vpop.xlane.xlu0 %7641
        %v7643 = vsel %vm2855, %v7567, 0.0
        %7644 = vadd.xlane.f32.xlu0 %v7643
        %v7645 = vpop.xlane.xlu0 %7644
        %v7646 = vsel %vm2855, %v7569, 0.0
        %7647 = vadd.xlane.f32.xlu0 %v7646
        %v7648 = vpop.xlane.xlu0 %7647
        %v7649 = vsel %vm2855, %v7571, 0.0
        %7650 = vadd.xlane.f32.xlu0 %v7649
        %v7651 = vpop.xlane.xlu0 %7650
        %v7652 = vsel %vm2855, %v7573, 0.0
        %7653 = vadd.xlane.f32.xlu0 %v7652
        %v7654 = vpop.xlane.xlu0 %7653
        %v7655 = vsel %vm2855, %v7575, 0.0
        %7656 = vadd.xlane.f32.xlu0 %v7655
        %v7657 = vpop.xlane.xlu0 %7656
        %v7658 = vsel %vm2855, %v7577, 0.0
        %7659 = vadd.xlane.f32.xlu0 %v7658
        %v7660 = vpop.xlane.xlu0 %7659
        %v7661 = vsel %vm2855, %v7579, 0.0
        %7662 = vadd.xlane.f32.xlu0 %v7661
        %v7663 = vpop.xlane.xlu0 %7662
        %v7664 = vsel %vm2855, %v7581, 0.0
        %7665 = vadd.xlane.f32.xlu0 %v7664
        %v7666 = vpop.xlane.xlu0 %7665
        %v7667 = vsel %vm2855, %v7583, 0.0
        %7668 = vadd.xlane.f32.xlu0 %v7667
        %v7669 = vpop.xlane.xlu0 %7668
        %v7670 = vsel %vm2855, %v7585, 0.0
        %7671 = vadd.xlane.f32.xlu0 %v7670
        %v7672 = vpop.xlane.xlu0 %7671
        %v7673 = vsel %vm2855, %v7587, 0.0
        %7674 = vadd.xlane.f32.xlu0 %v7673
        %v7675 = vpop.xlane.xlu0 %7674
        %v7676 = vsel %vm2855, %v7589, 0.0
        %7677 = vadd.xlane.f32.xlu0 %v7676
        %v7678 = vpop.xlane.xlu0 %7677
        %v7679 = vsel %vm2855, %v7591, 0.0
        %7680 = vadd.xlane.f32.xlu0 %v7679
        %v7681 = vpop.xlane.xlu0 %7680
        %v7682 = vsel %vm2855, %v7593, 0.0
        %7683 = vadd.xlane.f32.xlu0 %v7682
        %v7684 = vpop.xlane.xlu0 %7683
        %v7685 = vsel %vm2855, %v7595, 0.0
        %7686 = vadd.xlane.f32.xlu0 %v7685
        %v7687 = vpop.xlane.xlu0 %7686
        %v7688 = vsel %vm2855, %v7597, 0.0
        %7689 = vadd.xlane.f32.xlu0 %v7688
        %v7690 = vpop.xlane.xlu0 %7689
        %v7691 = vsel %vm2855, %v7599, 0.0
        %7692 = vadd.xlane.f32.xlu0 %v7691
        %v7693 = vpop.xlane.xlu0 %7692
        %v7694 = vsel %vm2855, %v7601, 0.0
        %7695 = vadd.xlane.f32.xlu0 %v7694
        %v7696 = vpop.xlane.xlu0 %7695
        %v7697 = vsel %vm2855, %v7603, 0.0
        %7698 = vadd.xlane.f32.xlu0 %v7697
        %v7699 = vpop.xlane.xlu0 %7698
        %v7700 = vpack.c.bf16 %v7543, %v7541
        %v7701 = vpack.c.bf16 %v7547, %v7545
        %v7702 = vpack.c.bf16 %v7551, %v7549
        %v7703 = vpack.c.bf16 %v7555, %v7553
        %v7704 = vpack.c.bf16 %v7559, %v7557
        %v7705 = vpack.c.bf16 %v7563, %v7561
        %v7706 = vpack.c.bf16 %v7567, %v7565
        %v7707 = vpack.c.bf16 %v7571, %v7569
        %v7708 = vpack.c.bf16 %v7575, %v7573
        %v7709 = vpack.c.bf16 %v7579, %v7577
        %v7710 = vpack.c.bf16 %v7583, %v7581
        %v7711 = vpack.c.bf16 %v7587, %v7585
        %v7712 = vpack.c.bf16 %v7591, %v7589
        %v7713 = vpack.c.bf16 %v7595, %v7593
        %v7714 = vpack.c.bf16 %v7599, %v7597
        %v7715 = vpack.c.bf16 %v7603, %v7601
        %7716 = vrot.lane.b32.xlu0 %v2082, 64
        %v7717 = vpop.permute.xlu0 %7716
        %v7720 = vsel %vm2855, %v7700, 0
        %7722 = vmatprep.subr.bf16.mxu0 0
        %7723 = vmatpush1.bf16.msra.mxu0 %v7717
        %7724 = vmatprep.subr.bf16.mxu0 0
        %7725 = vmatpush1.bf16.msra.mxu0 0
        %7726 = vmatprep.subr.bf16.mxu0 0
        %7727 = vmatpush1.bf16.msra.mxu0 0
        %7728 = vmatprep.subr.bf16.mxu0 0
        %7729 = vmatpush1.bf16.msra.mxu0 0
        %7730 = vmatprep.subr.bf16.mxu0 0
        %7731 = vmatpush1.bf16.msra.mxu0 0
        %7732 = vmatprep.subr.bf16.mxu0 0
        %7733 = vmatpush1.bf16.msra.mxu0 0
        %7734 = vmatprep.subr.bf16.mxu0 0
        %7735 = vmatpush1.bf16.msra.mxu0 0
        %7736 = vmatprep.subr.bf16.mxu0 0
        %7737 = vmatpush1.bf16.msra.mxu0 0
        %7738 = vmatprep.subr.bf16.mxu0 0
        %7739 = vmatpush1.bf16.msra.mxu0 0
        %7740 = vmatprep.subr.bf16.mxu0 0
        %7741 = vmatpush1.bf16.msra.mxu0 0
        %7742 = vmatprep.subr.bf16.mxu0 0
        %7743 = vmatpush1.bf16.msra.mxu0 0
        %7744 = vmatprep.subr.bf16.mxu0 0
        %7745 = vmatpush1.bf16.msra.mxu0 0
        %7746 = vmatprep.subr.bf16.mxu0 0
        %7747 = vmatpush1.bf16.msra.mxu0 0
        %7748 = vmatprep.subr.bf16.mxu0 0
        %7749 = vmatpush1.bf16.msra.mxu0 0
        %7750 = vmatprep.subr.bf16.mxu0 0
        %7751 = vmatpush1.bf16.msra.mxu0 0
        %7752 = vmatprep.subr.bf16.mxu0 0
        %7753 = vmatpush1.bf16.msra.mxu0 0
        %7754 = vmatprep.mubr.bf16.mxu0 0
        %7755 = vmatmul.mubr.bf16.gmra.mrb[0].mxu0 %v7720
        %v7756 = vpop.f32.mrb[0].mxu0
        %v7757 = vadd.f32 0.0, %v7756
        %v7758 = vpop.f32.mrb[0].mxu0
        %v7759 = vpop.f32.mrb[0].mxu0
        %v7760 = vadd.f32 0.0, %v7759
        %v7761 = vpop.f32.mrb[0].mxu0
        %7762 = vdwg.mxu0
        %7763 = vrot.lane.b32.xlu0 %v2083, 64
        %v7764 = vpop.permute.xlu0 %7763
        %v7767 = vsel %vm2855, %v7701, 0
        %7769 = vmatprep.subr.bf16.mxu0 0
        %7770 = vmatpush1.bf16.msra.mxu0 %v7764
        %7771 = vmatprep.subr.bf16.mxu0 0
        %7772 = vmatpush1.bf16.msra.mxu0 0
        %7773 = vmatprep.subr.bf16.mxu0 0
        %7774 = vmatpush1.bf16.msra.mxu0 0
        %7775 = vmatprep.subr.bf16.mxu0 0
        %7776 = vmatpush1.bf16.msra.mxu0 0
        %7777 = vmatprep.subr.bf16.mxu0 0
        %7778 = vmatpush1.bf16.msra.mxu0 0
        %7779 = vmatprep.subr.bf16.mxu0 0
        %7780 = vmatpush1.bf16.msra.mxu0 0
        %7781 = vmatprep.subr.bf16.mxu0 0
        %7782 = vmatpush1.bf16.msra.mxu0 0
        %7783 = vmatprep.subr.bf16.mxu0 0
        %7784 = vmatpush1.bf16.msra.mxu0 0
        %7785 = vmatprep.subr.bf16.mxu0 0
        %7786 = vmatpush1.bf16.msra.mxu0 0
        %7787 = vmatprep.subr.bf16.mxu0 0
        %7788 = vmatpush1.bf16.msra.mxu0 0
        %7789 = vmatprep.subr.bf16.mxu0 0
        %7790 = vmatpush1.bf16.msra.mxu0 0
        %7791 = vmatprep.subr.bf16.mxu0 0
        %7792 = vmatpush1.bf16.msra.mxu0 0
        %7793 = vmatprep.subr.bf16.mxu0 0
        %7794 = vmatpush1.bf16.msra.mxu0 0
        %7795 = vmatprep.subr.bf16.mxu0 0
        %7796 = vmatpush1.bf16.msra.mxu0 0
        %7797 = vmatprep.subr.bf16.mxu0 0
        %7798 = vmatpush1.bf16.msra.mxu0 0
        %7799 = vmatprep.subr.bf16.mxu0 0
        %7800 = vmatpush1.bf16.msra.mxu0 0
        %7801 = vmatprep.mubr.bf16.mxu0 0
        %7802 = vmatmul.mubr.bf16.gmra.mrb[0].mxu0 %v7767
        %v7803 = vpop.f32.mrb[0].mxu0
        %v7804 = vadd.f32 0.0, %v7803
        %v7805 = vpop.f32.mrb[0].mxu0
        %v7806 = vpop.f32.mrb[0].mxu0
        %v7807 = vadd.f32 0.0, %v7806
        %v7808 = vpop.f32.mrb[0].mxu0
        %7809 = vdwg.mxu0
        %7810 = vrot.lane.b32.xlu0 %v2084, 64
        %v7811 = vpop.permute.xlu0 %7810
        %v7814 = vsel %vm2855, %v7702, 0
        %7816 = vmatprep.subr.bf16.mxu0 0
        %7817 = vmatpush1.bf16.msra.mxu0 %v7811
        %7818 = vmatprep.subr.bf16.mxu0 0
        %7819 = vmatpush1.bf16.msra.mxu0 0
        %7820 = vmatprep.subr.bf16.mxu0 0
        %7821 = vmatpush1.bf16.msra.mxu0 0
        %7822 = vmatprep.subr.bf16.mxu0 0
        %7823 = vmatpush1.bf16.msra.mxu0 0
        %7824 = vmatprep.subr.bf16.mxu0 0
        %7825 = vmatpush1.bf16.msra.mxu0 0
        %7826 = vmatprep.subr.bf16.mxu0 0
        %7827 = vmatpush1.bf16.msra.mxu0 0
        %7828 = vmatprep.subr.bf16.mxu0 0
        %7829 = vmatpush1.bf16.msra.mxu0 0
        %7830 = vmatprep.subr.bf16.mxu0 0
        %7831 = vmatpush1.bf16.msra.mxu0 0
        %7832 = vmatprep.subr.bf16.mxu0 0
        %7833 = vmatpush1.bf16.msra.mxu0 0
        %7834 = vmatprep.subr.bf16.mxu0 0
        %7835 = vmatpush1.bf16.msra.mxu0 0
        %7836 = vmatprep.subr.bf16.mxu0 0
        %7837 = vmatpush1.bf16.msra.mxu0 0
        %7838 = vmatprep.subr.bf16.mxu0 0
        %7839 = vmatpush1.bf16.msra.mxu0 0
        %7840 = vmatprep.subr.bf16.mxu0 0
        %7841 = vmatpush1.bf16.msra.mxu0 0
        %7842 = vmatprep.subr.bf16.mxu0 0
        %7843 = vmatpush1.bf16.msra.mxu0 0
        %7844 = vmatprep.subr.bf16.mxu0 0
        %7845 = vmatpush1.bf16.msra.mxu0 0
        %7846 = vmatprep.subr.bf16.mxu0 0
        %7847 = vmatpush1.bf16.msra.mxu0 0
        %7848 = vmatprep.mubr.bf16.mxu0 0
        %7849 = vmatmul.mubr.bf16.gmra.mrb[0].mxu0 %v7814
        %v7850 = vpop.f32.mrb[0].mxu0
        %v7851 = vadd.f32 0.0, %v7850
        %v7852 = vpop.f32.mrb[0].mxu0
        %v7853 = vpop.f32.mrb[0].mxu0
        %v7854 = vadd.f32 0.0, %v7853
        %v7855 = vpop.f32.mrb[0].mxu0
        %7856 = vdwg.mxu0
        %7857 = vrot.lane.b32.xlu0 %v2085, 64
        %v7858 = vpop.permute.xlu0 %7857
        %v7861 = vsel %vm2855, %v7703, 0
        %7863 = vmatprep.subr.bf16.mxu0 0
        %7864 = vmatpush1.bf16.msra.mxu0 %v7858
        %7865 = vmatprep.subr.bf16.mxu0 0
        %7866 = vmatpush1.bf16.msra.mxu0 0
        %7867 = vmatprep.subr.bf16.mxu0 0
        %7868 = vmatpush1.bf16.msra.mxu0 0
        %7869 = vmatprep.subr.bf16.mxu0 0
        %7870 = vmatpush1.bf16.msra.mxu0 0
        %7871 = vmatprep.subr.bf16.mxu0 0
        %7872 = vmatpush1.bf16.msra.mxu0 0
        %7873 = vmatprep.subr.bf16.mxu0 0
        %7874 = vmatpush1.bf16.msra.mxu0 0
        %7875 = vmatprep.subr.bf16.mxu0 0
        %7876 = vmatpush1.bf16.msra.mxu0 0
        %7877 = vmatprep.subr.bf16.mxu0 0
        %7878 = vmatpush1.bf16.msra.mxu0 0
        %7879 = vmatprep.subr.bf16.mxu0 0
        %7880 = vmatpush1.bf16.msra.mxu0 0
        %7881 = vmatprep.subr.bf16.mxu0 0
        %7882 = vmatpush1.bf16.msra.mxu0 0
        %7883 = vmatprep.subr.bf16.mxu0 0
        %7884 = vmatpush1.bf16.msra.mxu0 0
        %7885 = vmatprep.subr.bf16.mxu0 0
        %7886 = vmatpush1.bf16.msra.mxu0 0
        %7887 = vmatprep.subr.bf16.mxu0 0
        %7888 = vmatpush1.bf16.msra.mxu0 0
        %7889 = vmatprep.subr.bf16.mxu0 0
        %7890 = vmatpush1.bf16.msra.mxu0 0
        %7891 = vmatprep.subr.bf16.mxu0 0
        %7892 = vmatpush1.bf16.msra.mxu0 0
        %7893 = vmatprep.subr.bf16.mxu0 0
        %7894 = vmatpush1.bf16.msra.mxu0 0
        %7895 = vmatprep.mubr.bf16.mxu0 0
        %7896 = vmatmul.mubr.bf16.gmra.mrb[0].mxu0 %v7861
        %v7897 = vpop.f32.mrb[0].mxu0
        %v7898 = vadd.f32 0.0, %v7897
        %v7899 = vpop.f32.mrb[0].mxu0
        %v7900 = vpop.f32.mrb[0].mxu0
        %v7901 = vadd.f32 0.0, %v7900
        %v7902 = vpop.f32.mrb[0].mxu0
        %7903 = vdwg.mxu0
        %7904 = vrot.lane.b32.xlu0 %v2086, 64
        %v7905 = vpop.permute.xlu0 %7904
        %v7908 = vsel %vm2855, %v7704, 0
        %7910 = vmatprep.subr.bf16.mxu0 0
        %7911 = vmatpush1.bf16.msra.mxu0 %v7905
        %7912 = vmatprep.subr.bf16.mxu0 0
        %7913 = vmatpush1.bf16.msra.mxu0 0
        %7914 = vmatprep.subr.bf16.mxu0 0
        %7915 = vmatpush1.bf16.msra.mxu0 0
        %7916 = vmatprep.subr.bf16.mxu0 0
        %7917 = vmatpush1.bf16.msra.mxu0 0
        %7918 = vmatprep.subr.bf16.mxu0 0
        %7919 = vmatpush1.bf16.msra.mxu0 0
        %7920 = vmatprep.subr.bf16.mxu0 0
        %7921 = vmatpush1.bf16.msra.mxu0 0
        %7922 = vmatprep.subr.bf16.mxu0 0
        %7923 = vmatpush1.bf16.msra.mxu0 0
        %7924 = vmatprep.subr.bf16.mxu0 0
        %7925 = vmatpush1.bf16.msra.mxu0 0
        %7926 = vmatprep.subr.bf16.mxu0 0
        %7927 = vmatpush1.bf16.msra.mxu0 0
        %7928 = vmatprep.subr.bf16.mxu0 0
        %7929 = vmatpush1.bf16.msra.mxu0 0
        %7930 = vmatprep.subr.bf16.mxu0 0
        %7931 = vmatpush1.bf16.msra.mxu0 0
        %7932 = vmatprep.subr.bf16.mxu0 0
        %7933 = vmatpush1.bf16.msra.mxu0 0
        %7934 = vmatprep.subr.bf16.mxu0 0
        %7935 = vmatpush1.bf16.msra.mxu0 0
        %7936 = vmatprep.subr.bf16.mxu0 0
        %7937 = vmatpush1.bf16.msra.mxu0 0
        %7938 = vmatprep.subr.bf16.mxu0 0
        %7939 = vmatpush1.bf16.msra.mxu0 0
        %7940 = vmatprep.subr.bf16.mxu0 0
        %7941 = vmatpush1.bf16.msra.mxu0 0
        %7942 = vmatprep.mubr.bf16.mxu0 0
        %7943 = vmatmul.mubr.bf16.gmra.mrb[0].mxu0 %v7908
        %v7944 = vpop.f32.mrb[0].mxu0
        %v7945 = vadd.f32 0.0, %v7944
        %v7946 = vpop.f32.mrb[0].mxu0
        %v7947 = vpop.f32.mrb[0].mxu0
        %v7948 = vadd.f32 0.0, %v7947
        %v7949 = vpop.f32.mrb[0].mxu0
        %7950 = vdwg.mxu0
        %7951 = vrot.lane.b32.xlu0 %v2087, 64
        %v7952 = vpop.permute.xlu0 %7951
        %v7955 = vsel %vm2855, %v7705, 0
        %7957 = vmatprep.subr.bf16.mxu0 0
        %7958 = vmatpush1.bf16.msra.mxu0 %v7952
        %7959 = vmatprep.subr.bf16.mxu0 0
        %7960 = vmatpush1.bf16.msra.mxu0 0
        %7961 = vmatprep.subr.bf16.mxu0 0
        %7962 = vmatpush1.bf16.msra.mxu0 0
        %7963 = vmatprep.subr.bf16.mxu0 0
        %7964 = vmatpush1.bf16.msra.mxu0 0
        %7965 = vmatprep.subr.bf16.mxu0 0
        %7966 = vmatpush1.bf16.msra.mxu0 0
        %7967 = vmatprep.subr.bf16.mxu0 0
        %7968 = vmatpush1.bf16.msra.mxu0 0
        %7969 = vmatprep.subr.bf16.mxu0 0
        %7970 = vmatpush1.bf16.msra.mxu0 0
        %7971 = vmatprep.subr.bf16.mxu0 0
        %7972 = vmatpush1.bf16.msra.mxu0 0
        %7973 = vmatprep.subr.bf16.mxu0 0
        %7974 = vmatpush1.bf16.msra.mxu0 0
        %7975 = vmatprep.subr.bf16.mxu0 0
        %7976 = vmatpush1.bf16.msra.mxu0 0
        %7977 = vmatprep.subr.bf16.mxu0 0
        %7978 = vmatpush1.bf16.msra.mxu0 0
        %7979 = vmatprep.subr.bf16.mxu0 0
        %7980 = vmatpush1.bf16.msra.mxu0 0
        %7981 = vmatprep.subr.bf16.mxu0 0
        %7982 = vmatpush1.bf16.msra.mxu0 0
        %7983 = vmatprep.subr.bf16.mxu0 0
        %7984 = vmatpush1.bf16.msra.mxu0 0
        %7985 = vmatprep.subr.bf16.mxu0 0
        %7986 = vmatpush1.bf16.msra.mxu0 0
        %7987 = vmatprep.subr.bf16.mxu0 0
        %7988 = vmatpush1.bf16.msra.mxu0 0
        %7989 = vmatprep.mubr.bf16.mxu0 0
        %7990 = vmatmul.mubr.bf16.gmra.mrb[0].mxu0 %v7955
        %v7991 = vpop.f32.mrb[0].mxu0
        %v7992 = vadd.f32 0.0, %v7991
        %v7993 = vpop.f32.mrb[0].mxu0
        %v7994 = vpop.f32.mrb[0].mxu0
        %v7995 = vadd.f32 0.0, %v7994
        %v7996 = vpop.f32.mrb[0].mxu0
        %7997 = vdwg.mxu0
        %7998 = vrot.lane.b32.xlu0 %v2088, 64
        %v7999 = vpop.permute.xlu0 %7998
        %v8002 = vsel %vm2855, %v7706, 0
        %8004 = vmatprep.subr.bf16.mxu0 0
        %8005 = vmatpush1.bf16.msra.mxu0 %v7999
        %8006 = vmatprep.subr.bf16.mxu0 0
        %8007 = vmatpush1.bf16.msra.mxu0 0
        %8008 = vmatprep.subr.bf16.mxu0 0
        %8009 = vmatpush1.bf16.msra.mxu0 0
        %8010 = vmatprep.subr.bf16.mxu0 0
        %8011 = vmatpush1.bf16.msra.mxu0 0
        %8012 = vmatprep.subr.bf16.mxu0 0
        %8013 = vmatpush1.bf16.msra.mxu0 0
        %8014 = vmatprep.subr.bf16.mxu0 0
        %8015 = vmatpush1.bf16.msra.mxu0 0
        %8016 = vmatprep.subr.bf16.mxu0 0
        %8017 = vmatpush1.bf16.msra.mxu0 0
        %8018 = vmatprep.subr.bf16.mxu0 0
        %8019 = vmatpush1.bf16.msra.mxu0 0
        %8020 = vmatprep.subr.bf16.mxu0 0
        %8021 = vmatpush1.bf16.msra.mxu0 0
        %8022 = vmatprep.subr.bf16.mxu0 0
        %8023 = vmatpush1.bf16.msra.mxu0 0
        %8024 = vmatprep.subr.bf16.mxu0 0
        %8025 = vmatpush1.bf16.msra.mxu0 0
        %8026 = vmatprep.subr.bf16.mxu0 0
        %8027 = vmatpush1.bf16.msra.mxu0 0
        %8028 = vmatprep.subr.bf16.mxu0 0
        %8029 = vmatpush1.bf16.msra.mxu0 0
        %8030 = vmatprep.subr.bf16.mxu0 0
        %8031 = vmatpush1.bf16.msra.mxu0 0
        %8032 = vmatprep.subr.bf16.mxu0 0
        %8033 = vmatpush1.bf16.msra.mxu0 0
        %8034 = vmatprep.subr.bf16.mxu0 0
        %8035 = vmatpush1.bf16.msra.mxu0 0
        %8036 = vmatprep.mubr.bf16.mxu0 0
        %8037 = vmatmul.mubr.bf16.gmra.mrb[0].mxu0 %v8002
        %v8038 = vpop.f32.mrb[0].mxu0
        %v8039 = vadd.f32 0.0, %v8038
        %v8040 = vpop.f32.mrb[0].mxu0
        %v8041 = vpop.f32.mrb[0].mxu0
        %v8042 = vadd.f32 0.0, %v8041
        %v8043 = vpop.f32.mrb[0].mxu0
        %8044 = vdwg.mxu0
        %8045 = vrot.lane.b32.xlu0 %v2089, 64
        %v8046 = vpop.permute.xlu0 %8045
        %v8049 = vsel %vm2855, %v7707, 0
        %8051 = vmatprep.subr.bf16.mxu0 0
        %8052 = vmatpush1.bf16.msra.mxu0 %v8046
        %8053 = vmatprep.subr.bf16.mxu0 0
        %8054 = vmatpush1.bf16.msra.mxu0 0
        %8055 = vmatprep.subr.bf16.mxu0 0
        %8056 = vmatpush1.bf16.msra.mxu0 0
        %8057 = vmatprep.subr.bf16.mxu0 0
        %8058 = vmatpush1.bf16.msra.mxu0 0
        %8059 = vmatprep.subr.bf16.mxu0 0
        %8060 = vmatpush1.bf16.msra.mxu0 0
        %8061 = vmatprep.subr.bf16.mxu0 0
        %8062 = vmatpush1.bf16.msra.mxu0 0
        %8063 = vmatprep.subr.bf16.mxu0 0
        %8064 = vmatpush1.bf16.msra.mxu0 0
        %8065 = vmatprep.subr.bf16.mxu0 0
        %8066 = vmatpush1.bf16.msra.mxu0 0
        %8067 = vmatprep.subr.bf16.mxu0 0
        %8068 = vmatpush1.bf16.msra.mxu0 0
        %8069 = vmatprep.subr.bf16.mxu0 0
        %8070 = vmatpush1.bf16.msra.mxu0 0
        %8071 = vmatprep.subr.bf16.mxu0 0
        %8072 = vmatpush1.bf16.msra.mxu0 0
        %8073 = vmatprep.subr.bf16.mxu0 0
        %8074 = vmatpush1.bf16.msra.mxu0 0
        %8075 = vmatprep.subr.bf16.mxu0 0
        %8076 = vmatpush1.bf16.msra.mxu0 0
        %8077 = vmatprep.subr.bf16.mxu0 0
        %8078 = vmatpush1.bf16.msra.mxu0 0
        %8079 = vmatprep.subr.bf16.mxu0 0
        %8080 = vmatpush1.bf16.msra.mxu0 0
        %8081 = vmatprep.subr.bf16.mxu0 0
        %8082 = vmatpush1.bf16.msra.mxu0 0
        %8083 = vmatprep.mubr.bf16.mxu0 0
        %8084 = vmatmul.mubr.bf16.gmra.mrb[0].mxu0 %v8049
        %v8085 = vpop.f32.mrb[0].mxu0
        %v8086 = vadd.f32 0.0, %v8085
        %v8087 = vpop.f32.mrb[0].mxu0
        %v8088 = vpop.f32.mrb[0].mxu0
        %v8089 = vadd.f32 0.0, %v8088
        %v8090 = vpop.f32.mrb[0].mxu0
        %8091 = vdwg.mxu0
        %8092 = vrot.lane.b32.xlu0 %v2090, 64
        %v8093 = vpop.permute.xlu0 %8092
        %v8096 = vsel %vm2855, %v7708, 0
        %8098 = vmatprep.subr.bf16.mxu0 0
        %8099 = vmatpush1.bf16.msra.mxu0 %v8093
        %8100 = vmatprep.subr.bf16.mxu0 0
        %8101 = vmatpush1.bf16.msra.mxu0 0
        %8102 = vmatprep.subr.bf16.mxu0 0
        %8103 = vmatpush1.bf16.msra.mxu0 0
        %8104 = vmatprep.subr.bf16.mxu0 0
        %8105 = vmatpush1.bf16.msra.mxu0 0
        %8106 = vmatprep.subr.bf16.mxu0 0
        %8107 = vmatpush1.bf16.msra.mxu0 0
        %8108 = vmatprep.subr.bf16.mxu0 0
        %8109 = vmatpush1.bf16.msra.mxu0 0
        %8110 = vmatprep.subr.bf16.mxu0 0
        %8111 = vmatpush1.bf16.msra.mxu0 0
        %8112 = vmatprep.subr.bf16.mxu0 0
        %8113 = vmatpush1.bf16.msra.mxu0 0
        %8114 = vmatprep.subr.bf16.mxu0 0
        %8115 = vmatpush1.bf16.msra.mxu0 0
        %8116 = vmatprep.subr.bf16.mxu0 0
        %8117 = vmatpush1.bf16.msra.mxu0 0
        %8118 = vmatprep.subr.bf16.mxu0 0
        %8119 = vmatpush1.bf16.msra.mxu0 0
        %8120 = vmatprep.subr.bf16.mxu0 0
        %8121 = vmatpush1.bf16.msra.mxu0 0
        %8122 = vmatprep.subr.bf16.mxu0 0
        %8123 = vmatpush1.bf16.msra.mxu0 0
        %8124 = vmatprep.subr.bf16.mxu0 0
        %8125 = vmatpush1.bf16.msra.mxu0 0
        %8126 = vmatprep.subr.bf16.mxu0 0
        %8127 = vmatpush1.bf16.msra.mxu0 0
        %8128 = vmatprep.subr.bf16.mxu0 0
        %8129 = vmatpush1.bf16.msra.mxu0 0
        %8130 = vmatprep.mubr.bf16.mxu0 0
        %8131 = vmatmul.mubr.bf16.gmra.mrb[0].mxu0 %v8096
        %v8132 = vpop.f32.mrb[0].mxu0
        %v8133 = vadd.f32 0.0, %v8132
        %v8134 = vpop.f32.mrb[0].mxu0
        %v8135 = vpop.f32.mrb[0].mxu0
        %v8136 = vadd.f32 0.0, %v8135
        %v8137 = vpop.f32.mrb[0].mxu0
        %8138 = vdwg.mxu0
        %8139 = vrot.lane.b32.xlu0 %v2091, 64
        %v8140 = vpop.permute.xlu0 %8139
        %v8143 = vsel %vm2855, %v7709, 0
        %8145 = vmatprep.subr.bf16.mxu0 0
        %8146 = vmatpush1.bf16.msra.mxu0 %v8140
        %8147 = vmatprep.subr.bf16.mxu0 0
        %8148 = vmatpush1.bf16.msra.mxu0 0
        %8149 = vmatprep.subr.bf16.mxu0 0
        %8150 = vmatpush1.bf16.msra.mxu0 0
        %8151 = vmatprep.subr.bf16.mxu0 0
        %8152 = vmatpush1.bf16.msra.mxu0 0
        %8153 = vmatprep.subr.bf16.mxu0 0
        %8154 = vmatpush1.bf16.msra.mxu0 0
        %8155 = vmatprep.subr.bf16.mxu0 0
        %8156 = vmatpush1.bf16.msra.mxu0 0
        %8157 = vmatprep.subr.bf16.mxu0 0
        %8158 = vmatpush1.bf16.msra.mxu0 0
        %8159 = vmatprep.subr.bf16.mxu0 0
        %8160 = vmatpush1.bf16.msra.mxu0 0
        %8161 = vmatprep.subr.bf16.mxu0 0
        %8162 = vmatpush1.bf16.msra.mxu0 0
        %8163 = vmatprep.subr.bf16.mxu0 0
        %8164 = vmatpush1.bf16.msra.mxu0 0
        %8165 = vmatprep.subr.bf16.mxu0 0
        %8166 = vmatpush1.bf16.msra.mxu0 0
        %8167 = vmatprep.subr.bf16.mxu0 0
        %8168 = vmatpush1.bf16.msra.mxu0 0
        %8169 = vmatprep.subr.bf16.mxu0 0
        %8170 = vmatpush1.bf16.msra.mxu0 0
        %8171 = vmatprep.subr.bf16.mxu0 0
        %8172 = vmatpush1.bf16.msra.mxu0 0
        %8173 = vmatprep.subr.bf16.mxu0 0
        %8174 = vmatpush1.bf16.msra.mxu0 0
        %8175 = vmatprep.subr.bf16.mxu0 0
        %8176 = vmatpush1.bf16.msra.mxu0 0
        %8177 = vmatprep.mubr.bf16.mxu0 0
        %8178 = vmatmul.mubr.bf16.gmra.mrb[0].mxu0 %v8143
        %v8179 = vpop.f32.mrb[0].mxu0
        %v8180 = vadd.f32 0.0, %v8179
        %v8181 = vpop.f32.mrb[0].mxu0
        %v8182 = vpop.f32.mrb[0].mxu0
        %v8183 = vadd.f32 0.0, %v8182
        %v8184 = vpop.f32.mrb[0].mxu0
        %8185 = vdwg.mxu0
        %8186 = vrot.lane.b32.xlu0 %v2092, 64
        %v8187 = vpop.permute.xlu0 %8186
        %v8190 = vsel %vm2855, %v7710, 0
        %8192 = vmatprep.subr.bf16.mxu0 0
        %8193 = vmatpush1.bf16.msra.mxu0 %v8187
        %8194 = vmatprep.subr.bf16.mxu0 0
        %8195 = vmatpush1.bf16.msra.mxu0 0
        %8196 = vmatprep.subr.bf16.mxu0 0
        %8197 = vmatpush1.bf16.msra.mxu0 0
        %8198 = vmatprep.subr.bf16.mxu0 0
        %8199 = vmatpush1.bf16.msra.mxu0 0
        %8200 = vmatprep.subr.bf16.mxu0 0
        %8201 = vmatpush1.bf16.msra.mxu0 0
        %8202 = vmatprep.subr.bf16.mxu0 0
        %8203 = vmatpush1.bf16.msra.mxu0 0
        %8204 = vmatprep.subr.bf16.mxu0 0
        %8205 = vmatpush1.bf16.msra.mxu0 0
        %8206 = vmatprep.subr.bf16.mxu0 0
        %8207 = vmatpush1.bf16.msra.mxu0 0
        %8208 = vmatprep.subr.bf16.mxu0 0
        %8209 = vmatpush1.bf16.msra.mxu0 0
        %8210 = vmatprep.subr.bf16.mxu0 0
        %8211 = vmatpush1.bf16.msra.mxu0 0
        %8212 = vmatprep.subr.bf16.mxu0 0
        %8213 = vmatpush1.bf16.msra.mxu0 0
        %8214 = vmatprep.subr.bf16.mxu0 0
        %8215 = vmatpush1.bf16.msra.mxu0 0
        %8216 = vmatprep.subr.bf16.mxu0 0
        %8217 = vmatpush1.bf16.msra.mxu0 0
        %8218 = vmatprep.subr.bf16.mxu0 0
        %8219 = vmatpush1.bf16.msra.mxu0 0
        %8220 = vmatprep.subr.bf16.mxu0 0
        %8221 = vmatpush1.bf16.msra.mxu0 0
        %8222 = vmatprep.subr.bf16.mxu0 0
        %8223 = vmatpush1.bf16.msra.mxu0 0
        %8224 = vmatprep.mubr.bf16.mxu0 0
        %8225 = vmatmul.mubr.bf16.gmra.mrb[0].mxu0 %v8190
        %v8226 = vpop.f32.mrb[0].mxu0
        %v8227 = vadd.f32 0.0, %v8226
        %v8228 = vpop.f32.mrb[0].mxu0
        %v8229 = vpop.f32.mrb[0].mxu0
        %v8230 = vadd.f32 0.0, %v8229
        %v8231 = vpop.f32.mrb[0].mxu0
        %8232 = vdwg.mxu0
        %8233 = vrot.lane.b32.xlu0 %v2093, 64
        %v8234 = vpop.permute.xlu0 %8233
        %v8237 = vsel %vm2855, %v7711, 0
        %8239 = vmatprep.subr.bf16.mxu0 0
        %8240 = vmatpush1.bf16.msra.mxu0 %v8234
        %8241 = vmatprep.subr.bf16.mxu0 0
        %8242 = vmatpush1.bf16.msra.mxu0 0
        %8243 = vmatprep.subr.bf16.mxu0 0
        %8244 = vmatpush1.bf16.msra.mxu0 0
        %8245 = vmatprep.subr.bf16.mxu0 0
        %8246 = vmatpush1.bf16.msra.mxu0 0
        %8247 = vmatprep.subr.bf16.mxu0 0
        %8248 = vmatpush1.bf16.msra.mxu0 0
        %8249 = vmatprep.subr.bf16.mxu0 0
        %8250 = vmatpush1.bf16.msra.mxu0 0
        %8251 = vmatprep.subr.bf16.mxu0 0
        %8252 = vmatpush1.bf16.msra.mxu0 0
        %8253 = vmatprep.subr.bf16.mxu0 0
        %8254 = vmatpush1.bf16.msra.mxu0 0
        %8255 = vmatprep.subr.bf16.mxu0 0
        %8256 = vmatpush1.bf16.msra.mxu0 0
        %8257 = vmatprep.subr.bf16.mxu0 0
        %8258 = vmatpush1.bf16.msra.mxu0 0
        %8259 = vmatprep.subr.bf16.mxu0 0
        %8260 = vmatpush1.bf16.msra.mxu0 0
        %8261 = vmatprep.subr.bf16.mxu0 0
        %8262 = vmatpush1.bf16.msra.mxu0 0
        %8263 = vmatprep.subr.bf16.mxu0 0
        %8264 = vmatpush1.bf16.msra.mxu0 0
        %8265 = vmatprep.subr.bf16.mxu0 0
        %8266 = vmatpush1.bf16.msra.mxu0 0
        %8267 = vmatprep.subr.bf16.mxu0 0
        %8268 = vmatpush1.bf16.msra.mxu0 0
        %8269 = vmatprep.subr.bf16.mxu0 0
        %8270 = vmatpush1.bf16.msra.mxu0 0
        %8271 = vmatprep.mubr.bf16.mxu0 0
        %8272 = vmatmul.mubr.bf16.gmra.mrb[0].mxu0 %v8237
        %v8273 = vpop.f32.mrb[0].mxu0
        %v8274 = vadd.f32 0.0, %v8273
        %v8275 = vpop.f32.mrb[0].mxu0
        %v8276 = vpop.f32.mrb[0].mxu0
        %v8277 = vadd.f32 0.0, %v8276
        %v8278 = vpop.f32.mrb[0].mxu0
        %8279 = vdwg.mxu0
        %8280 = vrot.lane.b32.xlu0 %v2094, 64
        %v8281 = vpop.permute.xlu0 %8280
        %v8284 = vsel %vm2855, %v7712, 0
        %8286 = vmatprep.subr.bf16.mxu0 0
        %8287 = vmatpush1.bf16.msra.mxu0 %v8281
        %8288 = vmatprep.subr.bf16.mxu0 0
        %8289 = vmatpush1.bf16.msra.mxu0 0
        %8290 = vmatprep.subr.bf16.mxu0 0
        %8291 = vmatpush1.bf16.msra.mxu0 0
        %8292 = vmatprep.subr.bf16.mxu0 0
        %8293 = vmatpush1.bf16.msra.mxu0 0
        %8294 = vmatprep.subr.bf16.mxu0 0
        %8295 = vmatpush1.bf16.msra.mxu0 0
        %8296 = vmatprep.subr.bf16.mxu0 0
        %8297 = vmatpush1.bf16.msra.mxu0 0
        %8298 = vmatprep.subr.bf16.mxu0 0
        %8299 = vmatpush1.bf16.msra.mxu0 0
        %8300 = vmatprep.subr.bf16.mxu0 0
        %8301 = vmatpush1.bf16.msra.mxu0 0
        %8302 = vmatprep.subr.bf16.mxu0 0
        %8303 = vmatpush1.bf16.msra.mxu0 0
        %8304 = vmatprep.subr.bf16.mxu0 0
        %8305 = vmatpush1.bf16.msra.mxu0 0
        %8306 = vmatprep.subr.bf16.mxu0 0
        %8307 = vmatpush1.bf16.msra.mxu0 0
        %8308 = vmatprep.subr.bf16.mxu0 0
        %8309 = vmatpush1.bf16.msra.mxu0 0
        %8310 = vmatprep.subr.bf16.mxu0 0
        %8311 = vmatpush1.bf16.msra.mxu0 0
        %8312 = vmatprep.subr.bf16.mxu0 0
        %8313 = vmatpush1.bf16.msra.mxu0 0
        %8314 = vmatprep.subr.bf16.mxu0 0
        %8315 = vmatpush1.bf16.msra.mxu0 0
        %8316 = vmatprep.subr.bf16.mxu0 0
        %8317 = vmatpush1.bf16.msra.mxu0 0
        %8318 = vmatprep.mubr.bf16.mxu0 0
        %8319 = vmatmul.mubr.bf16.gmra.mrb[0].mxu0 %v8284
        %v8320 = vpop.f32.mrb[0].mxu0
        %v8321 = vadd.f32 0.0, %v8320
        %v8322 = vpop.f32.mrb[0].mxu0
        %v8323 = vpop.f32.mrb[0].mxu0
        %v8324 = vadd.f32 0.0, %v8323
        %v8325 = vpop.f32.mrb[0].mxu0
        %8326 = vdwg.mxu0
        %8327 = vrot.lane.b32.xlu0 %v2095, 64
        %v8328 = vpop.permute.xlu0 %8327
        %v8331 = vsel %vm2855, %v7713, 0
        %8333 = vmatprep.subr.bf16.mxu0 0
        %8334 = vmatpush1.bf16.msra.mxu0 %v8328
        %8335 = vmatprep.subr.bf16.mxu0 0
        %8336 = vmatpush1.bf16.msra.mxu0 0
        %8337 = vmatprep.subr.bf16.mxu0 0
        %8338 = vmatpush1.bf16.msra.mxu0 0
        %8339 = vmatprep.subr.bf16.mxu0 0
        %8340 = vmatpush1.bf16.msra.mxu0 0
        %8341 = vmatprep.subr.bf16.mxu0 0
        %8342 = vmatpush1.bf16.msra.mxu0 0
        %8343 = vmatprep.subr.bf16.mxu0 0
        %8344 = vmatpush1.bf16.msra.mxu0 0
        %8345 = vmatprep.subr.bf16.mxu0 0
        %8346 = vmatpush1.bf16.msra.mxu0 0
        %8347 = vmatprep.subr.bf16.mxu0 0
        %8348 = vmatpush1.bf16.msra.mxu0 0
        %8349 = vmatprep.subr.bf16.mxu0 0
        %8350 = vmatpush1.bf16.msra.mxu0 0
        %8351 = vmatprep.subr.bf16.mxu0 0
        %8352 = vmatpush1.bf16.msra.mxu0 0
        %8353 = vmatprep.subr.bf16.mxu0 0
        %8354 = vmatpush1.bf16.msra.mxu0 0
        %8355 = vmatprep.subr.bf16.mxu0 0
        %8356 = vmatpush1.bf16.msra.mxu0 0
        %8357 = vmatprep.subr.bf16.mxu0 0
        %8358 = vmatpush1.bf16.msra.mxu0 0
        %8359 = vmatprep.subr.bf16.mxu0 0
        %8360 = vmatpush1.bf16.msra.mxu0 0
        %8361 = vmatprep.subr.bf16.mxu0 0
        %8362 = vmatpush1.bf16.msra.mxu0 0
        %8363 = vmatprep.subr.bf16.mxu0 0
        %8364 = vmatpush1.bf16.msra.mxu0 0
        %8365 = vmatprep.mubr.bf16.mxu0 0
        %8366 = vmatmul.mubr.bf16.gmra.mrb[0].mxu0 %v8331
        %v8367 = vpop.f32.mrb[0].mxu0
        %v8368 = vadd.f32 0.0, %v8367
        %v8369 = vpop.f32.mrb[0].mxu0
        %v8370 = vpop.f32.mrb[0].mxu0
        %v8371 = vadd.f32 0.0, %v8370
        %v8372 = vpop.f32.mrb[0].mxu0
        %8373 = vdwg.mxu0
        %8374 = vrot.lane.b32.xlu0 %v2096, 64
        %v8375 = vpop.permute.xlu0 %8374
        %v8378 = vsel %vm2855, %v7714, 0
        %8380 = vmatprep.subr.bf16.mxu0 0
        %8381 = vmatpush1.bf16.msra.mxu0 %v8375
        %8382 = vmatprep.subr.bf16.mxu0 0
        %8383 = vmatpush1.bf16.msra.mxu0 0
        %8384 = vmatprep.subr.bf16.mxu0 0
        %8385 = vmatpush1.bf16.msra.mxu0 0
        %8386 = vmatprep.subr.bf16.mxu0 0
        %8387 = vmatpush1.bf16.msra.mxu0 0
        %8388 = vmatprep.subr.bf16.mxu0 0
        %8389 = vmatpush1.bf16.msra.mxu0 0
        %8390 = vmatprep.subr.bf16.mxu0 0
        %8391 = vmatpush1.bf16.msra.mxu0 0
        %8392 = vmatprep.subr.bf16.mxu0 0
        %8393 = vmatpush1.bf16.msra.mxu0 0
        %8394 = vmatprep.subr.bf16.mxu0 0
        %8395 = vmatpush1.bf16.msra.mxu0 0
        %8396 = vmatprep.subr.bf16.mxu0 0
        %8397 = vmatpush1.bf16.msra.mxu0 0
        %8398 = vmatprep.subr.bf16.mxu0 0
        %8399 = vmatpush1.bf16.msra.mxu0 0
        %8400 = vmatprep.subr.bf16.mxu0 0
        %8401 = vmatpush1.bf16.msra.mxu0 0
        %8402 = vmatprep.subr.bf16.mxu0 0
        %8403 = vmatpush1.bf16.msra.mxu0 0
        %8404 = vmatprep.subr.bf16.mxu0 0
        %8405 = vmatpush1.bf16.msra.mxu0 0
        %8406 = vmatprep.subr.bf16.mxu0 0
        %8407 = vmatpush1.bf16.msra.mxu0 0
        %8408 = vmatprep.subr.bf16.mxu0 0
        %8409 = vmatpush1.bf16.msra.mxu0 0
        %8410 = vmatprep.subr.bf16.mxu0 0
        %8411 = vmatpush1.bf16.msra.mxu0 0
        %8412 = vmatprep.mubr.bf16.mxu0 0
        %8413 = vmatmul.mubr.bf16.gmra.mrb[0].mxu0 %v8378
        %v8414 = vpop.f32.mrb[0].mxu0
        %v8415 = vadd.f32 0.0, %v8414
        %v8416 = vpop.f32.mrb[0].mxu0
        %v8417 = vpop.f32.mrb[0].mxu0
        %v8418 = vadd.f32 0.0, %v8417
        %v8419 = vpop.f32.mrb[0].mxu0
        %8420 = vdwg.mxu0
        %8421 = vrot.lane.b32.xlu0 %v2097, 64
        %v8422 = vpop.permute.xlu0 %8421
        %v8425 = vsel %vm2855, %v7715, 0
        %8427 = vmatprep.subr.bf16.mxu0 0
        %8428 = vmatpush1.bf16.msra.mxu0 %v8422
        %8429 = vmatprep.subr.bf16.mxu0 0
        %8430 = vmatpush1.bf16.msra.mxu0 0
        %8431 = vmatprep.subr.bf16.mxu0 0
        %8432 = vmatpush1.bf16.msra.mxu0 0
        %8433 = vmatprep.subr.bf16.mxu0 0
        %8434 = vmatpush1.bf16.msra.mxu0 0
        %8435 = vmatprep.subr.bf16.mxu0 0
        %8436 = vmatpush1.bf16.msra.mxu0 0
        %8437 = vmatprep.subr.bf16.mxu0 0
        %8438 = vmatpush1.bf16.msra.mxu0 0
        %8439 = vmatprep.subr.bf16.mxu0 0
        %8440 = vmatpush1.bf16.msra.mxu0 0
        %8441 = vmatprep.subr.bf16.mxu0 0
        %8442 = vmatpush1.bf16.msra.mxu0 0
        %8443 = vmatprep.subr.bf16.mxu0 0
        %8444 = vmatpush1.bf16.msra.mxu0 0
        %8445 = vmatprep.subr.bf16.mxu0 0
        %8446 = vmatpush1.bf16.msra.mxu0 0
        %8447 = vmatprep.subr.bf16.mxu0 0
        %8448 = vmatpush1.bf16.msra.mxu0 0
        %8449 = vmatprep.subr.bf16.mxu0 0
        %8450 = vmatpush1.bf16.msra.mxu0 0
        %8451 = vmatprep.subr.bf16.mxu0 0
        %8452 = vmatpush1.bf16.msra.mxu0 0
        %8453 = vmatprep.subr.bf16.mxu0 0
        %8454 = vmatpush1.bf16.msra.mxu0 0
        %8455 = vmatprep.subr.bf16.mxu0 0
        %8456 = vmatpush1.bf16.msra.mxu0 0
        %8457 = vmatprep.subr.bf16.mxu0 0
        %8458 = vmatpush1.bf16.msra.mxu0 0
        %8459 = vmatprep.mubr.bf16.mxu0 0
        %8460 = vmatmul.mubr.bf16.gmra.mrb[0].mxu0 %v8425
        %v8461 = vpop.f32.mrb[0].mxu0
        %v8462 = vadd.f32 0.0, %v8461
        %v8463 = vpop.f32.mrb[0].mxu0
        %v8464 = vpop.f32.mrb[0].mxu0
        %v8465 = vadd.f32 0.0, %v8464
        %v8466 = vpop.f32.mrb[0].mxu0
        %8467 = vdwg.mxu0
        %v8468 = vrcp.pop %v7606
        %v8469 = vrcp.pop %v7609
        %v8470 = vrcp.pop %v7612
        %v8471 = vrcp.pop %v7615
        %v8472 = vrcp.pop %v7618
        %v8473 = vrcp.pop %v7621
        %v8474 = vrcp.pop %v7624
        %v8475 = vrcp.pop %v7627
        %v8476 = vrcp.pop %v7630
        %v8477 = vrcp.pop %v7633
        %v8478 = vrcp.pop %v7636
        %v8479 = vrcp.pop %v7639
        %v8480 = vrcp.pop %v7642
        %v8481 = vrcp.pop %v7645
        %v8482 = vrcp.pop %v7648
        %v8483 = vrcp.pop %v7651
        %v8484 = vrcp.pop %v7654
        %v8485 = vrcp.pop %v7657
        %v8486 = vrcp.pop %v7660
        %v8487 = vrcp.pop %v7663
        %v8488 = vrcp.pop %v7666
        %v8489 = vrcp.pop %v7669
        %v8490 = vrcp.pop %v7672
        %v8491 = vrcp.pop %v7675
        %v8492 = vrcp.pop %v7678
        %v8493 = vrcp.pop %v7681
        %v8494 = vrcp.pop %v7684
        %v8495 = vrcp.pop %v7687
        %v8496 = vrcp.pop %v7690
        %v8497 = vrcp.pop %v7693
        %v8498 = vrcp.pop %v7696
        %v8499 = vrcp.pop %v7699
        %v8500 = vmul.f32 %v7757, %v8468
        %v8501 = vmul.f32 %v7760, %v8469
        %v8502 = vmul.f32 %v7804, %v8470
        %v8503 = vmul.f32 %v7807, %v8471
        %v8504 = vmul.f32 %v7851, %v8472
        %v8505 = vmul.f32 %v7854, %v8473
        %v8506 = vmul.f32 %v7898, %v8474
        %v8507 = vmul.f32 %v7901, %v8475
        %v8508 = vmul.f32 %v7945, %v8476
        %v8509 = vmul.f32 %v7948, %v8477
        %v8510 = vmul.f32 %v7992, %v8478
        %v8511 = vmul.f32 %v7995, %v8479
        %v8512 = vmul.f32 %v8039, %v8480
        %v8513 = vmul.f32 %v8042, %v8481
        %v8514 = vmul.f32 %v8086, %v8482
        %v8515 = vmul.f32 %v8089, %v8483
        %v8516 = vmul.f32 %v8133, %v8484
        %v8517 = vmul.f32 %v8136, %v8485
        %v8518 = vmul.f32 %v8180, %v8486
        %v8519 = vmul.f32 %v8183, %v8487
        %v8520 = vmul.f32 %v8227, %v8488
        %v8521 = vmul.f32 %v8230, %v8489
        %v8522 = vmul.f32 %v8274, %v8490
        %v8523 = vmul.f32 %v8277, %v8491
        %v8524 = vmul.f32 %v8321, %v8492
        %v8525 = vmul.f32 %v8324, %v8493
        %v8526 = vmul.f32 %v8368, %v8494
        %v8527 = vmul.f32 %v8371, %v8495
        %v8528 = vmul.f32 %v8415, %v8496
        %v8529 = vmul.f32 %v8418, %v8497
        %v8530 = vmul.f32 %v8462, %v8498
        %v8531 = vmul.f32 %v8465, %v8499
        %8532 = vrot.lane.b32.xlu0 %v1955, 64
        %v8533 = vpop.permute.xlu0 %8532
        %8534 = vrot.lane.b32.xlu0 %v1957, 64
        %v8535 = vpop.permute.xlu0 %8534
        %8536 = vrot.lane.b32.xlu0 %v1959, 64
        %v8537 = vpop.permute.xlu0 %8536
        %8538 = vrot.lane.b32.xlu0 %v1961, 64
        %v8539 = vpop.permute.xlu0 %8538
        %8540 = vrot.lane.b32.xlu0 %v1963, 64
        %v8541 = vpop.permute.xlu0 %8540
        %8542 = vrot.lane.b32.xlu0 %v1965, 64
        %v8543 = vpop.permute.xlu0 %8542
        %8544 = vrot.lane.b32.xlu0 %v1967, 64
        %v8545 = vpop.permute.xlu0 %8544
        %8546 = vrot.lane.b32.xlu0 %v1969, 64
        %v8547 = vpop.permute.xlu0 %8546
        %8548 = vrot.lane.b32.xlu0 %v1971, 64
        %v8549 = vpop.permute.xlu0 %8548
        %8550 = vrot.lane.b32.xlu0 %v1973, 64
        %v8551 = vpop.permute.xlu0 %8550
        %8552 = vrot.lane.b32.xlu0 %v1975, 64
        %v8553 = vpop.permute.xlu0 %8552
        %8554 = vrot.lane.b32.xlu0 %v1977, 64
        %v8555 = vpop.permute.xlu0 %8554
        %8556 = vrot.lane.b32.xlu0 %v1979, 64
        %v8557 = vpop.permute.xlu0 %8556
        %8558 = vrot.lane.b32.xlu0 %v1981, 64
        %v8559 = vpop.permute.xlu0 %8558
        %8560 = vrot.lane.b32.xlu0 %v1983, 64
        %v8561 = vpop.permute.xlu0 %8560
        %8562 = vrot.lane.b32.xlu0 %v1985, 64
        %v8563 = vpop.permute.xlu0 %8562
        %8564 = vrot.lane.b32.xlu0 %v1987, 64
        %v8565 = vpop.permute.xlu0 %8564
        %8566 = vrot.lane.b32.xlu0 %v1989, 64
        %v8567 = vpop.permute.xlu0 %8566
        %8568 = vrot.lane.b32.xlu0 %v1991, 64
        %v8569 = vpop.permute.xlu0 %8568
        %8570 = vrot.lane.b32.xlu0 %v1993, 64
        %v8571 = vpop.permute.xlu0 %8570
        %8572 = vrot.lane.b32.xlu0 %v1995, 64
        %v8573 = vpop.permute.xlu0 %8572
        %8574 = vrot.lane.b32.xlu0 %v1997, 64
        %v8575 = vpop.permute.xlu0 %8574
        %8576 = vrot.lane.b32.xlu0 %v1999, 64
        %v8577 = vpop.permute.xlu0 %8576
        %8578 = vrot.lane.b32.xlu0 %v2001, 64
        %v8579 = vpop.permute.xlu0 %8578
        %8580 = vrot.lane.b32.xlu0 %v2003, 64
        %v8581 = vpop.permute.xlu0 %8580
        %8582 = vrot.lane.b32.xlu0 %v2005, 64
        %v8583 = vpop.permute.xlu0 %8582
        %8584 = vrot.lane.b32.xlu0 %v2007, 64
        %v8585 = vpop.permute.xlu0 %8584
        %8586 = vrot.lane.b32.xlu0 %v2009, 64
        %v8587 = vpop.permute.xlu0 %8586
        %8588 = vrot.lane.b32.xlu0 %v2011, 64
        %v8589 = vpop.permute.xlu0 %8588
        %8590 = vrot.lane.b32.xlu0 %v2013, 64
        %v8591 = vpop.permute.xlu0 %8590
        %8592 = vrot.lane.b32.xlu0 %v2015, 64
        %v8593 = vpop.permute.xlu0 %8592
        %8594 = vrot.lane.b32.xlu0 %v2017, 64
        %v8595 = vpop.permute.xlu0 %8594
        %v8628 = vmul.f32 %v8500, %v8533
        %v8629 = vmul.f32 %v8501, %v8535
        %v8630 = vmul.f32 %v8502, %v8537
        %v8631 = vmul.f32 %v8503, %v8539
        %v8632 = vmul.f32 %v8504, %v8541
        %v8633 = vmul.f32 %v8505, %v8543
        %v8634 = vmul.f32 %v8506, %v8545
        %v8635 = vmul.f32 %v8507, %v8547
        %v8636 = vmul.f32 %v8508, %v8549
        %v8637 = vmul.f32 %v8509, %v8551
        %v8638 = vmul.f32 %v8510, %v8553
        %v8639 = vmul.f32 %v8511, %v8555
        %v8640 = vmul.f32 %v8512, %v8557
        %v8641 = vmul.f32 %v8513, %v8559
        %v8642 = vmul.f32 %v8514, %v8561
        %v8643 = vmul.f32 %v8515, %v8563
        %v8644 = vmul.f32 %v8516, %v8565
        %v8645 = vmul.f32 %v8517, %v8567
        %v8646 = vmul.f32 %v8518, %v8569
        %v8647 = vmul.f32 %v8519, %v8571
        %v8648 = vmul.f32 %v8520, %v8573
        %v8649 = vmul.f32 %v8521, %v8575
        %v8650 = vmul.f32 %v8522, %v8577
        %v8651 = vmul.f32 %v8523, %v8579
        %v8652 = vmul.f32 %v8524, %v8581
        %v8653 = vmul.f32 %v8525, %v8583
        %v8654 = vmul.f32 %v8526, %v8585
        %v8655 = vmul.f32 %v8527, %v8587
        %v8656 = vmul.f32 %v8528, %v8589
        %v8657 = vmul.f32 %v8529, %v8591
        %v8658 = vmul.f32 %v8530, %v8593
        %v8659 = vmul.f32 %v8531, %v8595
        %v8660 = vpack.c.bf16 %v8629, %v8628
        %v8661 = vpack.c.bf16 %v8631, %v8630
        %v8662 = vpack.c.bf16 %v8633, %v8632
        %v8663 = vpack.c.bf16 %v8635, %v8634
        %v8664 = vpack.c.bf16 %v8637, %v8636
        %v8665 = vpack.c.bf16 %v8639, %v8638
        %v8666 = vpack.c.bf16 %v8641, %v8640
        %v8667 = vpack.c.bf16 %v8643, %v8642
        %v8668 = vpack.c.bf16 %v8645, %v8644
        %v8669 = vpack.c.bf16 %v8647, %v8646
        %v8670 = vpack.c.bf16 %v8649, %v8648
        %v8671 = vpack.c.bf16 %v8651, %v8650
        %v8672 = vpack.c.bf16 %v8653, %v8652
        %v8673 = vpack.c.bf16 %v8655, %v8654
        %v8674 = vpack.c.bf16 %v8657, %v8656
        %v8675 = vpack.c.bf16 %v8659, %v8658
        %v8676 = vld [vmem:[%s9 + $0x20] sm:$0xf]
        %v8677 = vld [vmem:[%s9 + $0x24] sm:$0xf]
        %v8678 = vld [vmem:[%s9 + $0x28] sm:$0xf]
        %v8679 = vld [vmem:[%s9 + $0x2c] sm:$0xf]
        %v8684 = vunpack.c.l.b16 %v8676
        %v8685 = vunpack.c.l.b16 %v8677
        %v8686 = vunpack.c.l.b16 %v8678
        %v8687 = vunpack.c.l.b16 %v8679
        %v8688 = vpack.c.b16 %v8685, %v8684
        %v8689 = vpack.c.b16 %v8687, %v8686
        %v8693 = vsel %vm2102, %v8660, 0
        %v8696 = vsel %vm2102, %v8661, 0
        %v8699 = vsel %vm2102, %v8662, 0
        %v8702 = vsel %vm2102, %v8663, 0
        %v8705 = vsel %vm2102, %v8664, 0
        %v8708 = vsel %vm2102, %v8665, 0
        %v8711 = vsel %vm2102, %v8666, 0
        %v8714 = vsel %vm2102, %v8667, 0
        %v8717 = vsel %vm2102, %v8668, 0
        %v8720 = vsel %vm2102, %v8669, 0
        %v8723 = vsel %vm2102, %v8670, 0
        %v8726 = vsel %vm2102, %v8671, 0
        %v8729 = vsel %vm2102, %v8672, 0
        %v8732 = vsel %vm2102, %v8673, 0
        %v8735 = vsel %vm2102, %v8674, 0
        %v8738 = vsel %vm2102, %v8675, 0
        %8740 = vmatprep.subr.bf16.mxu0 0
        %8741 = vmatpush1.bf16.msra.mxu0 %v8688
        %8742 = vmatprep.subr.bf16.mxu0 0
        %8743 = vmatpush1.bf16.msra.mxu0 %v8689
        %8744 = vmatprep.subr.bf16.mxu0 0
        %8745 = vmatpush1.bf16.msra.mxu0 0
        %8746 = vmatprep.subr.bf16.mxu0 0
        %8747 = vmatpush1.bf16.msra.mxu0 0
        %8748 = vmatprep.subr.bf16.mxu0 0
        %8749 = vmatpush1.bf16.msra.mxu0 0
        %8750 = vmatprep.subr.bf16.mxu0 0
        %8751 = vmatpush1.bf16.msra.mxu0 0
        %8752 = vmatprep.subr.bf16.mxu0 0
        %8753 = vmatpush1.bf16.msra.mxu0 0
        %8754 = vmatprep.subr.bf16.mxu0 0
        %8755 = vmatpush1.bf16.msra.mxu0 0
        %8756 = vmatprep.subr.bf16.mxu0 0
        %8757 = vmatpush1.bf16.msra.mxu0 0
        %8758 = vmatprep.subr.bf16.mxu0 0
        %8759 = vmatpush1.bf16.msra.mxu0 0
        %8760 = vmatprep.subr.bf16.mxu0 0
        %8761 = vmatpush1.bf16.msra.mxu0 0
        %8762 = vmatprep.subr.bf16.mxu0 0
        %8763 = vmatpush1.bf16.msra.mxu0 0
        %8764 = vmatprep.subr.bf16.mxu0 0
        %8765 = vmatpush1.bf16.msra.mxu0 0
        %8766 = vmatprep.subr.bf16.mxu0 0
        %8767 = vmatpush1.bf16.msra.mxu0 0
        %8768 = vmatprep.subr.bf16.mxu0 0
        %8769 = vmatpush1.bf16.msra.mxu0 0
        %8770 = vmatprep.subr.bf16.mxu0 0
        %8771 = vmatpush1.bf16.msra.mxu0 0
        %8772 = vmatprep.mubr.bf16.mxu0 0
        %8773 = vmatmul.mubr.bf16.gmra.mrb[0].mxu0 %v8693
        %v8774 = vpop.f32.mrb[0].mxu0
        %v8775 = vadd.f32 0.0, %v8774
        %v8776 = vpop.f32.mrb[0].mxu0
        %v8777 = vpop.f32.mrb[0].mxu0
        %v8778 = vadd.f32 0.0, %v8777
        %v8779 = vpop.f32.mrb[0].mxu0
        %8780 = vmatprep.mubr.bf16.mxu0 0
        %8781 = vmatmul.mubr.bf16.gmra.mrb[0].mxu0 %v8696
        %v8782 = vpop.f32.mrb[0].mxu0
        %v8783 = vadd.f32 0.0, %v8782
        %v8784 = vpop.f32.mrb[0].mxu0
        %v8785 = vpop.f32.mrb[0].mxu0
        %v8786 = vadd.f32 0.0, %v8785
        %v8787 = vpop.f32.mrb[0].mxu0
        %8788 = vmatprep.mubr.bf16.mxu0 0
        %8789 = vmatmul.mubr.bf16.gmra.mrb[0].mxu0 %v8699
        %v8790 = vpop.f32.mrb[0].mxu0
        %v8791 = vadd.f32 0.0, %v8790
        %v8792 = vpop.f32.mrb[0].mxu0
        %v8793 = vpop.f32.mrb[0].mxu0
        %v8794 = vadd.f32 0.0, %v8793
        %v8795 = vpop.f32.mrb[0].mxu0
        %8796 = vmatprep.mubr.bf16.mxu0 0
        %8797 = vmatmul.mubr.bf16.gmra.mrb[0].mxu0 %v8702
        %v8798 = vpop.f32.mrb[0].mxu0
        %v8799 = vadd.f32 0.0, %v8798
        %v8800 = vpop.f32.mrb[0].mxu0
        %v8801 = vpop.f32.mrb[0].mxu0
        %v8802 = vadd.f32 0.0, %v8801
        %v8803 = vpop.f32.mrb[0].mxu0
        %8804 = vmatprep.mubr.bf16.mxu0 0
        %8805 = vmatmul.mubr.bf16.gmra.mrb[0].mxu0 %v8705
        %v8806 = vpop.f32.mrb[0].mxu0
        %v8807 = vadd.f32 0.0, %v8806
        %v8808 = vpop.f32.mrb[0].mxu0
        %v8809 = vpop.f32.mrb[0].mxu0
        %v8810 = vadd.f32 0.0, %v8809
        %v8811 = vpop.f32.mrb[0].mxu0
        %8812 = vmatprep.mubr.bf16.mxu0 0
        %8813 = vmatmul.mubr.bf16.gmra.mrb[0].mxu0 %v8708
        %v8814 = vpop.f32.mrb[0].mxu0
        %v8815 = vadd.f32 0.0, %v8814
        %v8816 = vpop.f32.mrb[0].mxu0
        %v8817 = vpop.f32.mrb[0].mxu0
        %v8818 = vadd.f32 0.0, %v8817
        %v8819 = vpop.f32.mrb[0].mxu0
        %8820 = vmatprep.mubr.bf16.mxu0 0
        %8821 = vmatmul.mubr.bf16.gmra.mrb[0].mxu0 %v8711
        %v8822 = vpop.f32.mrb[0].mxu0
        %v8823 = vadd.f32 0.0, %v8822
        %v8824 = vpop.f32.mrb[0].mxu0
        %v8825 = vpop.f32.mrb[0].mxu0
        %v8826 = vadd.f32 0.0, %v8825
        %v8827 = vpop.f32.mrb[0].mxu0
        %8828 = vmatprep.mubr.bf16.mxu0 0
        %8829 = vmatmul.mubr.bf16.gmra.mrb[0].mxu0 %v8714
        %v8830 = vpop.f32.mrb[0].mxu0
        %v8831 = vadd.f32 0.0, %v8830
        %v8832 = vpop.f32.mrb[0].mxu0
        %v8833 = vpop.f32.mrb[0].mxu0
        %v8834 = vadd.f32 0.0, %v8833
        %v8835 = vpop.f32.mrb[0].mxu0
        %8836 = vmatprep.mubr.bf16.mxu0 0
        %8837 = vmatmul.mubr.bf16.gmra.mrb[0].mxu0 %v8717
        %v8838 = vpop.f32.mrb[0].mxu0
        %v8839 = vadd.f32 0.0, %v8838
        %v8840 = vpop.f32.mrb[0].mxu0
        %v8841 = vpop.f32.mrb[0].mxu0
        %v8842 = vadd.f32 0.0, %v8841
        %v8843 = vpop.f32.mrb[0].mxu0
        %8844 = vmatprep.mubr.bf16.mxu0 0
        %8845 = vmatmul.mubr.bf16.gmra.mrb[0].mxu0 %v8720
        %v8846 = vpop.f32.mrb[0].mxu0
        %v8847 = vadd.f32 0.0, %v8846
        %v8848 = vpop.f32.mrb[0].mxu0
        %v8849 = vpop.f32.mrb[0].mxu0
        %v8850 = vadd.f32 0.0, %v8849
        %v8851 = vpop.f32.mrb[0].mxu0
        %8852 = vmatprep.mubr.bf16.mxu0 0
        %8853 = vmatmul.mubr.bf16.gmra.mrb[0].mxu0 %v8723
        %v8854 = vpop.f32.mrb[0].mxu0
        %v8855 = vadd.f32 0.0, %v8854
        %v8856 = vpop.f32.mrb[0].mxu0
        %v8857 = vpop.f32.mrb[0].mxu0
        %v8858 = vadd.f32 0.0, %v8857
        %v8859 = vpop.f32.mrb[0].mxu0
        %8860 = vmatprep.mubr.bf16.mxu0 0
        %8861 = vmatmul.mubr.bf16.gmra.mrb[0].mxu0 %v8726
        %v8862 = vpop.f32.mrb[0].mxu0
        %v8863 = vadd.f32 0.0, %v8862
        %v8864 = vpop.f32.mrb[0].mxu0
        %v8865 = vpop.f32.mrb[0].mxu0
        %v8866 = vadd.f32 0.0, %v8865
        %v8867 = vpop.f32.mrb[0].mxu0
        %8868 = vmatprep.mubr.bf16.mxu0 0
        %8869 = vmatmul.mubr.bf16.gmra.mrb[0].mxu0 %v8729
        %v8870 = vpop.f32.mrb[0].mxu0
        %v8871 = vadd.f32 0.0, %v8870
        %v8872 = vpop.f32.mrb[0].mxu0
        %v8873 = vpop.f32.mrb[0].mxu0
        %v8874 = vadd.f32 0.0, %v8873
        %v8875 = vpop.f32.mrb[0].mxu0
        %8876 = vmatprep.mubr.bf16.mxu0 0
        %8877 = vmatmul.mubr.bf16.gmra.mrb[0].mxu0 %v8732
        %v8878 = vpop.f32.mrb[0].mxu0
        %v8879 = vadd.f32 0.0, %v8878
        %v8880 = vpop.f32.mrb[0].mxu0
        %v8881 = vpop.f32.mrb[0].mxu0
        %v8882 = vadd.f32 0.0, %v8881
        %v8883 = vpop.f32.mrb[0].mxu0
        %8884 = vmatprep.mubr.bf16.mxu0 0
        %8885 = vmatmul.mubr.bf16.gmra.mrb[0].mxu0 %v8735
        %v8886 = vpop.f32.mrb[0].mxu0
        %v8887 = vadd.f32 0.0, %v8886
        %v8888 = vpop.f32.mrb[0].mxu0
        %v8889 = vpop.f32.mrb[0].mxu0
        %v8890 = vadd.f32 0.0, %v8889
        %v8891 = vpop.f32.mrb[0].mxu0
        %8892 = vmatprep.mubr.bf16.mxu0 0
        %8893 = vmatmul.mubr.bf16.gmra.mrb[0].mxu0 %v8738
        %v8894 = vpop.f32.mrb[0].mxu0
        %v8895 = vadd.f32 0.0, %v8894
        %v8896 = vpop.f32.mrb[0].mxu0
        %v8897 = vpop.f32.mrb[0].mxu0
        %v8898 = vadd.f32 0.0, %v8897
        %v8899 = vpop.f32.mrb[0].mxu0
        %8900 = vdwg.mxu0
        %v8901 = vadd.f32 %v6465, %v8775
        %v8902 = vadd.f32 %v6468, %v8778
        %v8903 = vadd.f32 %v6473, %v8783
        %v8904 = vadd.f32 %v6476, %v8786
        %v8905 = vadd.f32 %v6481, %v8791
        %v8906 = vadd.f32 %v6484, %v8794
        %v8907 = vadd.f32 %v6489, %v8799
        %v8908 = vadd.f32 %v6492, %v8802
        %v8909 = vadd.f32 %v6497, %v8807
        %v8910 = vadd.f32 %v6500, %v8810
        %v8911 = vadd.f32 %v6505, %v8815
        %v8912 = vadd.f32 %v6508, %v8818
        %v8913 = vadd.f32 %v6513, %v8823
        %v8914 = vadd.f32 %v6516, %v8826
        %v8915 = vadd.f32 %v6521, %v8831
        %v8916 = vadd.f32 %v6524, %v8834
        %v8917 = vadd.f32 %v6529, %v8839
        %v8918 = vadd.f32 %v6532, %v8842
        %v8919 = vadd.f32 %v6537, %v8847
        %v8920 = vadd.f32 %v6540, %v8850
        %v8921 = vadd.f32 %v6545, %v8855
        %v8922 = vadd.f32 %v6548, %v8858
        %v8923 = vadd.f32 %v6553, %v8863
        %v8924 = vadd.f32 %v6556, %v8866
        %v8925 = vadd.f32 %v6561, %v8871
        %v8926 = vadd.f32 %v6564, %v8874
        %v8927 = vadd.f32 %v6569, %v8879
        %v8928 = vadd.f32 %v6572, %v8882
        %v8929 = vadd.f32 %v6577, %v8887
        %v8930 = vadd.f32 %v6580, %v8890
        %v8931 = vadd.f32 %v6585, %v8895
        %v8932 = vadd.f32 %v6588, %v8898
        %s8933 = scalar_lea.vmem %s437, 24
        %v8934 = vld [vmem:[%s8933] sm:$0xf]
        %v8935 = vld [vmem:[%s8933 + $0x4] sm:$0xf]
        %v8936 = vunpack.c.l.bf16 %v8934
        %v8937 = vunpack.c.l.bf16 %v8935
        %8938 = vrot.lane.b32.xlu0 %v2050, 32
        %v8939 = vpop.permute.xlu0 %8938
        %8940 = vrot.lane.b32.xlu0 %v2066, 32
        %v8941 = vpop.permute.xlu0 %8940
        %v8943 = vsel %vm2102, %v8939, 0
        %v8946 = vsel %vm2102, %v8941, 0
        %8948 = vmatprep.subr.bf16.mxu0 0
        %8949 = vmatpush1.bf16.xpose.msra.mxu0 %v8946
        %8950 = vmatprep.subr.bf16.mxu0 0
        %8951 = vmatpush1.bf16.xpose.msra.mxu0 0
        %8952 = vmatprep.subr.bf16.mxu0 0
        %8953 = vmatpush1.bf16.xpose.msra.mxu0 0
        %8954 = vmatprep.subr.bf16.mxu0 0
        %8955 = vmatpush1.bf16.xpose.msra.mxu0 0
        %8956 = vmatprep.subr.bf16.mxu0 0
        %8957 = vmatpush1.bf16.xpose.msra.mxu0 0
        %8958 = vmatprep.subr.bf16.mxu0 0
        %8959 = vmatpush1.bf16.xpose.msra.mxu0 0
        %8960 = vmatprep.subr.bf16.mxu0 0
        %8961 = vmatpush1.bf16.xpose.msra.mxu0 0
        %8962 = vmatprep.subr.bf16.mxu0 0
        %8963 = vmatpush1.bf16.xpose.msra.mxu0 0
        %8964 = vmatprep.subr.bf16.mxu0 0
        %8965 = vmatpush1.bf16.xpose.msra.mxu0 0
        %8966 = vmatprep.subr.bf16.mxu0 0
        %8967 = vmatpush1.bf16.xpose.msra.mxu0 0
        %8968 = vmatprep.subr.bf16.mxu0 0
        %8969 = vmatpush1.bf16.xpose.msra.mxu0 0
        %8970 = vmatprep.subr.bf16.mxu0 0
        %8971 = vmatpush1.bf16.xpose.msra.mxu0 0
        %8972 = vmatprep.subr.bf16.mxu0 0
        %8973 = vmatpush1.bf16.xpose.msra.mxu0 0
        %8974 = vmatprep.subr.bf16.mxu0 0
        %8975 = vmatpush1.bf16.xpose.msra.mxu0 0
        %8976 = vmatprep.subr.bf16.mxu0 0
        %8977 = vmatpush1.bf16.xpose.msra.mxu0 0
        %8978 = vmatprep.subr.bf16.mxu0 0
        %8979 = vmatpush1.bf16.xpose.msra.mxu0 0
        %8980 = vmatprep.mubr.bf16.mxu0 0
        %8981 = vmatmul.mubr.bf16.gmra.mrb[0].mxu0 %v8943
        %v8982 = vpop.f32.mrb[0].mxu0
        %v8983 = vadd.f32 %v8936, %v8982
        %v8984 = vpop.f32.mrb[0].mxu0
        %v8985 = vpop.f32.mrb[0].mxu0
        %v8986 = vadd.f32 %v8937, %v8985
        %v8987 = vpop.f32.mrb[0].mxu0
        %8988 = vdwg.mxu0
        %8989 = vrot.lane.b32.xlu0 %v2051, 32
        %v8990 = vpop.permute.xlu0 %8989
        %8991 = vrot.lane.b32.xlu0 %v2067, 32
        %v8992 = vpop.permute.xlu0 %8991
        %v8994 = vsel %vm2102, %v8990, 0
        %v8997 = vsel %vm2102, %v8992, 0
        %8999 = vmatprep.subr.bf16.mxu0 0
        %9000 = vmatpush1.bf16.xpose.msra.mxu0 %v8997
        %9001 = vmatprep.subr.bf16.mxu0 0
        %9002 = vmatpush1.bf16.xpose.msra.mxu0 0
        %9003 = vmatprep.subr.bf16.mxu0 0
        %9004 = vmatpush1.bf16.xpose.msra.mxu0 0
        %9005 = vmatprep.subr.bf16.mxu0 0
        %9006 = vmatpush1.bf16.xpose.msra.mxu0 0
        %9007 = vmatprep.subr.bf16.mxu0 0
        %9008 = vmatpush1.bf16.xpose.msra.mxu0 0
        %9009 = vmatprep.subr.bf16.mxu0 0
        %9010 = vmatpush1.bf16.xpose.msra.mxu0 0
        %9011 = vmatprep.subr.bf16.mxu0 0
        %9012 = vmatpush1.bf16.xpose.msra.mxu0 0
        %9013 = vmatprep.subr.bf16.mxu0 0
        %9014 = vmatpush1.bf16.xpose.msra.mxu0 0
        %9015 = vmatprep.subr.bf16.mxu0 0
        %9016 = vmatpush1.bf16.xpose.msra.mxu0 0
        %9017 = vmatprep.subr.bf16.mxu0 0
        %9018 = vmatpush1.bf16.xpose.msra.mxu0 0
        %9019 = vmatprep.subr.bf16.mxu0 0
        %9020 = vmatpush1.bf16.xpose.msra.mxu0 0
        %9021 = vmatprep.subr.bf16.mxu0 0
        %9022 = vmatpush1.bf16.xpose.msra.mxu0 0
        %9023 = vmatprep.subr.bf16.mxu0 0
        %9024 = vmatpush1.bf16.xpose.msra.mxu0 0
        %9025 = vmatprep.subr.bf16.mxu0 0
        %9026 = vmatpush1.bf16.xpose.msra.mxu0 0
        %9027 = vmatprep.subr.bf16.mxu0 0
        %9028 = vmatpush1.bf16.xpose.msra.mxu0 0
        %9029 = vmatprep.subr.bf16.mxu0 0
        %9030 = vmatpush1.bf16.xpose.msra.mxu0 0
        %9031 = vmatprep.mubr.bf16.mxu0 0
        %9032 = vmatmul.mubr.bf16.gmra.mrb[0].mxu0 %v8994
        %v9033 = vpop.f32.mrb[0].mxu0
        %v9034 = vadd.f32 %v8936, %v9033
        %v9035 = vpop.f32.mrb[0].mxu0
        %v9036 = vpop.f32.mrb[0].mxu0
        %v9037 = vadd.f32 %v8937, %v9036
        %v9038 = vpop.f32.mrb[0].mxu0
        %9039 = vdwg.mxu0
        %9040 = vrot.lane.b32.xlu0 %v2052, 32
        %v9041 = vpop.permute.xlu0 %9040
        %9042 = vrot.lane.b32.xlu0 %v2068, 32
        %v9043 = vpop.permute.xlu0 %9042
        %v9045 = vsel %vm2102, %v9041, 0
        %v9048 = vsel %vm2102, %v9043, 0
        %9050 = vmatprep.subr.bf16.mxu0 0
        %9051 = vmatpush1.bf16.xpose.msra.mxu0 %v9048
        %9052 = vmatprep.subr.bf16.mxu0 0
        %9053 = vmatpush1.bf16.xpose.msra.mxu0 0
        %9054 = vmatprep.subr.bf16.mxu0 0
        %9055 = vmatpush1.bf16.xpose.msra.mxu0 0
        %9056 = vmatprep.subr.bf16.mxu0 0
        %9057 = vmatpush1.bf16.xpose.msra.mxu0 0
        %9058 = vmatprep.subr.bf16.mxu0 0
        %9059 = vmatpush1.bf16.xpose.msra.mxu0 0
        %9060 = vmatprep.subr.bf16.mxu0 0
        %9061 = vmatpush1.bf16.xpose.msra.mxu0 0
        %9062 = vmatprep.subr.bf16.mxu0 0
        %9063 = vmatpush1.bf16.xpose.msra.mxu0 0
        %9064 = vmatprep.subr.bf16.mxu0 0
        %9065 = vmatpush1.bf16.xpose.msra.mxu0 0
        %9066 = vmatprep.subr.bf16.mxu0 0
        %9067 = vmatpush1.bf16.xpose.msra.mxu0 0
        %9068 = vmatprep.subr.bf16.mxu0 0
        %9069 = vmatpush1.bf16.xpose.msra.mxu0 0
        %9070 = vmatprep.subr.bf16.mxu0 0
        %9071 = vmatpush1.bf16.xpose.msra.mxu0 0
        %9072 = vmatprep.subr.bf16.mxu0 0
        %9073 = vmatpush1.bf16.xpose.msra.mxu0 0
        %9074 = vmatprep.subr.bf16.mxu0 0
        %9075 = vmatpush1.bf16.xpose.msra.mxu0 0
        %9076 = vmatprep.subr.bf16.mxu0 0
        %9077 = vmatpush1.bf16.xpose.msra.mxu0 0
        %9078 = vmatprep.subr.bf16.mxu0 0
        %9079 = vmatpush1.bf16.xpose.msra.mxu0 0
        %9080 = vmatprep.subr.bf16.mxu0 0
        %9081 = vmatpush1.bf16.xpose.msra.mxu0 0
        %9082 = vmatprep.mubr.bf16.mxu0 0
        %9083 = vmatmul.mubr.bf16.gmra.mrb[0].mxu0 %v9045
        %v9084 = vpop.f32.mrb[0].mxu0
        %v9085 = vadd.f32 %v8936, %v9084
        %v9086 = vpop.f32.mrb[0].mxu0
        %v9087 = vpop.f32.mrb[0].mxu0
        %v9088 = vadd.f32 %v8937, %v9087
        %v9089 = vpop.f32.mrb[0].mxu0
        %9090 = vdwg.mxu0
        %9091 = vrot.lane.b32.xlu0 %v2053, 32
        %v9092 = vpop.permute.xlu0 %9091
        %9093 = vrot.lane.b32.xlu0 %v2069, 32
        %v9094 = vpop.permute.xlu0 %9093
        %v9096 = vsel %vm2102, %v9092, 0
        %v9099 = vsel %vm2102, %v9094, 0
        %9101 = vmatprep.subr.bf16.mxu0 0
        %9102 = vmatpush1.bf16.xpose.msra.mxu0 %v9099
        %9103 = vmatprep.subr.bf16.mxu0 0
        %9104 = vmatpush1.bf16.xpose.msra.mxu0 0
        %9105 = vmatprep.subr.bf16.mxu0 0
        %9106 = vmatpush1.bf16.xpose.msra.mxu0 0
        %9107 = vmatprep.subr.bf16.mxu0 0
        %9108 = vmatpush1.bf16.xpose.msra.mxu0 0
        %9109 = vmatprep.subr.bf16.mxu0 0
        %9110 = vmatpush1.bf16.xpose.msra.mxu0 0
        %9111 = vmatprep.subr.bf16.mxu0 0
        %9112 = vmatpush1.bf16.xpose.msra.mxu0 0
        %9113 = vmatprep.subr.bf16.mxu0 0
        %9114 = vmatpush1.bf16.xpose.msra.mxu0 0
        %9115 = vmatprep.subr.bf16.mxu0 0
        %9116 = vmatpush1.bf16.xpose.msra.mxu0 0
        %9117 = vmatprep.subr.bf16.mxu0 0
        %9118 = vmatpush1.bf16.xpose.msra.mxu0 0
        %9119 = vmatprep.subr.bf16.mxu0 0
        %9120 = vmatpush1.bf16.xpose.msra.mxu0 0
        %9121 = vmatprep.subr.bf16.mxu0 0
        %9122 = vmatpush1.bf16.xpose.msra.mxu0 0
        %9123 = vmatprep.subr.bf16.mxu0 0
        %9124 = vmatpush1.bf16.xpose.msra.mxu0 0
        %9125 = vmatprep.subr.bf16.mxu0 0
        %9126 = vmatpush1.bf16.xpose.msra.mxu0 0
        %9127 = vmatprep.subr.bf16.mxu0 0
        %9128 = vmatpush1.bf16.xpose.msra.mxu0 0
        %9129 = vmatprep.subr.bf16.mxu0 0
        %9130 = vmatpush1.bf16.xpose.msra.mxu0 0
        %9131 = vmatprep.subr.bf16.mxu0 0
        %9132 = vmatpush1.bf16.xpose.msra.mxu0 0
        %9133 = vmatprep.mubr.bf16.mxu0 0
        %9134 = vmatmul.mubr.bf16.gmra.mrb[0].mxu0 %v9096
        %v9135 = vpop.f32.mrb[0].mxu0
        %v9136 = vadd.f32 %v8936, %v9135
        %v9137 = vpop.f32.mrb[0].mxu0
        %v9138 = vpop.f32.mrb[0].mxu0
        %v9139 = vadd.f32 %v8937, %v9138
        %v9140 = vpop.f32.mrb[0].mxu0
        %9141 = vdwg.mxu0
        %9142 = vrot.lane.b32.xlu0 %v2054, 32
        %v9143 = vpop.permute.xlu0 %9142
        %9144 = vrot.lane.b32.xlu0 %v2070, 32
        %v9145 = vpop.permute.xlu0 %9144
        %v9147 = vsel %vm2102, %v9143, 0
        %v9150 = vsel %vm2102, %v9145, 0
        %9152 = vmatprep.subr.bf16.mxu0 0
        %9153 = vmatpush1.bf16.xpose.msra.mxu0 %v9150
        %9154 = vmatprep.subr.bf16.mxu0 0
        %9155 = vmatpush1.bf16.xpose.msra.mxu0 0
        %9156 = vmatprep.subr.bf16.mxu0 0
        %9157 = vmatpush1.bf16.xpose.msra.mxu0 0
        %9158 = vmatprep.subr.bf16.mxu0 0
        %9159 = vmatpush1.bf16.xpose.msra.mxu0 0
        %9160 = vmatprep.subr.bf16.mxu0 0
        %9161 = vmatpush1.bf16.xpose.msra.mxu0 0
        %9162 = vmatprep.subr.bf16.mxu0 0
        %9163 = vmatpush1.bf16.xpose.msra.mxu0 0
        %9164 = vmatprep.subr.bf16.mxu0 0
        %9165 = vmatpush1.bf16.xpose.msra.mxu0 0
        %9166 = vmatprep.subr.bf16.mxu0 0
        %9167 = vmatpush1.bf16.xpose.msra.mxu0 0
        %9168 = vmatprep.subr.bf16.mxu0 0
        %9169 = vmatpush1.bf16.xpose.msra.mxu0 0
        %9170 = vmatprep.subr.bf16.mxu0 0
        %9171 = vmatpush1.bf16.xpose.msra.mxu0 0
        %9172 = vmatprep.subr.bf16.mxu0 0
        %9173 = vmatpush1.bf16.xpose.msra.mxu0 0
        %9174 = vmatprep.subr.bf16.mxu0 0
        %9175 = vmatpush1.bf16.xpose.msra.mxu0 0
        %9176 = vmatprep.subr.bf16.mxu0 0
        %9177 = vmatpush1.bf16.xpose.msra.mxu0 0
        %9178 = vmatprep.subr.bf16.mxu0 0
        %9179 = vmatpush1.bf16.xpose.msra.mxu0 0
        %9180 = vmatprep.subr.bf16.mxu0 0
        %9181 = vmatpush1.bf16.xpose.msra.mxu0 0
        %9182 = vmatprep.subr.bf16.mxu0 0
        %9183 = vmatpush1.bf16.xpose.msra.mxu0 0
        %9184 = vmatprep.mubr.bf16.mxu0 0
        %9185 = vmatmul.mubr.bf16.gmra.mrb[0].mxu0 %v9147
        %v9186 = vpop.f32.mrb[0].mxu0
        %v9187 = vadd.f32 %v8936, %v9186
        %v9188 = vpop.f32.mrb[0].mxu0
        %v9189 = vpop.f32.mrb[0].mxu0
        %v9190 = vadd.f32 %v8937, %v9189
        %v9191 = vpop.f32.mrb[0].mxu0
        %9192 = vdwg.mxu0
        %9193 = vrot.lane.b32.xlu0 %v2055, 32
        %v9194 = vpop.permute.xlu0 %9193
        %9195 = vrot.lane.b32.xlu0 %v2071, 32
        %v9196 = vpop.permute.xlu0 %9195
        %v9198 = vsel %vm2102, %v9194, 0
        %v9201 = vsel %vm2102, %v9196, 0
        %9203 = vmatprep.subr.bf16.mxu0 0
        %9204 = vmatpush1.bf16.xpose.msra.mxu0 %v9201
        %9205 = vmatprep.subr.bf16.mxu0 0
        %9206 = vmatpush1.bf16.xpose.msra.mxu0 0
        %9207 = vmatprep.subr.bf16.mxu0 0
        %9208 = vmatpush1.bf16.xpose.msra.mxu0 0
        %9209 = vmatprep.subr.bf16.mxu0 0
        %9210 = vmatpush1.bf16.xpose.msra.mxu0 0
        %9211 = vmatprep.subr.bf16.mxu0 0
        %9212 = vmatpush1.bf16.xpose.msra.mxu0 0
        %9213 = vmatprep.subr.bf16.mxu0 0
        %9214 = vmatpush1.bf16.xpose.msra.mxu0 0
        %9215 = vmatprep.subr.bf16.mxu0 0
        %9216 = vmatpush1.bf16.xpose.msra.mxu0 0
        %9217 = vmatprep.subr.bf16.mxu0 0
        %9218 = vmatpush1.bf16.xpose.msra.mxu0 0
        %9219 = vmatprep.subr.bf16.mxu0 0
        %9220 = vmatpush1.bf16.xpose.msra.mxu0 0
        %9221 = vmatprep.subr.bf16.mxu0 0
        %9222 = vmatpush1.bf16.xpose.msra.mxu0 0
        %9223 = vmatprep.subr.bf16.mxu0 0
        %9224 = vmatpush1.bf16.xpose.msra.mxu0 0
        %9225 = vmatprep.subr.bf16.mxu0 0
        %9226 = vmatpush1.bf16.xpose.msra.mxu0 0
        %9227 = vmatprep.subr.bf16.mxu0 0
        %9228 = vmatpush1.bf16.xpose.msra.mxu0 0
        %9229 = vmatprep.subr.bf16.mxu0 0
        %9230 = vmatpush1.bf16.xpose.msra.mxu0 0
        %9231 = vmatprep.subr.bf16.mxu0 0
        %9232 = vmatpush1.bf16.xpose.msra.mxu0 0
        %9233 = vmatprep.subr.bf16.mxu0 0
        %9234 = vmatpush1.bf16.xpose.msra.mxu0 0
        %9235 = vmatprep.mubr.bf16.mxu0 0
        %9236 = vmatmul.mubr.bf16.gmra.mrb[0].mxu0 %v9198
        %v9237 = vpop.f32.mrb[0].mxu0
        %v9238 = vadd.f32 %v8936, %v9237
        %v9239 = vpop.f32.mrb[0].mxu0
        %v9240 = vpop.f32.mrb[0].mxu0
        %v9241 = vadd.f32 %v8937, %v9240
        %v9242 = vpop.f32.mrb[0].mxu0
        %9243 = vdwg.mxu0
        %9244 = vrot.lane.b32.xlu0 %v2056, 32
        %v9245 = vpop.permute.xlu0 %9244
        %9246 = vrot.lane.b32.xlu0 %v2072, 32
        %v9247 = vpop.permute.xlu0 %9246
        %v9249 = vsel %vm2102, %v9245, 0
        %v9252 = vsel %vm2102, %v9247, 0
        %9254 = vmatprep.subr.bf16.mxu0 0
        %9255 = vmatpush1.bf16.xpose.msra.mxu0 %v9252
        %9256 = vmatprep.subr.bf16.mxu0 0
        %9257 = vmatpush1.bf16.xpose.msra.mxu0 0
        %9258 = vmatprep.subr.bf16.mxu0 0
        %9259 = vmatpush1.bf16.xpose.msra.mxu0 0
        %9260 = vmatprep.subr.bf16.mxu0 0
        %9261 = vmatpush1.bf16.xpose.msra.mxu0 0
        %9262 = vmatprep.subr.bf16.mxu0 0
        %9263 = vmatpush1.bf16.xpose.msra.mxu0 0
        %9264 = vmatprep.subr.bf16.mxu0 0
        %9265 = vmatpush1.bf16.xpose.msra.mxu0 0
        %9266 = vmatprep.subr.bf16.mxu0 0
        %9267 = vmatpush1.bf16.xpose.msra.mxu0 0
        %9268 = vmatprep.subr.bf16.mxu0 0
        %9269 = vmatpush1.bf16.xpose.msra.mxu0 0
        %9270 = vmatprep.subr.bf16.mxu0 0
        %9271 = vmatpush1.bf16.xpose.msra.mxu0 0
        %9272 = vmatprep.subr.bf16.mxu0 0
        %9273 = vmatpush1.bf16.xpose.msra.mxu0 0
        %9274 = vmatprep.subr.bf16.mxu0 0
        %9275 = vmatpush1.bf16.xpose.msra.mxu0 0
        %9276 = vmatprep.subr.bf16.mxu0 0
        %9277 = vmatpush1.bf16.xpose.msra.mxu0 0
        %9278 = vmatprep.subr.bf16.mxu0 0
        %9279 = vmatpush1.bf16.xpose.msra.mxu0 0
        %9280 = vmatprep.subr.bf16.mxu0 0
        %9281 = vmatpush1.bf16.xpose.msra.mxu0 0
        %9282 = vmatprep.subr.bf16.mxu0 0
        %9283 = vmatpush1.bf16.xpose.msra.mxu0 0
        %9284 = vmatprep.subr.bf16.mxu0 0
        %9285 = vmatpush1.bf16.xpose.msra.mxu0 0
        %9286 = vmatprep.mubr.bf16.mxu0 0
        %9287 = vmatmul.mubr.bf16.gmra.mrb[0].mxu0 %v9249
        %v9288 = vpop.f32.mrb[0].mxu0
        %v9289 = vadd.f32 %v8936, %v9288
        %v9290 = vpop.f32.mrb[0].mxu0
        %v9291 = vpop.f32.mrb[0].mxu0
        %v9292 = vadd.f32 %v8937, %v9291
        %v9293 = vpop.f32.mrb[0].mxu0
        %9294 = vdwg.mxu0
        %9295 = vrot.lane.b32.xlu0 %v2057, 32
        %v9296 = vpop.permute.xlu0 %9295
        %9297 = vrot.lane.b32.xlu0 %v2073, 32
        %v9298 = vpop.permute.xlu0 %9297
        %v9300 = vsel %vm2102, %v9296, 0
        %v9303 = vsel %vm2102, %v9298, 0
        %9305 = vmatprep.subr.bf16.mxu0 0
        %9306 = vmatpush1.bf16.xpose.msra.mxu0 %v9303
        %9307 = vmatprep.subr.bf16.mxu0 0
        %9308 = vmatpush1.bf16.xpose.msra.mxu0 0
        %9309 = vmatprep.subr.bf16.mxu0 0
        %9310 = vmatpush1.bf16.xpose.msra.mxu0 0
        %9311 = vmatprep.subr.bf16.mxu0 0
        %9312 = vmatpush1.bf16.xpose.msra.mxu0 0
        %9313 = vmatprep.subr.bf16.mxu0 0
        %9314 = vmatpush1.bf16.xpose.msra.mxu0 0
        %9315 = vmatprep.subr.bf16.mxu0 0
        %9316 = vmatpush1.bf16.xpose.msra.mxu0 0
        %9317 = vmatprep.subr.bf16.mxu0 0
        %9318 = vmatpush1.bf16.xpose.msra.mxu0 0
        %9319 = vmatprep.subr.bf16.mxu0 0
        %9320 = vmatpush1.bf16.xpose.msra.mxu0 0
        %9321 = vmatprep.subr.bf16.mxu0 0
        %9322 = vmatpush1.bf16.xpose.msra.mxu0 0
        %9323 = vmatprep.subr.bf16.mxu0 0
        %9324 = vmatpush1.bf16.xpose.msra.mxu0 0
        %9325 = vmatprep.subr.bf16.mxu0 0
        %9326 = vmatpush1.bf16.xpose.msra.mxu0 0
        %9327 = vmatprep.subr.bf16.mxu0 0
        %9328 = vmatpush1.bf16.xpose.msra.mxu0 0
        %9329 = vmatprep.subr.bf16.mxu0 0
        %9330 = vmatpush1.bf16.xpose.msra.mxu0 0
        %9331 = vmatprep.subr.bf16.mxu0 0
        %9332 = vmatpush1.bf16.xpose.msra.mxu0 0
        %9333 = vmatprep.subr.bf16.mxu0 0
        %9334 = vmatpush1.bf16.xpose.msra.mxu0 0
        %9335 = vmatprep.subr.bf16.mxu0 0
        %9336 = vmatpush1.bf16.xpose.msra.mxu0 0
        %9337 = vmatprep.mubr.bf16.mxu0 0
        %9338 = vmatmul.mubr.bf16.gmra.mrb[0].mxu0 %v9300
        %v9339 = vpop.f32.mrb[0].mxu0
        %v9340 = vadd.f32 %v8936, %v9339
        %v9341 = vpop.f32.mrb[0].mxu0
        %v9342 = vpop.f32.mrb[0].mxu0
        %v9343 = vadd.f32 %v8937, %v9342
        %v9344 = vpop.f32.mrb[0].mxu0
        %9345 = vdwg.mxu0
        %9346 = vrot.lane.b32.xlu0 %v2058, 32
        %v9347 = vpop.permute.xlu0 %9346
        %9348 = vrot.lane.b32.xlu0 %v2074, 32
        %v9349 = vpop.permute.xlu0 %9348
        %v9351 = vsel %vm2102, %v9347, 0
        %v9354 = vsel %vm2102, %v9349, 0
        %9356 = vmatprep.subr.bf16.mxu0 0
        %9357 = vmatpush1.bf16.xpose.msra.mxu0 %v9354
        %9358 = vmatprep.subr.bf16.mxu0 0
        %9359 = vmatpush1.bf16.xpose.msra.mxu0 0
        %9360 = vmatprep.subr.bf16.mxu0 0
        %9361 = vmatpush1.bf16.xpose.msra.mxu0 0
        %9362 = vmatprep.subr.bf16.mxu0 0
        %9363 = vmatpush1.bf16.xpose.msra.mxu0 0
        %9364 = vmatprep.subr.bf16.mxu0 0
        %9365 = vmatpush1.bf16.xpose.msra.mxu0 0
        %9366 = vmatprep.subr.bf16.mxu0 0
        %9367 = vmatpush1.bf16.xpose.msra.mxu0 0
        %9368 = vmatprep.subr.bf16.mxu0 0
        %9369 = vmatpush1.bf16.xpose.msra.mxu0 0
        %9370 = vmatprep.subr.bf16.mxu0 0
        %9371 = vmatpush1.bf16.xpose.msra.mxu0 0
        %9372 = vmatprep.subr.bf16.mxu0 0
        %9373 = vmatpush1.bf16.xpose.msra.mxu0 0
        %9374 = vmatprep.subr.bf16.mxu0 0
        %9375 = vmatpush1.bf16.xpose.msra.mxu0 0
        %9376 = vmatprep.subr.bf16.mxu0 0
        %9377 = vmatpush1.bf16.xpose.msra.mxu0 0
        %9378 = vmatprep.subr.bf16.mxu0 0
        %9379 = vmatpush1.bf16.xpose.msra.mxu0 0
        %9380 = vmatprep.subr.bf16.mxu0 0
        %9381 = vmatpush1.bf16.xpose.msra.mxu0 0
        %9382 = vmatprep.subr.bf16.mxu0 0
        %9383 = vmatpush1.bf16.xpose.msra.mxu0 0
        %9384 = vmatprep.subr.bf16.mxu0 0
        %9385 = vmatpush1.bf16.xpose.msra.mxu0 0
        %9386 = vmatprep.subr.bf16.mxu0 0
        %9387 = vmatpush1.bf16.xpose.msra.mxu0 0
        %9388 = vmatprep.mubr.bf16.mxu0 0
        %9389 = vmatmul.mubr.bf16.gmra.mrb[0].mxu0 %v9351
        %v9390 = vpop.f32.mrb[0].mxu0
        %v9391 = vadd.f32 %v8936, %v9390
        %v9392 = vpop.f32.mrb[0].mxu0
        %v9393 = vpop.f32.mrb[0].mxu0
        %v9394 = vadd.f32 %v8937, %v9393
        %v9395 = vpop.f32.mrb[0].mxu0
        %9396 = vdwg.mxu0
        %9397 = vrot.lane.b32.xlu0 %v2059, 32
        %v9398 = vpop.permute.xlu0 %9397
        %9399 = vrot.lane.b32.xlu0 %v2075, 32
        %v9400 = vpop.permute.xlu0 %9399
        %v9402 = vsel %vm2102, %v9398, 0
        %v9405 = vsel %vm2102, %v9400, 0
        %9407 = vmatprep.subr.bf16.mxu0 0
        %9408 = vmatpush1.bf16.xpose.msra.mxu0 %v9405
        %9409 = vmatprep.subr.bf16.mxu0 0
        %9410 = vmatpush1.bf16.xpose.msra.mxu0 0
        %9411 = vmatprep.subr.bf16.mxu0 0
        %9412 = vmatpush1.bf16.xpose.msra.mxu0 0
        %9413 = vmatprep.subr.bf16.mxu0 0
        %9414 = vmatpush1.bf16.xpose.msra.mxu0 0
        %9415 = vmatprep.subr.bf16.mxu0 0
        %9416 = vmatpush1.bf16.xpose.msra.mxu0 0
        %9417 = vmatprep.subr.bf16.mxu0 0
        %9418 = vmatpush1.bf16.xpose.msra.mxu0 0
        %9419 = vmatprep.subr.bf16.mxu0 0
        %9420 = vmatpush1.bf16.xpose.msra.mxu0 0
        %9421 = vmatprep.subr.bf16.mxu0 0
        %9422 = vmatpush1.bf16.xpose.msra.mxu0 0
        %9423 = vmatprep.subr.bf16.mxu0 0
        %9424 = vmatpush1.bf16.xpose.msra.mxu0 0
        %9425 = vmatprep.subr.bf16.mxu0 0
        %9426 = vmatpush1.bf16.xpose.msra.mxu0 0
        %9427 = vmatprep.subr.bf16.mxu0 0
        %9428 = vmatpush1.bf16.xpose.msra.mxu0 0
        %9429 = vmatprep.subr.bf16.mxu0 0
        %9430 = vmatpush1.bf16.xpose.msra.mxu0 0
        %9431 = vmatprep.subr.bf16.mxu0 0
        %9432 = vmatpush1.bf16.xpose.msra.mxu0 0
        %9433 = vmatprep.subr.bf16.mxu0 0
        %9434 = vmatpush1.bf16.xpose.msra.mxu0 0
        %9435 = vmatprep.subr.bf16.mxu0 0
        %9436 = vmatpush1.bf16.xpose.msra.mxu0 0
        %9437 = vmatprep.subr.bf16.mxu0 0
        %9438 = vmatpush1.bf16.xpose.msra.mxu0 0
        %9439 = vmatprep.mubr.bf16.mxu0 0
        %9440 = vmatmul.mubr.bf16.gmra.mrb[0].mxu0 %v9402
        %v9441 = vpop.f32.mrb[0].mxu0
        %v9442 = vadd.f32 %v8936, %v9441
        %v9443 = vpop.f32.mrb[0].mxu0
        %v9444 = vpop.f32.mrb[0].mxu0
        %v9445 = vadd.f32 %v8937, %v9444
        %v9446 = vpop.f32.mrb[0].mxu0
        %9447 = vdwg.mxu0
        %9448 = vrot.lane.b32.xlu0 %v2060, 32
        %v9449 = vpop.permute.xlu0 %9448
        %9450 = vrot.lane.b32.xlu0 %v2076, 32
        %v9451 = vpop.permute.xlu0 %9450
        %v9453 = vsel %vm2102, %v9449, 0
        %v9456 = vsel %vm2102, %v9451, 0
        %9458 = vmatprep.subr.bf16.mxu0 0
        %9459 = vmatpush1.bf16.xpose.msra.mxu0 %v9456
        %9460 = vmatprep.subr.bf16.mxu0 0
        %9461 = vmatpush1.bf16.xpose.msra.mxu0 0
        %9462 = vmatprep.subr.bf16.mxu0 0
        %9463 = vmatpush1.bf16.xpose.msra.mxu0 0
        %9464 = vmatprep.subr.bf16.mxu0 0
        %9465 = vmatpush1.bf16.xpose.msra.mxu0 0
        %9466 = vmatprep.subr.bf16.mxu0 0
        %9467 = vmatpush1.bf16.xpose.msra.mxu0 0
        %9468 = vmatprep.subr.bf16.mxu0 0
        %9469 = vmatpush1.bf16.xpose.msra.mxu0 0
        %9470 = vmatprep.subr.bf16.mxu0 0
        %9471 = vmatpush1.bf16.xpose.msra.mxu0 0
        %9472 = vmatprep.subr.bf16.mxu0 0
        %9473 = vmatpush1.bf16.xpose.msra.mxu0 0
        %9474 = vmatprep.subr.bf16.mxu0 0
        %9475 = vmatpush1.bf16.xpose.msra.mxu0 0
        %9476 = vmatprep.subr.bf16.mxu0 0
        %9477 = vmatpush1.bf16.xpose.msra.mxu0 0
        %9478 = vmatprep.subr.bf16.mxu0 0
        %9479 = vmatpush1.bf16.xpose.msra.mxu0 0
        %9480 = vmatprep.subr.bf16.mxu0 0
        %9481 = vmatpush1.bf16.xpose.msra.mxu0 0
        %9482 = vmatprep.subr.bf16.mxu0 0
        %9483 = vmatpush1.bf16.xpose.msra.mxu0 0
        %9484 = vmatprep.subr.bf16.mxu0 0
        %9485 = vmatpush1.bf16.xpose.msra.mxu0 0
        %9486 = vmatprep.subr.bf16.mxu0 0
        %9487 = vmatpush1.bf16.xpose.msra.mxu0 0
        %9488 = vmatprep.subr.bf16.mxu0 0
        %9489 = vmatpush1.bf16.xpose.msra.mxu0 0
        %9490 = vmatprep.mubr.bf16.mxu0 0
        %9491 = vmatmul.mubr.bf16.gmra.mrb[0].mxu0 %v9453
        %v9492 = vpop.f32.mrb[0].mxu0
        %v9493 = vadd.f32 %v8936, %v9492
        %v9494 = vpop.f32.mrb[0].mxu0
        %v9495 = vpop.f32.mrb[0].mxu0
        %v9496 = vadd.f32 %v8937, %v9495
        %v9497 = vpop.f32.mrb[0].mxu0
        %9498 = vdwg.mxu0
        %9499 = vrot.lane.b32.xlu0 %v2061, 32
        %v9500 = vpop.permute.xlu0 %9499
        %9501 = vrot.lane.b32.xlu0 %v2077, 32
        %v9502 = vpop.permute.xlu0 %9501
        %v9504 = vsel %vm2102, %v9500, 0
        %v9507 = vsel %vm2102, %v9502, 0
        %9509 = vmatprep.subr.bf16.mxu0 0
        %9510 = vmatpush1.bf16.xpose.msra.mxu0 %v9507
        %9511 = vmatprep.subr.bf16.mxu0 0
        %9512 = vmatpush1.bf16.xpose.msra.mxu0 0
        %9513 = vmatprep.subr.bf16.mxu0 0
        %9514 = vmatpush1.bf16.xpose.msra.mxu0 0
        %9515 = vmatprep.subr.bf16.mxu0 0
        %9516 = vmatpush1.bf16.xpose.msra.mxu0 0
        %9517 = vmatprep.subr.bf16.mxu0 0
        %9518 = vmatpush1.bf16.xpose.msra.mxu0 0
        %9519 = vmatprep.subr.bf16.mxu0 0
        %9520 = vmatpush1.bf16.xpose.msra.mxu0 0
        %9521 = vmatprep.subr.bf16.mxu0 0
        %9522 = vmatpush1.bf16.xpose.msra.mxu0 0
        %9523 = vmatprep.subr.bf16.mxu0 0
        %9524 = vmatpush1.bf16.xpose.msra.mxu0 0
        %9525 = vmatprep.subr.bf16.mxu0 0
        %9526 = vmatpush1.bf16.xpose.msra.mxu0 0
        %9527 = vmatprep.subr.bf16.mxu0 0
        %9528 = vmatpush1.bf16.xpose.msra.mxu0 0
        %9529 = vmatprep.subr.bf16.mxu0 0
        %9530 = vmatpush1.bf16.xpose.msra.mxu0 0
        %9531 = vmatprep.subr.bf16.mxu0 0
        %9532 = vmatpush1.bf16.xpose.msra.mxu0 0
        %9533 = vmatprep.subr.bf16.mxu0 0
        %9534 = vmatpush1.bf16.xpose.msra.mxu0 0
        %9535 = vmatprep.subr.bf16.mxu0 0
        %9536 = vmatpush1.bf16.xpose.msra.mxu0 0
        %9537 = vmatprep.subr.bf16.mxu0 0
        %9538 = vmatpush1.bf16.xpose.msra.mxu0 0
        %9539 = vmatprep.subr.bf16.mxu0 0
        %9540 = vmatpush1.bf16.xpose.msra.mxu0 0
        %9541 = vmatprep.mubr.bf16.mxu0 0
        %9542 = vmatmul.mubr.bf16.gmra.mrb[0].mxu0 %v9504
        %v9543 = vpop.f32.mrb[0].mxu0
        %v9544 = vadd.f32 %v8936, %v9543
        %v9545 = vpop.f32.mrb[0].mxu0
        %v9546 = vpop.f32.mrb[0].mxu0
        %v9547 = vadd.f32 %v8937, %v9546
        %v9548 = vpop.f32.mrb[0].mxu0
        %9549 = vdwg.mxu0
        %9550 = vrot.lane.b32.xlu0 %v2062, 32
        %v9551 = vpop.permute.xlu0 %9550
        %9552 = vrot.lane.b32.xlu0 %v2078, 32
        %v9553 = vpop.permute.xlu0 %9552
        %v9555 = vsel %vm2102, %v9551, 0
        %v9558 = vsel %vm2102, %v9553, 0
        %9560 = vmatprep.subr.bf16.mxu0 0
        %9561 = vmatpush1.bf16.xpose.msra.mxu0 %v9558
        %9562 = vmatprep.subr.bf16.mxu0 0
        %9563 = vmatpush1.bf16.xpose.msra.mxu0 0
        %9564 = vmatprep.subr.bf16.mxu0 0
        %9565 = vmatpush1.bf16.xpose.msra.mxu0 0
        %9566 = vmatprep.subr.bf16.mxu0 0
        %9567 = vmatpush1.bf16.xpose.msra.mxu0 0
        %9568 = vmatprep.subr.bf16.mxu0 0
        %9569 = vmatpush1.bf16.xpose.msra.mxu0 0
        %9570 = vmatprep.subr.bf16.mxu0 0
        %9571 = vmatpush1.bf16.xpose.msra.mxu0 0
        %9572 = vmatprep.subr.bf16.mxu0 0
        %9573 = vmatpush1.bf16.xpose.msra.mxu0 0
        %9574 = vmatprep.subr.bf16.mxu0 0
        %9575 = vmatpush1.bf16.xpose.msra.mxu0 0
        %9576 = vmatprep.subr.bf16.mxu0 0
        %9577 = vmatpush1.bf16.xpose.msra.mxu0 0
        %9578 = vmatprep.subr.bf16.mxu0 0
        %9579 = vmatpush1.bf16.xpose.msra.mxu0 0
        %9580 = vmatprep.subr.bf16.mxu0 0
        %9581 = vmatpush1.bf16.xpose.msra.mxu0 0
        %9582 = vmatprep.subr.bf16.mxu0 0
        %9583 = vmatpush1.bf16.xpose.msra.mxu0 0
        %9584 = vmatprep.subr.bf16.mxu0 0
        %9585 = vmatpush1.bf16.xpose.msra.mxu0 0
        %9586 = vmatprep.subr.bf16.mxu0 0
        %9587 = vmatpush1.bf16.xpose.msra.mxu0 0
        %9588 = vmatprep.subr.bf16.mxu0 0
        %9589 = vmatpush1.bf16.xpose.msra.mxu0 0
        %9590 = vmatprep.subr.bf16.mxu0 0
        %9591 = vmatpush1.bf16.xpose.msra.mxu0 0
        %9592 = vmatprep.mubr.bf16.mxu0 0
        %9593 = vmatmul.mubr.bf16.gmra.mrb[0].mxu0 %v9555
        %v9594 = vpop.f32.mrb[0].mxu0
        %v9595 = vadd.f32 %v8936, %v9594
        %v9596 = vpop.f32.mrb[0].mxu0
        %v9597 = vpop.f32.mrb[0].mxu0
        %v9598 = vadd.f32 %v8937, %v9597
        %v9599 = vpop.f32.mrb[0].mxu0
        %9600 = vdwg.mxu0
        %9601 = vrot.lane.b32.xlu0 %v2063, 32
        %v9602 = vpop.permute.xlu0 %9601
        %9603 = vrot.lane.b32.xlu0 %v2079, 32
        %v9604 = vpop.permute.xlu0 %9603
        %v9606 = vsel %vm2102, %v9602, 0
        %v9609 = vsel %vm2102, %v9604, 0
        %9611 = vmatprep.subr.bf16.mxu0 0
        %9612 = vmatpush1.bf16.xpose.msra.mxu0 %v9609
        %9613 = vmatprep.subr.bf16.mxu0 0
        %9614 = vmatpush1.bf16.xpose.msra.mxu0 0
        %9615 = vmatprep.subr.bf16.mxu0 0
        %9616 = vmatpush1.bf16.xpose.msra.mxu0 0
        %9617 = vmatprep.subr.bf16.mxu0 0
        %9618 = vmatpush1.bf16.xpose.msra.mxu0 0
        %9619 = vmatprep.subr.bf16.mxu0 0
        %9620 = vmatpush1.bf16.xpose.msra.mxu0 0
        %9621 = vmatprep.subr.bf16.mxu0 0
        %9622 = vmatpush1.bf16.xpose.msra.mxu0 0
        %9623 = vmatprep.subr.bf16.mxu0 0
        %9624 = vmatpush1.bf16.xpose.msra.mxu0 0
        %9625 = vmatprep.subr.bf16.mxu0 0
        %9626 = vmatpush1.bf16.xpose.msra.mxu0 0
        %9627 = vmatprep.subr.bf16.mxu0 0
        %9628 = vmatpush1.bf16.xpose.msra.mxu0 0
        %9629 = vmatprep.subr.bf16.mxu0 0
        %9630 = vmatpush1.bf16.xpose.msra.mxu0 0
        %9631 = vmatprep.subr.bf16.mxu0 0
        %9632 = vmatpush1.bf16.xpose.msra.mxu0 0
        %9633 = vmatprep.subr.bf16.mxu0 0
        %9634 = vmatpush1.bf16.xpose.msra.mxu0 0
        %9635 = vmatprep.subr.bf16.mxu0 0
        %9636 = vmatpush1.bf16.xpose.msra.mxu0 0
        %9637 = vmatprep.subr.bf16.mxu0 0
        %9638 = vmatpush1.bf16.xpose.msra.mxu0 0
        %9639 = vmatprep.subr.bf16.mxu0 0
        %9640 = vmatpush1.bf16.xpose.msra.mxu0 0
        %9641 = vmatprep.subr.bf16.mxu0 0
        %9642 = vmatpush1.bf16.xpose.msra.mxu0 0
        %9643 = vmatprep.mubr.bf16.mxu0 0
        %9644 = vmatmul.mubr.bf16.gmra.mrb[0].mxu0 %v9606
        %v9645 = vpop.f32.mrb[0].mxu0
        %v9646 = vadd.f32 %v8936, %v9645
        %v9647 = vpop.f32.mrb[0].mxu0
        %v9648 = vpop.f32.mrb[0].mxu0
        %v9649 = vadd.f32 %v8937, %v9648
        %v9650 = vpop.f32.mrb[0].mxu0
        %9651 = vdwg.mxu0
        %9652 = vrot.lane.b32.xlu0 %v2064, 32
        %v9653 = vpop.permute.xlu0 %9652
        %9654 = vrot.lane.b32.xlu0 %v2080, 32
        %v9655 = vpop.permute.xlu0 %9654
        %v9657 = vsel %vm2102, %v9653, 0
        %v9660 = vsel %vm2102, %v9655, 0
        %9662 = vmatprep.subr.bf16.mxu0 0
        %9663 = vmatpush1.bf16.xpose.msra.mxu0 %v9660
        %9664 = vmatprep.subr.bf16.mxu0 0
        %9665 = vmatpush1.bf16.xpose.msra.mxu0 0
        %9666 = vmatprep.subr.bf16.mxu0 0
        %9667 = vmatpush1.bf16.xpose.msra.mxu0 0
        %9668 = vmatprep.subr.bf16.mxu0 0
        %9669 = vmatpush1.bf16.xpose.msra.mxu0 0
        %9670 = vmatprep.subr.bf16.mxu0 0
        %9671 = vmatpush1.bf16.xpose.msra.mxu0 0
        %9672 = vmatprep.subr.bf16.mxu0 0
        %9673 = vmatpush1.bf16.xpose.msra.mxu0 0
        %9674 = vmatprep.subr.bf16.mxu0 0
        %9675 = vmatpush1.bf16.xpose.msra.mxu0 0
        %9676 = vmatprep.subr.bf16.mxu0 0
        %9677 = vmatpush1.bf16.xpose.msra.mxu0 0
        %9678 = vmatprep.subr.bf16.mxu0 0
        %9679 = vmatpush1.bf16.xpose.msra.mxu0 0
        %9680 = vmatprep.subr.bf16.mxu0 0
        %9681 = vmatpush1.bf16.xpose.msra.mxu0 0
        %9682 = vmatprep.subr.bf16.mxu0 0
        %9683 = vmatpush1.bf16.xpose.msra.mxu0 0
        %9684 = vmatprep.subr.bf16.mxu0 0
        %9685 = vmatpush1.bf16.xpose.msra.mxu0 0
        %9686 = vmatprep.subr.bf16.mxu0 0
        %9687 = vmatpush1.bf16.xpose.msra.mxu0 0
        %9688 = vmatprep.subr.bf16.mxu0 0
        %9689 = vmatpush1.bf16.xpose.msra.mxu0 0
        %9690 = vmatprep.subr.bf16.mxu0 0
        %9691 = vmatpush1.bf16.xpose.msra.mxu0 0
        %9692 = vmatprep.subr.bf16.mxu0 0
        %9693 = vmatpush1.bf16.xpose.msra.mxu0 0
        %9694 = vmatprep.mubr.bf16.mxu0 0
        %9695 = vmatmul.mubr.bf16.gmra.mrb[0].mxu0 %v9657
        %v9696 = vpop.f32.mrb[0].mxu0
        %v9697 = vadd.f32 %v8936, %v9696
        %v9698 = vpop.f32.mrb[0].mxu0
        %v9699 = vpop.f32.mrb[0].mxu0
        %v9700 = vadd.f32 %v8937, %v9699
        %v9701 = vpop.f32.mrb[0].mxu0
        %9702 = vdwg.mxu0
        %9703 = vrot.lane.b32.xlu0 %v2065, 32
        %v9704 = vpop.permute.xlu0 %9703
        %9705 = vrot.lane.b32.xlu0 %v2081, 32
        %v9706 = vpop.permute.xlu0 %9705
        %v9708 = vsel %vm2102, %v9704, 0
        %v9711 = vsel %vm2102, %v9706, 0
        %9713 = vmatprep.subr.bf16.mxu0 0
        %9714 = vmatpush1.bf16.xpose.msra.mxu0 %v9711
        %9715 = vmatprep.subr.bf16.mxu0 0
        %9716 = vmatpush1.bf16.xpose.msra.mxu0 0
        %9717 = vmatprep.subr.bf16.mxu0 0
        %9718 = vmatpush1.bf16.xpose.msra.mxu0 0
        %9719 = vmatprep.subr.bf16.mxu0 0
        %9720 = vmatpush1.bf16.xpose.msra.mxu0 0
        %9721 = vmatprep.subr.bf16.mxu0 0
        %9722 = vmatpush1.bf16.xpose.msra.mxu0 0
        %9723 = vmatprep.subr.bf16.mxu0 0
        %9724 = vmatpush1.bf16.xpose.msra.mxu0 0
        %9725 = vmatprep.subr.bf16.mxu0 0
        %9726 = vmatpush1.bf16.xpose.msra.mxu0 0
        %9727 = vmatprep.subr.bf16.mxu0 0
        %9728 = vmatpush1.bf16.xpose.msra.mxu0 0
        %9729 = vmatprep.subr.bf16.mxu0 0
        %9730 = vmatpush1.bf16.xpose.msra.mxu0 0
        %9731 = vmatprep.subr.bf16.mxu0 0
        %9732 = vmatpush1.bf16.xpose.msra.mxu0 0
        %9733 = vmatprep.subr.bf16.mxu0 0
        %9734 = vmatpush1.bf16.xpose.msra.mxu0 0
        %9735 = vmatprep.subr.bf16.mxu0 0
        %9736 = vmatpush1.bf16.xpose.msra.mxu0 0
        %9737 = vmatprep.subr.bf16.mxu0 0
        %9738 = vmatpush1.bf16.xpose.msra.mxu0 0
        %9739 = vmatprep.subr.bf16.mxu0 0
        %9740 = vmatpush1.bf16.xpose.msra.mxu0 0
        %9741 = vmatprep.subr.bf16.mxu0 0
        %9742 = vmatpush1.bf16.xpose.msra.mxu0 0
        %9743 = vmatprep.subr.bf16.mxu0 0
        %9744 = vmatpush1.bf16.xpose.msra.mxu0 0
        %9745 = vmatprep.mubr.bf16.mxu0 0
        %9746 = vmatmul.mubr.bf16.gmra.mrb[0].mxu0 %v9708
        %v9747 = vpop.f32.mrb[0].mxu0
        %v9748 = vadd.f32 %v8936, %v9747
        %v9749 = vpop.f32.mrb[0].mxu0
        %v9750 = vpop.f32.mrb[0].mxu0
        %v9751 = vadd.f32 %v8937, %v9750
        %v9752 = vpop.f32.mrb[0].mxu0
        %9753 = vdwg.mxu0
        %v9754 = vsel %vm2855, %v8983, -inf
        %9755 = vmax.xlane.f32.xlu0 %v9754
        %v9756 = vpop.xlane.xlu0 %9755
        %v9757 = vsel %vm2855, %v8986, -inf
        %9758 = vmax.xlane.f32.xlu0 %v9757
        %v9759 = vpop.xlane.xlu0 %9758
        %v9760 = vsel %vm2855, %v9034, -inf
        %9761 = vmax.xlane.f32.xlu0 %v9760
        %v9762 = vpop.xlane.xlu0 %9761
        %v9763 = vsel %vm2855, %v9037, -inf
        %9764 = vmax.xlane.f32.xlu0 %v9763
        %v9765 = vpop.xlane.xlu0 %9764
        %v9766 = vsel %vm2855, %v9085, -inf
        %9767 = vmax.xlane.f32.xlu0 %v9766
        %v9768 = vpop.xlane.xlu0 %9767
        %v9769 = vsel %vm2855, %v9088, -inf
        %9770 = vmax.xlane.f32.xlu0 %v9769
        %v9771 = vpop.xlane.xlu0 %9770
        %v9772 = vsel %vm2855, %v9136, -inf
        %9773 = vmax.xlane.f32.xlu0 %v9772
        %v9774 = vpop.xlane.xlu0 %9773
        %v9775 = vsel %vm2855, %v9139, -inf
        %9776 = vmax.xlane.f32.xlu0 %v9775
        %v9777 = vpop.xlane.xlu0 %9776
        %v9778 = vsel %vm2855, %v9187, -inf
        %9779 = vmax.xlane.f32.xlu0 %v9778
        %v9780 = vpop.xlane.xlu0 %9779
        %v9781 = vsel %vm2855, %v9190, -inf
        %9782 = vmax.xlane.f32.xlu0 %v9781
        %v9783 = vpop.xlane.xlu0 %9782
        %v9784 = vsel %vm2855, %v9238, -inf
        %9785 = vmax.xlane.f32.xlu0 %v9784
        %v9786 = vpop.xlane.xlu0 %9785
        %v9787 = vsel %vm2855, %v9241, -inf
        %9788 = vmax.xlane.f32.xlu0 %v9787
        %v9789 = vpop.xlane.xlu0 %9788
        %v9790 = vsel %vm2855, %v9289, -inf
        %9791 = vmax.xlane.f32.xlu0 %v9790
        %v9792 = vpop.xlane.xlu0 %9791
        %v9793 = vsel %vm2855, %v9292, -inf
        %9794 = vmax.xlane.f32.xlu0 %v9793
        %v9795 = vpop.xlane.xlu0 %9794
        %v9796 = vsel %vm2855, %v9340, -inf
        %9797 = vmax.xlane.f32.xlu0 %v9796
        %v9798 = vpop.xlane.xlu0 %9797
        %v9799 = vsel %vm2855, %v9343, -inf
        %9800 = vmax.xlane.f32.xlu0 %v9799
        %v9801 = vpop.xlane.xlu0 %9800
        %v9802 = vsel %vm2855, %v9391, -inf
        %9803 = vmax.xlane.f32.xlu0 %v9802
        %v9804 = vpop.xlane.xlu0 %9803
        %v9805 = vsel %vm2855, %v9394, -inf
        %9806 = vmax.xlane.f32.xlu0 %v9805
        %v9807 = vpop.xlane.xlu0 %9806
        %v9808 = vsel %vm2855, %v9442, -inf
        %9809 = vmax.xlane.f32.xlu0 %v9808
        %v9810 = vpop.xlane.xlu0 %9809
        %v9811 = vsel %vm2855, %v9445, -inf
        %9812 = vmax.xlane.f32.xlu0 %v9811
        %v9813 = vpop.xlane.xlu0 %9812
        %v9814 = vsel %vm2855, %v9493, -inf
        %9815 = vmax.xlane.f32.xlu0 %v9814
        %v9816 = vpop.xlane.xlu0 %9815
        %v9817 = vsel %vm2855, %v9496, -inf
        %9818 = vmax.xlane.f32.xlu0 %v9817
        %v9819 = vpop.xlane.xlu0 %9818
        %v9820 = vsel %vm2855, %v9544, -inf
        %9821 = vmax.xlane.f32.xlu0 %v9820
        %v9822 = vpop.xlane.xlu0 %9821
        %v9823 = vsel %vm2855, %v9547, -inf
        %9824 = vmax.xlane.f32.xlu0 %v9823
        %v9825 = vpop.xlane.xlu0 %9824
        %v9826 = vsel %vm2855, %v9595, -inf
        %9827 = vmax.xlane.f32.xlu0 %v9826
        %v9828 = vpop.xlane.xlu0 %9827
        %v9829 = vsel %vm2855, %v9598, -inf
        %9830 = vmax.xlane.f32.xlu0 %v9829
        %v9831 = vpop.xlane.xlu0 %9830
        %v9832 = vsel %vm2855, %v9646, -inf
        %9833 = vmax.xlane.f32.xlu0 %v9832
        %v9834 = vpop.xlane.xlu0 %9833
        %v9835 = vsel %vm2855, %v9649, -inf
        %9836 = vmax.xlane.f32.xlu0 %v9835
        %v9837 = vpop.xlane.xlu0 %9836
        %v9838 = vsel %vm2855, %v9697, -inf
        %9839 = vmax.xlane.f32.xlu0 %v9838
        %v9840 = vpop.xlane.xlu0 %9839
        %v9841 = vsel %vm2855, %v9700, -inf
        %9842 = vmax.xlane.f32.xlu0 %v9841
        %v9843 = vpop.xlane.xlu0 %9842
        %v9844 = vsel %vm2855, %v9748, -inf
        %9845 = vmax.xlane.f32.xlu0 %v9844
        %v9846 = vpop.xlane.xlu0 %9845
        %v9847 = vsel %vm2855, %v9751, -inf
        %9848 = vmax.xlane.f32.xlu0 %v9847
        %v9849 = vpop.xlane.xlu0 %9848
        %v9850 = vsub.f32 %v8983, %v9756
        %v9851 = vsub.f32 %v8986, %v9759
        %v9852 = vsub.f32 %v9034, %v9762
        %v9853 = vsub.f32 %v9037, %v9765
        %v9854 = vsub.f32 %v9085, %v9768
        %v9855 = vsub.f32 %v9088, %v9771
        %v9856 = vsub.f32 %v9136, %v9774
        %v9857 = vsub.f32 %v9139, %v9777
        %v9858 = vsub.f32 %v9187, %v9780
        %v9859 = vsub.f32 %v9190, %v9783
        %v9860 = vsub.f32 %v9238, %v9786
        %v9861 = vsub.f32 %v9241, %v9789
        %v9862 = vsub.f32 %v9289, %v9792
        %v9863 = vsub.f32 %v9292, %v9795
        %v9864 = vsub.f32 %v9340, %v9798
        %v9865 = vsub.f32 %v9343, %v9801
        %v9866 = vsub.f32 %v9391, %v9804
        %v9867 = vsub.f32 %v9394, %v9807
        %v9868 = vsub.f32 %v9442, %v9810
        %v9869 = vsub.f32 %v9445, %v9813
        %v9870 = vsub.f32 %v9493, %v9816
        %v9871 = vsub.f32 %v9496, %v9819
        %v9872 = vsub.f32 %v9544, %v9822
        %v9873 = vsub.f32 %v9547, %v9825
        %v9874 = vsub.f32 %v9595, %v9828
        %v9875 = vsub.f32 %v9598, %v9831
        %v9876 = vsub.f32 %v9646, %v9834
        %v9877 = vsub.f32 %v9649, %v9837
        %v9878 = vsub.f32 %v9697, %v9840
        %v9879 = vsub.f32 %v9700, %v9843
        %v9880 = vsub.f32 %v9748, %v9846
        %v9881 = vsub.f32 %v9751, %v9849
        %v9882 = vmul.f32 %v9850, 1.442695
        %v9883 = vpow.pop %v9882
        %v9884 = vmul.f32 %v9851, 1.442695
        %v9885 = vpow.pop %v9884
        %v9886 = vmul.f32 %v9852, 1.442695
        %v9887 = vpow.pop %v9886
        %v9888 = vmul.f32 %v9853, 1.442695
        %v9889 = vpow.pop %v9888
        %v9890 = vmul.f32 %v9854, 1.442695
        %v9891 = vpow.pop %v9890
        %v9892 = vmul.f32 %v9855, 1.442695
        %v9893 = vpow.pop %v9892
        %v9894 = vmul.f32 %v9856, 1.442695
        %v9895 = vpow.pop %v9894
        %v9896 = vmul.f32 %v9857, 1.442695
        %v9897 = vpow.pop %v9896
        %v9898 = vmul.f32 %v9858, 1.442695
        %v9899 = vpow.pop %v9898
        %v9900 = vmul.f32 %v9859, 1.442695
        %v9901 = vpow.pop %v9900
        %v9902 = vmul.f32 %v9860, 1.442695
        %v9903 = vpow.pop %v9902
        %v9904 = vmul.f32 %v9861, 1.442695
        %v9905 = vpow.pop %v9904
        %v9906 = vmul.f32 %v9862, 1.442695
        %v9907 = vpow.pop %v9906
        %v9908 = vmul.f32 %v9863, 1.442695
        %v9909 = vpow.pop %v9908
        %v9910 = vmul.f32 %v9864, 1.442695
        %v9911 = vpow.pop %v9910
        %v9912 = vmul.f32 %v9865, 1.442695
        %v9913 = vpow.pop %v9912
        %v9914 = vmul.f32 %v9866, 1.442695
        %v9915 = vpow.pop %v9914
        %v9916 = vmul.f32 %v9867, 1.442695
        %v9917 = vpow.pop %v9916
        %v9918 = vmul.f32 %v9868, 1.442695
        %v9919 = vpow.pop %v9918
        %v9920 = vmul.f32 %v9869, 1.442695
        %v9921 = vpow.pop %v9920
        %v9922 = vmul.f32 %v9870, 1.442695
        %v9923 = vpow.pop %v9922
        %v9924 = vmul.f32 %v9871, 1.442695
        %v9925 = vpow.pop %v9924
        %v9926 = vmul.f32 %v9872, 1.442695
        %v9927 = vpow.pop %v9926
        %v9928 = vmul.f32 %v9873, 1.442695
        %v9929 = vpow.pop %v9928
        %v9930 = vmul.f32 %v9874, 1.442695
        %v9931 = vpow.pop %v9930
        %v9932 = vmul.f32 %v9875, 1.442695
        %v9933 = vpow.pop %v9932
        %v9934 = vmul.f32 %v9876, 1.442695
        %v9935 = vpow.pop %v9934
        %v9936 = vmul.f32 %v9877, 1.442695
        %v9937 = vpow.pop %v9936
        %v9938 = vmul.f32 %v9878, 1.442695
        %v9939 = vpow.pop %v9938
        %v9940 = vmul.f32 %v9879, 1.442695
        %v9941 = vpow.pop %v9940
        %v9942 = vmul.f32 %v9880, 1.442695
        %v9943 = vpow.pop %v9942
        %v9944 = vmul.f32 %v9881, 1.442695
        %v9945 = vpow.pop %v9944
        %v9946 = vsel %vm2855, %v9883, 0.0
        %9947 = vadd.xlane.f32.xlu0 %v9946
        %v9948 = vpop.xlane.xlu0 %9947
        %v9949 = vsel %vm2855, %v9885, 0.0
        %9950 = vadd.xlane.f32.xlu0 %v9949
        %v9951 = vpop.xlane.xlu0 %9950
        %v9952 = vsel %vm2855, %v9887, 0.0
        %9953 = vadd.xlane.f32.xlu0 %v9952
        %v9954 = vpop.xlane.xlu0 %9953
        %v9955 = vsel %vm2855, %v9889, 0.0
        %9956 = vadd.xlane.f32.xlu0 %v9955
        %v9957 = vpop.xlane.xlu0 %9956
        %v9958 = vsel %vm2855, %v9891, 0.0
        %9959 = vadd.xlane.f32.xlu0 %v9958
        %v9960 = vpop.xlane.xlu0 %9959
        %v9961 = vsel %vm2855, %v9893, 0.0
        %9962 = vadd.xlane.f32.xlu0 %v9961
        %v9963 = vpop.xlane.xlu0 %9962
        %v9964 = vsel %vm2855, %v9895, 0.0
        %9965 = vadd.xlane.f32.xlu0 %v9964
        %v9966 = vpop.xlane.xlu0 %9965
        %v9967 = vsel %vm2855, %v9897, 0.0
        %9968 = vadd.xlane.f32.xlu0 %v9967
        %v9969 = vpop.xlane.xlu0 %9968
        %v9970 = vsel %vm2855, %v9899, 0.0
        %9971 = vadd.xlane.f32.xlu0 %v9970
        %v9972 = vpop.xlane.xlu0 %9971
        %v9973 = vsel %vm2855, %v9901, 0.0
        %9974 = vadd.xlane.f32.xlu0 %v9973
        %v9975 = vpop.xlane.xlu0 %9974
        %v9976 = vsel %vm2855, %v9903, 0.0
        %9977 = vadd.xlane.f32.xlu0 %v9976
        %v9978 = vpop.xlane.xlu0 %9977
        %v9979 = vsel %vm2855, %v9905, 0.0
        %9980 = vadd.xlane.f32.xlu0 %v9979
        %v9981 = vpop.xlane.xlu0 %9980
        %v9982 = vsel %vm2855, %v9907, 0.0
        %9983 = vadd.xlane.f32.xlu0 %v9982
        %v9984 = vpop.xlane.xlu0 %9983
        %v9985 = vsel %vm2855, %v9909, 0.0
        %9986 = vadd.xlane.f32.xlu0 %v9985
        %v9987 = vpop.xlane.xlu0 %9986
        %v9988 = vsel %vm2855, %v9911, 0.0
        %9989 = vadd.xlane.f32.xlu0 %v9988
        %v9990 = vpop.xlane.xlu0 %9989
        %v9991 = vsel %vm2855, %v9913, 0.0
        %9992 = vadd.xlane.f32.xlu0 %v9991
        %v9993 = vpop.xlane.xlu0 %9992
        %v9994 = vsel %vm2855, %v9915, 0.0
        %9995 = vadd.xlane.f32.xlu0 %v9994
        %v9996 = vpop.xlane.xlu0 %9995
        %v9997 = vsel %vm2855, %v9917, 0.0
        %9998 = vadd.xlane.f32.xlu0 %v9997
        %v9999 = vpop.xlane.xlu0 %9998
        %v10000 = vsel %vm2855, %v9919, 0.0
        %10001 = vadd.xlane.f32.xlu0 %v10000
        %v10002 = vpop.xlane.xlu0 %10001
        %v10003 = vsel %vm2855, %v9921, 0.0
        %10004 = vadd.xlane.f32.xlu0 %v10003
        %v10005 = vpop.xlane.xlu0 %10004
        %v10006 = vsel %vm2855, %v9923, 0.0
        %10007 = vadd.xlane.f32.xlu0 %v10006
        %v10008 = vpop.xlane.xlu0 %10007
        %v10009 = vsel %vm2855, %v9925, 0.0
        %10010 = vadd.xlane.f32.xlu0 %v10009
        %v10011 = vpop.xlane.xlu0 %10010
        %v10012 = vsel %vm2855, %v9927, 0.0
        %10013 = vadd.xlane.f32.xlu0 %v10012
        %v10014 = vpop.xlane.xlu0 %10013
        %v10015 = vsel %vm2855, %v9929, 0.0
        %10016 = vadd.xlane.f32.xlu0 %v10015
        %v10017 = vpop.xlane.xlu0 %10016
        %v10018 = vsel %vm2855, %v9931, 0.0
        %10019 = vadd.xlane.f32.xlu0 %v10018
        %v10020 = vpop.xlane.xlu0 %10019
        %v10021 = vsel %vm2855, %v9933, 0.0
        %10022 = vadd.xlane.f32.xlu0 %v10021
        %v10023 = vpop.xlane.xlu0 %10022
        %v10024 = vsel %vm2855, %v9935, 0.0
        %10025 = vadd.xlane.f32.xlu0 %v10024
        %v10026 = vpop.xlane.xlu0 %10025
        %v10027 = vsel %vm2855, %v9937, 0.0
        %10028 = vadd.xlane.f32.xlu0 %v10027
        %v10029 = vpop.xlane.xlu0 %10028
        %v10030 = vsel %vm2855, %v9939, 0.0
        %10031 = vadd.xlane.f32.xlu0 %v10030
        %v10032 = vpop.xlane.xlu0 %10031
        %v10033 = vsel %vm2855, %v9941, 0.0
        %10034 = vadd.xlane.f32.xlu0 %v10033
        %v10035 = vpop.xlane.xlu0 %10034
        %v10036 = vsel %vm2855, %v9943, 0.0
        %10037 = vadd.xlane.f32.xlu0 %v10036
        %v10038 = vpop.xlane.xlu0 %10037
        %v10039 = vsel %vm2855, %v9945, 0.0
        %10040 = vadd.xlane.f32.xlu0 %v10039
        %v10041 = vpop.xlane.xlu0 %10040
        %v10042 = vpack.c.bf16 %v9885, %v9883
        %v10043 = vpack.c.bf16 %v9889, %v9887
        %v10044 = vpack.c.bf16 %v9893, %v9891
        %v10045 = vpack.c.bf16 %v9897, %v9895
        %v10046 = vpack.c.bf16 %v9901, %v9899
        %v10047 = vpack.c.bf16 %v9905, %v9903
        %v10048 = vpack.c.bf16 %v9909, %v9907
        %v10049 = vpack.c.bf16 %v9913, %v9911
        %v10050 = vpack.c.bf16 %v9917, %v9915
        %v10051 = vpack.c.bf16 %v9921, %v9919
        %v10052 = vpack.c.bf16 %v9925, %v9923
        %v10053 = vpack.c.bf16 %v9929, %v9927
        %v10054 = vpack.c.bf16 %v9933, %v9931
        %v10055 = vpack.c.bf16 %v9937, %v9935
        %v10056 = vpack.c.bf16 %v9941, %v9939
        %v10057 = vpack.c.bf16 %v9945, %v9943
        %10058 = vrot.lane.b32.xlu0 %v2082, 32
        %v10059 = vpop.permute.xlu0 %10058
        %v10062 = vsel %vm2855, %v10042, 0
        %10064 = vmatprep.subr.bf16.mxu0 0
        %10065 = vmatpush1.bf16.msra.mxu0 %v10059
        %10066 = vmatprep.subr.bf16.mxu0 0
        %10067 = vmatpush1.bf16.msra.mxu0 0
        %10068 = vmatprep.subr.bf16.mxu0 0
        %10069 = vmatpush1.bf16.msra.mxu0 0
        %10070 = vmatprep.subr.bf16.mxu0 0
        %10071 = vmatpush1.bf16.msra.mxu0 0
        %10072 = vmatprep.subr.bf16.mxu0 0
        %10073 = vmatpush1.bf16.msra.mxu0 0
        %10074 = vmatprep.subr.bf16.mxu0 0
        %10075 = vmatpush1.bf16.msra.mxu0 0
        %10076 = vmatprep.subr.bf16.mxu0 0
        %10077 = vmatpush1.bf16.msra.mxu0 0
        %10078 = vmatprep.subr.bf16.mxu0 0
        %10079 = vmatpush1.bf16.msra.mxu0 0
        %10080 = vmatprep.subr.bf16.mxu0 0
        %10081 = vmatpush1.bf16.msra.mxu0 0
        %10082 = vmatprep.subr.bf16.mxu0 0
        %10083 = vmatpush1.bf16.msra.mxu0 0
        %10084 = vmatprep.subr.bf16.mxu0 0
        %10085 = vmatpush1.bf16.msra.mxu0 0
        %10086 = vmatprep.subr.bf16.mxu0 0
        %10087 = vmatpush1.bf16.msra.mxu0 0
        %10088 = vmatprep.subr.bf16.mxu0 0
        %10089 = vmatpush1.bf16.msra.mxu0 0
        %10090 = vmatprep.subr.bf16.mxu0 0
        %10091 = vmatpush1.bf16.msra.mxu0 0
        %10092 = vmatprep.subr.bf16.mxu0 0
        %10093 = vmatpush1.bf16.msra.mxu0 0
        %10094 = vmatprep.subr.bf16.mxu0 0
        %10095 = vmatpush1.bf16.msra.mxu0 0
        %10096 = vmatprep.mubr.bf16.mxu0 0
        %10097 = vmatmul.mubr.bf16.gmra.mrb[0].mxu0 %v10062
        %v10098 = vpop.f32.mrb[0].mxu0
        %v10099 = vadd.f32 0.0, %v10098
        %v10100 = vpop.f32.mrb[0].mxu0
        %v10101 = vpop.f32.mrb[0].mxu0
        %v10102 = vadd.f32 0.0, %v10101
        %v10103 = vpop.f32.mrb[0].mxu0
        %10104 = vdwg.mxu0
        %10105 = vrot.lane.b32.xlu0 %v2083, 32
        %v10106 = vpop.permute.xlu0 %10105
        %v10109 = vsel %vm2855, %v10043, 0
        %10111 = vmatprep.subr.bf16.mxu0 0
        %10112 = vmatpush1.bf16.msra.mxu0 %v10106
        %10113 = vmatprep.subr.bf16.mxu0 0
        %10114 = vmatpush1.bf16.msra.mxu0 0
        %10115 = vmatprep.subr.bf16.mxu0 0
        %10116 = vmatpush1.bf16.msra.mxu0 0
        %10117 = vmatprep.subr.bf16.mxu0 0
        %10118 = vmatpush1.bf16.msra.mxu0 0
        %10119 = vmatprep.subr.bf16.mxu0 0
        %10120 = vmatpush1.bf16.msra.mxu0 0
        %10121 = vmatprep.subr.bf16.mxu0 0
        %10122 = vmatpush1.bf16.msra.mxu0 0
        %10123 = vmatprep.subr.bf16.mxu0 0
        %10124 = vmatpush1.bf16.msra.mxu0 0
        %10125 = vmatprep.subr.bf16.mxu0 0
        %10126 = vmatpush1.bf16.msra.mxu0 0
        %10127 = vmatprep.subr.bf16.mxu0 0
        %10128 = vmatpush1.bf16.msra.mxu0 0
        %10129 = vmatprep.subr.bf16.mxu0 0
        %10130 = vmatpush1.bf16.msra.mxu0 0
        %10131 = vmatprep.subr.bf16.mxu0 0
        %10132 = vmatpush1.bf16.msra.mxu0 0
        %10133 = vmatprep.subr.bf16.mxu0 0
        %10134 = vmatpush1.bf16.msra.mxu0 0
        %10135 = vmatprep.subr.bf16.mxu0 0
        %10136 = vmatpush1.bf16.msra.mxu0 0
        %10137 = vmatprep.subr.bf16.mxu0 0
        %10138 = vmatpush1.bf16.msra.mxu0 0
        %10139 = vmatprep.subr.bf16.mxu0 0
        %10140 = vmatpush1.bf16.msra.mxu0 0
        %10141 = vmatprep.subr.bf16.mxu0 0
        %10142 = vmatpush1.bf16.msra.mxu0 0
        %10143 = vmatprep.mubr.bf16.mxu0 0
        %10144 = vmatmul.mubr.bf16.gmra.mrb[0].mxu0 %v10109
        %v10145 = vpop.f32.mrb[0].mxu0
        %v10146 = vadd.f32 0.0, %v10145
        %v10147 = vpop.f32.mrb[0].mxu0
        %v10148 = vpop.f32.mrb[0].mxu0
        %v10149 = vadd.f32 0.0, %v10148
        %v10150 = vpop.f32.mrb[0].mxu0
        %10151 = vdwg.mxu0
        %10152 = vrot.lane.b32.xlu0 %v2084, 32
        %v10153 = vpop.permute.xlu0 %10152
        %v10156 = vsel %vm2855, %v10044, 0
        %10158 = vmatprep.subr.bf16.mxu0 0
        %10159 = vmatpush1.bf16.msra.mxu0 %v10153
        %10160 = vmatprep.subr.bf16.mxu0 0
        %10161 = vmatpush1.bf16.msra.mxu0 0
        %10162 = vmatprep.subr.bf16.mxu0 0
        %10163 = vmatpush1.bf16.msra.mxu0 0
        %10164 = vmatprep.subr.bf16.mxu0 0
        %10165 = vmatpush1.bf16.msra.mxu0 0
        %10166 = vmatprep.subr.bf16.mxu0 0
        %10167 = vmatpush1.bf16.msra.mxu0 0
        %10168 = vmatprep.subr.bf16.mxu0 0
        %10169 = vmatpush1.bf16.msra.mxu0 0
        %10170 = vmatprep.subr.bf16.mxu0 0
        %10171 = vmatpush1.bf16.msra.mxu0 0
        %10172 = vmatprep.subr.bf16.mxu0 0
        %10173 = vmatpush1.bf16.msra.mxu0 0
        %10174 = vmatprep.subr.bf16.mxu0 0
        %10175 = vmatpush1.bf16.msra.mxu0 0
        %10176 = vmatprep.subr.bf16.mxu0 0
        %10177 = vmatpush1.bf16.msra.mxu0 0
        %10178 = vmatprep.subr.bf16.mxu0 0
        %10179 = vmatpush1.bf16.msra.mxu0 0
        %10180 = vmatprep.subr.bf16.mxu0 0
        %10181 = vmatpush1.bf16.msra.mxu0 0
        %10182 = vmatprep.subr.bf16.mxu0 0
        %10183 = vmatpush1.bf16.msra.mxu0 0
        %10184 = vmatprep.subr.bf16.mxu0 0
        %10185 = vmatpush1.bf16.msra.mxu0 0
        %10186 = vmatprep.subr.bf16.mxu0 0
        %10187 = vmatpush1.bf16.msra.mxu0 0
        %10188 = vmatprep.subr.bf16.mxu0 0
        %10189 = vmatpush1.bf16.msra.mxu0 0
        %10190 = vmatprep.mubr.bf16.mxu0 0
        %10191 = vmatmul.mubr.bf16.gmra.mrb[0].mxu0 %v10156
        %v10192 = vpop.f32.mrb[0].mxu0
        %v10193 = vadd.f32 0.0, %v10192
        %v10194 = vpop.f32.mrb[0].mxu0
        %v10195 = vpop.f32.mrb[0].mxu0
        %v10196 = vadd.f32 0.0, %v10195
        %v10197 = vpop.f32.mrb[0].mxu0
        %10198 = vdwg.mxu0
        %10199 = vrot.lane.b32.xlu0 %v2085, 32
        %v10200 = vpop.permute.xlu0 %10199
        %v10203 = vsel %vm2855, %v10045, 0
        %10205 = vmatprep.subr.bf16.mxu0 0
        %10206 = vmatpush1.bf16.msra.mxu0 %v10200
        %10207 = vmatprep.subr.bf16.mxu0 0
        %10208 = vmatpush1.bf16.msra.mxu0 0
        %10209 = vmatprep.subr.bf16.mxu0 0
        %10210 = vmatpush1.bf16.msra.mxu0 0
        %10211 = vmatprep.subr.bf16.mxu0 0
        %10212 = vmatpush1.bf16.msra.mxu0 0
        %10213 = vmatprep.subr.bf16.mxu0 0
        %10214 = vmatpush1.bf16.msra.mxu0 0
        %10215 = vmatprep.subr.bf16.mxu0 0
        %10216 = vmatpush1.bf16.msra.mxu0 0
        %10217 = vmatprep.subr.bf16.mxu0 0
        %10218 = vmatpush1.bf16.msra.mxu0 0
        %10219 = vmatprep.subr.bf16.mxu0 0
        %10220 = vmatpush1.bf16.msra.mxu0 0
        %10221 = vmatprep.subr.bf16.mxu0 0
        %10222 = vmatpush1.bf16.msra.mxu0 0
        %10223 = vmatprep.subr.bf16.mxu0 0
        %10224 = vmatpush1.bf16.msra.mxu0 0
        %10225 = vmatprep.subr.bf16.mxu0 0
        %10226 = vmatpush1.bf16.msra.mxu0 0
        %10227 = vmatprep.subr.bf16.mxu0 0
        %10228 = vmatpush1.bf16.msra.mxu0 0
        %10229 = vmatprep.subr.bf16.mxu0 0
        %10230 = vmatpush1.bf16.msra.mxu0 0
        %10231 = vmatprep.subr.bf16.mxu0 0
        %10232 = vmatpush1.bf16.msra.mxu0 0
        %10233 = vmatprep.subr.bf16.mxu0 0
        %10234 = vmatpush1.bf16.msra.mxu0 0
        %10235 = vmatprep.subr.bf16.mxu0 0
        %10236 = vmatpush1.bf16.msra.mxu0 0
        %10237 = vmatprep.mubr.bf16.mxu0 0
        %10238 = vmatmul.mubr.bf16.gmra.mrb[0].mxu0 %v10203
        %v10239 = vpop.f32.mrb[0].mxu0
        %v10240 = vadd.f32 0.0, %v10239
        %v10241 = vpop.f32.mrb[0].mxu0
        %v10242 = vpop.f32.mrb[0].mxu0
        %v10243 = vadd.f32 0.0, %v10242
        %v10244 = vpop.f32.mrb[0].mxu0
        %10245 = vdwg.mxu0
        %10246 = vrot.lane.b32.xlu0 %v2086, 32
        %v10247 = vpop.permute.xlu0 %10246
        %v10250 = vsel %vm2855, %v10046, 0
        %10252 = vmatprep.subr.bf16.mxu0 0
        %10253 = vmatpush1.bf16.msra.mxu0 %v10247
        %10254 = vmatprep.subr.bf16.mxu0 0
        %10255 = vmatpush1.bf16.msra.mxu0 0
        %10256 = vmatprep.subr.bf16.mxu0 0
        %10257 = vmatpush1.bf16.msra.mxu0 0
        %10258 = vmatprep.subr.bf16.mxu0 0
        %10259 = vmatpush1.bf16.msra.mxu0 0
        %10260 = vmatprep.subr.bf16.mxu0 0
        %10261 = vmatpush1.bf16.msra.mxu0 0
        %10262 = vmatprep.subr.bf16.mxu0 0
        %10263 = vmatpush1.bf16.msra.mxu0 0
        %10264 = vmatprep.subr.bf16.mxu0 0
        %10265 = vmatpush1.bf16.msra.mxu0 0
        %10266 = vmatprep.subr.bf16.mxu0 0
        %10267 = vmatpush1.bf16.msra.mxu0 0
        %10268 = vmatprep.subr.bf16.mxu0 0
        %10269 = vmatpush1.bf16.msra.mxu0 0
        %10270 = vmatprep.subr.bf16.mxu0 0
        %10271 = vmatpush1.bf16.msra.mxu0 0
        %10272 = vmatprep.subr.bf16.mxu0 0
        %10273 = vmatpush1.bf16.msra.mxu0 0
        %10274 = vmatprep.subr.bf16.mxu0 0
        %10275 = vmatpush1.bf16.msra.mxu0 0
        %10276 = vmatprep.subr.bf16.mxu0 0
        %10277 = vmatpush1.bf16.msra.mxu0 0
        %10278 = vmatprep.subr.bf16.mxu0 0
        %10279 = vmatpush1.bf16.msra.mxu0 0
        %10280 = vmatprep.subr.bf16.mxu0 0
        %10281 = vmatpush1.bf16.msra.mxu0 0
        %10282 = vmatprep.subr.bf16.mxu0 0
        %10283 = vmatpush1.bf16.msra.mxu0 0
        %10284 = vmatprep.mubr.bf16.mxu0 0
        %10285 = vmatmul.mubr.bf16.gmra.mrb[0].mxu0 %v10250
        %v10286 = vpop.f32.mrb[0].mxu0
        %v10287 = vadd.f32 0.0, %v10286
        %v10288 = vpop.f32.mrb[0].mxu0
        %v10289 = vpop.f32.mrb[0].mxu0
        %v10290 = vadd.f32 0.0, %v10289
        %v10291 = vpop.f32.mrb[0].mxu0
        %10292 = vdwg.mxu0
        %10293 = vrot.lane.b32.xlu0 %v2087, 32
        %v10294 = vpop.permute.xlu0 %10293
        %v10297 = vsel %vm2855, %v10047, 0
        %10299 = vmatprep.subr.bf16.mxu0 0
        %10300 = vmatpush1.bf16.msra.mxu0 %v10294
        %10301 = vmatprep.subr.bf16.mxu0 0
        %10302 = vmatpush1.bf16.msra.mxu0 0
        %10303 = vmatprep.subr.bf16.mxu0 0
        %10304 = vmatpush1.bf16.msra.mxu0 0
        %10305 = vmatprep.subr.bf16.mxu0 0
        %10306 = vmatpush1.bf16.msra.mxu0 0
        %10307 = vmatprep.subr.bf16.mxu0 0
        %10308 = vmatpush1.bf16.msra.mxu0 0
        %10309 = vmatprep.subr.bf16.mxu0 0
        %10310 = vmatpush1.bf16.msra.mxu0 0
        %10311 = vmatprep.subr.bf16.mxu0 0
        %10312 = vmatpush1.bf16.msra.mxu0 0
        %10313 = vmatprep.subr.bf16.mxu0 0
        %10314 = vmatpush1.bf16.msra.mxu0 0
        %10315 = vmatprep.subr.bf16.mxu0 0
        %10316 = vmatpush1.bf16.msra.mxu0 0
        %10317 = vmatprep.subr.bf16.mxu0 0
        %10318 = vmatpush1.bf16.msra.mxu0 0
        %10319 = vmatprep.subr.bf16.mxu0 0
        %10320 = vmatpush1.bf16.msra.mxu0 0
        %10321 = vmatprep.subr.bf16.mxu0 0
        %10322 = vmatpush1.bf16.msra.mxu0 0
        %10323 = vmatprep.subr.bf16.mxu0 0
        %10324 = vmatpush1.bf16.msra.mxu0 0
        %10325 = vmatprep.subr.bf16.mxu0 0
        %10326 = vmatpush1.bf16.msra.mxu0 0
        %10327 = vmatprep.subr.bf16.mxu0 0
        %10328 = vmatpush1.bf16.msra.mxu0 0
        %10329 = vmatprep.subr.bf16.mxu0 0
        %10330 = vmatpush1.bf16.msra.mxu0 0
        %10331 = vmatprep.mubr.bf16.mxu0 0
        %10332 = vmatmul.mubr.bf16.gmra.mrb[0].mxu0 %v10297
        %v10333 = vpop.f32.mrb[0].mxu0
        %v10334 = vadd.f32 0.0, %v10333
        %v10335 = vpop.f32.mrb[0].mxu0
        %v10336 = vpop.f32.mrb[0].mxu0
        %v10337 = vadd.f32 0.0, %v10336
        %v10338 = vpop.f32.mrb[0].mxu0
        %10339 = vdwg.mxu0
        %10340 = vrot.lane.b32.xlu0 %v2088, 32
        %v10341 = vpop.permute.xlu0 %10340
        %v10344 = vsel %vm2855, %v10048, 0
        %10346 = vmatprep.subr.bf16.mxu0 0
        %10347 = vmatpush1.bf16.msra.mxu0 %v10341
        %10348 = vmatprep.subr.bf16.mxu0 0
        %10349 = vmatpush1.bf16.msra.mxu0 0
        %10350 = vmatprep.subr.bf16.mxu0 0
        %10351 = vmatpush1.bf16.msra.mxu0 0
        %10352 = vmatprep.subr.bf16.mxu0 0
        %10353 = vmatpush1.bf16.msra.mxu0 0
        %10354 = vmatprep.subr.bf16.mxu0 0
        %10355 = vmatpush1.bf16.msra.mxu0 0
        %10356 = vmatprep.subr.bf16.mxu0 0
        %10357 = vmatpush1.bf16.msra.mxu0 0
        %10358 = vmatprep.subr.bf16.mxu0 0
        %10359 = vmatpush1.bf16.msra.mxu0 0
        %10360 = vmatprep.subr.bf16.mxu0 0
        %10361 = vmatpush1.bf16.msra.mxu0 0
        %10362 = vmatprep.subr.bf16.mxu0 0
        %10363 = vmatpush1.bf16.msra.mxu0 0
        %10364 = vmatprep.subr.bf16.mxu0 0
        %10365 = vmatpush1.bf16.msra.mxu0 0
        %10366 = vmatprep.subr.bf16.mxu0 0
        %10367 = vmatpush1.bf16.msra.mxu0 0
        %10368 = vmatprep.subr.bf16.mxu0 0
        %10369 = vmatpush1.bf16.msra.mxu0 0
        %10370 = vmatprep.subr.bf16.mxu0 0
        %10371 = vmatpush1.bf16.msra.mxu0 0
        %10372 = vmatprep.subr.bf16.mxu0 0
        %10373 = vmatpush1.bf16.msra.mxu0 0
        %10374 = vmatprep.subr.bf16.mxu0 0
        %10375 = vmatpush1.bf16.msra.mxu0 0
        %10376 = vmatprep.subr.bf16.mxu0 0
        %10377 = vmatpush1.bf16.msra.mxu0 0
        %10378 = vmatprep.mubr.bf16.mxu0 0
        %10379 = vmatmul.mubr.bf16.gmra.mrb[0].mxu0 %v10344
        %v10380 = vpop.f32.mrb[0].mxu0
        %v10381 = vadd.f32 0.0, %v10380
        %v10382 = vpop.f32.mrb[0].mxu0
        %v10383 = vpop.f32.mrb[0].mxu0
        %v10384 = vadd.f32 0.0, %v10383
        %v10385 = vpop.f32.mrb[0].mxu0
        %10386 = vdwg.mxu0
        %10387 = vrot.lane.b32.xlu0 %v2089, 32
        %v10388 = vpop.permute.xlu0 %10387
        %v10391 = vsel %vm2855, %v10049, 0
        %10393 = vmatprep.subr.bf16.mxu0 0
        %10394 = vmatpush1.bf16.msra.mxu0 %v10388
        %10395 = vmatprep.subr.bf16.mxu0 0
        %10396 = vmatpush1.bf16.msra.mxu0 0
        %10397 = vmatprep.subr.bf16.mxu0 0
        %10398 = vmatpush1.bf16.msra.mxu0 0
        %10399 = vmatprep.subr.bf16.mxu0 0
        %10400 = vmatpush1.bf16.msra.mxu0 0
        %10401 = vmatprep.subr.bf16.mxu0 0
        %10402 = vmatpush1.bf16.msra.mxu0 0
        %10403 = vmatprep.subr.bf16.mxu0 0
        %10404 = vmatpush1.bf16.msra.mxu0 0
        %10405 = vmatprep.subr.bf16.mxu0 0
        %10406 = vmatpush1.bf16.msra.mxu0 0
        %10407 = vmatprep.subr.bf16.mxu0 0
        %10408 = vmatpush1.bf16.msra.mxu0 0
        %10409 = vmatprep.subr.bf16.mxu0 0
        %10410 = vmatpush1.bf16.msra.mxu0 0
        %10411 = vmatprep.subr.bf16.mxu0 0
        %10412 = vmatpush1.bf16.msra.mxu0 0
        %10413 = vmatprep.subr.bf16.mxu0 0
        %10414 = vmatpush1.bf16.msra.mxu0 0
        %10415 = vmatprep.subr.bf16.mxu0 0
        %10416 = vmatpush1.bf16.msra.mxu0 0
        %10417 = vmatprep.subr.bf16.mxu0 0
        %10418 = vmatpush1.bf16.msra.mxu0 0
        %10419 = vmatprep.subr.bf16.mxu0 0
        %10420 = vmatpush1.bf16.msra.mxu0 0
        %10421 = vmatprep.subr.bf16.mxu0 0
        %10422 = vmatpush1.bf16.msra.mxu0 0
        %10423 = vmatprep.subr.bf16.mxu0 0
        %10424 = vmatpush1.bf16.msra.mxu0 0
        %10425 = vmatprep.mubr.bf16.mxu0 0
        %10426 = vmatmul.mubr.bf16.gmra.mrb[0].mxu0 %v10391
        %v10427 = vpop.f32.mrb[0].mxu0
        %v10428 = vadd.f32 0.0, %v10427
        %v10429 = vpop.f32.mrb[0].mxu0
        %v10430 = vpop.f32.mrb[0].mxu0
        %v10431 = vadd.f32 0.0, %v10430
        %v10432 = vpop.f32.mrb[0].mxu0
        %10433 = vdwg.mxu0
        %10434 = vrot.lane.b32.xlu0 %v2090, 32
        %v10435 = vpop.permute.xlu0 %10434
        %v10438 = vsel %vm2855, %v10050, 0
        %10440 = vmatprep.subr.bf16.mxu0 0
        %10441 = vmatpush1.bf16.msra.mxu0 %v10435
        %10442 = vmatprep.subr.bf16.mxu0 0
        %10443 = vmatpush1.bf16.msra.mxu0 0
        %10444 = vmatprep.subr.bf16.mxu0 0
        %10445 = vmatpush1.bf16.msra.mxu0 0
        %10446 = vmatprep.subr.bf16.mxu0 0
        %10447 = vmatpush1.bf16.msra.mxu0 0
        %10448 = vmatprep.subr.bf16.mxu0 0
        %10449 = vmatpush1.bf16.msra.mxu0 0
        %10450 = vmatprep.subr.bf16.mxu0 0
        %10451 = vmatpush1.bf16.msra.mxu0 0
        %10452 = vmatprep.subr.bf16.mxu0 0
        %10453 = vmatpush1.bf16.msra.mxu0 0
        %10454 = vmatprep.subr.bf16.mxu0 0
        %10455 = vmatpush1.bf16.msra.mxu0 0
        %10456 = vmatprep.subr.bf16.mxu0 0
        %10457 = vmatpush1.bf16.msra.mxu0 0
        %10458 = vmatprep.subr.bf16.mxu0 0
        %10459 = vmatpush1.bf16.msra.mxu0 0
        %10460 = vmatprep.subr.bf16.mxu0 0
        %10461 = vmatpush1.bf16.msra.mxu0 0
        %10462 = vmatprep.subr.bf16.mxu0 0
        %10463 = vmatpush1.bf16.msra.mxu0 0
        %10464 = vmatprep.subr.bf16.mxu0 0
        %10465 = vmatpush1.bf16.msra.mxu0 0
        %10466 = vmatprep.subr.bf16.mxu0 0
        %10467 = vmatpush1.bf16.msra.mxu0 0
        %10468 = vmatprep.subr.bf16.mxu0 0
        %10469 = vmatpush1.bf16.msra.mxu0 0
        %10470 = vmatprep.subr.bf16.mxu0 0
        %10471 = vmatpush1.bf16.msra.mxu0 0
        %10472 = vmatprep.mubr.bf16.mxu0 0
        %10473 = vmatmul.mubr.bf16.gmra.mrb[0].mxu0 %v10438
        %v10474 = vpop.f32.mrb[0].mxu0
        %v10475 = vadd.f32 0.0, %v10474
        %v10476 = vpop.f32.mrb[0].mxu0
        %v10477 = vpop.f32.mrb[0].mxu0
        %v10478 = vadd.f32 0.0, %v10477
        %v10479 = vpop.f32.mrb[0].mxu0
        %10480 = vdwg.mxu0
        %10481 = vrot.lane.b32.xlu0 %v2091, 32
        %v10482 = vpop.permute.xlu0 %10481
        %v10485 = vsel %vm2855, %v10051, 0
        %10487 = vmatprep.subr.bf16.mxu0 0
        %10488 = vmatpush1.bf16.msra.mxu0 %v10482
        %10489 = vmatprep.subr.bf16.mxu0 0
        %10490 = vmatpush1.bf16.msra.mxu0 0
        %10491 = vmatprep.subr.bf16.mxu0 0
        %10492 = vmatpush1.bf16.msra.mxu0 0
        %10493 = vmatprep.subr.bf16.mxu0 0
        %10494 = vmatpush1.bf16.msra.mxu0 0
        %10495 = vmatprep.subr.bf16.mxu0 0
        %10496 = vmatpush1.bf16.msra.mxu0 0
        %10497 = vmatprep.subr.bf16.mxu0 0
        %10498 = vmatpush1.bf16.msra.mxu0 0
        %10499 = vmatprep.subr.bf16.mxu0 0
        %10500 = vmatpush1.bf16.msra.mxu0 0
        %10501 = vmatprep.subr.bf16.mxu0 0
        %10502 = vmatpush1.bf16.msra.mxu0 0
        %10503 = vmatprep.subr.bf16.mxu0 0
        %10504 = vmatpush1.bf16.msra.mxu0 0
        %10505 = vmatprep.subr.bf16.mxu0 0
        %10506 = vmatpush1.bf16.msra.mxu0 0
        %10507 = vmatprep.subr.bf16.mxu0 0
        %10508 = vmatpush1.bf16.msra.mxu0 0
        %10509 = vmatprep.subr.bf16.mxu0 0
        %10510 = vmatpush1.bf16.msra.mxu0 0
        %10511 = vmatprep.subr.bf16.mxu0 0
        %10512 = vmatpush1.bf16.msra.mxu0 0
        %10513 = vmatprep.subr.bf16.mxu0 0
        %10514 = vmatpush1.bf16.msra.mxu0 0
        %10515 = vmatprep.subr.bf16.mxu0 0
        %10516 = vmatpush1.bf16.msra.mxu0 0
        %10517 = vmatprep.subr.bf16.mxu0 0
        %10518 = vmatpush1.bf16.msra.mxu0 0
        %10519 = vmatprep.mubr.bf16.mxu0 0
        %10520 = vmatmul.mubr.bf16.gmra.mrb[0].mxu0 %v10485
        %v10521 = vpop.f32.mrb[0].mxu0
        %v10522 = vadd.f32 0.0, %v10521
        %v10523 = vpop.f32.mrb[0].mxu0
        %v10524 = vpop.f32.mrb[0].mxu0
        %v10525 = vadd.f32 0.0, %v10524
        %v10526 = vpop.f32.mrb[0].mxu0
        %10527 = vdwg.mxu0
        %10528 = vrot.lane.b32.xlu0 %v2092, 32
        %v10529 = vpop.permute.xlu0 %10528
        %v10532 = vsel %vm2855, %v10052, 0
        %10534 = vmatprep.subr.bf16.mxu0 0
        %10535 = vmatpush1.bf16.msra.mxu0 %v10529
        %10536 = vmatprep.subr.bf16.mxu0 0
        %10537 = vmatpush1.bf16.msra.mxu0 0
        %10538 = vmatprep.subr.bf16.mxu0 0
        %10539 = vmatpush1.bf16.msra.mxu0 0
        %10540 = vmatprep.subr.bf16.mxu0 0
        %10541 = vmatpush1.bf16.msra.mxu0 0
        %10542 = vmatprep.subr.bf16.mxu0 0
        %10543 = vmatpush1.bf16.msra.mxu0 0
        %10544 = vmatprep.subr.bf16.mxu0 0
        %10545 = vmatpush1.bf16.msra.mxu0 0
        %10546 = vmatprep.subr.bf16.mxu0 0
        %10547 = vmatpush1.bf16.msra.mxu0 0
        %10548 = vmatprep.subr.bf16.mxu0 0
        %10549 = vmatpush1.bf16.msra.mxu0 0
        %10550 = vmatprep.subr.bf16.mxu0 0
        %10551 = vmatpush1.bf16.msra.mxu0 0
        %10552 = vmatprep.subr.bf16.mxu0 0
        %10553 = vmatpush1.bf16.msra.mxu0 0
        %10554 = vmatprep.subr.bf16.mxu0 0
        %10555 = vmatpush1.bf16.msra.mxu0 0
        %10556 = vmatprep.subr.bf16.mxu0 0
        %10557 = vmatpush1.bf16.msra.mxu0 0
        %10558 = vmatprep.subr.bf16.mxu0 0
        %10559 = vmatpush1.bf16.msra.mxu0 0
        %10560 = vmatprep.subr.bf16.mxu0 0
        %10561 = vmatpush1.bf16.msra.mxu0 0
        %10562 = vmatprep.subr.bf16.mxu0 0
        %10563 = vmatpush1.bf16.msra.mxu0 0
        %10564 = vmatprep.subr.bf16.mxu0 0
        %10565 = vmatpush1.bf16.msra.mxu0 0
        %10566 = vmatprep.mubr.bf16.mxu0 0
        %10567 = vmatmul.mubr.bf16.gmra.mrb[0].mxu0 %v10532
        %v10568 = vpop.f32.mrb[0].mxu0
        %v10569 = vadd.f32 0.0, %v10568
        %v10570 = vpop.f32.mrb[0].mxu0
        %v10571 = vpop.f32.mrb[0].mxu0
        %v10572 = vadd.f32 0.0, %v10571
        %v10573 = vpop.f32.mrb[0].mxu0
        %10574 = vdwg.mxu0
        %10575 = vrot.lane.b32.xlu0 %v2093, 32
        %v10576 = vpop.permute.xlu0 %10575
        %v10579 = vsel %vm2855, %v10053, 0
        %10581 = vmatprep.subr.bf16.mxu0 0
        %10582 = vmatpush1.bf16.msra.mxu0 %v10576
        %10583 = vmatprep.subr.bf16.mxu0 0
        %10584 = vmatpush1.bf16.msra.mxu0 0
        %10585 = vmatprep.subr.bf16.mxu0 0
        %10586 = vmatpush1.bf16.msra.mxu0 0
        %10587 = vmatprep.subr.bf16.mxu0 0
        %10588 = vmatpush1.bf16.msra.mxu0 0
        %10589 = vmatprep.subr.bf16.mxu0 0
        %10590 = vmatpush1.bf16.msra.mxu0 0
        %10591 = vmatprep.subr.bf16.mxu0 0
        %10592 = vmatpush1.bf16.msra.mxu0 0
        %10593 = vmatprep.subr.bf16.mxu0 0
        %10594 = vmatpush1.bf16.msra.mxu0 0
        %10595 = vmatprep.subr.bf16.mxu0 0
        %10596 = vmatpush1.bf16.msra.mxu0 0
        %10597 = vmatprep.subr.bf16.mxu0 0
        %10598 = vmatpush1.bf16.msra.mxu0 0
        %10599 = vmatprep.subr.bf16.mxu0 0
        %10600 = vmatpush1.bf16.msra.mxu0 0
        %10601 = vmatprep.subr.bf16.mxu0 0
        %10602 = vmatpush1.bf16.msra.mxu0 0
        %10603 = vmatprep.subr.bf16.mxu0 0
        %10604 = vmatpush1.bf16.msra.mxu0 0
        %10605 = vmatprep.subr.bf16.mxu0 0
        %10606 = vmatpush1.bf16.msra.mxu0 0
        %10607 = vmatprep.subr.bf16.mxu0 0
        %10608 = vmatpush1.bf16.msra.mxu0 0
        %10609 = vmatprep.subr.bf16.mxu0 0
        %10610 = vmatpush1.bf16.msra.mxu0 0
        %10611 = vmatprep.subr.bf16.mxu0 0
        %10612 = vmatpush1.bf16.msra.mxu0 0
        %10613 = vmatprep.mubr.bf16.mxu0 0
        %10614 = vmatmul.mubr.bf16.gmra.mrb[0].mxu0 %v10579
        %v10615 = vpop.f32.mrb[0].mxu0
        %v10616 = vadd.f32 0.0, %v10615
        %v10617 = vpop.f32.mrb[0].mxu0
        %v10618 = vpop.f32.mrb[0].mxu0
        %v10619 = vadd.f32 0.0, %v10618
        %v10620 = vpop.f32.mrb[0].mxu0
        %10621 = vdwg.mxu0
        %10622 = vrot.lane.b32.xlu0 %v2094, 32
        %v10623 = vpop.permute.xlu0 %10622
        %v10626 = vsel %vm2855, %v10054, 0
        %10628 = vmatprep.subr.bf16.mxu0 0
        %10629 = vmatpush1.bf16.msra.mxu0 %v10623
        %10630 = vmatprep.subr.bf16.mxu0 0
        %10631 = vmatpush1.bf16.msra.mxu0 0
        %10632 = vmatprep.subr.bf16.mxu0 0
        %10633 = vmatpush1.bf16.msra.mxu0 0
        %10634 = vmatprep.subr.bf16.mxu0 0
        %10635 = vmatpush1.bf16.msra.mxu0 0
        %10636 = vmatprep.subr.bf16.mxu0 0
        %10637 = vmatpush1.bf16.msra.mxu0 0
        %10638 = vmatprep.subr.bf16.mxu0 0
        %10639 = vmatpush1.bf16.msra.mxu0 0
        %10640 = vmatprep.subr.bf16.mxu0 0
        %10641 = vmatpush1.bf16.msra.mxu0 0
        %10642 = vmatprep.subr.bf16.mxu0 0
        %10643 = vmatpush1.bf16.msra.mxu0 0
        %10644 = vmatprep.subr.bf16.mxu0 0
        %10645 = vmatpush1.bf16.msra.mxu0 0
        %10646 = vmatprep.subr.bf16.mxu0 0
        %10647 = vmatpush1.bf16.msra.mxu0 0
        %10648 = vmatprep.subr.bf16.mxu0 0
        %10649 = vmatpush1.bf16.msra.mxu0 0
        %10650 = vmatprep.subr.bf16.mxu0 0
        %10651 = vmatpush1.bf16.msra.mxu0 0
        %10652 = vmatprep.subr.bf16.mxu0 0
        %10653 = vmatpush1.bf16.msra.mxu0 0
        %10654 = vmatprep.subr.bf16.mxu0 0
        %10655 = vmatpush1.bf16.msra.mxu0 0
        %10656 = vmatprep.subr.bf16.mxu0 0
        %10657 = vmatpush1.bf16.msra.mxu0 0
        %10658 = vmatprep.subr.bf16.mxu0 0
        %10659 = vmatpush1.bf16.msra.mxu0 0
        %10660 = vmatprep.mubr.bf16.mxu0 0
        %10661 = vmatmul.mubr.bf16.gmra.mrb[0].mxu0 %v10626
        %v10662 = vpop.f32.mrb[0].mxu0
        %v10663 = vadd.f32 0.0, %v10662
        %v10664 = vpop.f32.mrb[0].mxu0
        %v10665 = vpop.f32.mrb[0].mxu0
        %v10666 = vadd.f32 0.0, %v10665
        %v10667 = vpop.f32.mrb[0].mxu0
        %10668 = vdwg.mxu0
        %10669 = vrot.lane.b32.xlu0 %v2095, 32
        %v10670 = vpop.permute.xlu0 %10669
        %v10673 = vsel %vm2855, %v10055, 0
        %10675 = vmatprep.subr.bf16.mxu0 0
        %10676 = vmatpush1.bf16.msra.mxu0 %v10670
        %10677 = vmatprep.subr.bf16.mxu0 0
        %10678 = vmatpush1.bf16.msra.mxu0 0
        %10679 = vmatprep.subr.bf16.mxu0 0
        %10680 = vmatpush1.bf16.msra.mxu0 0
        %10681 = vmatprep.subr.bf16.mxu0 0
        %10682 = vmatpush1.bf16.msra.mxu0 0
        %10683 = vmatprep.subr.bf16.mxu0 0
        %10684 = vmatpush1.bf16.msra.mxu0 0
        %10685 = vmatprep.subr.bf16.mxu0 0
        %10686 = vmatpush1.bf16.msra.mxu0 0
        %10687 = vmatprep.subr.bf16.mxu0 0
        %10688 = vmatpush1.bf16.msra.mxu0 0
        %10689 = vmatprep.subr.bf16.mxu0 0
        %10690 = vmatpush1.bf16.msra.mxu0 0
        %10691 = vmatprep.subr.bf16.mxu0 0
        %10692 = vmatpush1.bf16.msra.mxu0 0
        %10693 = vmatprep.subr.bf16.mxu0 0
        %10694 = vmatpush1.bf16.msra.mxu0 0
        %10695 = vmatprep.subr.bf16.mxu0 0
        %10696 = vmatpush1.bf16.msra.mxu0 0
        %10697 = vmatprep.subr.bf16.mxu0 0
        %10698 = vmatpush1.bf16.msra.mxu0 0
        %10699 = vmatprep.subr.bf16.mxu0 0
        %10700 = vmatpush1.bf16.msra.mxu0 0
        %10701 = vmatprep.subr.bf16.mxu0 0
        %10702 = vmatpush1.bf16.msra.mxu0 0
        %10703 = vmatprep.subr.bf16.mxu0 0
        %10704 = vmatpush1.bf16.msra.mxu0 0
        %10705 = vmatprep.subr.bf16.mxu0 0
        %10706 = vmatpush1.bf16.msra.mxu0 0
        %10707 = vmatprep.mubr.bf16.mxu0 0
        %10708 = vmatmul.mubr.bf16.gmra.mrb[0].mxu0 %v10673
        %v10709 = vpop.f32.mrb[0].mxu0
        %v10710 = vadd.f32 0.0, %v10709
        %v10711 = vpop.f32.mrb[0].mxu0
        %v10712 = vpop.f32.mrb[0].mxu0
        %v10713 = vadd.f32 0.0, %v10712
        %v10714 = vpop.f32.mrb[0].mxu0
        %10715 = vdwg.mxu0
        %10716 = vrot.lane.b32.xlu0 %v2096, 32
        %v10717 = vpop.permute.xlu0 %10716
        %v10720 = vsel %vm2855, %v10056, 0
        %10722 = vmatprep.subr.bf16.mxu0 0
        %10723 = vmatpush1.bf16.msra.mxu0 %v10717
        %10724 = vmatprep.subr.bf16.mxu0 0
        %10725 = vmatpush1.bf16.msra.mxu0 0
        %10726 = vmatprep.subr.bf16.mxu0 0
        %10727 = vmatpush1.bf16.msra.mxu0 0
        %10728 = vmatprep.subr.bf16.mxu0 0
        %10729 = vmatpush1.bf16.msra.mxu0 0
        %10730 = vmatprep.subr.bf16.mxu0 0
        %10731 = vmatpush1.bf16.msra.mxu0 0
        %10732 = vmatprep.subr.bf16.mxu0 0
        %10733 = vmatpush1.bf16.msra.mxu0 0
        %10734 = vmatprep.subr.bf16.mxu0 0
        %10735 = vmatpush1.bf16.msra.mxu0 0
        %10736 = vmatprep.subr.bf16.mxu0 0
        %10737 = vmatpush1.bf16.msra.mxu0 0
        %10738 = vmatprep.subr.bf16.mxu0 0
        %10739 = vmatpush1.bf16.msra.mxu0 0
        %10740 = vmatprep.subr.bf16.mxu0 0
        %10741 = vmatpush1.bf16.msra.mxu0 0
        %10742 = vmatprep.subr.bf16.mxu0 0
        %10743 = vmatpush1.bf16.msra.mxu0 0
        %10744 = vmatprep.subr.bf16.mxu0 0
        %10745 = vmatpush1.bf16.msra.mxu0 0
        %10746 = vmatprep.subr.bf16.mxu0 0
        %10747 = vmatpush1.bf16.msra.mxu0 0
        %10748 = vmatprep.subr.bf16.mxu0 0
        %10749 = vmatpush1.bf16.msra.mxu0 0
        %10750 = vmatprep.subr.bf16.mxu0 0
        %10751 = vmatpush1.bf16.msra.mxu0 0
        %10752 = vmatprep.subr.bf16.mxu0 0
        %10753 = vmatpush1.bf16.msra.mxu0 0
        %10754 = vmatprep.mubr.bf16.mxu0 0
        %10755 = vmatmul.mubr.bf16.gmra.mrb[0].mxu0 %v10720
        %v10756 = vpop.f32.mrb[0].mxu0
        %v10757 = vadd.f32 0.0, %v10756
        %v10758 = vpop.f32.mrb[0].mxu0
        %v10759 = vpop.f32.mrb[0].mxu0
        %v10760 = vadd.f32 0.0, %v10759
        %v10761 = vpop.f32.mrb[0].mxu0
        %10762 = vdwg.mxu0
        %10763 = vrot.lane.b32.xlu0 %v2097, 32
        %v10764 = vpop.permute.xlu0 %10763
        %v10767 = vsel %vm2855, %v10057, 0
        %10769 = vmatprep.subr.bf16.mxu0 0
        %10770 = vmatpush1.bf16.msra.mxu0 %v10764
        %10771 = vmatprep.subr.bf16.mxu0 0
        %10772 = vmatpush1.bf16.msra.mxu0 0
        %10773 = vmatprep.subr.bf16.mxu0 0
        %10774 = vmatpush1.bf16.msra.mxu0 0
        %10775 = vmatprep.subr.bf16.mxu0 0
        %10776 = vmatpush1.bf16.msra.mxu0 0
        %10777 = vmatprep.subr.bf16.mxu0 0
        %10778 = vmatpush1.bf16.msra.mxu0 0
        %10779 = vmatprep.subr.bf16.mxu0 0
        %10780 = vmatpush1.bf16.msra.mxu0 0
        %10781 = vmatprep.subr.bf16.mxu0 0
        %10782 = vmatpush1.bf16.msra.mxu0 0
        %10783 = vmatprep.subr.bf16.mxu0 0
        %10784 = vmatpush1.bf16.msra.mxu0 0
        %10785 = vmatprep.subr.bf16.mxu0 0
        %10786 = vmatpush1.bf16.msra.mxu0 0
        %10787 = vmatprep.subr.bf16.mxu0 0
        %10788 = vmatpush1.bf16.msra.mxu0 0
        %10789 = vmatprep.subr.bf16.mxu0 0
        %10790 = vmatpush1.bf16.msra.mxu0 0
        %10791 = vmatprep.subr.bf16.mxu0 0
        %10792 = vmatpush1.bf16.msra.mxu0 0
        %10793 = vmatprep.subr.bf16.mxu0 0
        %10794 = vmatpush1.bf16.msra.mxu0 0
        %10795 = vmatprep.subr.bf16.mxu0 0
        %10796 = vmatpush1.bf16.msra.mxu0 0
        %10797 = vmatprep.subr.bf16.mxu0 0
        %10798 = vmatpush1.bf16.msra.mxu0 0
        %10799 = vmatprep.subr.bf16.mxu0 0
        %10800 = vmatpush1.bf16.msra.mxu0 0
        %10801 = vmatprep.mubr.bf16.mxu0 0
        %10802 = vmatmul.mubr.bf16.gmra.mrb[0].mxu0 %v10767
        %v10803 = vpop.f32.mrb[0].mxu0
        %v10804 = vadd.f32 0.0, %v10803
        %v10805 = vpop.f32.mrb[0].mxu0
        %v10806 = vpop.f32.mrb[0].mxu0
        %v10807 = vadd.f32 0.0, %v10806
        %v10808 = vpop.f32.mrb[0].mxu0
        %10809 = vdwg.mxu0
        %v10810 = vrcp.pop %v9948
        %v10811 = vrcp.pop %v9951
        %v10812 = vrcp.pop %v9954
        %v10813 = vrcp.pop %v9957
        %v10814 = vrcp.pop %v9960
        %v10815 = vrcp.pop %v9963
        %v10816 = vrcp.pop %v9966
        %v10817 = vrcp.pop %v9969
        %v10818 = vrcp.pop %v9972
        %v10819 = vrcp.pop %v9975
        %v10820 = vrcp.pop %v9978
        %v10821 = vrcp.pop %v9981
        %v10822 = vrcp.pop %v9984
        %v10823 = vrcp.pop %v9987
        %v10824 = vrcp.pop %v9990
        %v10825 = vrcp.pop %v9993
        %v10826 = vrcp.pop %v9996
        %v10827 = vrcp.pop %v9999
        %v10828 = vrcp.pop %v10002
        %v10829 = vrcp.pop %v10005
        %v10830 = vrcp.pop %v10008
        %v10831 = vrcp.pop %v10011
        %v10832 = vrcp.pop %v10014
        %v10833 = vrcp.pop %v10017
        %v10834 = vrcp.pop %v10020
        %v10835 = vrcp.pop %v10023
        %v10836 = vrcp.pop %v10026
        %v10837 = vrcp.pop %v10029
        %v10838 = vrcp.pop %v10032
        %v10839 = vrcp.pop %v10035
        %v10840 = vrcp.pop %v10038
        %v10841 = vrcp.pop %v10041
        %v10842 = vmul.f32 %v10099, %v10810
        %v10843 = vmul.f32 %v10102, %v10811
        %v10844 = vmul.f32 %v10146, %v10812
        %v10845 = vmul.f32 %v10149, %v10813
        %v10846 = vmul.f32 %v10193, %v10814
        %v10847 = vmul.f32 %v10196, %v10815
        %v10848 = vmul.f32 %v10240, %v10816
        %v10849 = vmul.f32 %v10243, %v10817
        %v10850 = vmul.f32 %v10287, %v10818
        %v10851 = vmul.f32 %v10290, %v10819
        %v10852 = vmul.f32 %v10334, %v10820
        %v10853 = vmul.f32 %v10337, %v10821
        %v10854 = vmul.f32 %v10381, %v10822
        %v10855 = vmul.f32 %v10384, %v10823
        %v10856 = vmul.f32 %v10428, %v10824
        %v10857 = vmul.f32 %v10431, %v10825
        %v10858 = vmul.f32 %v10475, %v10826
        %v10859 = vmul.f32 %v10478, %v10827
        %v10860 = vmul.f32 %v10522, %v10828
        %v10861 = vmul.f32 %v10525, %v10829
        %v10862 = vmul.f32 %v10569, %v10830
        %v10863 = vmul.f32 %v10572, %v10831
        %v10864 = vmul.f32 %v10616, %v10832
        %v10865 = vmul.f32 %v10619, %v10833
        %v10866 = vmul.f32 %v10663, %v10834
        %v10867 = vmul.f32 %v10666, %v10835
        %v10868 = vmul.f32 %v10710, %v10836
        %v10869 = vmul.f32 %v10713, %v10837
        %v10870 = vmul.f32 %v10757, %v10838
        %v10871 = vmul.f32 %v10760, %v10839
        %v10872 = vmul.f32 %v10804, %v10840
        %v10873 = vmul.f32 %v10807, %v10841
        %10874 = vrot.lane.b32.xlu0 %v1955, 32
        %v10875 = vpop.permute.xlu0 %10874
        %10876 = vrot.lane.b32.xlu0 %v1957, 32
        %v10877 = vpop.permute.xlu0 %10876
        %10878 = vrot.lane.b32.xlu0 %v1959, 32
        %v10879 = vpop.permute.xlu0 %10878
        %10880 = vrot.lane.b32.xlu0 %v1961, 32
        %v10881 = vpop.permute.xlu0 %10880
        %10882 = vrot.lane.b32.xlu0 %v1963, 32
        %v10883 = vpop.permute.xlu0 %10882
        %10884 = vrot.lane.b32.xlu0 %v1965, 32
        %v10885 = vpop.permute.xlu0 %10884
        %10886 = vrot.lane.b32.xlu0 %v1967, 32
        %v10887 = vpop.permute.xlu0 %10886
        %10888 = vrot.lane.b32.xlu0 %v1969, 32
        %v10889 = vpop.permute.xlu0 %10888
        %10890 = vrot.lane.b32.xlu0 %v1971, 32
        %v10891 = vpop.permute.xlu0 %10890
        %10892 = vrot.lane.b32.xlu0 %v1973, 32
        %v10893 = vpop.permute.xlu0 %10892
        %10894 = vrot.lane.b32.xlu0 %v1975, 32
        %v10895 = vpop.permute.xlu0 %10894
        %10896 = vrot.lane.b32.xlu0 %v1977, 32
        %v10897 = vpop.permute.xlu0 %10896
        %10898 = vrot.lane.b32.xlu0 %v1979, 32
        %v10899 = vpop.permute.xlu0 %10898
        %10900 = vrot.lane.b32.xlu0 %v1981, 32
        %v10901 = vpop.permute.xlu0 %10900
        %10902 = vrot.lane.b32.xlu0 %v1983, 32
        %v10903 = vpop.permute.xlu0 %10902
        %10904 = vrot.lane.b32.xlu0 %v1985, 32
        %v10905 = vpop.permute.xlu0 %10904
        %10906 = vrot.lane.b32.xlu0 %v1987, 32
        %v10907 = vpop.permute.xlu0 %10906
        %10908 = vrot.lane.b32.xlu0 %v1989, 32
        %v10909 = vpop.permute.xlu0 %10908
        %10910 = vrot.lane.b32.xlu0 %v1991, 32
        %v10911 = vpop.permute.xlu0 %10910
        %10912 = vrot.lane.b32.xlu0 %v1993, 32
        %v10913 = vpop.permute.xlu0 %10912
        %10914 = vrot.lane.b32.xlu0 %v1995, 32
        %v10915 = vpop.permute.xlu0 %10914
        %10916 = vrot.lane.b32.xlu0 %v1997, 32
        %v10917 = vpop.permute.xlu0 %10916
        %10918 = vrot.lane.b32.xlu0 %v1999, 32
        %v10919 = vpop.permute.xlu0 %10918
        %10920 = vrot.lane.b32.xlu0 %v2001, 32
        %v10921 = vpop.permute.xlu0 %10920
        %10922 = vrot.lane.b32.xlu0 %v2003, 32
        %v10923 = vpop.permute.xlu0 %10922
        %10924 = vrot.lane.b32.xlu0 %v2005, 32
        %v10925 = vpop.permute.xlu0 %10924
        %10926 = vrot.lane.b32.xlu0 %v2007, 32
        %v10927 = vpop.permute.xlu0 %10926
        %10928 = vrot.lane.b32.xlu0 %v2009, 32
        %v10929 = vpop.permute.xlu0 %10928
        %10930 = vrot.lane.b32.xlu0 %v2011, 32
        %v10931 = vpop.permute.xlu0 %10930
        %10932 = vrot.lane.b32.xlu0 %v2013, 32
        %v10933 = vpop.permute.xlu0 %10932
        %10934 = vrot.lane.b32.xlu0 %v2015, 32
        %v10935 = vpop.permute.xlu0 %10934
        %10936 = vrot.lane.b32.xlu0 %v2017, 32
        %v10937 = vpop.permute.xlu0 %10936
        %v10970 = vmul.f32 %v10842, %v10875
        %v10971 = vmul.f32 %v10843, %v10877
        %v10972 = vmul.f32 %v10844, %v10879
        %v10973 = vmul.f32 %v10845, %v10881
        %v10974 = vmul.f32 %v10846, %v10883
        %v10975 = vmul.f32 %v10847, %v10885
        %v10976 = vmul.f32 %v10848, %v10887
        %v10977 = vmul.f32 %v10849, %v10889
        %v10978 = vmul.f32 %v10850, %v10891
        %v10979 = vmul.f32 %v10851, %v10893
        %v10980 = vmul.f32 %v10852, %v10895
        %v10981 = vmul.f32 %v10853, %v10897
        %v10982 = vmul.f32 %v10854, %v10899
        %v10983 = vmul.f32 %v10855, %v10901
        %v10984 = vmul.f32 %v10856, %v10903
        %v10985 = vmul.f32 %v10857, %v10905
        %v10986 = vmul.f32 %v10858, %v10907
        %v10987 = vmul.f32 %v10859, %v10909
        %v10988 = vmul.f32 %v10860, %v10911
        %v10989 = vmul.f32 %v10861, %v10913
        %v10990 = vmul.f32 %v10862, %v10915
        %v10991 = vmul.f32 %v10863, %v10917
        %v10992 = vmul.f32 %v10864, %v10919
        %v10993 = vmul.f32 %v10865, %v10921
        %v10994 = vmul.f32 %v10866, %v10923
        %v10995 = vmul.f32 %v10867, %v10925
        %v10996 = vmul.f32 %v10868, %v10927
        %v10997 = vmul.f32 %v10869, %v10929
        %v10998 = vmul.f32 %v10870, %v10931
        %v10999 = vmul.f32 %v10871, %v10933
        %v11000 = vmul.f32 %v10872, %v10935
        %v11001 = vmul.f32 %v10873, %v10937
        %v11002 = vpack.c.bf16 %v10971, %v10970
        %v11003 = vpack.c.bf16 %v10973, %v10972
        %v11004 = vpack.c.bf16 %v10975, %v10974
        %v11005 = vpack.c.bf16 %v10977, %v10976
        %v11006 = vpack.c.bf16 %v10979, %v10978
        %v11007 = vpack.c.bf16 %v10981, %v10980
        %v11008 = vpack.c.bf16 %v10983, %v10982
        %v11009 = vpack.c.bf16 %v10985, %v10984
        %v11010 = vpack.c.bf16 %v10987, %v10986
        %v11011 = vpack.c.bf16 %v10989, %v10988
        %v11012 = vpack.c.bf16 %v10991, %v10990
        %v11013 = vpack.c.bf16 %v10993, %v10992
        %v11014 = vpack.c.bf16 %v10995, %v10994
        %v11015 = vpack.c.bf16 %v10997, %v10996
        %v11016 = vpack.c.bf16 %v10999, %v10998
        %v11017 = vpack.c.bf16 %v11001, %v11000
        %v11018 = vld [vmem:[%s9 + $0x30] sm:$0xf]
        %v11019 = vld [vmem:[%s9 + $0x34] sm:$0xf]
        %v11020 = vld [vmem:[%s9 + $0x38] sm:$0xf]
        %v11021 = vld [vmem:[%s9 + $0x3c] sm:$0xf]
        %v11026 = vunpack.c.l.b16 %v11018
        %v11027 = vunpack.c.l.b16 %v11019
        %v11028 = vunpack.c.l.b16 %v11020
        %v11029 = vunpack.c.l.b16 %v11021
        %v11030 = vpack.c.b16 %v11027, %v11026
        %v11031 = vpack.c.b16 %v11029, %v11028
        %v11035 = vsel %vm2102, %v11002, 0
        %v11038 = vsel %vm2102, %v11003, 0
        %v11041 = vsel %vm2102, %v11004, 0
        %v11044 = vsel %vm2102, %v11005, 0
        %v11047 = vsel %vm2102, %v11006, 0
        %v11050 = vsel %vm2102, %v11007, 0
        %v11053 = vsel %vm2102, %v11008, 0
        %v11056 = vsel %vm2102, %v11009, 0
        %v11059 = vsel %vm2102, %v11010, 0
        %v11062 = vsel %vm2102, %v11011, 0
        %v11065 = vsel %vm2102, %v11012, 0
        %v11068 = vsel %vm2102, %v11013, 0
        %v11071 = vsel %vm2102, %v11014, 0
        %v11074 = vsel %vm2102, %v11015, 0
        %v11077 = vsel %vm2102, %v11016, 0
        %v11080 = vsel %vm2102, %v11017, 0
        %11082 = vmatprep.subr.bf16.mxu0 0
        %11083 = vmatpush1.bf16.msra.mxu0 %v11030
        %11084 = vmatprep.subr.bf16.mxu0 0
        %11085 = vmatpush1.bf16.msra.mxu0 %v11031
        %11086 = vmatprep.subr.bf16.mxu0 0
        %11087 = vmatpush1.bf16.msra.mxu0 0
        %11088 = vmatprep.subr.bf16.mxu0 0
        %11089 = vmatpush1.bf16.msra.mxu0 0
        %11090 = vmatprep.subr.bf16.mxu0 0
        %11091 = vmatpush1.bf16.msra.mxu0 0
        %11092 = vmatprep.subr.bf16.mxu0 0
        %11093 = vmatpush1.bf16.msra.mxu0 0
        %11094 = vmatprep.subr.bf16.mxu0 0
        %11095 = vmatpush1.bf16.msra.mxu0 0
        %11096 = vmatprep.subr.bf16.mxu0 0
        %11097 = vmatpush1.bf16.msra.mxu0 0
        %11098 = vmatprep.subr.bf16.mxu0 0
        %11099 = vmatpush1.bf16.msra.mxu0 0
        %11100 = vmatprep.subr.bf16.mxu0 0
        %11101 = vmatpush1.bf16.msra.mxu0 0
        %11102 = vmatprep.subr.bf16.mxu0 0
        %11103 = vmatpush1.bf16.msra.mxu0 0
        %11104 = vmatprep.subr.bf16.mxu0 0
        %11105 = vmatpush1.bf16.msra.mxu0 0
        %11106 = vmatprep.subr.bf16.mxu0 0
        %11107 = vmatpush1.bf16.msra.mxu0 0
        %11108 = vmatprep.subr.bf16.mxu0 0
        %11109 = vmatpush1.bf16.msra.mxu0 0
        %11110 = vmatprep.subr.bf16.mxu0 0
        %11111 = vmatpush1.bf16.msra.mxu0 0
        %11112 = vmatprep.subr.bf16.mxu0 0
        %11113 = vmatpush1.bf16.msra.mxu0 0
        %11114 = vmatprep.mubr.bf16.mxu0 0
        %11115 = vmatmul.mubr.bf16.gmra.mrb[0].mxu0 %v11035
        %v11116 = vpop.f32.mrb[0].mxu0
        %v11117 = vadd.f32 0.0, %v11116
        %v11118 = vpop.f32.mrb[0].mxu0
        %v11119 = vpop.f32.mrb[0].mxu0
        %v11120 = vadd.f32 0.0, %v11119
        %v11121 = vpop.f32.mrb[0].mxu0
        %11122 = vmatprep.mubr.bf16.mxu0 0
        %11123 = vmatmul.mubr.bf16.gmra.mrb[0].mxu0 %v11038
        %v11124 = vpop.f32.mrb[0].mxu0
        %v11125 = vadd.f32 0.0, %v11124
        %v11126 = vpop.f32.mrb[0].mxu0
        %v11127 = vpop.f32.mrb[0].mxu0
        %v11128 = vadd.f32 0.0, %v11127
        %v11129 = vpop.f32.mrb[0].mxu0
        %11130 = vmatprep.mubr.bf16.mxu0 0
        %11131 = vmatmul.mubr.bf16.gmra.mrb[0].mxu0 %v11041
        %v11132 = vpop.f32.mrb[0].mxu0
        %v11133 = vadd.f32 0.0, %v11132
        %v11134 = vpop.f32.mrb[0].mxu0
        %v11135 = vpop.f32.mrb[0].mxu0
        %v11136 = vadd.f32 0.0, %v11135
        %v11137 = vpop.f32.mrb[0].mxu0
        %11138 = vmatprep.mubr.bf16.mxu0 0
        %11139 = vmatmul.mubr.bf16.gmra.mrb[0].mxu0 %v11044
        %v11140 = vpop.f32.mrb[0].mxu0
        %v11141 = vadd.f32 0.0, %v11140
        %v11142 = vpop.f32.mrb[0].mxu0
        %v11143 = vpop.f32.mrb[0].mxu0
        %v11144 = vadd.f32 0.0, %v11143
        %v11145 = vpop.f32.mrb[0].mxu0
        %11146 = vmatprep.mubr.bf16.mxu0 0
        %11147 = vmatmul.mubr.bf16.gmra.mrb[0].mxu0 %v11047
        %v11148 = vpop.f32.mrb[0].mxu0
        %v11149 = vadd.f32 0.0, %v11148
        %v11150 = vpop.f32.mrb[0].mxu0
        %v11151 = vpop.f32.mrb[0].mxu0
        %v11152 = vadd.f32 0.0, %v11151
        %v11153 = vpop.f32.mrb[0].mxu0
        %11154 = vmatprep.mubr.bf16.mxu0 0
        %11155 = vmatmul.mubr.bf16.gmra.mrb[0].mxu0 %v11050
        %v11156 = vpop.f32.mrb[0].mxu0
        %v11157 = vadd.f32 0.0, %v11156
        %v11158 = vpop.f32.mrb[0].mxu0
        %v11159 = vpop.f32.mrb[0].mxu0
        %v11160 = vadd.f32 0.0, %v11159
        %v11161 = vpop.f32.mrb[0].mxu0
        %11162 = vmatprep.mubr.bf16.mxu0 0
        %11163 = vmatmul.mubr.bf16.gmra.mrb[0].mxu0 %v11053
        %v11164 = vpop.f32.mrb[0].mxu0
        %v11165 = vadd.f32 0.0, %v11164
        %v11166 = vpop.f32.mrb[0].mxu0
        %v11167 = vpop.f32.mrb[0].mxu0
        %v11168 = vadd.f32 0.0, %v11167
        %v11169 = vpop.f32.mrb[0].mxu0
        %11170 = vmatprep.mubr.bf16.mxu0 0
        %11171 = vmatmul.mubr.bf16.gmra.mrb[0].mxu0 %v11056
        %v11172 = vpop.f32.mrb[0].mxu0
        %v11173 = vadd.f32 0.0, %v11172
        %v11174 = vpop.f32.mrb[0].mxu0
        %v11175 = vpop.f32.mrb[0].mxu0
        %v11176 = vadd.f32 0.0, %v11175
        %v11177 = vpop.f32.mrb[0].mxu0
        %11178 = vmatprep.mubr.bf16.mxu0 0
        %11179 = vmatmul.mubr.bf16.gmra.mrb[0].mxu0 %v11059
        %v11180 = vpop.f32.mrb[0].mxu0
        %v11181 = vadd.f32 0.0, %v11180
        %v11182 = vpop.f32.mrb[0].mxu0
        %v11183 = vpop.f32.mrb[0].mxu0
        %v11184 = vadd.f32 0.0, %v11183
        %v11185 = vpop.f32.mrb[0].mxu0
        %11186 = vmatprep.mubr.bf16.mxu0 0
        %11187 = vmatmul.mubr.bf16.gmra.mrb[0].mxu0 %v11062
        %v11188 = vpop.f32.mrb[0].mxu0
        %v11189 = vadd.f32 0.0, %v11188
        %v11190 = vpop.f32.mrb[0].mxu0
        %v11191 = vpop.f32.mrb[0].mxu0
        %v11192 = vadd.f32 0.0, %v11191
        %v11193 = vpop.f32.mrb[0].mxu0
        %11194 = vmatprep.mubr.bf16.mxu0 0
        %11195 = vmatmul.mubr.bf16.gmra.mrb[0].mxu0 %v11065
        %v11196 = vpop.f32.mrb[0].mxu0
        %v11197 = vadd.f32 0.0, %v11196
        %v11198 = vpop.f32.mrb[0].mxu0
        %v11199 = vpop.f32.mrb[0].mxu0
        %v11200 = vadd.f32 0.0, %v11199
        %v11201 = vpop.f32.mrb[0].mxu0
        %11202 = vmatprep.mubr.bf16.mxu0 0
        %11203 = vmatmul.mubr.bf16.gmra.mrb[0].mxu0 %v11068
        %v11204 = vpop.f32.mrb[0].mxu0
        %v11205 = vadd.f32 0.0, %v11204
        %v11206 = vpop.f32.mrb[0].mxu0
        %v11207 = vpop.f32.mrb[0].mxu0
        %v11208 = vadd.f32 0.0, %v11207
        %v11209 = vpop.f32.mrb[0].mxu0
        %11210 = vmatprep.mubr.bf16.mxu0 0
        %11211 = vmatmul.mubr.bf16.gmra.mrb[0].mxu0 %v11071
        %v11212 = vpop.f32.mrb[0].mxu0
        %v11213 = vadd.f32 0.0, %v11212
        %v11214 = vpop.f32.mrb[0].mxu0
        %v11215 = vpop.f32.mrb[0].mxu0
        %v11216 = vadd.f32 0.0, %v11215
        %v11217 = vpop.f32.mrb[0].mxu0
        %11218 = vmatprep.mubr.bf16.mxu0 0
        %11219 = vmatmul.mubr.bf16.gmra.mrb[0].mxu0 %v11074
        %v11220 = vpop.f32.mrb[0].mxu0
        %v11221 = vadd.f32 0.0, %v11220
        %v11222 = vpop.f32.mrb[0].mxu0
        %v11223 = vpop.f32.mrb[0].mxu0
        %v11224 = vadd.f32 0.0, %v11223
        %v11225 = vpop.f32.mrb[0].mxu0
        %11226 = vmatprep.mubr.bf16.mxu0 0
        %11227 = vmatmul.mubr.bf16.gmra.mrb[0].mxu0 %v11077
        %v11228 = vpop.f32.mrb[0].mxu0
        %v11229 = vadd.f32 0.0, %v11228
        %v11230 = vpop.f32.mrb[0].mxu0
        %v11231 = vpop.f32.mrb[0].mxu0
        %v11232 = vadd.f32 0.0, %v11231
        %v11233 = vpop.f32.mrb[0].mxu0
        %11234 = vmatprep.mubr.bf16.mxu0 0
        %11235 = vmatmul.mubr.bf16.gmra.mrb[0].mxu0 %v11080
        %v11236 = vpop.f32.mrb[0].mxu0
        %v11237 = vadd.f32 0.0, %v11236
        %v11238 = vpop.f32.mrb[0].mxu0
        %v11239 = vpop.f32.mrb[0].mxu0
        %v11240 = vadd.f32 0.0, %v11239
        %v11241 = vpop.f32.mrb[0].mxu0
        %11242 = vdwg.mxu0
        %v11243 = vadd.f32 %v8901, %v11117
        %v11244 = vadd.f32 %v8902, %v11120
        %v11245 = vadd.f32 %v8903, %v11125
        %v11246 = vadd.f32 %v8904, %v11128
        %v11247 = vadd.f32 %v8905, %v11133
        %v11248 = vadd.f32 %v8906, %v11136
        %v11249 = vadd.f32 %v8907, %v11141
        %v11250 = vadd.f32 %v8908, %v11144
        %v11251 = vadd.f32 %v8909, %v11149
        %v11252 = vadd.f32 %v8910, %v11152
        %v11253 = vadd.f32 %v8911, %v11157
        %v11254 = vadd.f32 %v8912, %v11160
        %v11255 = vadd.f32 %v8913, %v11165
        %v11256 = vadd.f32 %v8914, %v11168
        %v11257 = vadd.f32 %v8915, %v11173
        %v11258 = vadd.f32 %v8916, %v11176
        %v11259 = vadd.f32 %v8917, %v11181
        %v11260 = vadd.f32 %v8918, %v11184
        %v11261 = vadd.f32 %v8919, %v11189
        %v11262 = vadd.f32 %v8920, %v11192
        %v11263 = vadd.f32 %v8921, %v11197
        %v11264 = vadd.f32 %v8922, %v11200
        %v11265 = vadd.f32 %v8923, %v11205
        %v11266 = vadd.f32 %v8924, %v11208
        %v11267 = vadd.f32 %v8925, %v11213
        %v11268 = vadd.f32 %v8926, %v11216
        %v11269 = vadd.f32 %v8927, %v11221
        %v11270 = vadd.f32 %v8928, %v11224
        %v11271 = vadd.f32 %v8929, %v11229
        %v11272 = vadd.f32 %v8930, %v11232
        %v11273 = vadd.f32 %v8931, %v11237
        %v11274 = vadd.f32 %v8932, %v11240
        %v11275 = vld [vmem:[%s10] sm:$0x1]
        %v11277 = vlaneseq
        %v11278 = vshrl.u32 %v11277, 7
        %v11279 = vsub.s32 0, %v11278
        %v11280 = vrot.slane %v11275, %v11279
        %v11282 = vadd.f32 %v11243, %v11280
        %v11283 = vadd.f32 %v11244, %v11280
        %v11284 = vadd.f32 %v11245, %v11280
        %v11285 = vadd.f32 %v11246, %v11280
        %v11286 = vadd.f32 %v11247, %v11280
        %v11287 = vadd.f32 %v11248, %v11280
        %v11288 = vadd.f32 %v11249, %v11280
        %v11289 = vadd.f32 %v11250, %v11280
        %v11290 = vadd.f32 %v11251, %v11280
        %v11291 = vadd.f32 %v11252, %v11280
        %v11292 = vadd.f32 %v11253, %v11280
        %v11293 = vadd.f32 %v11254, %v11280
        %v11294 = vadd.f32 %v11255, %v11280
        %v11295 = vadd.f32 %v11256, %v11280
        %v11296 = vadd.f32 %v11257, %v11280
        %v11297 = vadd.f32 %v11258, %v11280
        %v11298 = vadd.f32 %v11259, %v11280
        %v11299 = vadd.f32 %v11260, %v11280
        %v11300 = vadd.f32 %v11261, %v11280
        %v11301 = vadd.f32 %v11262, %v11280
        %v11302 = vadd.f32 %v11263, %v11280
        %v11303 = vadd.f32 %v11264, %v11280
        %v11304 = vadd.f32 %v11265, %v11280
        %v11305 = vadd.f32 %v11266, %v11280
        %v11306 = vadd.f32 %v11267, %v11280
        %v11307 = vadd.f32 %v11268, %v11280
        %v11308 = vadd.f32 %v11269, %v11280
        %v11309 = vadd.f32 %v11270, %v11280
        %v11310 = vadd.f32 %v11271, %v11280
        %v11311 = vadd.f32 %v11272, %v11280
        %v11312 = vadd.f32 %v11273, %v11280
        %v11313 = vadd.f32 %v11274, %v11280
        %11314 = vst [vmem:[%s421] sm:$0xff] %v11282
        %11315 = vst [vmem:[%s421 + $0x8] sm:$0xff] %v11283
        %11316 = vst [vmem:[%s421 + $0x10] sm:$0xff] %v11284
        %11317 = vst [vmem:[%s421 + $0x18] sm:$0xff] %v11285
        %11318 = vst [vmem:[%s421 + $0x20] sm:$0xff] %v11286
        %11319 = vst [vmem:[%s421 + $0x28] sm:$0xff] %v11287
        %11320 = vst [vmem:[%s421 + $0x30] sm:$0xff] %v11288
        %11321 = vst [vmem:[%s421 + $0x38] sm:$0xff] %v11289
        %11322 = vst [vmem:[%s421 + $0x40] sm:$0xff] %v11290
        %11323 = vst [vmem:[%s421 + $0x48] sm:$0xff] %v11291
        %11324 = vst [vmem:[%s421 + $0x50] sm:$0xff] %v11292
        %11325 = vst [vmem:[%s421 + $0x58] sm:$0xff] %v11293
        %11326 = vst [vmem:[%s421 + $0x60] sm:$0xff] %v11294
        %11327 = vst [vmem:[%s421 + $0x68] sm:$0xff] %v11295
        %11328 = vst [vmem:[%s421 + $0x70] sm:$0xff] %v11296
        %11329 = vst [vmem:[%s421 + $0x78] sm:$0xff] %v11297
        %11330 = vst [vmem:[%s421 + $0x80] sm:$0xff] %v11298
        %11331 = vst [vmem:[%s421 + $0x88] sm:$0xff] %v11299
        %11332 = vst [vmem:[%s421 + $0x90] sm:$0xff] %v11300
        %11333 = vst [vmem:[%s421 + $0x98] sm:$0xff] %v11301
        %11334 = vst [vmem:[%s421 + $0xa0] sm:$0xff] %v11302
        %11335 = vst [vmem:[%s421 + $0xa8] sm:$0xff] %v11303
        %11336 = vst [vmem:[%s421 + $0xb0] sm:$0xff] %v11304
        %11337 = vst [vmem:[%s421 + $0xb8] sm:$0xff] %v11305
        %11338 = vst [vmem:[%s421 + $0xc0] sm:$0xff] %v11306
        %11339 = vst [vmem:[%s421 + $0xc8] sm:$0xff] %v11307
        %11340 = vst [vmem:[%s421 + $0xd0] sm:$0xff] %v11308
        %11341 = vst [vmem:[%s421 + $0xd8] sm:$0xff] %v11309
        %11342 = vst [vmem:[%s421 + $0xe0] sm:$0xff] %v11310
        %11343 = vst [vmem:[%s421 + $0xe8] sm:$0xff] %v11311
        %11344 = vst [vmem:[%s421 + $0xf0] sm:$0xff] %v11312
        %11345 = vst [vmem:[%s421 + $0xf8] sm:$0xff] %v11313
        %s11346 = sand.u32 %s290, 1
        %s11347 = scalar_lea.sflag [#allocation3], %s11346
        %s11348 = sand.u32 %s290, 1
        %s11349 = smul.addr %s11348, 256
        %s11350 = scalar_lea.vmem [#allocation2], %s11349
        // Predicated region
        $region65: #{triangle_attention.1} parent=63 // pred_check
          %p11351 = pneg %p300
        $region66: #{triangle_attention.1} parent=63 // pred_check_branch
          %11353 = sbr.rel (%p11351) target = $region68
        $region67: #{triangle_attention.1} parent=63 // pred_region
          %s11354 = smul.u32 16, %s30
          %s11356 = ssub.s32 4096, 4096
          %11357 = vsyncadd %s11347, %s11356
          %s11358 = smul.addr %s11354, 2
          %s11359 = smul.addr %s29, 32
          %s11360 = sadd.s32 %s11358, %s11359
          %s11361 = smul.addr %s11360, 128
          %s11362 = scalar_lea.hbm %s11, %s11361
          %s11363 = sshll.u32 %s11350, 4
          %s11364 = int_to_ptr.vmem [resolvable:$true] %s11363
          %11369 = dma.vmem_to_hbm [thread:$0]  %s11364, 4096, %s11362, %s11347, 128, 128, 8
        $region68: #{triangle_attention.1} parent=63 // pred_fallthru
          _
      $region64: #{triangle_attention.1} parent=5 // pred_fallthru
        _
      %p11370 = scmp.le.s32.totalorder 2, %s20
      // Predicated region
      $region69: #{triangle_attention.1} parent=5 // pred_check
        %p11371 = pneg %p11370
      $region70: #{triangle_attention.1} parent=5 // pred_check_branch
        %11373 = sbr.rel (%p11371) target = $region72
      $region71: #{triangle_attention.1} parent=5 // pred_region
        %s11374 = ssub.s32 %s20, 2
        // Predicated region
        $region73: #{triangle_attention.1} parent=71 // pred_check
          %p11375 = pneg %p306
        $region74: #{triangle_attention.1} parent=71 // pred_check_branch
          %11377 = sbr.rel (%p11375) target = $region76
        $region75: #{triangle_attention.1} parent=71 // pred_region
          %s11378 = sand.u32 %s291, 1
          %s11379 = scalar_lea.sflag [#allocation3], %s11378
          %s11380 = sand.u32 %s291, 1
          %s11381 = smul.addr %s11380, 256
          %s11382 = scalar_lea.vmem [#allocation2], %s11381
          %11383 = dma.done %s11379, 4096
        $region76: #{triangle_attention.1} parent=71 // pred_fallthru
          _
      $region72: #{triangle_attention.1} parent=5 // pred_fallthru
        _
    $region6: #{triangle_attention.1} parent=1 // loop_footer
      %s24 = sadd.s32 1, %s20
    $region7: #{triangle_attention.1} parent=1 // loop_footer_branch
      %19 = sbr.rel target = $region3
    $region8: #{triangle_attention.1} parent=1 // loop_exit
      _
    %11384 = vsyncpa [#allocation3], 1
    %s11385 = scalar_lea.sflag [#allocation3], 1
    %11386 = vsyncpa %s11385, 1

</llo_original>
